<compile_context>
chip_gen: v5e
topology: v5e:2x2
jax: 0.10.0
libtpu: 0.0.40
codegen_flags: <defaults>
</compile_context>

<pallas_src>
import jax
import jax.numpy as jnp
import numpy as np
from jax.experimental import pallas as pl
from jax.experimental.pallas import tpu as pltpu

K = 5          # depthwise conv kernel size (K x K), padding K // 2
PAD = K // 2
KK = K * K


# ----------------------------------------------------------------------------
# Fused kernel: char conv (im2col matmul) + relu + max(Lc) + resize + Highway
# ----------------------------------------------------------------------------
def _fused_embedding_kernel(
        wd_ref, ch_ref,                       # activations (one batch tile)
        wconv_ref, pb_ref,                    # fused depthwise(x)pointwise conv
        wrw_ref, wrc_ref,                     # split resize weights (no concat)
        wl0_ref, bl0_ref, wg0_ref, bg0_ref,   # highway layer 0
        wl1_ref, bl1_ref, wg1_ref, bg1_ref,   # highway layer 1
        out_ref,                              # (bt*Lw, H) lane-contiguous slab
        pad_ref, patch_ref):                  # VMEM scratch
    bt, lw, lc, dc = ch_ref.shape
    dw_dim = wd_ref.shape[-1]
    m_conv = bt * lw * lc
    m_out = bt * lw
    cdt = wconv_ref.dtype                     # matmul operand dtype (bf16/f32)

    # --- char path: zero-pad the block inside VMEM (no HBM padded copy) -----
    # Zeroed every step so the kernel is safe under megacore grid sharding.
    pad_ref[...] = jnp.zeros_like(pad_ref)
    pad_ref[:, PAD:PAD + lw, PAD:PAD + lc, :] = ch_ref[...].astype(cdt)

    # --- im2col: 25 shifted windows -> one (M, 25*Dc) patch matrix ----------
    for di in range(K):
        for dj in range(K):
            tap = di * K + dj
            patch_ref[:, :, :, tap * dc:(tap + 1) * dc] = (
                pad_ref[:, di:di + lw, dj:dj + lc, :])
    patches = patch_ref[...].reshape(m_conv, KK * dc)

    # depthwise + pointwise conv as ONE MXU matmul (K = 25*Dc), bias + relu
    y = jnp.dot(patches, wconv_ref[...],
                preferred_element_type=jnp.float32) + pb_ref[0]
    y = jnp.maximum(y, 0.0)
    # max over char positions (PyTorch: torch.max(ch_emb, dim=3))
    ch = jnp.max(y.reshape(m_out, lc, dc), axis=1)            # (bt*Lw, Dc) f32

    # --- resize 1x1 conv (no bias): split weight == conv on the concat ------
    wd = wd_ref[...].reshape(m_out, dw_dim).astype(cdt)
    h = (jnp.dot(wd, wrw_ref[...], preferred_element_type=jnp.float32) +
         jnp.dot(ch.astype(cdt), wrc_ref[...],
                 preferred_element_type=jnp.float32))

    # --- 2-layer Highway (elementwise math kept in f32) ---------------------
    for wl_ref, bl_ref, wg_ref, bg_ref in (
            (wl0_ref, bl0_ref, wg0_ref, bg0_ref),
            (wl1_ref, bl1_ref, wg1_ref, bg1_ref)):
        hc = h.astype(cdt)
        g = jax.nn.sigmoid(
            jnp.dot(hc, wg_ref[...], preferred_element_type=jnp.float32)
            + bg_ref[0])
        tr = jnp.maximum(
            jnp.dot(hc, wl_ref[...], preferred_element_type=jnp.float32)
            + bl_ref[0], 0.0)
        h = g * tr + (1.0 - g) * h

    out_ref[...] = h.astype(out_ref.dtype)


def _pick_batch_tile(b, lw):
    """Batch tile: target a few hundred matmul rows per step, but keep >= 2
    grid steps when possible so v7x megacore can shard the batch axis."""
    bt = max(1, min(b, 512 // max(lw, 1)))
    while b % bt:
        bt -= 1
    if bt == b and b > 1:
        bt = b // 2
        while b % bt:
            bt -= 1
    return bt


def fused_embedding(wd_emb, ch_emb, params, use_bf16_matmul=True):
    b, lw, dw_dim = wd_emb.shape
    _, _, lc, dc = ch_emb.shape
    hid = params["wl0"].shape[1]
    cdt = jnp.bfloat16 if use_bf16_matmul else jnp.float32

    # Fold depthwise + pointwise conv into one (25*Dc, Dc) im2col weight.
    w_conv = (params["dw"][..., None] * params["pw"][None, None]
              ).reshape(KK * dc, dc).astype(cdt)
    # Split the resize weight so no concat([wd, ch]) is needed.
    wrw = params["wr"][:dw_dim].astype(cdt)
    wrc = params["wr"][dw_dim:].astype(cdt)
    wl0, wg0 = params["wl0"].astype(cdt), params["wg0"].astype(cdt)
    wl1, wg1 = params["wl1"].astype(cdt), params["wg1"].astype(cdt)

    bt = _pick_batch_tile(b, lw)
    nbt = b // bt

    def full(shape):
        return pl.BlockSpec(shape, lambda i, _s=shape: (0,) * len(_s))

    out2d = pl.pallas_call(
        _fused_embedding_kernel,
        out_shape=jax.ShapeDtypeStruct((b * lw, hid), jnp.float32),
        grid=(nbt,),
        in_specs=[
            pl.BlockSpec((bt, lw, dw_dim), lambda i: (i, 0, 0)),
            pl.BlockSpec((bt, lw, lc, dc), lambda i: (i, 0, 0, 0)),
            full((KK * dc, dc)),
            full((1, dc)),
            full((dw_dim, hid)),
            full((dc, hid)),
            full((hid, hid)), full((1, hid)), full((hid, hid)), full((1, hid)),
            full((hid, hid)), full((1, hid)), full((hid, hid)), full((1, hid)),
        ],
        out_specs=pl.BlockSpec((bt * lw, hid), lambda i: (i, 0)),
        scratch_shapes=[
            pltpu.VMEM((bt, lw + 2 * PAD, lc + 2 * PAD, dc), cdt),
            pltpu.VMEM((bt, lw, lc, KK * dc), cdt),
        ],
        # NOTE: when scaling to real BiDAF sizes (Lw~400, Dc~64, H~128), keep
        # 2x(input blocks + scratch + output block) under ~48 MiB for v7x and
        # set vmem_limit_bytes explicitly.
        compiler_params=pltpu.CompilerParams(
            dimension_semantics=("parallel",)),
    )(wd_emb, ch_emb, w_conv, params["pb"], wrw, wrc,
      wl0, params["bl0"], wg0, params["bg0"],
      wl1, params["bl1"], wg1, params["bg1"])

    return out2d.reshape(b, lw, hid)


# ----------------------------------------------------------------------------
# Full forward (embedding gathers are glue in plain JAX)
# ----------------------------------------------------------------------------
def embedding_forward(wx, cx, params, use_bf16_matmul=True):
    wd_emb = jnp.take(params["word_vectors"], wx, axis=0)     # (B, Lw, Dw)
    ch_emb = jnp.take(params["char_vectors"], cx, axis=0)     # (B, Lw, Lc, Dc)
    return fused_embedding(wd_emb, ch_emb, params, use_bf16_matmul)


# Pure-JAX reference (unfused math, f32) for correctness check.
def embedding_reference(wx, cx, params):
    wd_emb = jnp.take(params["word_vectors"], wx, axis=0)
    ch_emb = jnp.take(params["char_vectors"], cx, axis=0)
    b, lw, lc, dc = ch_emb.shape
    chp = jnp.pad(ch_emb, ((0, 0), (PAD, PAD), (PAD, PAD), (0, 0)))
    acc = jnp.zeros((b, lw, lc, dc), jnp.float32)
    for di in range(K):
        for dj in range(K):
            acc = acc + chp[:, di:di + lw, dj:dj + lc, :] * params["dw"][di, dj]
    y = jnp.maximum(acc @ params["pw"] + params["pb"][0], 0.0)
    ch_out = y.max(axis=2)
    h = jnp.concatenate([wd_emb, ch_out], axis=-1) @ params["wr"]
    for i in range(2):
        g = jax.nn.sigmoid(h @ params[f"wg{i}"] + params[f"bg{i}"][0])
        t = jnp.maximum(h @ params[f"wl{i}"] + params[f"bl{i}"][0], 0.0)
        h = g * t + (1.0 - g) * h
    return h


if __name__ == "__main__":
    # small deterministic config
    B, Lw, Lc = 2, 16, 16          # batch, words per example, chars per word
    Vw, Vc = 50, 30                # word / char vocab sizes
    Dw, Dc, H = 32, 16, 32         # word emb, char emb, hidden size

    key = jax.random.PRNGKey(0)
    ks = jax.random.split(key, 16)

    params = {
        "word_vectors": 0.1 * jax.random.normal(ks[0], (Vw, Dw), jnp.float32),
        "char_vectors": 0.1 * jax.random.normal(ks[1], (Vc, Dc), jnp.float32),
        "dw": 0.2 * jax.random.normal(ks[2], (K, K, Dc), jnp.float32),   # depthwise
        "pw": 0.2 * jax.random.normal(ks[3], (Dc, Dc), jnp.float32),     # pointwise
        "pb": 0.05 * jax.random.normal(ks[4], (1, Dc), jnp.float32),
        "wr": 0.2 * jax.random.normal(ks[5], (Dw + Dc, H), jnp.float32),  # resize
        "wl0": 0.2 * jax.random.normal(ks[6], (H, H), jnp.float32),
        "bl0": 0.05 * jax.random.normal(ks[7], (1, H), jnp.float32),
        "wg0": 0.2 * jax.random.normal(ks[8], (H, H), jnp.float32),
        "bg0": 0.05 * jax.random.normal(ks[9], (1, H), jnp.float32),
        "wl1": 0.2 * jax.random.normal(ks[10], (H, H), jnp.float32),
        "bl1": 0.05 * jax.random.normal(ks[11], (1, H), jnp.float32),
        "wg1": 0.2 * jax.random.normal(ks[12], (H, H), jnp.float32),
        "bg1": 0.05 * jax.random.normal(ks[13], (1, H), jnp.float32),
    }

    wx = jax.random.randint(ks[14], (B, Lw), 0, Vw)
    cx = jax.random.randint(ks[15], (B, Lw, Lc), 0, Vc)

    # f32 matmul path: must match the reference tightly.
    out_f32 = jax.block_until_ready(
        embedding_forward(wx, cx, params, use_bf16_matmul=False))
    # bf16-operand MXU path (default / optimized): looser tolerance.
    out_bf16 = jax.block_until_ready(
        embedding_forward(wx, cx, params, use_bf16_matmul=True))
    ref = jax.block_until_ready(embedding_reference(wx, cx, params))

    assert out_f32.shape == (B, Lw, H), out_f32.shape
    assert out_bf16.shape == (B, Lw, H), out_bf16.shape
    np.testing.assert_allclose(np.asarray(out_f32), np.asarray(ref),
                               rtol=1e-4, atol=1e-4)
    np.testing.assert_allclose(np.asarray(out_bf16), np.asarray(ref),
                               rtol=2e-2, atol=2e-2)
    print("KERNEL_OK")
</pallas_src>

<mosaic_0001>
module attributes {stable_mosaic.version = 11 : i64} {
  func.func @_fused_embedding_kernel(%arg0: i32, %arg1: memref<1x16x32xf32, #tpu.memory_space<vmem>>, %arg2: memref<1x16x16x16xf32, #tpu.memory_space<vmem>>, %arg3: memref<400x16xf32, #tpu.memory_space<vmem>>, %arg4: memref<1x16xf32, #tpu.memory_space<vmem>>, %arg5: memref<32x32xf32, #tpu.memory_space<vmem>>, %arg6: memref<16x32xf32, #tpu.memory_space<vmem>>, %arg7: memref<32x32xf32, #tpu.memory_space<vmem>>, %arg8: memref<1x32xf32, #tpu.memory_space<vmem>>, %arg9: memref<32x32xf32, #tpu.memory_space<vmem>>, %arg10: memref<1x32xf32, #tpu.memory_space<vmem>>, %arg11: memref<32x32xf32, #tpu.memory_space<vmem>>, %arg12: memref<1x32xf32, #tpu.memory_space<vmem>>, %arg13: memref<32x32xf32, #tpu.memory_space<vmem>>, %arg14: memref<1x32xf32, #tpu.memory_space<vmem>>, %arg15: memref<16x32xf32, #tpu.memory_space<vmem>>, %arg16: memref<1x20x20x16xf32, #tpu.memory_space<vmem>>, %arg17: memref<1x16x16x400xf32, #tpu.memory_space<vmem>>) attributes {dimension_semantics = [#tpu.dimension_semantics<parallel>], iteration_bounds = array<i64: 2>, scalar_prefetch = 0 : i64, scratch_operands = 2 : i64, tpu.core_type = #tpu.core_type<tc>, window_params = [{transform_indices = @transform_0, window_bounds = array<i64: 1, 16, 32>}, {transform_indices = @transform_1, window_bounds = array<i64: 1, 16, 16, 16>}, {pipeline_mode = #tpu.pipeline_mode<synchronous>, transform_indices = @transform_2, window_bounds = array<i64: 400, 16>}, {pipeline_mode = #tpu.pipeline_mode<synchronous>, transform_indices = @transform_3, window_bounds = array<i64: 1, 16>}, {pipeline_mode = #tpu.pipeline_mode<synchronous>, transform_indices = @transform_4, window_bounds = array<i64: 32, 32>}, {pipeline_mode = #tpu.pipeline_mode<synchronous>, transform_indices = @transform_5, window_bounds = array<i64: 16, 32>}, {pipeline_mode = #tpu.pipeline_mode<synchronous>, transform_indices = @transform_6, window_bounds = array<i64: 32, 32>}, {pipeline_mode = #tpu.pipeline_mode<synchronous>, transform_indices = @transform_7, window_bounds = array<i64: 1, 32>}, {pipeline_mode = #tpu.pipeline_mode<synchronous>, transform_indices = @transform_8, window_bounds = array<i64: 32, 32>}, {pipeline_mode = #tpu.pipeline_mode<synchronous>, transform_indices = @transform_9, window_bounds = array<i64: 1, 32>}, {pipeline_mode = #tpu.pipeline_mode<synchronous>, transform_indices = @transform_10, window_bounds = array<i64: 32, 32>}, {pipeline_mode = #tpu.pipeline_mode<synchronous>, transform_indices = @transform_11, window_bounds = array<i64: 1, 32>}, {pipeline_mode = #tpu.pipeline_mode<synchronous>, transform_indices = @transform_12, window_bounds = array<i64: 32, 32>}, {pipeline_mode = #tpu.pipeline_mode<synchronous>, transform_indices = @transform_13, window_bounds = array<i64: 1, 32>}, {transform_indices = @transform_14, window_bounds = array<i64: 16, 32>}]} {
    %cst = arith.constant 0.000000e+00 : f32
    %0 = vector.broadcast %cst : f32 to vector<1x20x20x16xf32>
    %c0 = arith.constant 0 : index
    %c0_0 = arith.constant 0 : index
    %c0_1 = arith.constant 0 : index
    %c0_2 = arith.constant 0 : index
    %1 = vector.load %arg16[%c0, %c0_0, %c0_1, %c0_2] : memref<1x20x20x16xf32, #tpu.memory_space<vmem>>, vector<1x20x20x16xf32>
    tpu.vector_store %arg16[%c0, %c0_0, %c0_1, %c0_2], %0 {strides = array<i32>} : memref<1x20x20x16xf32, #tpu.memory_space<vmem>>, vector<1x20x20x16xf32>,
    %c0_3 = arith.constant 0 : index
    %c0_4 = arith.constant 0 : index
    %c0_5 = arith.constant 0 : index
    %c0_6 = arith.constant 0 : index
    %2 = vector.load %arg2[%c0_3, %c0_4, %c0_5, %c0_6] : memref<1x16x16x16xf32, #tpu.memory_space<vmem>>, vector<1x16x16x16xf32>
    %c0_7 = arith.constant 0 : index
    %c2 = arith.constant 2 : index
    %c2_8 = arith.constant 2 : index
    %c0_9 = arith.constant 0 : index
    %3 = vector.load %arg16[%c0_7, %c2, %c2_8, %c0_9] : memref<1x20x20x16xf32, #tpu.memory_space<vmem>>, vector<1x16x16x16xf32>
    tpu.vector_store %arg16[%c0_7, %c2, %c2_8, %c0_9], %2 {strides = array<i32>} : memref<1x20x20x16xf32, #tpu.memory_space<vmem>>, vector<1x16x16x16xf32>,
    %c0_10 = arith.constant 0 : index
    %c0_11 = arith.constant 0 : index
    %c0_12 = arith.constant 0 : index
    %c0_13 = arith.constant 0 : index
    %4 = vector.load %arg16[%c0_10, %c0_11, %c0_12, %c0_13] : memref<1x20x20x16xf32, #tpu.memory_space<vmem>>, vector<1x16x16x16xf32>
    %c0_14 = arith.constant 0 : index
    %c0_15 = arith.constant 0 : index
    %c0_16 = arith.constant 0 : index
    %c0_17 = arith.constant 0 : index
    %5 = vector.load %arg17[%c0_14, %c0_15, %c0_16, %c0_17] : memref<1x16x16x400xf32, #tpu.memory_space<vmem>>, vector<1x16x16x16xf32>
    tpu.vector_store %arg17[%c0_14, %c0_15, %c0_16, %c0_17], %4 {strides = array<i32>} : memref<1x16x16x400xf32, #tpu.memory_space<vmem>>, vector<1x16x16x16xf32>,
    %c0_18 = arith.constant 0 : index
    %c0_19 = arith.constant 0 : index
    %c1 = arith.constant 1 : index
    %c0_20 = arith.constant 0 : index
    %6 = vector.load %arg16[%c0_18, %c0_19, %c1, %c0_20] : memref<1x20x20x16xf32, #tpu.memory_space<vmem>>, vector<1x16x16x16xf32>
    %c0_21 = arith.constant 0 : index
    %c0_22 = arith.constant 0 : index
    %c0_23 = arith.constant 0 : index
    %c16 = arith.constant 16 : index
    %7 = vector.load %arg17[%c0_21, %c0_22, %c0_23, %c16] : memref<1x16x16x400xf32, #tpu.memory_space<vmem>>, vector<1x16x16x16xf32>
    tpu.vector_store %arg17[%c0_21, %c0_22, %c0_23, %c16], %6 {strides = array<i32>} : memref<1x16x16x400xf32, #tpu.memory_space<vmem>>, vector<1x16x16x16xf32>,
    %c0_24 = arith.constant 0 : index
    %c0_25 = arith.constant 0 : index
    %c2_26 = arith.constant 2 : index
    %c0_27 = arith.constant 0 : index
    %8 = vector.load %arg16[%c0_24, %c0_25, %c2_26, %c0_27] : memref<1x20x20x16xf32, #tpu.memory_space<vmem>>, vector<1x16x16x16xf32>
    %c0_28 = arith.constant 0 : index
    %c0_29 = arith.constant 0 : index
    %c0_30 = arith.constant 0 : index
    %c32 = arith.constant 32 : index
    %9 = vector.load %arg17[%c0_28, %c0_29, %c0_30, %c32] : memref<1x16x16x400xf32, #tpu.memory_space<vmem>>, vector<1x16x16x16xf32>
    tpu.vector_store %arg17[%c0_28, %c0_29, %c0_30, %c32], %8 {strides = array<i32>} : memref<1x16x16x400xf32, #tpu.memory_space<vmem>>, vector<1x16x16x16xf32>,
    %c0_31 = arith.constant 0 : index
    %c0_32 = arith.constant 0 : index
    %c3 = arith.constant 3 : index
    %c0_33 = arith.constant 0 : index
    %10 = vector.load %arg16[%c0_31, %c0_32, %c3, %c0_33] : memref<1x20x20x16xf32, #tpu.memory_space<vmem>>, vector<1x16x16x16xf32>
    %c0_34 = arith.constant 0 : index
    %c0_35 = arith.constant 0 : index
    %c0_36 = arith.constant 0 : index
    %c48 = arith.constant 48 : index
    %11 = vector.load %arg17[%c0_34, %c0_35, %c0_36, %c48] : memref<1x16x16x400xf32, #tpu.memory_space<vmem>>, vector<1x16x16x16xf32>
    tpu.vector_store %arg17[%c0_34, %c0_35, %c0_36, %c48], %10 {strides = array<i32>} : memref<1x16x16x400xf32, #tpu.memory_space<vmem>>, vector<1x16x16x16xf32>,
    %c0_37 = arith.constant 0 : index
    %c0_38 = arith.constant 0 : index
    %c4 = arith.constant 4 : index
    %c0_39 = arith.constant 0 : index
    %12 = vector.load %arg16[%c0_37, %c0_38, %c4, %c0_39] : memref<1x20x20x16xf32, #tpu.memory_space<vmem>>, vector<1x16x16x16xf32>
    %c0_40 = arith.constant 0 : index
    %c0_41 = arith.constant 0 : index
    %c0_42 = arith.constant 0 : index
    %c64 = arith.constant 64 : index
    %13 = vector.load %arg17[%c0_40, %c0_41, %c0_42, %c64] : memref<1x16x16x400xf32, #tpu.memory_space<vmem>>, vector<1x16x16x16xf32>
    tpu.vector_store %arg17[%c0_40, %c0_41, %c0_42, %c64], %12 {strides = array<i32>} : memref<1x16x16x400xf32, #tpu.memory_space<vmem>>, vector<1x16x16x16xf32>,
    %c0_43 = arith.constant 0 : index
    %c1_44 = arith.constant 1 : index
    %c0_45 = arith.constant 0 : index
    %c0_46 = arith.constant 0 : index
    %14 = vector.load %arg16[%c0_43, %c1_44, %c0_45, %c0_46] : memref<1x20x20x16xf32, #tpu.memory_space<vmem>>, vector<1x16x16x16xf32>
    %c0_47 = arith.constant 0 : index
    %c0_48 = arith.constant 0 : index
    %c0_49 = arith.constant 0 : index
    %c80 = arith.constant 80 : index
    %15 = vector.load %arg17[%c0_47, %c0_48, %c0_49, %c80] : memref<1x16x16x400xf32, #tpu.memory_space<vmem>>, vector<1x16x16x16xf32>
    tpu.vector_store %arg17[%c0_47, %c0_48, %c0_49, %c80], %14 {strides = array<i32>} : memref<1x16x16x400xf32, #tpu.memory_space<vmem>>, vector<1x16x16x16xf32>,
    %c0_50 = arith.constant 0 : index
    %c1_51 = arith.constant 1 : index
    %c1_52 = arith.constant 1 : index
    %c0_53 = arith.constant 0 : index
    %16 = vector.load %arg16[%c0_50, %c1_51, %c1_52, %c0_53] : memref<1x20x20x16xf32, #tpu.memory_space<vmem>>, vector<1x16x16x16xf32>
    %c0_54 = arith.constant 0 : index
    %c0_55 = arith.constant 0 : index
    %c0_56 = arith.constant 0 : index
    %c96 = arith.constant 96 : index
    %17 = vector.load %arg17[%c0_54, %c0_55, %c0_56, %c96] : memref<1x16x16x400xf32, #tpu.memory_space<vmem>>, vector<1x16x16x16xf32>
    tpu.vector_store %arg17[%c0_54, %c0_55, %c0_56, %c96], %16 {strides = array<i32>} : memref<1x16x16x400xf32, #tpu.memory_space<vmem>>, vector<1x16x16x16xf32>,
    %c0_57 = arith.constant 0 : index
    %c1_58 = arith.constant 1 : index
    %c2_59 = arith.constant 2 : index
    %c0_60 = arith.constant 0 : index
    %18 = vector.load %arg16[%c0_57, %c1_58, %c2_59, %c0_60] : memref<1x20x20x16xf32, #tpu.memory_space<vmem>>, vector<1x16x16x16xf32>
    %c0_61 = arith.constant 0 : index
    %c0_62 = arith.constant 0 : index
    %c0_63 = arith.constant 0 : index
    %c112 = arith.constant 112 : index
    %19 = vector.load %arg17[%c0_61, %c0_62, %c0_63, %c112] : memref<1x16x16x400xf32, #tpu.memory_space<vmem>>, vector<1x16x16x16xf32>
    tpu.vector_store %arg17[%c0_61, %c0_62, %c0_63, %c112], %18 {strides = array<i32>} : memref<1x16x16x400xf32, #tpu.memory_space<vmem>>, vector<1x16x16x16xf32>,
    %c0_64 = arith.constant 0 : index
    %c1_65 = arith.constant 1 : index
    %c3_66 = arith.constant 3 : index
    %c0_67 = arith.constant 0 : index
    %20 = vector.load %arg16[%c0_64, %c1_65, %c3_66, %c0_67] : memref<1x20x20x16xf32, #tpu.memory_space<vmem>>, vector<1x16x16x16xf32>
    %c0_68 = arith.constant 0 : index
    %c0_69 = arith.constant 0 : index
    %c0_70 = arith.constant 0 : index
    %c128 = arith.constant 128 : index
    %21 = vector.load %arg17[%c0_68, %c0_69, %c0_70, %c128] : memref<1x16x16x400xf32, #tpu.memory_space<vmem>>, vector<1x16x16x16xf32>
    tpu.vector_store %arg17[%c0_68, %c0_69, %c0_70, %c128], %20 {strides = array<i32>} : memref<1x16x16x400xf32, #tpu.memory_space<vmem>>, vector<1x16x16x16xf32>,
    %c0_71 = arith.constant 0 : index
    %c1_72 = arith.constant 1 : index
    %c4_73 = arith.constant 4 : index
    %c0_74 = arith.constant 0 : index
    %22 = vector.load %arg16[%c0_71, %c1_72, %c4_73, %c0_74] : memref<1x20x20x16xf32, #tpu.memory_space<vmem>>, vector<1x16x16x16xf32>
    %c0_75 = arith.constant 0 : index
    %c0_76 = arith.constant 0 : index
    %c0_77 = arith.constant 0 : index
    %c144 = arith.constant 144 : index
    %23 = vector.load %arg17[%c0_75, %c0_76, %c0_77, %c144] : memref<1x16x16x400xf32, #tpu.memory_space<vmem>>, vector<1x16x16x16xf32>
    tpu.vector_store %arg17[%c0_75, %c0_76, %c0_77, %c144], %22 {strides = array<i32>} : memref<1x16x16x400xf32, #tpu.memory_space<vmem>>, vector<1x16x16x16xf32>,
    %c0_78 = arith.constant 0 : index
    %c2_79 = arith.constant 2 : index
    %c0_80 = arith.constant 0 : index
    %c0_81 = arith.constant 0 : index
    %24 = vector.load %arg16[%c0_78, %c2_79, %c0_80, %c0_81] : memref<1x20x20x16xf32, #tpu.memory_space<vmem>>, vector<1x16x16x16xf32>
    %c0_82 = arith.constant 0 : index
    %c0_83 = arith.constant 0 : index
    %c0_84 = arith.constant 0 : index
    %c160 = arith.constant 160 : index
    %25 = vector.load %arg17[%c0_82, %c0_83, %c0_84, %c160] : memref<1x16x16x400xf32, #tpu.memory_space<vmem>>, vector<1x16x16x16xf32>
    tpu.vector_store %arg17[%c0_82, %c0_83, %c0_84, %c160], %24 {strides = array<i32>} : memref<1x16x16x400xf32, #tpu.memory_space<vmem>>, vector<1x16x16x16xf32>,
    %c0_85 = arith.constant 0 : index
    %c2_86 = arith.constant 2 : index
    %c1_87 = arith.constant 1 : index
    %c0_88 = arith.constant 0 : index
    %26 = vector.load %arg16[%c0_85, %c2_86, %c1_87, %c0_88] : memref<1x20x20x16xf32, #tpu.memory_space<vmem>>, vector<1x16x16x16xf32>
    %c0_89 = arith.constant 0 : index
    %c0_90 = arith.constant 0 : index
    %c0_91 = arith.constant 0 : index
    %c176 = arith.constant 176 : index
    %27 = vector.load %arg17[%c0_89, %c0_90, %c0_91, %c176] : memref<1x16x16x400xf32, #tpu.memory_space<vmem>>, vector<1x16x16x16xf32>
    tpu.vector_store %arg17[%c0_89, %c0_90, %c0_91, %c176], %26 {strides = array<i32>} : memref<1x16x16x400xf32, #tpu.memory_space<vmem>>, vector<1x16x16x16xf32>,
    %c0_92 = arith.constant 0 : index
    %c2_93 = arith.constant 2 : index
    %c2_94 = arith.constant 2 : index
    %c0_95 = arith.constant 0 : index
    %28 = vector.load %arg16[%c0_92, %c2_93, %c2_94, %c0_95] : memref<1x20x20x16xf32, #tpu.memory_space<vmem>>, vector<1x16x16x16xf32>
    %c0_96 = arith.constant 0 : index
    %c0_97 = arith.constant 0 : index
    %c0_98 = arith.constant 0 : index
    %c192 = arith.constant 192 : index
    %29 = vector.load %arg17[%c0_96, %c0_97, %c0_98, %c192] : memref<1x16x16x400xf32, #tpu.memory_space<vmem>>, vector<1x16x16x16xf32>
    tpu.vector_store %arg17[%c0_96, %c0_97, %c0_98, %c192], %28 {strides = array<i32>} : memref<1x16x16x400xf32, #tpu.memory_space<vmem>>, vector<1x16x16x16xf32>,
    %c0_99 = arith.constant 0 : index
    %c2_100 = arith.constant 2 : index
    %c3_101 = arith.constant 3 : index
    %c0_102 = arith.constant 0 : index
    %30 = vector.load %arg16[%c0_99, %c2_100, %c3_101, %c0_102] : memref<1x20x20x16xf32, #tpu.memory_space<vmem>>, vector<1x16x16x16xf32>
    %c0_103 = arith.constant 0 : index
    %c0_104 = arith.constant 0 : index
    %c0_105 = arith.constant 0 : index
    %c208 = arith.constant 208 : index
    %31 = vector.load %arg17[%c0_103, %c0_104, %c0_105, %c208] : memref<1x16x16x400xf32, #tpu.memory_space<vmem>>, vector<1x16x16x16xf32>
    tpu.vector_store %arg17[%c0_103, %c0_104, %c0_105, %c208], %30 {strides = array<i32>} : memref<1x16x16x400xf32, #tpu.memory_space<vmem>>, vector<1x16x16x16xf32>,
    %c0_106 = arith.constant 0 : index
    %c2_107 = arith.constant 2 : index
    %c4_108 = arith.constant 4 : index
    %c0_109 = arith.constant 0 : index
    %32 = vector.load %arg16[%c0_106, %c2_107, %c4_108, %c0_109] : memref<1x20x20x16xf32, #tpu.memory_space<vmem>>, vector<1x16x16x16xf32>
    %c0_110 = arith.constant 0 : index
    %c0_111 = arith.constant 0 : index
    %c0_112 = arith.constant 0 : index
    %c224 = arith.constant 224 : index
    %33 = vector.load %arg17[%c0_110, %c0_111, %c0_112, %c224] : memref<1x16x16x400xf32, #tpu.memory_space<vmem>>, vector<1x16x16x16xf32>
    tpu.vector_store %arg17[%c0_110, %c0_111, %c0_112, %c224], %32 {strides = array<i32>} : memref<1x16x16x400xf32, #tpu.memory_space<vmem>>, vector<1x16x16x16xf32>,
    %c0_113 = arith.constant 0 : index
    %c3_114 = arith.constant 3 : index
    %c0_115 = arith.constant 0 : index
    %c0_116 = arith.constant 0 : index
    %34 = vector.load %arg16[%c0_113, %c3_114, %c0_115, %c0_116] : memref<1x20x20x16xf32, #tpu.memory_space<vmem>>, vector<1x16x16x16xf32>
    %c0_117 = arith.constant 0 : index
    %c0_118 = arith.constant 0 : index
    %c0_119 = arith.constant 0 : index
    %c240 = arith.constant 240 : index
    %35 = vector.load %arg17[%c0_117, %c0_118, %c0_119, %c240] : memref<1x16x16x400xf32, #tpu.memory_space<vmem>>, vector<1x16x16x16xf32>
    tpu.vector_store %arg17[%c0_117, %c0_118, %c0_119, %c240], %34 {strides = array<i32>} : memref<1x16x16x400xf32, #tpu.memory_space<vmem>>, vector<1x16x16x16xf32>,
    %c0_120 = arith.constant 0 : index
    %c3_121 = arith.constant 3 : index
    %c1_122 = arith.constant 1 : index
    %c0_123 = arith.constant 0 : index
    %36 = vector.load %arg16[%c0_120, %c3_121, %c1_122, %c0_123] : memref<1x20x20x16xf32, #tpu.memory_space<vmem>>, vector<1x16x16x16xf32>
    %c0_124 = arith.constant 0 : index
    %c0_125 = arith.constant 0 : index
    %c0_126 = arith.constant 0 : index
    %c256 = arith.constant 256 : index
    %37 = vector.load %arg17[%c0_124, %c0_125, %c0_126, %c256] : memref<1x16x16x400xf32, #tpu.memory_space<vmem>>, vector<1x16x16x16xf32>
    tpu.vector_store %arg17[%c0_124, %c0_125, %c0_126, %c256], %36 {strides = array<i32>} : memref<1x16x16x400xf32, #tpu.memory_space<vmem>>, vector<1x16x16x16xf32>,
    %c0_127 = arith.constant 0 : index
    %c3_128 = arith.constant 3 : index
    %c2_129 = arith.constant 2 : index
    %c0_130 = arith.constant 0 : index
    %38 = vector.load %arg16[%c0_127, %c3_128, %c2_129, %c0_130] : memref<1x20x20x16xf32, #tpu.memory_space<vmem>>, vector<1x16x16x16xf32>
    %c0_131 = arith.constant 0 : index
    %c0_132 = arith.constant 0 : index
    %c0_133 = arith.constant 0 : index
    %c272 = arith.constant 272 : index
    %39 = vector.load %arg17[%c0_131, %c0_132, %c0_133, %c272] : memref<1x16x16x400xf32, #tpu.memory_space<vmem>>, vector<1x16x16x16xf32>
    tpu.vector_store %arg17[%c0_131, %c0_132, %c0_133, %c272], %38 {strides = array<i32>} : memref<1x16x16x400xf32, #tpu.memory_space<vmem>>, vector<1x16x16x16xf32>,
    %c0_134 = arith.constant 0 : index
    %c3_135 = arith.constant 3 : index
    %c3_136 = arith.constant 3 : index
    %c0_137 = arith.constant 0 : index
    %40 = vector.load %arg16[%c0_134, %c3_135, %c3_136, %c0_137] : memref<1x20x20x16xf32, #tpu.memory_space<vmem>>, vector<1x16x16x16xf32>
    %c0_138 = arith.constant 0 : index
    %c0_139 = arith.constant 0 : index
    %c0_140 = arith.constant 0 : index
    %c288 = arith.constant 288 : index
    %41 = vector.load %arg17[%c0_138, %c0_139, %c0_140, %c288] : memref<1x16x16x400xf32, #tpu.memory_space<vmem>>, vector<1x16x16x16xf32>
    tpu.vector_store %arg17[%c0_138, %c0_139, %c0_140, %c288], %40 {strides = array<i32>} : memref<1x16x16x400xf32, #tpu.memory_space<vmem>>, vector<1x16x16x16xf32>,
    %c0_141 = arith.constant 0 : index
    %c3_142 = arith.constant 3 : index
    %c4_143 = arith.constant 4 : index
    %c0_144 = arith.constant 0 : index
    %42 = vector.load %arg16[%c0_141, %c3_142, %c4_143, %c0_144] : memref<1x20x20x16xf32, #tpu.memory_space<vmem>>, vector<1x16x16x16xf32>
    %c0_145 = arith.constant 0 : index
    %c0_146 = arith.constant 0 : index
    %c0_147 = arith.constant 0 : index
    %c304 = arith.constant 304 : index
    %43 = vector.load %arg17[%c0_145, %c0_146, %c0_147, %c304] : memref<1x16x16x400xf32, #tpu.memory_space<vmem>>, vector<1x16x16x16xf32>
    tpu.vector_store %arg17[%c0_145, %c0_146, %c0_147, %c304], %42 {strides = array<i32>} : memref<1x16x16x400xf32, #tpu.memory_space<vmem>>, vector<1x16x16x16xf32>,
    %c0_148 = arith.constant 0 : index
    %c4_149 = arith.constant 4 : index
    %c0_150 = arith.constant 0 : index
    %c0_151 = arith.constant 0 : index
    %44 = vector.load %arg16[%c0_148, %c4_149, %c0_150, %c0_151] : memref<1x20x20x16xf32, #tpu.memory_space<vmem>>, vector<1x16x16x16xf32>
    %c0_152 = arith.constant 0 : index
    %c0_153 = arith.constant 0 : index
    %c0_154 = arith.constant 0 : index
    %c320 = arith.constant 320 : index
    %45 = vector.load %arg17[%c0_152, %c0_153, %c0_154, %c320] : memref<1x16x16x400xf32, #tpu.memory_space<vmem>>, vector<1x16x16x16xf32>
    tpu.vector_store %arg17[%c0_152, %c0_153, %c0_154, %c320], %44 {strides = array<i32>} : memref<1x16x16x400xf32, #tpu.memory_space<vmem>>, vector<1x16x16x16xf32>,
    %c0_155 = arith.constant 0 : index
    %c4_156 = arith.constant 4 : index
    %c1_157 = arith.constant 1 : index
    %c0_158 = arith.constant 0 : index
    %46 = vector.load %arg16[%c0_155, %c4_156, %c1_157, %c0_158] : memref<1x20x20x16xf32, #tpu.memory_space<vmem>>, vector<1x16x16x16xf32>
    %c0_159 = arith.constant 0 : index
    %c0_160 = arith.constant 0 : index
    %c0_161 = arith.constant 0 : index
    %c336 = arith.constant 336 : index
    %47 = vector.load %arg17[%c0_159, %c0_160, %c0_161, %c336] : memref<1x16x16x400xf32, #tpu.memory_space<vmem>>, vector<1x16x16x16xf32>
    tpu.vector_store %arg17[%c0_159, %c0_160, %c0_161, %c336], %46 {strides = array<i32>} : memref<1x16x16x400xf32, #tpu.memory_space<vmem>>, vector<1x16x16x16xf32>,
    %c0_162 = arith.constant 0 : index
    %c4_163 = arith.constant 4 : index
    %c2_164 = arith.constant 2 : index
    %c0_165 = arith.constant 0 : index
    %48 = vector.load %arg16[%c0_162, %c4_163, %c2_164, %c0_165] : memref<1x20x20x16xf32, #tpu.memory_space<vmem>>, vector<1x16x16x16xf32>
    %c0_166 = arith.constant 0 : index
    %c0_167 = arith.constant 0 : index
    %c0_168 = arith.constant 0 : index
    %c352 = arith.constant 352 : index
    %49 = vector.load %arg17[%c0_166, %c0_167, %c0_168, %c352] : memref<1x16x16x400xf32, #tpu.memory_space<vmem>>, vector<1x16x16x16xf32>
    tpu.vector_store %arg17[%c0_166, %c0_167, %c0_168, %c352], %48 {strides = array<i32>} : memref<1x16x16x400xf32, #tpu.memory_space<vmem>>, vector<1x16x16x16xf32>,
    %c0_169 = arith.constant 0 : index
    %c4_170 = arith.constant 4 : index
    %c3_171 = arith.constant 3 : index
    %c0_172 = arith.constant 0 : index
    %50 = vector.load %arg16[%c0_169, %c4_170, %c3_171, %c0_172] : memref<1x20x20x16xf32, #tpu.memory_space<vmem>>, vector<1x16x16x16xf32>
    %c0_173 = arith.constant 0 : index
    %c0_174 = arith.constant 0 : index
    %c0_175 = arith.constant 0 : index
    %c368 = arith.constant 368 : index
    %51 = vector.load %arg17[%c0_173, %c0_174, %c0_175, %c368] : memref<1x16x16x400xf32, #tpu.memory_space<vmem>>, vector<1x16x16x16xf32>
    tpu.vector_store %arg17[%c0_173, %c0_174, %c0_175, %c368], %50 {strides = array<i32>} : memref<1x16x16x400xf32, #tpu.memory_space<vmem>>, vector<1x16x16x16xf32>,
    %c0_176 = arith.constant 0 : index
    %c4_177 = arith.constant 4 : index
    %c4_178 = arith.constant 4 : index
    %c0_179 = arith.constant 0 : index
    %52 = vector.load %arg16[%c0_176, %c4_177, %c4_178, %c0_179] : memref<1x20x20x16xf32, #tpu.memory_space<vmem>>, vector<1x16x16x16xf32>
    %c0_180 = arith.constant 0 : index
    %c0_181 = arith.constant 0 : index
    %c0_182 = arith.constant 0 : index
    %c384 = arith.constant 384 : index
    %53 = vector.load %arg17[%c0_180, %c0_181, %c0_182, %c384] : memref<1x16x16x400xf32, #tpu.memory_space<vmem>>, vector<1x16x16x16xf32>
    tpu.vector_store %arg17[%c0_180, %c0_181, %c0_182, %c384], %52 {strides = array<i32>} : memref<1x16x16x400xf32, #tpu.memory_space<vmem>>, vector<1x16x16x16xf32>,
    %c0_183 = arith.constant 0 : index
    %c0_184 = arith.constant 0 : index
    %c0_185 = arith.constant 0 : index
    %c0_186 = arith.constant 0 : index
    %54 = vector.load %arg17[%c0_183, %c0_184, %c0_185, %c0_186] : memref<1x16x16x400xf32, #tpu.memory_space<vmem>>, vector<1x16x16x400xf32>
    %55 = vector.shape_cast %54 : vector<1x16x16x400xf32> to vector<256x400xf32>
    %c0_187 = arith.constant 0 : index
    %c0_188 = arith.constant 0 : index
    %56 = vector.load %arg3[%c0_187, %c0_188] : memref<400x16xf32, #tpu.memory_space<vmem>>, vector<400x16xf32>
    %cst_189 = arith.constant dense<0.000000e+00> : vector<256x16xf32>
    %57 = tpu.matmul %55, %56, %cst_189 {dimension_numbers = #tpu.dot_dimension_numbers<[1], [0], [0], [1], [0, 0, 1, 1], [], []>} : vector<256x400xf32>, vector<400x16xf32>, vector<256x16xf32> -> vector<256x16xf32>
    %c0_190 = arith.constant 0 : index
    %c0_191 = arith.constant 0 : index
    %58 = vector.load %arg4[%c0_190, %c0_191] : memref<1x16xf32, #tpu.memory_space<vmem>>, vector<1x16xf32>
    %59 = vector.shape_cast %58 : vector<1x16xf32> to vector<16xf32>
    %60 = vector.shape_cast %59 : vector<16xf32> to vector<1x16xf32>
    %61 = vector.broadcast %60 : vector<1x16xf32> to vector<256x16xf32>
    %62 = arith.addf %57, %61 : vector<256x16xf32>
    %cst_192 = arith.constant 0.000000e+00 : f32
    %63 = vector.broadcast %cst_192 : f32 to vector<256x16xf32>
    %64 = arith.maximumf %62, %63 : vector<256x16xf32>
    %65 = vector.shape_cast %64 : vector<256x16xf32> to vector<16x16x16xf32>
    %cst_193 = arith.constant dense<0xFF800000> : vector<16x16xf32>
    %66 = vector.multi_reduction <maximumf>, %65, %cst_193 [1] : vector<16x16x16xf32> to vector<16x16xf32>
    %c0_194 = arith.constant 0 : index
    %c0_195 = arith.constant 0 : index
    %c0_196 = arith.constant 0 : index
    %67 = vector.load %arg1[%c0_194, %c0_195, %c0_196] : memref<1x16x32xf32, #tpu.memory_space<vmem>>, vector<1x16x32xf32>
    %68 = vector.shape_cast %67 : vector<1x16x32xf32> to vector<16x32xf32>
    %c0_197 = arith.constant 0 : index
    %c0_198 = arith.constant 0 : index
    %69 = vector.load %arg5[%c0_197, %c0_198] : memref<32x32xf32, #tpu.memory_space<vmem>>, vector<32x32xf32>
    %cst_199 = arith.constant dense<0.000000e+00> : vector<16x32xf32>
    %70 = tpu.matmul %68, %69, %cst_199 {dimension_numbers = #tpu.dot_dimension_numbers<[1], [0], [0], [1], [0, 0, 1, 1], [], []>} : vector<16x32xf32>, vector<32x32xf32>, vector<16x32xf32> -> vector<16x32xf32>
    %c0_200 = arith.constant 0 : index
    %c0_201 = arith.constant 0 : index
    %71 = vector.load %arg6[%c0_200, %c0_201] : memref<16x32xf32, #tpu.memory_space<vmem>>, vector<16x32xf32>
    %cst_202 = arith.constant dense<0.000000e+00> : vector<16x32xf32>
    %72 = tpu.matmul %66, %71, %cst_202 {dimension_numbers = #tpu.dot_dimension_numbers<[1], [0], [0], [1], [0, 0, 1, 1], [], []>} : vector<16x16xf32>, vector<16x32xf32>, vector<16x32xf32> -> vector<16x32xf32>
    %73 = arith.addf %70, %72 : vector<16x32xf32>
    %c0_203 = arith.constant 0 : index
    %c0_204 = arith.constant 0 : index
    %74 = vector.load %arg9[%c0_203, %c0_204] : memref<32x32xf32, #tpu.memory_space<vmem>>, vector<32x32xf32>
    %cst_205 = arith.constant dense<0.000000e+00> : vector<16x32xf32>
    %75 = tpu.matmul %73, %74, %cst_205 {dimension_numbers = #tpu.dot_dimension_numbers<[1], [0], [0], [1], [0, 0, 1, 1], [], []>} : vector<16x32xf32>, vector<32x32xf32>, vector<16x32xf32> -> vector<16x32xf32>
    %c0_206 = arith.constant 0 : index
    %c0_207 = arith.constant 0 : index
    %76 = vector.load %arg10[%c0_206, %c0_207] : memref<1x32xf32, #tpu.memory_space<vmem>>, vector<1x32xf32>
    %77 = vector.shape_cast %76 : vector<1x32xf32> to vector<32xf32>
    %78 = vector.shape_cast %77 : vector<32xf32> to vector<1x32xf32>
    %79 = vector.broadcast %78 : vector<1x32xf32> to vector<16x32xf32>
    %80 = arith.addf %75, %79 : vector<16x32xf32>
    %81 = arith.negf %80 : vector<16x32xf32>
    %82 = math.exp %81 : vector<16x32xf32>
    %cst_208 = arith.constant 1.000000e+00 : f32
    %83 = vector.broadcast %cst_208 : f32 to vector<16x32xf32>
    %84 = arith.addf %83, %82 : vector<16x32xf32>
    %85 = arith.divf %83, %84 : vector<16x32xf32>
    %c0_209 = arith.constant 0 : index
    %c0_210 = arith.constant 0 : index
    %86 = vector.load %arg7[%c0_209, %c0_210] : memref<32x32xf32, #tpu.memory_space<vmem>>, vector<32x32xf32>
    %cst_211 = arith.constant dense<0.000000e+00> : vector<16x32xf32>
    %87 = tpu.matmul %73, %86, %cst_211 {dimension_numbers = #tpu.dot_dimension_numbers<[1], [0], [0], [1], [0, 0, 1, 1], [], []>} : vector<16x32xf32>, vector<32x32xf32>, vector<16x32xf32> -> vector<16x32xf32>
    %c0_212 = arith.constant 0 : index
    %c0_213 = arith.constant 0 : index
    %88 = vector.load %arg8[%c0_212, %c0_213] : memref<1x32xf32, #tpu.memory_space<vmem>>, vector<1x32xf32>
    %89 = vector.shape_cast %88 : vector<1x32xf32> to vector<32xf32>
    %90 = vector.shape_cast %89 : vector<32xf32> to vector<1x32xf32>
    %91 = vector.broadcast %90 : vector<1x32xf32> to vector<16x32xf32>
    %92 = arith.addf %87, %91 : vector<16x32xf32>
    %cst_214 = arith.constant 0.000000e+00 : f32
    %93 = vector.broadcast %cst_214 : f32 to vector<16x32xf32>
    %94 = arith.maximumf %92, %93 : vector<16x32xf32>
    %95 = arith.mulf %85, %94 : vector<16x32xf32>
    %cst_215 = arith.constant 1.000000e+00 : f32
    %96 = vector.broadcast %cst_215 : f32 to vector<16x32xf32>
    %97 = arith.subf %96, %85 : vector<16x32xf32>
    %98 = arith.mulf %97, %73 : vector<16x32xf32>
    %99 = arith.addf %95, %98 : vector<16x32xf32>
    %c0_216 = arith.constant 0 : index
    %c0_217 = arith.constant 0 : index
    %100 = vector.load %arg13[%c0_216, %c0_217] : memref<32x32xf32, #tpu.memory_space<vmem>>, vector<32x32xf32>
    %cst_218 = arith.constant dense<0.000000e+00> : vector<16x32xf32>
    %101 = tpu.matmul %99, %100, %cst_218 {dimension_numbers = #tpu.dot_dimension_numbers<[1], [0], [0], [1], [0, 0, 1, 1], [], []>} : vector<16x32xf32>, vector<32x32xf32>, vector<16x32xf32> -> vector<16x32xf32>
    %c0_219 = arith.constant 0 : index
    %c0_220 = arith.constant 0 : index
    %102 = vector.load %arg14[%c0_219, %c0_220] : memref<1x32xf32, #tpu.memory_space<vmem>>, vector<1x32xf32>
    %103 = vector.shape_cast %102 : vector<1x32xf32> to vector<32xf32>
    %104 = vector.shape_cast %103 : vector<32xf32> to vector<1x32xf32>
    %105 = vector.broadcast %104 : vector<1x32xf32> to vector<16x32xf32>
    %106 = arith.addf %101, %105 : vector<16x32xf32>
    %107 = arith.negf %106 : vector<16x32xf32>
    %108 = math.exp %107 : vector<16x32xf32>
    %cst_221 = arith.constant 1.000000e+00 : f32
    %109 = vector.broadcast %cst_221 : f32 to vector<16x32xf32>
    %110 = arith.addf %109, %108 : vector<16x32xf32>
    %111 = arith.divf %109, %110 : vector<16x32xf32>
    %c0_222 = arith.constant 0 : index
    %c0_223 = arith.constant 0 : index
    %112 = vector.load %arg11[%c0_222, %c0_223] : memref<32x32xf32, #tpu.memory_space<vmem>>, vector<32x32xf32>
    %cst_224 = arith.constant dense<0.000000e+00> : vector<16x32xf32>
    %113 = tpu.matmul %99, %112, %cst_224 {dimension_numbers = #tpu.dot_dimension_numbers<[1], [0], [0], [1], [0, 0, 1, 1], [], []>} : vector<16x32xf32>, vector<32x32xf32>, vector<16x32xf32> -> vector<16x32xf32>
    %c0_225 = arith.constant 0 : index
    %c0_226 = arith.constant 0 : index
    %114 = vector.load %arg12[%c0_225, %c0_226] : memref<1x32xf32, #tpu.memory_space<vmem>>, vector<1x32xf32>
    %115 = vector.shape_cast %114 : vector<1x32xf32> to vector<32xf32>
    %116 = vector.shape_cast %115 : vector<32xf32> to vector<1x32xf32>
    %117 = vector.broadcast %116 : vector<1x32xf32> to vector<16x32xf32>
    %118 = arith.addf %113, %117 : vector<16x32xf32>
    %cst_227 = arith.constant 0.000000e+00 : f32
    %119 = vector.broadcast %cst_227 : f32 to vector<16x32xf32>
    %120 = arith.maximumf %118, %119 : vector<16x32xf32>
    %121 = arith.mulf %111, %120 : vector<16x32xf32>
    %cst_228 = arith.constant 1.000000e+00 : f32
    %122 = vector.broadcast %cst_228 : f32 to vector<16x32xf32>
    %123 = arith.subf %122, %111 : vector<16x32xf32>
    %124 = arith.mulf %123, %99 : vector<16x32xf32>
    %125 = arith.addf %121, %124 : vector<16x32xf32>
    %c0_229 = arith.constant 0 : index
    %c0_230 = arith.constant 0 : index
    %126 = vector.load %arg15[%c0_229, %c0_230] : memref<16x32xf32, #tpu.memory_space<vmem>>, vector<16x32xf32>
    tpu.vector_store %arg15[%c0_229, %c0_230], %125 {strides = array<i32>} : memref<16x32xf32, #tpu.memory_space<vmem>>, vector<16x32xf32>,
    return
  }
  func.func @transform_0(%arg0: i32) -> (i32, i32, i32) {
    %c0_i32 = arith.constant 0 : i32
    %c0_i32_0 = arith.constant 0 : i32
    %c0_i32_1 = arith.constant 0 : i32
    return %arg0, %c0_i32, %c0_i32_0 : i32, i32, i32
  }
  func.func @transform_1(%arg0: i32) -> (i32, i32, i32, i32) {
    %c0_i32 = arith.constant 0 : i32
    %c0_i32_0 = arith.constant 0 : i32
    %c0_i32_1 = arith.constant 0 : i32
    %c0_i32_2 = arith.constant 0 : i32
    return %arg0, %c0_i32, %c0_i32_0, %c0_i32_1 : i32, i32, i32, i32
  }
  func.func @transform_2(%arg0: i32) -> (i32, i32) {
    %c0_i32 = arith.constant 0 : i32
    %c0_i32_0 = arith.constant 0 : i32
    %c0_i32_1 = arith.constant 0 : i32
    return %c0_i32, %c0_i32_0 : i32, i32
  }
  func.func @transform_3(%arg0: i32) -> (i32, i32) {
    %c0_i32 = arith.constant 0 : i32
    %c0_i32_0 = arith.constant 0 : i32
    %c0_i32_1 = arith.constant 0 : i32
    return %c0_i32, %c0_i32_0 : i32, i32
  }
  func.func @transform_4(%arg0: i32) -> (i32, i32) {
    %c0_i32 = arith.constant 0 : i32
    %c0_i32_0 = arith.constant 0 : i32
    %c0_i32_1 = arith.constant 0 : i32
    return %c0_i32, %c0_i32_0 : i32, i32
  }
  func.func @transform_5(%arg0: i32) -> (i32, i32) {
    %c0_i32 = arith.constant 0 : i32
    %c0_i32_0 = arith.constant 0 : i32
    %c0_i32_1 = arith.constant 0 : i32
    return %c0_i32, %c0_i32_0 : i32, i32
  }
  func.func @transform_6(%arg0: i32) -> (i32, i32) {
    %c0_i32 = arith.constant 0 : i32
    %c0_i32_0 = arith.constant 0 : i32
    %c0_i32_1 = arith.constant 0 : i32
    return %c0_i32, %c0_i32_0 : i32, i32
  }
  func.func @transform_7(%arg0: i32) -> (i32, i32) {
    %c0_i32 = arith.constant 0 : i32
    %c0_i32_0 = arith.constant 0 : i32
    %c0_i32_1 = arith.constant 0 : i32
    return %c0_i32, %c0_i32_0 : i32, i32
  }
  func.func @transform_8(%arg0: i32) -> (i32, i32) {
    %c0_i32 = arith.constant 0 : i32
    %c0_i32_0 = arith.constant 0 : i32
    %c0_i32_1 = arith.constant 0 : i32
    return %c0_i32, %c0_i32_0 : i32, i32
  }
  func.func @transform_9(%arg0: i32) -> (i32, i32) {
    %c0_i32 = arith.constant 0 : i32
    %c0_i32_0 = arith.constant 0 : i32
    %c0_i32_1 = arith.constant 0 : i32
    return %c0_i32, %c0_i32_0 : i32, i32
  }
  func.func @transform_10(%arg0: i32) -> (i32, i32) {
    %c0_i32 = arith.constant 0 : i32
    %c0_i32_0 = arith.constant 0 : i32
    %c0_i32_1 = arith.constant 0 : i32
    return %c0_i32, %c0_i32_0 : i32, i32
  }
  func.func @transform_11(%arg0: i32) -> (i32, i32) {
    %c0_i32 = arith.constant 0 : i32
    %c0_i32_0 = arith.constant 0 : i32
    %c0_i32_1 = arith.constant 0 : i32
    return %c0_i32, %c0_i32_0 : i32, i32
  }
  func.func @transform_12(%arg0: i32) -> (i32, i32) {
    %c0_i32 = arith.constant 0 : i32
    %c0_i32_0 = arith.constant 0 : i32
    %c0_i32_1 = arith.constant 0 : i32
    return %c0_i32, %c0_i32_0 : i32, i32
  }
  func.func @transform_13(%arg0: i32) -> (i32, i32) {
    %c0_i32 = arith.constant 0 : i32
    %c0_i32_0 = arith.constant 0 : i32
    %c0_i32_1 = arith.constant 0 : i32
    return %c0_i32, %c0_i32_0 : i32, i32
  }
  func.func @transform_14(%arg0: i32) -> (i32, i32) {
    %c0_i32 = arith.constant 0 : i32
    %c0_i32_0 = arith.constant 0 : i32
    return %arg0, %c0_i32 : i32, i32
  }
}

</mosaic_0001>

<llo_original>
// kernel: tpu_custom_call.1
$region0: #{tpu_custom_call.1}
  #allocation0 [shape = 'u32[]', space=smem, size = 0x4, offset = 0x4, fixed_abs, tag = 'smem constant byte address 0x4 - core index']
  #allocation1 [shape = 'u32[72,128]{1,0:T(1,128)}', space=vmem, size = 0x9000, scoped, tag = 'internal scratch']
  #allocation2 [shape = 'f32[1,20,20,16]{3,2,1,0:T(8,128)}', space=vmem, size = 0x3c000, scoped, tag = 'scratch operand']
  #allocation3 [shape = 'f32[1,16,16,400]{3,2,1,0:T(8,128)}', space=vmem, size = 0x80000, scoped, tag = 'scratch operand']
  %s0 = inlined_call_operand.vmem [shape: f32[2,16,32], index: 0, kind: input, shape index: {}]
  %s1 = inlined_call_operand.hbm [shape: f32[2,16,16,16], index: 1, kind: input, shape index: {}]
  %s2 = inlined_call_operand.vmem [shape: f32[400,16], index: 2, kind: input, shape index: {}]
  %s3 = inlined_call_operand.vmem [shape: f32[1,16], index: 3, kind: input, shape index: {}]
  %s4 = inlined_call_operand.vmem [shape: f32[32,32], index: 4, kind: input, shape index: {}]
  %s5 = inlined_call_operand.vmem [shape: f32[16,32], index: 5, kind: input, shape index: {}]
  %s6 = inlined_call_operand.vmem [shape: f32[32,32], index: 6, kind: input, shape index: {}]
  %s7 = inlined_call_operand.vmem [shape: f32[1,32], index: 7, kind: input, shape index: {}]
  %s8 = inlined_call_operand.vmem [shape: f32[32,32], index: 8, kind: input, shape index: {}]
  %s9 = inlined_call_operand.vmem [shape: f32[1,32], index: 9, kind: input, shape index: {}]
  %s10 = inlined_call_operand.vmem [shape: f32[32,32], index: 10, kind: input, shape index: {}]
  %s11 = inlined_call_operand.vmem [shape: f32[1,32], index: 11, kind: input, shape index: {}]
  %s12 = inlined_call_operand.vmem [shape: f32[32,32], index: 12, kind: input, shape index: {}]
  %s13 = inlined_call_operand.vmem [shape: f32[1,32], index: 13, kind: input, shape index: {}]
  %s14 = inlined_call_operand.hbm [shape: f32[32,32], index: 14, kind: output, shape index: {}]
  %s15 = sld [smem:[#allocation0]]
  $region93: #{tpu_custom_call.1} parent=0
    _
  %s17 = ssub.s32 1, %s15
  %s18 = scalar_select 0, %s17, %s15
  $region1: #{tpu_custom_call.1} parent=0
    #allocation4 [shape = 'u8[262144]{0}', space=vmem, size = 0x40000, scoped, tag = 'input window, operand 1']
    #allocation5 [shape = 's32[2]{0}', space=sflag, size = 0x8, scoped, tag = 'scoped memory for tpu_custom_call.1']
    #allocation6 [shape = 's32[2]{0}', space=sflag, size = 0x8, scoped, tag = 'scoped memory for tpu_custom_call.1']
    #allocation7 [shape = 'u8[16384]{0}', space=vmem, size = 0x4000, scoped, tag = 'output window, operand 0']
    %19 = vsyncpa [#allocation5], 0
    %s20 = scalar_lea.sflag [#allocation5], 1
    %21 = vsyncpa %s20, 0
    %22 = vsyncpa [#allocation6], 0
    %s23 = scalar_lea.sflag [#allocation6], 1
    %24 = vsyncpa %s23, 0
    loop: start=0, step=1, limit=4
    $region2: #{tpu_custom_call.1} parent=1 // loop_pre_header
      _
    $region3: #{tpu_custom_call.1} parent=1 // loop_header
      %s26 = sphi 0, %s30
      %p27 = scmp.ge.s32.totalorder %s26, 4
      %s36 = sphi 0, %s38
      %s39 = sphi 0, %s36
      %s40 = sphi 0, %s39
      %s56 = sphi 0, %s40
      %s62 = sphi 0, %s64
      %s65 = sphi 0, %s62
      %s66 = sphi 0, %s65
      %s82 = sphi 0, %s66
      %s86 = sphi 0, %s86
      %s88 = sphi 0, %s86
      %s89 = sphi 0, %s88
      %s103 = sphi 0, %s89
      %s107 = sphi 0, %s107
      %s109 = sphi 0, %s107
      %s110 = sphi 0, %s109
      %s124 = sphi 0, %s110
      %s128 = sphi 0, %s128
      %s130 = sphi 0, %s128
      %s131 = sphi 0, %s130
      %s145 = sphi 0, %s131
      %s149 = sphi 0, %s149
      %s151 = sphi 0, %s149
      %s152 = sphi 0, %s151
      %s166 = sphi 0, %s152
      %s170 = sphi 0, %s170
      %s172 = sphi 0, %s170
      %s173 = sphi 0, %s172
      %s187 = sphi 0, %s173
      %s191 = sphi 0, %s191
      %s193 = sphi 0, %s191
      %s194 = sphi 0, %s193
      %s208 = sphi 0, %s194
      %s212 = sphi 0, %s212
      %s214 = sphi 0, %s212
      %s215 = sphi 0, %s214
      %s229 = sphi 0, %s215
      %s233 = sphi 0, %s233
      %s235 = sphi 0, %s233
      %s236 = sphi 0, %s235
      %s250 = sphi 0, %s236
      %s254 = sphi 0, %s254
      %s256 = sphi 0, %s254
      %s257 = sphi 0, %s256
      %s271 = sphi 0, %s257
      %s275 = sphi 0, %s275
      %s277 = sphi 0, %s275
      %s278 = sphi 0, %s277
      %s292 = sphi 0, %s278
      %s296 = sphi 0, %s296
      %s298 = sphi 0, %s296
      %s299 = sphi 0, %s298
      %s313 = sphi 0, %s299
      %s317 = sphi 0, %s317
      %s319 = sphi 0, %s317
      %s320 = sphi 0, %s319
      %s334 = sphi 0, %s320
      %s340 = sphi 0, %s342
      %s343 = sphi 0, %s340
      %s344 = sphi 0, %s343
      %s360 = sphi 0, %s344
    $region4: #{tpu_custom_call.1} parent=1 // loop_header_branch
      %29 = sbr.rel (%p27) target = $region8
    $region5: #{tpu_custom_call.1} parent=1 // loop_body
      %s31 = ssub.s32 %s26, 1
      %s32 = ssub.s32 %s26, 2
      %s33 = sadd.s32 %s26, 1
      %s34 = ssub.s32 %s26, %s33
      %p35 = scmp.eq.s32.totalorder %s34, 0
      %s37 = sadd.s32 %s36, 1
      %s38 = scalar_select %p35, %s36, %s37
      %p41 = pneg %p35
      %p42 = scmp.eq.s32.totalorder %s26, 1
      %p43 = por %p41, %p42
      %p44 = scmp.ne.s32.totalorder %s36, %s39
      %p45 = scmp.eq.s32.totalorder %s26, 0
      %p46 = por %p44, %p45
      %p47 = scmp.ne.s32.totalorder %s36, %s39
      %p48 = scmp.eq.s32.totalorder %s31, 1
      %p49 = por %p47, %p48
      %p50 = scmp.ne.s32.totalorder %s39, %s40
      %p51 = scmp.eq.s32.totalorder %s31, 0
      %p52 = por %p50, %p51
      %p53 = scmp.ne.s32.totalorder %s39, %s40
      %p54 = scmp.eq.s32.totalorder %s32, 1
      %p55 = por %p53, %p54
      %p57 = scmp.ne.s32.totalorder %s40, %s56
      %p58 = scmp.eq.s32.totalorder %s32, 0
      %p59 = por %p57, %p58
      %s60 = ssub.s32 %s26, %s33
      %p61 = scmp.eq.s32.totalorder %s60, 0
      %s63 = sadd.s32 %s62, 1
      %s64 = scalar_select %p61, %s62, %s63
      %p67 = pneg %p61
      %p68 = scmp.eq.s32.totalorder %s26, 1
      %p69 = por %p67, %p68
      %p70 = scmp.ne.s32.totalorder %s62, %s65
      %p71 = scmp.eq.s32.totalorder %s26, 0
      %p72 = por %p70, %p71
      %p73 = scmp.ne.s32.totalorder %s62, %s65
      %p74 = scmp.eq.s32.totalorder %s31, 1
      %p75 = por %p73, %p74
      %p76 = scmp.ne.s32.totalorder %s65, %s66
      %p77 = scmp.eq.s32.totalorder %s31, 0
      %p78 = por %p76, %p77
      %p79 = scmp.ne.s32.totalorder %s65, %s66
      %p80 = scmp.eq.s32.totalorder %s32, 1
      %p81 = por %p79, %p80
      %p83 = scmp.ne.s32.totalorder %s66, %s82
      %p84 = scmp.eq.s32.totalorder %s32, 0
      %p85 = por %p83, %p84
      %s87 = sadd.s32 %s86, 1
      %p90 = scmp.eq.s32.totalorder %s26, 1
      %p91 = scmp.ne.s32.totalorder %s86, %s88
      %p92 = scmp.eq.s32.totalorder %s26, 0
      %p93 = por %p91, %p92
      %p94 = scmp.ne.s32.totalorder %s86, %s88
      %p95 = scmp.eq.s32.totalorder %s31, 1
      %p96 = por %p94, %p95
      %p97 = scmp.ne.s32.totalorder %s88, %s89
      %p98 = scmp.eq.s32.totalorder %s31, 0
      %p99 = por %p97, %p98
      %p100 = scmp.ne.s32.totalorder %s88, %s89
      %p101 = scmp.eq.s32.totalorder %s32, 1
      %p102 = por %p100, %p101
      %p104 = scmp.ne.s32.totalorder %s89, %s103
      %p105 = scmp.eq.s32.totalorder %s32, 0
      %p106 = por %p104, %p105
      %s108 = sadd.s32 %s107, 1
      %p111 = scmp.eq.s32.totalorder %s26, 1
      %p112 = scmp.ne.s32.totalorder %s107, %s109
      %p113 = scmp.eq.s32.totalorder %s26, 0
      %p114 = por %p112, %p113
      %p115 = scmp.ne.s32.totalorder %s107, %s109
      %p116 = scmp.eq.s32.totalorder %s31, 1
      %p117 = por %p115, %p116
      %p118 = scmp.ne.s32.totalorder %s109, %s110
      %p119 = scmp.eq.s32.totalorder %s31, 0
      %p120 = por %p118, %p119
      %p121 = scmp.ne.s32.totalorder %s109, %s110
      %p122 = scmp.eq.s32.totalorder %s32, 1
      %p123 = por %p121, %p122
      %p125 = scmp.ne.s32.totalorder %s110, %s124
      %p126 = scmp.eq.s32.totalorder %s32, 0
      %p127 = por %p125, %p126
      %s129 = sadd.s32 %s128, 1
      %p132 = scmp.eq.s32.totalorder %s26, 1
      %p133 = scmp.ne.s32.totalorder %s128, %s130
      %p134 = scmp.eq.s32.totalorder %s26, 0
      %p135 = por %p133, %p134
      %p136 = scmp.ne.s32.totalorder %s128, %s130
      %p137 = scmp.eq.s32.totalorder %s31, 1
      %p138 = por %p136, %p137
      %p139 = scmp.ne.s32.totalorder %s130, %s131
      %p140 = scmp.eq.s32.totalorder %s31, 0
      %p141 = por %p139, %p140
      %p142 = scmp.ne.s32.totalorder %s130, %s131
      %p143 = scmp.eq.s32.totalorder %s32, 1
      %p144 = por %p142, %p143
      %p146 = scmp.ne.s32.totalorder %s131, %s145
      %p147 = scmp.eq.s32.totalorder %s32, 0
      %p148 = por %p146, %p147
      %s150 = sadd.s32 %s149, 1
      %p153 = scmp.eq.s32.totalorder %s26, 1
      %p154 = scmp.ne.s32.totalorder %s149, %s151
      %p155 = scmp.eq.s32.totalorder %s26, 0
      %p156 = por %p154, %p155
      %p157 = scmp.ne.s32.totalorder %s149, %s151
      %p158 = scmp.eq.s32.totalorder %s31, 1
      %p159 = por %p157, %p158
      %p160 = scmp.ne.s32.totalorder %s151, %s152
      %p161 = scmp.eq.s32.totalorder %s31, 0
      %p162 = por %p160, %p161
      %p163 = scmp.ne.s32.totalorder %s151, %s152
      %p164 = scmp.eq.s32.totalorder %s32, 1
      %p165 = por %p163, %p164
      %p167 = scmp.ne.s32.totalorder %s152, %s166
      %p168 = scmp.eq.s32.totalorder %s32, 0
      %p169 = por %p167, %p168
      %s171 = sadd.s32 %s170, 1
      %p174 = scmp.eq.s32.totalorder %s26, 1
      %p175 = scmp.ne.s32.totalorder %s170, %s172
      %p176 = scmp.eq.s32.totalorder %s26, 0
      %p177 = por %p175, %p176
      %p178 = scmp.ne.s32.totalorder %s170, %s172
      %p179 = scmp.eq.s32.totalorder %s31, 1
      %p180 = por %p178, %p179
      %p181 = scmp.ne.s32.totalorder %s172, %s173
      %p182 = scmp.eq.s32.totalorder %s31, 0
      %p183 = por %p181, %p182
      %p184 = scmp.ne.s32.totalorder %s172, %s173
      %p185 = scmp.eq.s32.totalorder %s32, 1
      %p186 = por %p184, %p185
      %p188 = scmp.ne.s32.totalorder %s173, %s187
      %p189 = scmp.eq.s32.totalorder %s32, 0
      %p190 = por %p188, %p189
      %s192 = sadd.s32 %s191, 1
      %p195 = scmp.eq.s32.totalorder %s26, 1
      %p196 = scmp.ne.s32.totalorder %s191, %s193
      %p197 = scmp.eq.s32.totalorder %s26, 0
      %p198 = por %p196, %p197
      %p199 = scmp.ne.s32.totalorder %s191, %s193
      %p200 = scmp.eq.s32.totalorder %s31, 1
      %p201 = por %p199, %p200
      %p202 = scmp.ne.s32.totalorder %s193, %s194
      %p203 = scmp.eq.s32.totalorder %s31, 0
      %p204 = por %p202, %p203
      %p205 = scmp.ne.s32.totalorder %s193, %s194
      %p206 = scmp.eq.s32.totalorder %s32, 1
      %p207 = por %p205, %p206
      %p209 = scmp.ne.s32.totalorder %s194, %s208
      %p210 = scmp.eq.s32.totalorder %s32, 0
      %p211 = por %p209, %p210
      %s213 = sadd.s32 %s212, 1
      %p216 = scmp.eq.s32.totalorder %s26, 1
      %p217 = scmp.ne.s32.totalorder %s212, %s214
      %p218 = scmp.eq.s32.totalorder %s26, 0
      %p219 = por %p217, %p218
      %p220 = scmp.ne.s32.totalorder %s212, %s214
      %p221 = scmp.eq.s32.totalorder %s31, 1
      %p222 = por %p220, %p221
      %p223 = scmp.ne.s32.totalorder %s214, %s215
      %p224 = scmp.eq.s32.totalorder %s31, 0
      %p225 = por %p223, %p224
      %p226 = scmp.ne.s32.totalorder %s214, %s215
      %p227 = scmp.eq.s32.totalorder %s32, 1
      %p228 = por %p226, %p227
      %p230 = scmp.ne.s32.totalorder %s215, %s229
      %p231 = scmp.eq.s32.totalorder %s32, 0
      %p232 = por %p230, %p231
      %s234 = sadd.s32 %s233, 1
      %p237 = scmp.eq.s32.totalorder %s26, 1
      %p238 = scmp.ne.s32.totalorder %s233, %s235
      %p239 = scmp.eq.s32.totalorder %s26, 0
      %p240 = por %p238, %p239
      %p241 = scmp.ne.s32.totalorder %s233, %s235
      %p242 = scmp.eq.s32.totalorder %s31, 1
      %p243 = por %p241, %p242
      %p244 = scmp.ne.s32.totalorder %s235, %s236
      %p245 = scmp.eq.s32.totalorder %s31, 0
      %p246 = por %p244, %p245
      %p247 = scmp.ne.s32.totalorder %s235, %s236
      %p248 = scmp.eq.s32.totalorder %s32, 1
      %p249 = por %p247, %p248
      %p251 = scmp.ne.s32.totalorder %s236, %s250
      %p252 = scmp.eq.s32.totalorder %s32, 0
      %p253 = por %p251, %p252
      %s255 = sadd.s32 %s254, 1
      %p258 = scmp.eq.s32.totalorder %s26, 1
      %p259 = scmp.ne.s32.totalorder %s254, %s256
      %p260 = scmp.eq.s32.totalorder %s26, 0
      %p261 = por %p259, %p260
      %p262 = scmp.ne.s32.totalorder %s254, %s256
      %p263 = scmp.eq.s32.totalorder %s31, 1
      %p264 = por %p262, %p263
      %p265 = scmp.ne.s32.totalorder %s256, %s257
      %p266 = scmp.eq.s32.totalorder %s31, 0
      %p267 = por %p265, %p266
      %p268 = scmp.ne.s32.totalorder %s256, %s257
      %p269 = scmp.eq.s32.totalorder %s32, 1
      %p270 = por %p268, %p269
      %p272 = scmp.ne.s32.totalorder %s257, %s271
      %p273 = scmp.eq.s32.totalorder %s32, 0
      %p274 = por %p272, %p273
      %s276 = sadd.s32 %s275, 1
      %p279 = scmp.eq.s32.totalorder %s26, 1
      %p280 = scmp.ne.s32.totalorder %s275, %s277
      %p281 = scmp.eq.s32.totalorder %s26, 0
      %p282 = por %p280, %p281
      %p283 = scmp.ne.s32.totalorder %s275, %s277
      %p284 = scmp.eq.s32.totalorder %s31, 1
      %p285 = por %p283, %p284
      %p286 = scmp.ne.s32.totalorder %s277, %s278
      %p287 = scmp.eq.s32.totalorder %s31, 0
      %p288 = por %p286, %p287
      %p289 = scmp.ne.s32.totalorder %s277, %s278
      %p290 = scmp.eq.s32.totalorder %s32, 1
      %p291 = por %p289, %p290
      %p293 = scmp.ne.s32.totalorder %s278, %s292
      %p294 = scmp.eq.s32.totalorder %s32, 0
      %p295 = por %p293, %p294
      %s297 = sadd.s32 %s296, 1
      %p300 = scmp.eq.s32.totalorder %s26, 1
      %p301 = scmp.ne.s32.totalorder %s296, %s298
      %p302 = scmp.eq.s32.totalorder %s26, 0
      %p303 = por %p301, %p302
      %p304 = scmp.ne.s32.totalorder %s296, %s298
      %p305 = scmp.eq.s32.totalorder %s31, 1
      %p306 = por %p304, %p305
      %p307 = scmp.ne.s32.totalorder %s298, %s299
      %p308 = scmp.eq.s32.totalorder %s31, 0
      %p309 = por %p307, %p308
      %p310 = scmp.ne.s32.totalorder %s298, %s299
      %p311 = scmp.eq.s32.totalorder %s32, 1
      %p312 = por %p310, %p311
      %p314 = scmp.ne.s32.totalorder %s299, %s313
      %p315 = scmp.eq.s32.totalorder %s32, 0
      %p316 = por %p314, %p315
      %s318 = sadd.s32 %s317, 1
      %p321 = scmp.eq.s32.totalorder %s26, 1
      %p322 = scmp.ne.s32.totalorder %s317, %s319
      %p323 = scmp.eq.s32.totalorder %s26, 0
      %p324 = por %p322, %p323
      %p325 = scmp.ne.s32.totalorder %s317, %s319
      %p326 = scmp.eq.s32.totalorder %s31, 1
      %p327 = por %p325, %p326
      %p328 = scmp.ne.s32.totalorder %s319, %s320
      %p329 = scmp.eq.s32.totalorder %s31, 0
      %p330 = por %p328, %p329
      %p331 = scmp.ne.s32.totalorder %s319, %s320
      %p332 = scmp.eq.s32.totalorder %s32, 1
      %p333 = por %p331, %p332
      %p335 = scmp.ne.s32.totalorder %s320, %s334
      %p336 = scmp.eq.s32.totalorder %s32, 0
      %p337 = por %p335, %p336
      %s338 = ssub.s32 %s26, %s33
      %p339 = scmp.eq.s32.totalorder %s338, 0
      %s341 = sadd.s32 %s340, 1
      %s342 = scalar_select %p339, %s340, %s341
      %p345 = pneg %p339
      %p346 = scmp.eq.s32.totalorder %s26, 1
      %p347 = por %p345, %p346
      %p348 = scmp.ne.s32.totalorder %s340, %s343
      %p349 = scmp.eq.s32.totalorder %s26, 0
      %p350 = por %p348, %p349
      %p351 = scmp.ne.s32.totalorder %s340, %s343
      %p352 = scmp.eq.s32.totalorder %s31, 1
      %p353 = por %p351, %p352
      %p354 = scmp.ne.s32.totalorder %s343, %s344
      %p355 = scmp.eq.s32.totalorder %s31, 0
      %p356 = por %p354, %p355
      %p357 = scmp.ne.s32.totalorder %s343, %s344
      %p358 = scmp.eq.s32.totalorder %s32, 1
      %p359 = por %p357, %p358
      %p361 = scmp.ne.s32.totalorder %s344, %s360
      %p362 = scmp.eq.s32.totalorder %s32, 0
      %p363 = por %p361, %p362
      %p364 = scmp.le.s32.totalorder 1, %s26
      %p365 = scmp.lt.s32.totalorder %s26, 3
      %p366 = pnand %p364, %p365
      %p367 = pneg %p366
      // Predicated region
      $region9: #{tpu_custom_call.1} parent=5 // pred_check
        _
      $region10: #{tpu_custom_call.1} parent=5 // pred_check_branch
        %369 = sbr.rel (%p366) target = $region12
      $region11: #{tpu_custom_call.1} parent=5 // pred_region
        %s370 = ssub.s32 %s26, 1
        // Predicated region
        $region13: #{tpu_custom_call.1} parent=11 // pred_check
          %p371 = pneg %p99
        $region14: #{tpu_custom_call.1} parent=11 // pred_check_branch
          %373 = sbr.rel (%p371) target = $region16
        $region15: #{tpu_custom_call.1} parent=11 // pred_region
          _
        $region16: #{tpu_custom_call.1} parent=11 // pred_fallthru
          _
        // Predicated region
        $region17: #{tpu_custom_call.1} parent=11 // pred_check
          %p374 = pneg %p120
        $region18: #{tpu_custom_call.1} parent=11 // pred_check_branch
          %376 = sbr.rel (%p374) target = $region20
        $region19: #{tpu_custom_call.1} parent=11 // pred_region
          _
        $region20: #{tpu_custom_call.1} parent=11 // pred_fallthru
          _
        // Predicated region
        $region21: #{tpu_custom_call.1} parent=11 // pred_check
          %p377 = pneg %p141
        $region22: #{tpu_custom_call.1} parent=11 // pred_check_branch
          %379 = sbr.rel (%p377) target = $region24
        $region23: #{tpu_custom_call.1} parent=11 // pred_region
          _
        $region24: #{tpu_custom_call.1} parent=11 // pred_fallthru
          _
        // Predicated region
        $region25: #{tpu_custom_call.1} parent=11 // pred_check
          %p380 = pneg %p162
        $region26: #{tpu_custom_call.1} parent=11 // pred_check_branch
          %382 = sbr.rel (%p380) target = $region28
        $region27: #{tpu_custom_call.1} parent=11 // pred_region
          _
        $region28: #{tpu_custom_call.1} parent=11 // pred_fallthru
          _
        // Predicated region
        $region29: #{tpu_custom_call.1} parent=11 // pred_check
          %p383 = pneg %p183
        $region30: #{tpu_custom_call.1} parent=11 // pred_check_branch
          %385 = sbr.rel (%p383) target = $region32
        $region31: #{tpu_custom_call.1} parent=11 // pred_region
          _
        $region32: #{tpu_custom_call.1} parent=11 // pred_fallthru
          _
        // Predicated region
        $region33: #{tpu_custom_call.1} parent=11 // pred_check
          %p386 = pneg %p204
        $region34: #{tpu_custom_call.1} parent=11 // pred_check_branch
          %388 = sbr.rel (%p386) target = $region36
        $region35: #{tpu_custom_call.1} parent=11 // pred_region
          _
        $region36: #{tpu_custom_call.1} parent=11 // pred_fallthru
          _
        // Predicated region
        $region37: #{tpu_custom_call.1} parent=11 // pred_check
          %p389 = pneg %p225
        $region38: #{tpu_custom_call.1} parent=11 // pred_check_branch
          %391 = sbr.rel (%p389) target = $region40
        $region39: #{tpu_custom_call.1} parent=11 // pred_region
          _
        $region40: #{tpu_custom_call.1} parent=11 // pred_fallthru
          _
        // Predicated region
        $region41: #{tpu_custom_call.1} parent=11 // pred_check
          %p392 = pneg %p246
        $region42: #{tpu_custom_call.1} parent=11 // pred_check_branch
          %394 = sbr.rel (%p392) target = $region44
        $region43: #{tpu_custom_call.1} parent=11 // pred_region
          _
        $region44: #{tpu_custom_call.1} parent=11 // pred_fallthru
          _
        // Predicated region
        $region45: #{tpu_custom_call.1} parent=11 // pred_check
          %p395 = pneg %p267
        $region46: #{tpu_custom_call.1} parent=11 // pred_check_branch
          %397 = sbr.rel (%p395) target = $region48
        $region47: #{tpu_custom_call.1} parent=11 // pred_region
          _
        $region48: #{tpu_custom_call.1} parent=11 // pred_fallthru
          _
        // Predicated region
        $region49: #{tpu_custom_call.1} parent=11 // pred_check
          %p398 = pneg %p288
        $region50: #{tpu_custom_call.1} parent=11 // pred_check_branch
          %400 = sbr.rel (%p398) target = $region52
        $region51: #{tpu_custom_call.1} parent=11 // pred_region
          _
        $region52: #{tpu_custom_call.1} parent=11 // pred_fallthru
          _
        // Predicated region
        $region53: #{tpu_custom_call.1} parent=11 // pred_check
          %p401 = pneg %p309
        $region54: #{tpu_custom_call.1} parent=11 // pred_check_branch
          %403 = sbr.rel (%p401) target = $region56
        $region55: #{tpu_custom_call.1} parent=11 // pred_region
          _
        $region56: #{tpu_custom_call.1} parent=11 // pred_fallthru
          _
        // Predicated region
        $region57: #{tpu_custom_call.1} parent=11 // pred_check
          %p404 = pneg %p330
        $region58: #{tpu_custom_call.1} parent=11 // pred_check_branch
          %406 = sbr.rel (%p404) target = $region60
        $region59: #{tpu_custom_call.1} parent=11 // pred_region
          _
        $region60: #{tpu_custom_call.1} parent=11 // pred_fallthru
          _
      $region12: #{tpu_custom_call.1} parent=5 // pred_fallthru
        _
      %p407 = scmp.lt.s32.totalorder %s26, 2
      // Predicated region
      $region61: #{tpu_custom_call.1} parent=5 // pred_check
        %p408 = pneg %p407
      $region62: #{tpu_custom_call.1} parent=5 // pred_check_branch
        %410 = sbr.rel (%p408) target = $region64
      $region63: #{tpu_custom_call.1} parent=5 // pred_region
        // Predicated region
        $region65: #{tpu_custom_call.1} parent=63 // pred_check
          %p411 = pneg %p46
        $region66: #{tpu_custom_call.1} parent=63 // pred_check_branch
          %413 = sbr.rel (%p411) target = $region68
        $region67: #{tpu_custom_call.1} parent=63 // pred_region
          %p414 = scmp.lt.s32.totalorder %s26, 1
          %s415 = scalar_select %p414, %s26, 1
          %s416 = smul.addr %s415, 2
          %s417 = smul.addr %s416, 8
          %s418 = scalar_lea.vmem %s0, %s417
        $region68: #{tpu_custom_call.1} parent=63 // pred_fallthru
          _
        // Predicated region
        $region69: #{tpu_custom_call.1} parent=63 // pred_check
          %p419 = pneg %p72
        $region70: #{tpu_custom_call.1} parent=63 // pred_check_branch
          %421 = sbr.rel (%p419) target = $region72
        $region71: #{tpu_custom_call.1} parent=63 // pred_region
          %s422 = sand.u32 %s62, 1
          %s423 = scalar_lea.sflag [#allocation5], %s422
          %s424 = sand.u32 %s62, 1
          %s425 = smul.addr %s424, 256
          %s426 = scalar_lea.vmem [#allocation4], %s425
          %428 = vsyncadd %s423, 0
          %s429 = smul.addr %s26, 32
          %s430 = smul.addr %s429, 8
          %s431 = scalar_lea.hbm %s1, %s430
          %s432 = sshll.u32 %s431, 4
          %s433 = int_to_ptr.hbm [resolvable:$true] %s432
          %s434 = sshll.u32 %s426, 4
          %s435 = int_to_ptr.vmem [resolvable:$true] %s434
          %440 = dma.hbm_to_vmem [thread:$0]  %s433, 4096, %s435, %s423, 128, 128, 8
        $region72: #{tpu_custom_call.1} parent=63 // pred_fallthru
          _
      $region64: #{tpu_custom_call.1} parent=5 // pred_fallthru
        _
      %p441 = scmp.le.s32.totalorder 1, %s26
      %p442 = scmp.lt.s32.totalorder %s26, 3
      %p443 = pnand %p441, %p442
      %p444 = pneg %p443
      // Predicated region
      $region73: #{tpu_custom_call.1} parent=5 // pred_check
        _
      $region74: #{tpu_custom_call.1} parent=5 // pred_check_branch
        %446 = sbr.rel (%p443) target = $region76
      $region75: #{tpu_custom_call.1} parent=5 // pred_region
        %s447 = ssub.s32 %s26, 1
        %s448 = sand.u32 %s65, 1
        %s449 = scalar_lea.sflag [#allocation5], %s448
        %s450 = sand.u32 %s65, 1
        %s451 = smul.addr %s450, 256
        %s452 = scalar_lea.vmem [#allocation4], %s451
        // Predicated region
        $region77: #{tpu_custom_call.1} parent=75 // pred_check
          %p453 = pneg %p78
        $region78: #{tpu_custom_call.1} parent=75 // pred_check_branch
          %455 = sbr.rel (%p453) target = $region80
        $region79: #{tpu_custom_call.1} parent=75 // pred_region
          %457 = dma.done %s449, 4096
        $region80: #{tpu_custom_call.1} parent=75 // pred_fallthru
          _
        %p458 = scmp.lt.s32.totalorder %s31, 1
        %s459 = scalar_select %p458, %s31, 1
        %s460 = smul.addr %s459, 2
        %s461 = smul.addr %s460, 8
        %s462 = scalar_lea.vmem %s0, %s461
        %p463 = pneg %p52
        %p464 = pneg %p49
        %s465 = sand.u32 %s65, 1
        %s466 = scalar_lea.sflag [#allocation5], %s465
        %s467 = sand.u32 %s65, 1
        %s468 = smul.addr %s467, 256
        %s469 = scalar_lea.vmem [#allocation4], %s468
        %p470 = pneg %p78
        %p471 = pneg %p75
        %p472 = pneg %p99
        %p473 = pneg %p96
        %p474 = pneg %p120
        %p475 = pneg %p117
        %p476 = pneg %p141
        %p477 = pneg %p138
        %p478 = pneg %p162
        %p479 = pneg %p159
        %p480 = pneg %p183
        %p481 = pneg %p180
        %p482 = pneg %p204
        %p483 = pneg %p201
        %p484 = pneg %p225
        %p485 = pneg %p222
        %p486 = pneg %p246
        %p487 = pneg %p243
        %p488 = pneg %p267
        %p489 = pneg %p264
        %p490 = pneg %p288
        %p491 = pneg %p285
        %p492 = pneg %p309
        %p493 = pneg %p306
        %p494 = pneg %p330
        %p495 = pneg %p327
        %p496 = pneg %p356
        %p497 = pneg %p353
        %s498 = sand.u32 %s343, 1
        %s499 = scalar_lea.sflag [#allocation6], %s498
        %s500 = sand.u32 %s343, 1
        %s501 = smul.addr %s500, 16
        %s502 = scalar_lea.vmem [#allocation7], %s501
        %p503 = scmp.lt.s32.totalorder %s31, 1
        %s504 = scalar_select %p503, %s31, 1
        %s505 = smul.addr %s504, 2
        %s506 = smul.addr %s505, 8
        %s507 = scalar_lea.vmem %s0, %s506
        %s508 = smul.u32 2, %s31
        %vm509 = vcmask 130048
        %510 = vst.msk [vmem:[#allocation2] sm:$0xff] %vm509, 0.0
        %511 = vst.msk [vmem:[#allocation2 + $0x8] sm:$0xff] %vm509, 0.0
        %vm512 = vcmask 125952
        %513 = vst.msk [vmem:[#allocation2 + $0x10] sm:$0xf] %vm512, 0.0
        %514 = vst.msk [vmem:[#allocation2 + $0x18] sm:$0xff] %vm509, 0.0
        %515 = vst.msk [vmem:[#allocation2 + $0x20] sm:$0xff] %vm509, 0.0
        %516 = vst.msk [vmem:[#allocation2 + $0x28] sm:$0xf] %vm512, 0.0
        %517 = vst.msk [vmem:[#allocation2 + $0x30] sm:$0xff] %vm509, 0.0
        %518 = vst.msk [vmem:[#allocation2 + $0x38] sm:$0xff] %vm509, 0.0
        %519 = vst.msk [vmem:[#allocation2 + $0x40] sm:$0xf] %vm512, 0.0
        %520 = vst.msk [vmem:[#allocation2 + $0x48] sm:$0xff] %vm509, 0.0
        %521 = vst.msk [vmem:[#allocation2 + $0x50] sm:$0xff] %vm509, 0.0
        %522 = vst.msk [vmem:[#allocation2 + $0x58] sm:$0xf] %vm512, 0.0
        %523 = vst.msk [vmem:[#allocation2 + $0x60] sm:$0xff] %vm509, 0.0
        %524 = vst.msk [vmem:[#allocation2 + $0x68] sm:$0xff] %vm509, 0.0
        %525 = vst.msk [vmem:[#allocation2 + $0x70] sm:$0xf] %vm512, 0.0
        %526 = vst.msk [vmem:[#allocation2 + $0x78] sm:$0xff] %vm509, 0.0
        %527 = vst.msk [vmem:[#allocation2 + $0x80] sm:$0xff] %vm509, 0.0
        %528 = vst.msk [vmem:[#allocation2 + $0x88] sm:$0xf] %vm512, 0.0
        %529 = vst.msk [vmem:[#allocation2 + $0x90] sm:$0xff] %vm509, 0.0
        %530 = vst.msk [vmem:[#allocation2 + $0x98] sm:$0xff] %vm509, 0.0
        %531 = vst.msk [vmem:[#allocation2 + $0xa0] sm:$0xf] %vm512, 0.0
        %532 = vst.msk [vmem:[#allocation2 + $0xa8] sm:$0xff] %vm509, 0.0
        %533 = vst.msk [vmem:[#allocation2 + $0xb0] sm:$0xff] %vm509, 0.0
        %534 = vst.msk [vmem:[#allocation2 + $0xb8] sm:$0xf] %vm512, 0.0
        %535 = vst.msk [vmem:[#allocation2 + $0xc0] sm:$0xff] %vm509, 0.0
        %536 = vst.msk [vmem:[#allocation2 + $0xc8] sm:$0xff] %vm509, 0.0
        %537 = vst.msk [vmem:[#allocation2 + $0xd0] sm:$0xf] %vm512, 0.0
        %538 = vst.msk [vmem:[#allocation2 + $0xd8] sm:$0xff] %vm509, 0.0
        %539 = vst.msk [vmem:[#allocation2 + $0xe0] sm:$0xff] %vm509, 0.0
        %540 = vst.msk [vmem:[#allocation2 + $0xe8] sm:$0xf] %vm512, 0.0
        %541 = vst.msk [vmem:[#allocation2 + $0xf0] sm:$0xff] %vm509, 0.0
        %542 = vst.msk [vmem:[#allocation2 + $0xf8] sm:$0xff] %vm509, 0.0
        %543 = vst.msk [vmem:[#allocation2 + $0x100] sm:$0xf] %vm512, 0.0
        %544 = vst.msk [vmem:[#allocation2 + $0x108] sm:$0xff] %vm509, 0.0
        %545 = vst.msk [vmem:[#allocation2 + $0x110] sm:$0xff] %vm509, 0.0
        %546 = vst.msk [vmem:[#allocation2 + $0x118] sm:$0xf] %vm512, 0.0
        %547 = vst.msk [vmem:[#allocation2 + $0x120] sm:$0xff] %vm509, 0.0
        %548 = vst.msk [vmem:[#allocation2 + $0x128] sm:$0xff] %vm509, 0.0
        %549 = vst.msk [vmem:[#allocation2 + $0x130] sm:$0xf] %vm512, 0.0
        %550 = vst.msk [vmem:[#allocation2 + $0x138] sm:$0xff] %vm509, 0.0
        %551 = vst.msk [vmem:[#allocation2 + $0x140] sm:$0xff] %vm509, 0.0
        %552 = vst.msk [vmem:[#allocation2 + $0x148] sm:$0xf] %vm512, 0.0
        %553 = vst.msk [vmem:[#allocation2 + $0x150] sm:$0xff] %vm509, 0.0
        %554 = vst.msk [vmem:[#allocation2 + $0x158] sm:$0xff] %vm509, 0.0
        %555 = vst.msk [vmem:[#allocation2 + $0x160] sm:$0xf] %vm512, 0.0
        %556 = vst.msk [vmem:[#allocation2 + $0x168] sm:$0xff] %vm509, 0.0
        %557 = vst.msk [vmem:[#allocation2 + $0x170] sm:$0xff] %vm509, 0.0
        %558 = vst.msk [vmem:[#allocation2 + $0x178] sm:$0xf] %vm512, 0.0
        %559 = vst.msk [vmem:[#allocation2 + $0x180] sm:$0xff] %vm509, 0.0
        %560 = vst.msk [vmem:[#allocation2 + $0x188] sm:$0xff] %vm509, 0.0
        %561 = vst.msk [vmem:[#allocation2 + $0x190] sm:$0xf] %vm512, 0.0
        %562 = vst.msk [vmem:[#allocation2 + $0x198] sm:$0xff] %vm509, 0.0
        %563 = vst.msk [vmem:[#allocation2 + $0x1a0] sm:$0xff] %vm509, 0.0
        %564 = vst.msk [vmem:[#allocation2 + $0x1a8] sm:$0xf] %vm512, 0.0
        %565 = vst.msk [vmem:[#allocation2 + $0x1b0] sm:$0xff] %vm509, 0.0
        %566 = vst.msk [vmem:[#allocation2 + $0x1b8] sm:$0xff] %vm509, 0.0
        %567 = vst.msk [vmem:[#allocation2 + $0x1c0] sm:$0xf] %vm512, 0.0
        %568 = vst.msk [vmem:[#allocation2 + $0x1c8] sm:$0xff] %vm509, 0.0
        %569 = vst.msk [vmem:[#allocation2 + $0x1d0] sm:$0xff] %vm509, 0.0
        %570 = vst.msk [vmem:[#allocation2 + $0x1d8] sm:$0xf] %vm512, 0.0
        %v571 = vld [vmem:[%s452] sm:$0xff]
        %v572 = vld [vmem:[%s452 + $0x8] sm:$0xff]
        %v573 = vld [vmem:[%s452 + $0x10] sm:$0xff]
        %v574 = vld [vmem:[%s452 + $0x18] sm:$0xff]
        %v575 = vld [vmem:[%s452 + $0x20] sm:$0xff]
        %v576 = vld [vmem:[%s452 + $0x28] sm:$0xff]
        %v577 = vld [vmem:[%s452 + $0x30] sm:$0xff]
        %v578 = vld [vmem:[%s452 + $0x38] sm:$0xff]
        %v579 = vld [vmem:[%s452 + $0x40] sm:$0xff]
        %v580 = vld [vmem:[%s452 + $0x48] sm:$0xff]
        %v581 = vld [vmem:[%s452 + $0x50] sm:$0xff]
        %v582 = vld [vmem:[%s452 + $0x58] sm:$0xff]
        %v583 = vld [vmem:[%s452 + $0x60] sm:$0xff]
        %v584 = vld [vmem:[%s452 + $0x68] sm:$0xff]
        %v585 = vld [vmem:[%s452 + $0x70] sm:$0xff]
        %v586 = vld [vmem:[%s452 + $0x78] sm:$0xff]
        %v587 = vld [vmem:[%s452 + $0x80] sm:$0xff]
        %v588 = vld [vmem:[%s452 + $0x88] sm:$0xff]
        %v589 = vld [vmem:[%s452 + $0x90] sm:$0xff]
        %v590 = vld [vmem:[%s452 + $0x98] sm:$0xff]
        %v591 = vld [vmem:[%s452 + $0xa0] sm:$0xff]
        %v592 = vld [vmem:[%s452 + $0xa8] sm:$0xff]
        %v593 = vld [vmem:[%s452 + $0xb0] sm:$0xff]
        %v594 = vld [vmem:[%s452 + $0xb8] sm:$0xff]
        %v595 = vld [vmem:[%s452 + $0xc0] sm:$0xff]
        %v596 = vld [vmem:[%s452 + $0xc8] sm:$0xff]
        %v597 = vld [vmem:[%s452 + $0xd0] sm:$0xff]
        %v598 = vld [vmem:[%s452 + $0xd8] sm:$0xff]
        %v599 = vld [vmem:[%s452 + $0xe0] sm:$0xff]
        %v600 = vld [vmem:[%s452 + $0xe8] sm:$0xff]
        %v601 = vld [vmem:[%s452 + $0xf0] sm:$0xff]
        %v602 = vld [vmem:[%s452 + $0xf8] sm:$0xff]
        %s603 = scalar_lea.vmem [#allocation2], 48
        %604 = vst.msk [vmem:[%s603 + $0x2] sm:$0xff] %vm509, %v571
        %605 = vst.msk [vmem:[%s603 + $0xa] sm:$0xff] %vm509, %v572
        %606 = vst.msk [vmem:[%s603 + $0x1a] sm:$0xff] %vm509, %v573
        %607 = vst.msk [vmem:[%s603 + $0x22] sm:$0xff] %vm509, %v574
        %608 = vst.msk [vmem:[%s603 + $0x32] sm:$0xff] %vm509, %v575
        %609 = vst.msk [vmem:[%s603 + $0x3a] sm:$0xff] %vm509, %v576
        %610 = vst.msk [vmem:[%s603 + $0x4a] sm:$0xff] %vm509, %v577
        %611 = vst.msk [vmem:[%s603 + $0x52] sm:$0xff] %vm509, %v578
        %612 = vst.msk [vmem:[%s603 + $0x62] sm:$0xff] %vm509, %v579
        %613 = vst.msk [vmem:[%s603 + $0x6a] sm:$0xff] %vm509, %v580
        %614 = vst.msk [vmem:[%s603 + $0x7a] sm:$0xff] %vm509, %v581
        %615 = vst.msk [vmem:[%s603 + $0x82] sm:$0xff] %vm509, %v582
        %616 = vst.msk [vmem:[%s603 + $0x92] sm:$0xff] %vm509, %v583
        %617 = vst.msk [vmem:[%s603 + $0x9a] sm:$0xff] %vm509, %v584
        %618 = vst.msk [vmem:[%s603 + $0xaa] sm:$0xff] %vm509, %v585
        %619 = vst.msk [vmem:[%s603 + $0xb2] sm:$0xff] %vm509, %v586
        %620 = vst.msk [vmem:[%s603 + $0xc2] sm:$0xff] %vm509, %v587
        %621 = vst.msk [vmem:[%s603 + $0xca] sm:$0xff] %vm509, %v588
        %622 = vst.msk [vmem:[%s603 + $0xda] sm:$0xff] %vm509, %v589
        %623 = vst.msk [vmem:[%s603 + $0xe2] sm:$0xff] %vm509, %v590
        %624 = vst.msk [vmem:[%s603 + $0xf2] sm:$0xff] %vm509, %v591
        %625 = vst.msk [vmem:[%s603 + $0xfa] sm:$0xff] %vm509, %v592
        %626 = vst.msk [vmem:[%s603 + $0x10a] sm:$0xff] %vm509, %v593
        %627 = vst.msk [vmem:[%s603 + $0x112] sm:$0xff] %vm509, %v594
        %628 = vst.msk [vmem:[%s603 + $0x122] sm:$0xff] %vm509, %v595
        %629 = vst.msk [vmem:[%s603 + $0x12a] sm:$0xff] %vm509, %v596
        %630 = vst.msk [vmem:[%s603 + $0x13a] sm:$0xff] %vm509, %v597
        %631 = vst.msk [vmem:[%s603 + $0x142] sm:$0xff] %vm509, %v598
        %632 = vst.msk [vmem:[%s603 + $0x152] sm:$0xff] %vm509, %v599
        %633 = vst.msk [vmem:[%s603 + $0x15a] sm:$0xff] %vm509, %v600
        %634 = vst.msk [vmem:[%s603 + $0x16a] sm:$0xff] %vm509, %v601
        %635 = vst.msk [vmem:[%s603 + $0x172] sm:$0xff] %vm509, %v602
        %v636 = vld [vmem:[#allocation2] sm:$0xff]
        %v637 = vld [vmem:[#allocation2 + $0x8] sm:$0xff]
        %v638 = vld [vmem:[#allocation2 + $0x18] sm:$0xff]
        %v639 = vld [vmem:[#allocation2 + $0x20] sm:$0xff]
        %v640 = vld [vmem:[#allocation2 + $0x30] sm:$0xff]
        %v641 = vld [vmem:[#allocation2 + $0x38] sm:$0xff]
        %v642 = vld [vmem:[#allocation2 + $0x48] sm:$0xff]
        %v643 = vld [vmem:[#allocation2 + $0x50] sm:$0xff]
        %v644 = vld [vmem:[#allocation2 + $0x60] sm:$0xff]
        %v645 = vld [vmem:[#allocation2 + $0x68] sm:$0xff]
        %v646 = vld [vmem:[#allocation2 + $0x78] sm:$0xff]
        %v647 = vld [vmem:[#allocation2 + $0x80] sm:$0xff]
        %v648 = vld [vmem:[#allocation2 + $0x90] sm:$0xff]
        %v649 = vld [vmem:[#allocation2 + $0x98] sm:$0xff]
        %v650 = vld [vmem:[#allocation2 + $0xa8] sm:$0xff]
        %v651 = vld [vmem:[#allocation2 + $0xb0] sm:$0xff]
        %v652 = vld [vmem:[#allocation2 + $0xc0] sm:$0xff]
        %v653 = vld [vmem:[#allocation2 + $0xc8] sm:$0xff]
        %v654 = vld [vmem:[#allocation2 + $0xd8] sm:$0xff]
        %v655 = vld [vmem:[#allocation2 + $0xe0] sm:$0xff]
        %v656 = vld [vmem:[#allocation2 + $0xf0] sm:$0xff]
        %v657 = vld [vmem:[#allocation2 + $0xf8] sm:$0xff]
        %v658 = vld [vmem:[#allocation2 + $0x108] sm:$0xff]
        %v659 = vld [vmem:[#allocation2 + $0x110] sm:$0xff]
        %v660 = vld [vmem:[#allocation2 + $0x120] sm:$0xff]
        %v661 = vld [vmem:[#allocation2 + $0x128] sm:$0xff]
        %v662 = vld [vmem:[#allocation2 + $0x138] sm:$0xff]
        %v663 = vld [vmem:[#allocation2 + $0x140] sm:$0xff]
        %v664 = vld [vmem:[#allocation2 + $0x150] sm:$0xff]
        %v665 = vld [vmem:[#allocation2 + $0x158] sm:$0xff]
        %v666 = vld [vmem:[#allocation2 + $0x168] sm:$0xff]
        %v667 = vld [vmem:[#allocation2 + $0x170] sm:$0xff]
        %668 = vst.msk [vmem:[#allocation3] sm:$0xff] %vm509, %v636
        %669 = vst.msk [vmem:[#allocation3 + $0x20] sm:$0xff] %vm509, %v637
        %670 = vst.msk [vmem:[#allocation3 + $0x40] sm:$0xff] %vm509, %v638
        %671 = vst.msk [vmem:[#allocation3 + $0x60] sm:$0xff] %vm509, %v639
        %672 = vst.msk [vmem:[#allocation3 + $0x80] sm:$0xff] %vm509, %v640
        %673 = vst.msk [vmem:[#allocation3 + $0xa0] sm:$0xff] %vm509, %v641
        %674 = vst.msk [vmem:[#allocation3 + $0xc0] sm:$0xff] %vm509, %v642
        %675 = vst.msk [vmem:[#allocation3 + $0xe0] sm:$0xff] %vm509, %v643
        %676 = vst.msk [vmem:[#allocation3 + $0x100] sm:$0xff] %vm509, %v644
        %677 = vst.msk [vmem:[#allocation3 + $0x120] sm:$0xff] %vm509, %v645
        %678 = vst.msk [vmem:[#allocation3 + $0x140] sm:$0xff] %vm509, %v646
        %679 = vst.msk [vmem:[#allocation3 + $0x160] sm:$0xff] %vm509, %v647
        %680 = vst.msk [vmem:[#allocation3 + $0x180] sm:$0xff] %vm509, %v648
        %681 = vst.msk [vmem:[#allocation3 + $0x1a0] sm:$0xff] %vm509, %v649
        %682 = vst.msk [vmem:[#allocation3 + $0x1c0] sm:$0xff] %vm509, %v650
        %683 = vst.msk [vmem:[#allocation3 + $0x1e0] sm:$0xff] %vm509, %v651
        %684 = vst.msk [vmem:[#allocation3 + $0x200] sm:$0xff] %vm509, %v652
        %685 = vst.msk [vmem:[#allocation3 + $0x220] sm:$0xff] %vm509, %v653
        %686 = vst.msk [vmem:[#allocation3 + $0x240] sm:$0xff] %vm509, %v654
        %687 = vst.msk [vmem:[#allocation3 + $0x260] sm:$0xff] %vm509, %v655
        %688 = vst.msk [vmem:[#allocation3 + $0x280] sm:$0xff] %vm509, %v656
        %689 = vst.msk [vmem:[#allocation3 + $0x2a0] sm:$0xff] %vm509, %v657
        %690 = vst.msk [vmem:[#allocation3 + $0x2c0] sm:$0xff] %vm509, %v658
        %691 = vst.msk [vmem:[#allocation3 + $0x2e0] sm:$0xff] %vm509, %v659
        %692 = vst.msk [vmem:[#allocation3 + $0x300] sm:$0xff] %vm509, %v660
        %693 = vst.msk [vmem:[#allocation3 + $0x320] sm:$0xff] %vm509, %v661
        %694 = vst.msk [vmem:[#allocation3 + $0x340] sm:$0xff] %vm509, %v662
        %695 = vst.msk [vmem:[#allocation3 + $0x360] sm:$0xff] %vm509, %v663
        %696 = vst.msk [vmem:[#allocation3 + $0x380] sm:$0xff] %vm509, %v664
        %697 = vst.msk [vmem:[#allocation3 + $0x3a0] sm:$0xff] %vm509, %v665
        %698 = vst.msk [vmem:[#allocation3 + $0x3c0] sm:$0xff] %vm509, %v666
        %699 = vst.msk [vmem:[#allocation3 + $0x3e0] sm:$0xff] %vm509, %v667
        %v700 = vld [vmem:[#allocation2 + $0x1] sm:$0xff]
        %v701 = vld [vmem:[#allocation2 + $0x9] sm:$0xff]
        %v702 = vld [vmem:[#allocation2 + $0x19] sm:$0xff]
        %v703 = vld [vmem:[#allocation2 + $0x21] sm:$0xff]
        %v704 = vld [vmem:[#allocation2 + $0x31] sm:$0xff]
        %v705 = vld [vmem:[#allocation2 + $0x39] sm:$0xff]
        %v706 = vld [vmem:[#allocation2 + $0x49] sm:$0xff]
        %v707 = vld [vmem:[#allocation2 + $0x51] sm:$0xff]
        %v708 = vld [vmem:[#allocation2 + $0x61] sm:$0xff]
        %v709 = vld [vmem:[#allocation2 + $0x69] sm:$0xff]
        %v710 = vld [vmem:[#allocation2 + $0x79] sm:$0xff]
        %v711 = vld [vmem:[#allocation2 + $0x81] sm:$0xff]
        %v712 = vld [vmem:[#allocation2 + $0x91] sm:$0xff]
        %v713 = vld [vmem:[#allocation2 + $0x99] sm:$0xff]
        %v714 = vld [vmem:[#allocation2 + $0xa9] sm:$0xff]
        %v715 = vld [vmem:[#allocation2 + $0xb1] sm:$0xff]
        %v716 = vld [vmem:[#allocation2 + $0xc1] sm:$0xff]
        %v717 = vld [vmem:[#allocation2 + $0xc9] sm:$0xff]
        %v718 = vld [vmem:[#allocation2 + $0xd9] sm:$0xff]
        %v719 = vld [vmem:[#allocation2 + $0xe1] sm:$0xff]
        %v720 = vld [vmem:[#allocation2 + $0xf1] sm:$0xff]
        %v721 = vld [vmem:[#allocation2 + $0xf9] sm:$0xff]
        %v722 = vld [vmem:[#allocation2 + $0x109] sm:$0xff]
        %v723 = vld [vmem:[#allocation2 + $0x111] sm:$0xff]
        %v724 = vld [vmem:[#allocation2 + $0x121] sm:$0xff]
        %v725 = vld [vmem:[#allocation2 + $0x129] sm:$0xff]
        %v726 = vld [vmem:[#allocation2 + $0x139] sm:$0xff]
        %v727 = vld [vmem:[#allocation2 + $0x141] sm:$0xff]
        %v728 = vld [vmem:[#allocation2 + $0x151] sm:$0xff]
        %v729 = vld [vmem:[#allocation2 + $0x159] sm:$0xff]
        %v730 = vld [vmem:[#allocation2 + $0x169] sm:$0xff]
        %v731 = vld [vmem:[#allocation2 + $0x171] sm:$0xff]
        %764 = vrot.lane.b32.xlu0 %v700, 16
        %v765 = vpop.permute.xlu0 %764
        %766 = vrot.lane.b32.xlu0 %v701, 16
        %v767 = vpop.permute.xlu0 %766
        %768 = vrot.lane.b32.xlu0 %v702, 16
        %v769 = vpop.permute.xlu0 %768
        %770 = vrot.lane.b32.xlu0 %v703, 16
        %v771 = vpop.permute.xlu0 %770
        %772 = vrot.lane.b32.xlu0 %v704, 16
        %v773 = vpop.permute.xlu0 %772
        %774 = vrot.lane.b32.xlu0 %v705, 16
        %v775 = vpop.permute.xlu0 %774
        %776 = vrot.lane.b32.xlu0 %v706, 16
        %v777 = vpop.permute.xlu0 %776
        %778 = vrot.lane.b32.xlu0 %v707, 16
        %v779 = vpop.permute.xlu0 %778
        %780 = vrot.lane.b32.xlu0 %v708, 16
        %v781 = vpop.permute.xlu0 %780
        %782 = vrot.lane.b32.xlu0 %v709, 16
        %v783 = vpop.permute.xlu0 %782
        %784 = vrot.lane.b32.xlu0 %v710, 16
        %v785 = vpop.permute.xlu0 %784
        %786 = vrot.lane.b32.xlu0 %v711, 16
        %v787 = vpop.permute.xlu0 %786
        %788 = vrot.lane.b32.xlu0 %v712, 16
        %v789 = vpop.permute.xlu0 %788
        %790 = vrot.lane.b32.xlu0 %v713, 16
        %v791 = vpop.permute.xlu0 %790
        %792 = vrot.lane.b32.xlu0 %v714, 16
        %v793 = vpop.permute.xlu0 %792
        %794 = vrot.lane.b32.xlu0 %v715, 16
        %v795 = vpop.permute.xlu0 %794
        %796 = vrot.lane.b32.xlu0 %v716, 16
        %v797 = vpop.permute.xlu0 %796
        %798 = vrot.lane.b32.xlu0 %v717, 16
        %v799 = vpop.permute.xlu0 %798
        %800 = vrot.lane.b32.xlu0 %v718, 16
        %v801 = vpop.permute.xlu0 %800
        %802 = vrot.lane.b32.xlu0 %v719, 16
        %v803 = vpop.permute.xlu0 %802
        %804 = vrot.lane.b32.xlu0 %v720, 16
        %v805 = vpop.permute.xlu0 %804
        %806 = vrot.lane.b32.xlu0 %v721, 16
        %v807 = vpop.permute.xlu0 %806
        %808 = vrot.lane.b32.xlu0 %v722, 16
        %v809 = vpop.permute.xlu0 %808
        %810 = vrot.lane.b32.xlu0 %v723, 16
        %v811 = vpop.permute.xlu0 %810
        %812 = vrot.lane.b32.xlu0 %v724, 16
        %v813 = vpop.permute.xlu0 %812
        %814 = vrot.lane.b32.xlu0 %v725, 16
        %v815 = vpop.permute.xlu0 %814
        %816 = vrot.lane.b32.xlu0 %v726, 16
        %v817 = vpop.permute.xlu0 %816
        %818 = vrot.lane.b32.xlu0 %v727, 16
        %v819 = vpop.permute.xlu0 %818
        %820 = vrot.lane.b32.xlu0 %v728, 16
        %v821 = vpop.permute.xlu0 %820
        %822 = vrot.lane.b32.xlu0 %v729, 16
        %v823 = vpop.permute.xlu0 %822
        %824 = vrot.lane.b32.xlu0 %v730, 16
        %v825 = vpop.permute.xlu0 %824
        %826 = vrot.lane.b32.xlu0 %v731, 16
        %v827 = vpop.permute.xlu0 %826
        %vm860 = vcmask 261248
        %861 = vst.msk [vmem:[#allocation3] sm:$0xff] %vm860, %v765
        %862 = vst.msk [vmem:[#allocation3 + $0x20] sm:$0xff] %vm860, %v767
        %863 = vst.msk [vmem:[#allocation3 + $0x40] sm:$0xff] %vm860, %v769
        %864 = vst.msk [vmem:[#allocation3 + $0x60] sm:$0xff] %vm860, %v771
        %865 = vst.msk [vmem:[#allocation3 + $0x80] sm:$0xff] %vm860, %v773
        %866 = vst.msk [vmem:[#allocation3 + $0xa0] sm:$0xff] %vm860, %v775
        %867 = vst.msk [vmem:[#allocation3 + $0xc0] sm:$0xff] %vm860, %v777
        %868 = vst.msk [vmem:[#allocation3 + $0xe0] sm:$0xff] %vm860, %v779
        %869 = vst.msk [vmem:[#allocation3 + $0x100] sm:$0xff] %vm860, %v781
        %870 = vst.msk [vmem:[#allocation3 + $0x120] sm:$0xff] %vm860, %v783
        %871 = vst.msk [vmem:[#allocation3 + $0x140] sm:$0xff] %vm860, %v785
        %872 = vst.msk [vmem:[#allocation3 + $0x160] sm:$0xff] %vm860, %v787
        %873 = vst.msk [vmem:[#allocation3 + $0x180] sm:$0xff] %vm860, %v789
        %874 = vst.msk [vmem:[#allocation3 + $0x1a0] sm:$0xff] %vm860, %v791
        %875 = vst.msk [vmem:[#allocation3 + $0x1c0] sm:$0xff] %vm860, %v793
        %876 = vst.msk [vmem:[#allocation3 + $0x1e0] sm:$0xff] %vm860, %v795
        %877 = vst.msk [vmem:[#allocation3 + $0x200] sm:$0xff] %vm860, %v797
        %878 = vst.msk [vmem:[#allocation3 + $0x220] sm:$0xff] %vm860, %v799
        %879 = vst.msk [vmem:[#allocation3 + $0x240] sm:$0xff] %vm860, %v801
        %880 = vst.msk [vmem:[#allocation3 + $0x260] sm:$0xff] %vm860, %v803
        %881 = vst.msk [vmem:[#allocation3 + $0x280] sm:$0xff] %vm860, %v805
        %882 = vst.msk [vmem:[#allocation3 + $0x2a0] sm:$0xff] %vm860, %v807
        %883 = vst.msk [vmem:[#allocation3 + $0x2c0] sm:$0xff] %vm860, %v809
        %884 = vst.msk [vmem:[#allocation3 + $0x2e0] sm:$0xff] %vm860, %v811
        %885 = vst.msk [vmem:[#allocation3 + $0x300] sm:$0xff] %vm860, %v813
        %886 = vst.msk [vmem:[#allocation3 + $0x320] sm:$0xff] %vm860, %v815
        %887 = vst.msk [vmem:[#allocation3 + $0x340] sm:$0xff] %vm860, %v817
        %888 = vst.msk [vmem:[#allocation3 + $0x360] sm:$0xff] %vm860, %v819
        %889 = vst.msk [vmem:[#allocation3 + $0x380] sm:$0xff] %vm860, %v821
        %890 = vst.msk [vmem:[#allocation3 + $0x3a0] sm:$0xff] %vm860, %v823
        %891 = vst.msk [vmem:[#allocation3 + $0x3c0] sm:$0xff] %vm860, %v825
        %892 = vst.msk [vmem:[#allocation3 + $0x3e0] sm:$0xff] %vm860, %v827
        %v893 = vld [vmem:[#allocation2 + $0x2] sm:$0xff]
        %v894 = vld [vmem:[#allocation2 + $0xa] sm:$0xff]
        %v895 = vld [vmem:[#allocation2 + $0x1a] sm:$0xff]
        %v896 = vld [vmem:[#allocation2 + $0x22] sm:$0xff]
        %v897 = vld [vmem:[#allocation2 + $0x32] sm:$0xff]
        %v898 = vld [vmem:[#allocation2 + $0x3a] sm:$0xff]
        %v899 = vld [vmem:[#allocation2 + $0x4a] sm:$0xff]
        %v900 = vld [vmem:[#allocation2 + $0x52] sm:$0xff]
        %v901 = vld [vmem:[#allocation2 + $0x62] sm:$0xff]
        %v902 = vld [vmem:[#allocation2 + $0x6a] sm:$0xff]
        %v903 = vld [vmem:[#allocation2 + $0x7a] sm:$0xff]
        %v904 = vld [vmem:[#allocation2 + $0x82] sm:$0xff]
        %v905 = vld [vmem:[#allocation2 + $0x92] sm:$0xff]
        %v906 = vld [vmem:[#allocation2 + $0x9a] sm:$0xff]
        %v907 = vld [vmem:[#allocation2 + $0xaa] sm:$0xff]
        %v908 = vld [vmem:[#allocation2 + $0xb2] sm:$0xff]
        %v909 = vld [vmem:[#allocation2 + $0xc2] sm:$0xff]
        %v910 = vld [vmem:[#allocation2 + $0xca] sm:$0xff]
        %v911 = vld [vmem:[#allocation2 + $0xda] sm:$0xff]
        %v912 = vld [vmem:[#allocation2 + $0xe2] sm:$0xff]
        %v913 = vld [vmem:[#allocation2 + $0xf2] sm:$0xff]
        %v914 = vld [vmem:[#allocation2 + $0xfa] sm:$0xff]
        %v915 = vld [vmem:[#allocation2 + $0x10a] sm:$0xff]
        %v916 = vld [vmem:[#allocation2 + $0x112] sm:$0xff]
        %v917 = vld [vmem:[#allocation2 + $0x122] sm:$0xff]
        %v918 = vld [vmem:[#allocation2 + $0x12a] sm:$0xff]
        %v919 = vld [vmem:[#allocation2 + $0x13a] sm:$0xff]
        %v920 = vld [vmem:[#allocation2 + $0x142] sm:$0xff]
        %v921 = vld [vmem:[#allocation2 + $0x152] sm:$0xff]
        %v922 = vld [vmem:[#allocation2 + $0x15a] sm:$0xff]
        %v923 = vld [vmem:[#allocation2 + $0x16a] sm:$0xff]
        %v924 = vld [vmem:[#allocation2 + $0x172] sm:$0xff]
        %957 = vrot.lane.b32.xlu0 %v893, 32
        %v958 = vpop.permute.xlu0 %957
        %959 = vrot.lane.b32.xlu0 %v894, 32
        %v960 = vpop.permute.xlu0 %959
        %961 = vrot.lane.b32.xlu0 %v895, 32
        %v962 = vpop.permute.xlu0 %961
        %963 = vrot.lane.b32.xlu0 %v896, 32
        %v964 = vpop.permute.xlu0 %963
        %965 = vrot.lane.b32.xlu0 %v897, 32
        %v966 = vpop.permute.xlu0 %965
        %967 = vrot.lane.b32.xlu0 %v898, 32
        %v968 = vpop.permute.xlu0 %967
        %969 = vrot.lane.b32.xlu0 %v899, 32
        %v970 = vpop.permute.xlu0 %969
        %971 = vrot.lane.b32.xlu0 %v900, 32
        %v972 = vpop.permute.xlu0 %971
        %973 = vrot.lane.b32.xlu0 %v901, 32
        %v974 = vpop.permute.xlu0 %973
        %975 = vrot.lane.b32.xlu0 %v902, 32
        %v976 = vpop.permute.xlu0 %975
        %977 = vrot.lane.b32.xlu0 %v903, 32
        %v978 = vpop.permute.xlu0 %977
        %979 = vrot.lane.b32.xlu0 %v904, 32
        %v980 = vpop.permute.xlu0 %979
        %981 = vrot.lane.b32.xlu0 %v905, 32
        %v982 = vpop.permute.xlu0 %981
        %983 = vrot.lane.b32.xlu0 %v906, 32
        %v984 = vpop.permute.xlu0 %983
        %985 = vrot.lane.b32.xlu0 %v907, 32
        %v986 = vpop.permute.xlu0 %985
        %987 = vrot.lane.b32.xlu0 %v908, 32
        %v988 = vpop.permute.xlu0 %987
        %989 = vrot.lane.b32.xlu0 %v909, 32
        %v990 = vpop.permute.xlu0 %989
        %991 = vrot.lane.b32.xlu0 %v910, 32
        %v992 = vpop.permute.xlu0 %991
        %993 = vrot.lane.b32.xlu0 %v911, 32
        %v994 = vpop.permute.xlu0 %993
        %995 = vrot.lane.b32.xlu0 %v912, 32
        %v996 = vpop.permute.xlu0 %995
        %997 = vrot.lane.b32.xlu0 %v913, 32
        %v998 = vpop.permute.xlu0 %997
        %999 = vrot.lane.b32.xlu0 %v914, 32
        %v1000 = vpop.permute.xlu0 %999
        %1001 = vrot.lane.b32.xlu0 %v915, 32
        %v1002 = vpop.permute.xlu0 %1001
        %1003 = vrot.lane.b32.xlu0 %v916, 32
        %v1004 = vpop.permute.xlu0 %1003
        %1005 = vrot.lane.b32.xlu0 %v917, 32
        %v1006 = vpop.permute.xlu0 %1005
        %1007 = vrot.lane.b32.xlu0 %v918, 32
        %v1008 = vpop.permute.xlu0 %1007
        %1009 = vrot.lane.b32.xlu0 %v919, 32
        %v1010 = vpop.permute.xlu0 %1009
        %1011 = vrot.lane.b32.xlu0 %v920, 32
        %v1012 = vpop.permute.xlu0 %1011
        %1013 = vrot.lane.b32.xlu0 %v921, 32
        %v1014 = vpop.permute.xlu0 %1013
        %1015 = vrot.lane.b32.xlu0 %v922, 32
        %v1016 = vpop.permute.xlu0 %1015
        %1017 = vrot.lane.b32.xlu0 %v923, 32
        %v1018 = vpop.permute.xlu0 %1017
        %1019 = vrot.lane.b32.xlu0 %v924, 32
        %v1020 = vpop.permute.xlu0 %1019
        %vm1053 = vcmask 392448
        %1054 = vst.msk [vmem:[#allocation3] sm:$0xff] %vm1053, %v958
        %1055 = vst.msk [vmem:[#allocation3 + $0x20] sm:$0xff] %vm1053, %v960
        %1056 = vst.msk [vmem:[#allocation3 + $0x40] sm:$0xff] %vm1053, %v962
        %1057 = vst.msk [vmem:[#allocation3 + $0x60] sm:$0xff] %vm1053, %v964
        %1058 = vst.msk [vmem:[#allocation3 + $0x80] sm:$0xff] %vm1053, %v966
        %1059 = vst.msk [vmem:[#allocation3 + $0xa0] sm:$0xff] %vm1053, %v968
        %1060 = vst.msk [vmem:[#allocation3 + $0xc0] sm:$0xff] %vm1053, %v970
        %1061 = vst.msk [vmem:[#allocation3 + $0xe0] sm:$0xff] %vm1053, %v972
        %1062 = vst.msk [vmem:[#allocation3 + $0x100] sm:$0xff] %vm1053, %v974
        %1063 = vst.msk [vmem:[#allocation3 + $0x120] sm:$0xff] %vm1053, %v976
        %1064 = vst.msk [vmem:[#allocation3 + $0x140] sm:$0xff] %vm1053, %v978
        %1065 = vst.msk [vmem:[#allocation3 + $0x160] sm:$0xff] %vm1053, %v980
        %1066 = vst.msk [vmem:[#allocation3 + $0x180] sm:$0xff] %vm1053, %v982
        %1067 = vst.msk [vmem:[#allocation3 + $0x1a0] sm:$0xff] %vm1053, %v984
        %1068 = vst.msk [vmem:[#allocation3 + $0x1c0] sm:$0xff] %vm1053, %v986
        %1069 = vst.msk [vmem:[#allocation3 + $0x1e0] sm:$0xff] %vm1053, %v988
        %1070 = vst.msk [vmem:[#allocation3 + $0x200] sm:$0xff] %vm1053, %v990
        %1071 = vst.msk [vmem:[#allocation3 + $0x220] sm:$0xff] %vm1053, %v992
        %1072 = vst.msk [vmem:[#allocation3 + $0x240] sm:$0xff] %vm1053, %v994
        %1073 = vst.msk [vmem:[#allocation3 + $0x260] sm:$0xff] %vm1053, %v996
        %1074 = vst.msk [vmem:[#allocation3 + $0x280] sm:$0xff] %vm1053, %v998
        %1075 = vst.msk [vmem:[#allocation3 + $0x2a0] sm:$0xff] %vm1053, %v1000
        %1076 = vst.msk [vmem:[#allocation3 + $0x2c0] sm:$0xff] %vm1053, %v1002
        %1077 = vst.msk [vmem:[#allocation3 + $0x2e0] sm:$0xff] %vm1053, %v1004
        %1078 = vst.msk [vmem:[#allocation3 + $0x300] sm:$0xff] %vm1053, %v1006
        %1079 = vst.msk [vmem:[#allocation3 + $0x320] sm:$0xff] %vm1053, %v1008
        %1080 = vst.msk [vmem:[#allocation3 + $0x340] sm:$0xff] %vm1053, %v1010
        %1081 = vst.msk [vmem:[#allocation3 + $0x360] sm:$0xff] %vm1053, %v1012
        %1082 = vst.msk [vmem:[#allocation3 + $0x380] sm:$0xff] %vm1053, %v1014
        %1083 = vst.msk [vmem:[#allocation3 + $0x3a0] sm:$0xff] %vm1053, %v1016
        %1084 = vst.msk [vmem:[#allocation3 + $0x3c0] sm:$0xff] %vm1053, %v1018
        %1085 = vst.msk [vmem:[#allocation3 + $0x3e0] sm:$0xff] %vm1053, %v1020
        %v1086 = vld [vmem:[#allocation2 + $0x3] sm:$0xff]
        %v1087 = vld [vmem:[#allocation2 + $0xb] sm:$0xff]
        %v1088 = vld [vmem:[#allocation2 + $0x1b] sm:$0xff]
        %v1089 = vld [vmem:[#allocation2 + $0x23] sm:$0xff]
        %v1090 = vld [vmem:[#allocation2 + $0x33] sm:$0xff]
        %v1091 = vld [vmem:[#allocation2 + $0x3b] sm:$0xff]
        %v1092 = vld [vmem:[#allocation2 + $0x4b] sm:$0xff]
        %v1093 = vld [vmem:[#allocation2 + $0x53] sm:$0xff]
        %v1094 = vld [vmem:[#allocation2 + $0x63] sm:$0xff]
        %v1095 = vld [vmem:[#allocation2 + $0x6b] sm:$0xff]
        %v1096 = vld [vmem:[#allocation2 + $0x7b] sm:$0xff]
        %v1097 = vld [vmem:[#allocation2 + $0x83] sm:$0xff]
        %v1098 = vld [vmem:[#allocation2 + $0x93] sm:$0xff]
        %v1099 = vld [vmem:[#allocation2 + $0x9b] sm:$0xff]
        %v1100 = vld [vmem:[#allocation2 + $0xab] sm:$0xff]
        %v1101 = vld [vmem:[#allocation2 + $0xb3] sm:$0xff]
        %v1102 = vld [vmem:[#allocation2 + $0xc3] sm:$0xff]
        %v1103 = vld [vmem:[#allocation2 + $0xcb] sm:$0xff]
        %v1104 = vld [vmem:[#allocation2 + $0xdb] sm:$0xff]
        %v1105 = vld [vmem:[#allocation2 + $0xe3] sm:$0xff]
        %v1106 = vld [vmem:[#allocation2 + $0xf3] sm:$0xff]
        %v1107 = vld [vmem:[#allocation2 + $0xfb] sm:$0xff]
        %v1108 = vld [vmem:[#allocation2 + $0x10b] sm:$0xff]
        %v1109 = vld [vmem:[#allocation2 + $0x113] sm:$0xff]
        %v1110 = vld [vmem:[#allocation2 + $0x123] sm:$0xff]
        %v1111 = vld [vmem:[#allocation2 + $0x12b] sm:$0xff]
        %v1112 = vld [vmem:[#allocation2 + $0x13b] sm:$0xff]
        %v1113 = vld [vmem:[#allocation2 + $0x143] sm:$0xff]
        %v1114 = vld [vmem:[#allocation2 + $0x153] sm:$0xff]
        %v1115 = vld [vmem:[#allocation2 + $0x15b] sm:$0xff]
        %v1116 = vld [vmem:[#allocation2 + $0x16b] sm:$0xff]
        %v1117 = vld [vmem:[#allocation2 + $0x173] sm:$0xff]
        %1150 = vrot.lane.b32.xlu0 %v1086, 48
        %v1151 = vpop.permute.xlu0 %1150
        %1152 = vrot.lane.b32.xlu0 %v1087, 48
        %v1153 = vpop.permute.xlu0 %1152
        %1154 = vrot.lane.b32.xlu0 %v1088, 48
        %v1155 = vpop.permute.xlu0 %1154
        %1156 = vrot.lane.b32.xlu0 %v1089, 48
        %v1157 = vpop.permute.xlu0 %1156
        %1158 = vrot.lane.b32.xlu0 %v1090, 48
        %v1159 = vpop.permute.xlu0 %1158
        %1160 = vrot.lane.b32.xlu0 %v1091, 48
        %v1161 = vpop.permute.xlu0 %1160
        %1162 = vrot.lane.b32.xlu0 %v1092, 48
        %v1163 = vpop.permute.xlu0 %1162
        %1164 = vrot.lane.b32.xlu0 %v1093, 48
        %v1165 = vpop.permute.xlu0 %1164
        %1166 = vrot.lane.b32.xlu0 %v1094, 48
        %v1167 = vpop.permute.xlu0 %1166
        %1168 = vrot.lane.b32.xlu0 %v1095, 48
        %v1169 = vpop.permute.xlu0 %1168
        %1170 = vrot.lane.b32.xlu0 %v1096, 48
        %v1171 = vpop.permute.xlu0 %1170
        %1172 = vrot.lane.b32.xlu0 %v1097, 48
        %v1173 = vpop.permute.xlu0 %1172
        %1174 = vrot.lane.b32.xlu0 %v1098, 48
        %v1175 = vpop.permute.xlu0 %1174
        %1176 = vrot.lane.b32.xlu0 %v1099, 48
        %v1177 = vpop.permute.xlu0 %1176
        %1178 = vrot.lane.b32.xlu0 %v1100, 48
        %v1179 = vpop.permute.xlu0 %1178
        %1180 = vrot.lane.b32.xlu0 %v1101, 48
        %v1181 = vpop.permute.xlu0 %1180
        %1182 = vrot.lane.b32.xlu0 %v1102, 48
        %v1183 = vpop.permute.xlu0 %1182
        %1184 = vrot.lane.b32.xlu0 %v1103, 48
        %v1185 = vpop.permute.xlu0 %1184
        %1186 = vrot.lane.b32.xlu0 %v1104, 48
        %v1187 = vpop.permute.xlu0 %1186
        %1188 = vrot.lane.b32.xlu0 %v1105, 48
        %v1189 = vpop.permute.xlu0 %1188
        %1190 = vrot.lane.b32.xlu0 %v1106, 48
        %v1191 = vpop.permute.xlu0 %1190
        %1192 = vrot.lane.b32.xlu0 %v1107, 48
        %v1193 = vpop.permute.xlu0 %1192
        %1194 = vrot.lane.b32.xlu0 %v1108, 48
        %v1195 = vpop.permute.xlu0 %1194
        %1196 = vrot.lane.b32.xlu0 %v1109, 48
        %v1197 = vpop.permute.xlu0 %1196
        %1198 = vrot.lane.b32.xlu0 %v1110, 48
        %v1199 = vpop.permute.xlu0 %1198
        %1200 = vrot.lane.b32.xlu0 %v1111, 48
        %v1201 = vpop.permute.xlu0 %1200
        %1202 = vrot.lane.b32.xlu0 %v1112, 48
        %v1203 = vpop.permute.xlu0 %1202
        %1204 = vrot.lane.b32.xlu0 %v1113, 48
        %v1205 = vpop.permute.xlu0 %1204
        %1206 = vrot.lane.b32.xlu0 %v1114, 48
        %v1207 = vpop.permute.xlu0 %1206
        %1208 = vrot.lane.b32.xlu0 %v1115, 48
        %v1209 = vpop.permute.xlu0 %1208
        %1210 = vrot.lane.b32.xlu0 %v1116, 48
        %v1211 = vpop.permute.xlu0 %1210
        %1212 = vrot.lane.b32.xlu0 %v1117, 48
        %v1213 = vpop.permute.xlu0 %1212
        %vm1246 = vcmask 523648
        %1247 = vst.msk [vmem:[#allocation3] sm:$0xff] %vm1246, %v1151
        %1248 = vst.msk [vmem:[#allocation3 + $0x20] sm:$0xff] %vm1246, %v1153
        %1249 = vst.msk [vmem:[#allocation3 + $0x40] sm:$0xff] %vm1246, %v1155
        %1250 = vst.msk [vmem:[#allocation3 + $0x60] sm:$0xff] %vm1246, %v1157
        %1251 = vst.msk [vmem:[#allocation3 + $0x80] sm:$0xff] %vm1246, %v1159
        %1252 = vst.msk [vmem:[#allocation3 + $0xa0] sm:$0xff] %vm1246, %v1161
        %1253 = vst.msk [vmem:[#allocation3 + $0xc0] sm:$0xff] %vm1246, %v1163
        %1254 = vst.msk [vmem:[#allocation3 + $0xe0] sm:$0xff] %vm1246, %v1165
        %1255 = vst.msk [vmem:[#allocation3 + $0x100] sm:$0xff] %vm1246, %v1167
        %1256 = vst.msk [vmem:[#allocation3 + $0x120] sm:$0xff] %vm1246, %v1169
        %1257 = vst.msk [vmem:[#allocation3 + $0x140] sm:$0xff] %vm1246, %v1171
        %1258 = vst.msk [vmem:[#allocation3 + $0x160] sm:$0xff] %vm1246, %v1173
        %1259 = vst.msk [vmem:[#allocation3 + $0x180] sm:$0xff] %vm1246, %v1175
        %1260 = vst.msk [vmem:[#allocation3 + $0x1a0] sm:$0xff] %vm1246, %v1177
        %1261 = vst.msk [vmem:[#allocation3 + $0x1c0] sm:$0xff] %vm1246, %v1179
        %1262 = vst.msk [vmem:[#allocation3 + $0x1e0] sm:$0xff] %vm1246, %v1181
        %1263 = vst.msk [vmem:[#allocation3 + $0x200] sm:$0xff] %vm1246, %v1183
        %1264 = vst.msk [vmem:[#allocation3 + $0x220] sm:$0xff] %vm1246, %v1185
        %1265 = vst.msk [vmem:[#allocation3 + $0x240] sm:$0xff] %vm1246, %v1187
        %1266 = vst.msk [vmem:[#allocation3 + $0x260] sm:$0xff] %vm1246, %v1189
        %1267 = vst.msk [vmem:[#allocation3 + $0x280] sm:$0xff] %vm1246, %v1191
        %1268 = vst.msk [vmem:[#allocation3 + $0x2a0] sm:$0xff] %vm1246, %v1193
        %1269 = vst.msk [vmem:[#allocation3 + $0x2c0] sm:$0xff] %vm1246, %v1195
        %1270 = vst.msk [vmem:[#allocation3 + $0x2e0] sm:$0xff] %vm1246, %v1197
        %1271 = vst.msk [vmem:[#allocation3 + $0x300] sm:$0xff] %vm1246, %v1199
        %1272 = vst.msk [vmem:[#allocation3 + $0x320] sm:$0xff] %vm1246, %v1201
        %1273 = vst.msk [vmem:[#allocation3 + $0x340] sm:$0xff] %vm1246, %v1203
        %1274 = vst.msk [vmem:[#allocation3 + $0x360] sm:$0xff] %vm1246, %v1205
        %1275 = vst.msk [vmem:[#allocation3 + $0x380] sm:$0xff] %vm1246, %v1207
        %1276 = vst.msk [vmem:[#allocation3 + $0x3a0] sm:$0xff] %vm1246, %v1209
        %1277 = vst.msk [vmem:[#allocation3 + $0x3c0] sm:$0xff] %vm1246, %v1211
        %1278 = vst.msk [vmem:[#allocation3 + $0x3e0] sm:$0xff] %vm1246, %v1213
        %v1279 = vld [vmem:[#allocation2 + $0x4] sm:$0xff]
        %v1280 = vld [vmem:[#allocation2 + $0xc] sm:$0xff]
        %v1281 = vld [vmem:[#allocation2 + $0x1c] sm:$0xff]
        %v1282 = vld [vmem:[#allocation2 + $0x24] sm:$0xff]
        %v1283 = vld [vmem:[#allocation2 + $0x34] sm:$0xff]
        %v1284 = vld [vmem:[#allocation2 + $0x3c] sm:$0xff]
        %v1285 = vld [vmem:[#allocation2 + $0x4c] sm:$0xff]
        %v1286 = vld [vmem:[#allocation2 + $0x54] sm:$0xff]
        %v1287 = vld [vmem:[#allocation2 + $0x64] sm:$0xff]
        %v1288 = vld [vmem:[#allocation2 + $0x6c] sm:$0xff]
        %v1289 = vld [vmem:[#allocation2 + $0x7c] sm:$0xff]
        %v1290 = vld [vmem:[#allocation2 + $0x84] sm:$0xff]
        %v1291 = vld [vmem:[#allocation2 + $0x94] sm:$0xff]
        %v1292 = vld [vmem:[#allocation2 + $0x9c] sm:$0xff]
        %v1293 = vld [vmem:[#allocation2 + $0xac] sm:$0xff]
        %v1294 = vld [vmem:[#allocation2 + $0xb4] sm:$0xff]
        %v1295 = vld [vmem:[#allocation2 + $0xc4] sm:$0xff]
        %v1296 = vld [vmem:[#allocation2 + $0xcc] sm:$0xff]
        %v1297 = vld [vmem:[#allocation2 + $0xdc] sm:$0xff]
        %v1298 = vld [vmem:[#allocation2 + $0xe4] sm:$0xff]
        %v1299 = vld [vmem:[#allocation2 + $0xf4] sm:$0xff]
        %v1300 = vld [vmem:[#allocation2 + $0xfc] sm:$0xff]
        %v1301 = vld [vmem:[#allocation2 + $0x10c] sm:$0xff]
        %v1302 = vld [vmem:[#allocation2 + $0x114] sm:$0xff]
        %v1303 = vld [vmem:[#allocation2 + $0x124] sm:$0xff]
        %v1304 = vld [vmem:[#allocation2 + $0x12c] sm:$0xff]
        %v1305 = vld [vmem:[#allocation2 + $0x13c] sm:$0xff]
        %v1306 = vld [vmem:[#allocation2 + $0x144] sm:$0xff]
        %v1307 = vld [vmem:[#allocation2 + $0x154] sm:$0xff]
        %v1308 = vld [vmem:[#allocation2 + $0x15c] sm:$0xff]
        %v1309 = vld [vmem:[#allocation2 + $0x16c] sm:$0xff]
        %v1310 = vld [vmem:[#allocation2 + $0x174] sm:$0xff]
        %1343 = vrot.lane.b32.xlu0 %v1279, 64
        %v1344 = vpop.permute.xlu0 %1343
        %1345 = vrot.lane.b32.xlu0 %v1280, 64
        %v1346 = vpop.permute.xlu0 %1345
        %1347 = vrot.lane.b32.xlu0 %v1281, 64
        %v1348 = vpop.permute.xlu0 %1347
        %1349 = vrot.lane.b32.xlu0 %v1282, 64
        %v1350 = vpop.permute.xlu0 %1349
        %1351 = vrot.lane.b32.xlu0 %v1283, 64
        %v1352 = vpop.permute.xlu0 %1351
        %1353 = vrot.lane.b32.xlu0 %v1284, 64
        %v1354 = vpop.permute.xlu0 %1353
        %1355 = vrot.lane.b32.xlu0 %v1285, 64
        %v1356 = vpop.permute.xlu0 %1355
        %1357 = vrot.lane.b32.xlu0 %v1286, 64
        %v1358 = vpop.permute.xlu0 %1357
        %1359 = vrot.lane.b32.xlu0 %v1287, 64
        %v1360 = vpop.permute.xlu0 %1359
        %1361 = vrot.lane.b32.xlu0 %v1288, 64
        %v1362 = vpop.permute.xlu0 %1361
        %1363 = vrot.lane.b32.xlu0 %v1289, 64
        %v1364 = vpop.permute.xlu0 %1363
        %1365 = vrot.lane.b32.xlu0 %v1290, 64
        %v1366 = vpop.permute.xlu0 %1365
        %1367 = vrot.lane.b32.xlu0 %v1291, 64
        %v1368 = vpop.permute.xlu0 %1367
        %1369 = vrot.lane.b32.xlu0 %v1292, 64
        %v1370 = vpop.permute.xlu0 %1369
        %1371 = vrot.lane.b32.xlu0 %v1293, 64
        %v1372 = vpop.permute.xlu0 %1371
        %1373 = vrot.lane.b32.xlu0 %v1294, 64
        %v1374 = vpop.permute.xlu0 %1373
        %1375 = vrot.lane.b32.xlu0 %v1295, 64
        %v1376 = vpop.permute.xlu0 %1375
        %1377 = vrot.lane.b32.xlu0 %v1296, 64
        %v1378 = vpop.permute.xlu0 %1377
        %1379 = vrot.lane.b32.xlu0 %v1297, 64
        %v1380 = vpop.permute.xlu0 %1379
        %1381 = vrot.lane.b32.xlu0 %v1298, 64
        %v1382 = vpop.permute.xlu0 %1381
        %1383 = vrot.lane.b32.xlu0 %v1299, 64
        %v1384 = vpop.permute.xlu0 %1383
        %1385 = vrot.lane.b32.xlu0 %v1300, 64
        %v1386 = vpop.permute.xlu0 %1385
        %1387 = vrot.lane.b32.xlu0 %v1301, 64
        %v1388 = vpop.permute.xlu0 %1387
        %1389 = vrot.lane.b32.xlu0 %v1302, 64
        %v1390 = vpop.permute.xlu0 %1389
        %1391 = vrot.lane.b32.xlu0 %v1303, 64
        %v1392 = vpop.permute.xlu0 %1391
        %1393 = vrot.lane.b32.xlu0 %v1304, 64
        %v1394 = vpop.permute.xlu0 %1393
        %1395 = vrot.lane.b32.xlu0 %v1305, 64
        %v1396 = vpop.permute.xlu0 %1395
        %1397 = vrot.lane.b32.xlu0 %v1306, 64
        %v1398 = vpop.permute.xlu0 %1397
        %1399 = vrot.lane.b32.xlu0 %v1307, 64
        %v1400 = vpop.permute.xlu0 %1399
        %1401 = vrot.lane.b32.xlu0 %v1308, 64
        %v1402 = vpop.permute.xlu0 %1401
        %1403 = vrot.lane.b32.xlu0 %v1309, 64
        %v1404 = vpop.permute.xlu0 %1403
        %1405 = vrot.lane.b32.xlu0 %v1310, 64
        %v1406 = vpop.permute.xlu0 %1405
        %vm1439 = vcmask 654848
        %1440 = vst.msk [vmem:[#allocation3] sm:$0xff] %vm1439, %v1344
        %1441 = vst.msk [vmem:[#allocation3 + $0x20] sm:$0xff] %vm1439, %v1346
        %1442 = vst.msk [vmem:[#allocation3 + $0x40] sm:$0xff] %vm1439, %v1348
        %1443 = vst.msk [vmem:[#allocation3 + $0x60] sm:$0xff] %vm1439, %v1350
        %1444 = vst.msk [vmem:[#allocation3 + $0x80] sm:$0xff] %vm1439, %v1352
        %1445 = vst.msk [vmem:[#allocation3 + $0xa0] sm:$0xff] %vm1439, %v1354
        %1446 = vst.msk [vmem:[#allocation3 + $0xc0] sm:$0xff] %vm1439, %v1356
        %1447 = vst.msk [vmem:[#allocation3 + $0xe0] sm:$0xff] %vm1439, %v1358
        %1448 = vst.msk [vmem:[#allocation3 + $0x100] sm:$0xff] %vm1439, %v1360
        %1449 = vst.msk [vmem:[#allocation3 + $0x120] sm:$0xff] %vm1439, %v1362
        %1450 = vst.msk [vmem:[#allocation3 + $0x140] sm:$0xff] %vm1439, %v1364
        %1451 = vst.msk [vmem:[#allocation3 + $0x160] sm:$0xff] %vm1439, %v1366
        %1452 = vst.msk [vmem:[#allocation3 + $0x180] sm:$0xff] %vm1439, %v1368
        %1453 = vst.msk [vmem:[#allocation3 + $0x1a0] sm:$0xff] %vm1439, %v1370
        %1454 = vst.msk [vmem:[#allocation3 + $0x1c0] sm:$0xff] %vm1439, %v1372
        %1455 = vst.msk [vmem:[#allocation3 + $0x1e0] sm:$0xff] %vm1439, %v1374
        %1456 = vst.msk [vmem:[#allocation3 + $0x200] sm:$0xff] %vm1439, %v1376
        %1457 = vst.msk [vmem:[#allocation3 + $0x220] sm:$0xff] %vm1439, %v1378
        %1458 = vst.msk [vmem:[#allocation3 + $0x240] sm:$0xff] %vm1439, %v1380
        %1459 = vst.msk [vmem:[#allocation3 + $0x260] sm:$0xff] %vm1439, %v1382
        %1460 = vst.msk [vmem:[#allocation3 + $0x280] sm:$0xff] %vm1439, %v1384
        %1461 = vst.msk [vmem:[#allocation3 + $0x2a0] sm:$0xff] %vm1439, %v1386
        %1462 = vst.msk [vmem:[#allocation3 + $0x2c0] sm:$0xff] %vm1439, %v1388
        %1463 = vst.msk [vmem:[#allocation3 + $0x2e0] sm:$0xff] %vm1439, %v1390
        %1464 = vst.msk [vmem:[#allocation3 + $0x300] sm:$0xff] %vm1439, %v1392
        %1465 = vst.msk [vmem:[#allocation3 + $0x320] sm:$0xff] %vm1439, %v1394
        %1466 = vst.msk [vmem:[#allocation3 + $0x340] sm:$0xff] %vm1439, %v1396
        %1467 = vst.msk [vmem:[#allocation3 + $0x360] sm:$0xff] %vm1439, %v1398
        %1468 = vst.msk [vmem:[#allocation3 + $0x380] sm:$0xff] %vm1439, %v1400
        %1469 = vst.msk [vmem:[#allocation3 + $0x3a0] sm:$0xff] %vm1439, %v1402
        %1470 = vst.msk [vmem:[#allocation3 + $0x3c0] sm:$0xff] %vm1439, %v1404
        %1471 = vst.msk [vmem:[#allocation3 + $0x3e0] sm:$0xff] %vm1439, %v1406
        %s1472 = scalar_lea.vmem [#allocation2], 24
        %v1473 = vld [vmem:[%s1472] sm:$0xff]
        %v1474 = vld [vmem:[%s1472 + $0x8] sm:$0xff]
        %v1475 = vld [vmem:[%s1472 + $0x18] sm:$0xff]
        %v1476 = vld [vmem:[%s1472 + $0x20] sm:$0xff]
        %v1477 = vld [vmem:[%s1472 + $0x30] sm:$0xff]
        %v1478 = vld [vmem:[%s1472 + $0x38] sm:$0xff]
        %v1479 = vld [vmem:[%s1472 + $0x48] sm:$0xff]
        %v1480 = vld [vmem:[%s1472 + $0x50] sm:$0xff]
        %v1481 = vld [vmem:[%s1472 + $0x60] sm:$0xff]
        %v1482 = vld [vmem:[%s1472 + $0x68] sm:$0xff]
        %v1483 = vld [vmem:[%s1472 + $0x78] sm:$0xff]
        %v1484 = vld [vmem:[%s1472 + $0x80] sm:$0xff]
        %v1485 = vld [vmem:[%s1472 + $0x90] sm:$0xff]
        %v1486 = vld [vmem:[%s1472 + $0x98] sm:$0xff]
        %v1487 = vld [vmem:[%s1472 + $0xa8] sm:$0xff]
        %v1488 = vld [vmem:[%s1472 + $0xb0] sm:$0xff]
        %v1489 = vld [vmem:[%s1472 + $0xc0] sm:$0xff]
        %v1490 = vld [vmem:[%s1472 + $0xc8] sm:$0xff]
        %v1491 = vld [vmem:[%s1472 + $0xd8] sm:$0xff]
        %v1492 = vld [vmem:[%s1472 + $0xe0] sm:$0xff]
        %v1493 = vld [vmem:[%s1472 + $0xf0] sm:$0xff]
        %v1494 = vld [vmem:[%s1472 + $0xf8] sm:$0xff]
        %v1495 = vld [vmem:[%s1472 + $0x108] sm:$0xff]
        %v1496 = vld [vmem:[%s1472 + $0x110] sm:$0xff]
        %v1497 = vld [vmem:[%s1472 + $0x120] sm:$0xff]
        %v1498 = vld [vmem:[%s1472 + $0x128] sm:$0xff]
        %v1499 = vld [vmem:[%s1472 + $0x138] sm:$0xff]
        %v1500 = vld [vmem:[%s1472 + $0x140] sm:$0xff]
        %v1501 = vld [vmem:[%s1472 + $0x150] sm:$0xff]
        %v1502 = vld [vmem:[%s1472 + $0x158] sm:$0xff]
        %v1503 = vld [vmem:[%s1472 + $0x168] sm:$0xff]
        %v1504 = vld [vmem:[%s1472 + $0x170] sm:$0xff]
        %1537 = vrot.lane.b32.xlu0 %v1473, 80
        %v1538 = vpop.permute.xlu0 %1537
        %1539 = vrot.lane.b32.xlu0 %v1474, 80
        %v1540 = vpop.permute.xlu0 %1539
        %1541 = vrot.lane.b32.xlu0 %v1475, 80
        %v1542 = vpop.permute.xlu0 %1541
        %1543 = vrot.lane.b32.xlu0 %v1476, 80
        %v1544 = vpop.permute.xlu0 %1543
        %1545 = vrot.lane.b32.xlu0 %v1477, 80
        %v1546 = vpop.permute.xlu0 %1545
        %1547 = vrot.lane.b32.xlu0 %v1478, 80
        %v1548 = vpop.permute.xlu0 %1547
        %1549 = vrot.lane.b32.xlu0 %v1479, 80
        %v1550 = vpop.permute.xlu0 %1549
        %1551 = vrot.lane.b32.xlu0 %v1480, 80
        %v1552 = vpop.permute.xlu0 %1551
        %1553 = vrot.lane.b32.xlu0 %v1481, 80
        %v1554 = vpop.permute.xlu0 %1553
        %1555 = vrot.lane.b32.xlu0 %v1482, 80
        %v1556 = vpop.permute.xlu0 %1555
        %1557 = vrot.lane.b32.xlu0 %v1483, 80
        %v1558 = vpop.permute.xlu0 %1557
        %1559 = vrot.lane.b32.xlu0 %v1484, 80
        %v1560 = vpop.permute.xlu0 %1559
        %1561 = vrot.lane.b32.xlu0 %v1485, 80
        %v1562 = vpop.permute.xlu0 %1561
        %1563 = vrot.lane.b32.xlu0 %v1486, 80
        %v1564 = vpop.permute.xlu0 %1563
        %1565 = vrot.lane.b32.xlu0 %v1487, 80
        %v1566 = vpop.permute.xlu0 %1565
        %1567 = vrot.lane.b32.xlu0 %v1488, 80
        %v1568 = vpop.permute.xlu0 %1567
        %1569 = vrot.lane.b32.xlu0 %v1489, 80
        %v1570 = vpop.permute.xlu0 %1569
        %1571 = vrot.lane.b32.xlu0 %v1490, 80
        %v1572 = vpop.permute.xlu0 %1571
        %1573 = vrot.lane.b32.xlu0 %v1491, 80
        %v1574 = vpop.permute.xlu0 %1573
        %1575 = vrot.lane.b32.xlu0 %v1492, 80
        %v1576 = vpop.permute.xlu0 %1575
        %1577 = vrot.lane.b32.xlu0 %v1493, 80
        %v1578 = vpop.permute.xlu0 %1577
        %1579 = vrot.lane.b32.xlu0 %v1494, 80
        %v1580 = vpop.permute.xlu0 %1579
        %1581 = vrot.lane.b32.xlu0 %v1495, 80
        %v1582 = vpop.permute.xlu0 %1581
        %1583 = vrot.lane.b32.xlu0 %v1496, 80
        %v1584 = vpop.permute.xlu0 %1583
        %1585 = vrot.lane.b32.xlu0 %v1497, 80
        %v1586 = vpop.permute.xlu0 %1585
        %1587 = vrot.lane.b32.xlu0 %v1498, 80
        %v1588 = vpop.permute.xlu0 %1587
        %1589 = vrot.lane.b32.xlu0 %v1499, 80
        %v1590 = vpop.permute.xlu0 %1589
        %1591 = vrot.lane.b32.xlu0 %v1500, 80
        %v1592 = vpop.permute.xlu0 %1591
        %1593 = vrot.lane.b32.xlu0 %v1501, 80
        %v1594 = vpop.permute.xlu0 %1593
        %1595 = vrot.lane.b32.xlu0 %v1502, 80
        %v1596 = vpop.permute.xlu0 %1595
        %1597 = vrot.lane.b32.xlu0 %v1503, 80
        %v1598 = vpop.permute.xlu0 %1597
        %1599 = vrot.lane.b32.xlu0 %v1504, 80
        %v1600 = vpop.permute.xlu0 %1599
        %vm1633 = vcmask 786048
        %1634 = vst.msk [vmem:[#allocation3] sm:$0xff] %vm1633, %v1538
        %1635 = vst.msk [vmem:[#allocation3 + $0x20] sm:$0xff] %vm1633, %v1540
        %1636 = vst.msk [vmem:[#allocation3 + $0x40] sm:$0xff] %vm1633, %v1542
        %1637 = vst.msk [vmem:[#allocation3 + $0x60] sm:$0xff] %vm1633, %v1544
        %1638 = vst.msk [vmem:[#allocation3 + $0x80] sm:$0xff] %vm1633, %v1546
        %1639 = vst.msk [vmem:[#allocation3 + $0xa0] sm:$0xff] %vm1633, %v1548
        %1640 = vst.msk [vmem:[#allocation3 + $0xc0] sm:$0xff] %vm1633, %v1550
        %1641 = vst.msk [vmem:[#allocation3 + $0xe0] sm:$0xff] %vm1633, %v1552
        %1642 = vst.msk [vmem:[#allocation3 + $0x100] sm:$0xff] %vm1633, %v1554
        %1643 = vst.msk [vmem:[#allocation3 + $0x120] sm:$0xff] %vm1633, %v1556
        %1644 = vst.msk [vmem:[#allocation3 + $0x140] sm:$0xff] %vm1633, %v1558
        %1645 = vst.msk [vmem:[#allocation3 + $0x160] sm:$0xff] %vm1633, %v1560
        %1646 = vst.msk [vmem:[#allocation3 + $0x180] sm:$0xff] %vm1633, %v1562
        %1647 = vst.msk [vmem:[#allocation3 + $0x1a0] sm:$0xff] %vm1633, %v1564
        %1648 = vst.msk [vmem:[#allocation3 + $0x1c0] sm:$0xff] %vm1633, %v1566
        %1649 = vst.msk [vmem:[#allocation3 + $0x1e0] sm:$0xff] %vm1633, %v1568
        %1650 = vst.msk [vmem:[#allocation3 + $0x200] sm:$0xff] %vm1633, %v1570
        %1651 = vst.msk [vmem:[#allocation3 + $0x220] sm:$0xff] %vm1633, %v1572
        %1652 = vst.msk [vmem:[#allocation3 + $0x240] sm:$0xff] %vm1633, %v1574
        %1653 = vst.msk [vmem:[#allocation3 + $0x260] sm:$0xff] %vm1633, %v1576
        %1654 = vst.msk [vmem:[#allocation3 + $0x280] sm:$0xff] %vm1633, %v1578
        %1655 = vst.msk [vmem:[#allocation3 + $0x2a0] sm:$0xff] %vm1633, %v1580
        %1656 = vst.msk [vmem:[#allocation3 + $0x2c0] sm:$0xff] %vm1633, %v1582
        %1657 = vst.msk [vmem:[#allocation3 + $0x2e0] sm:$0xff] %vm1633, %v1584
        %1658 = vst.msk [vmem:[#allocation3 + $0x300] sm:$0xff] %vm1633, %v1586
        %1659 = vst.msk [vmem:[#allocation3 + $0x320] sm:$0xff] %vm1633, %v1588
        %1660 = vst.msk [vmem:[#allocation3 + $0x340] sm:$0xff] %vm1633, %v1590
        %1661 = vst.msk [vmem:[#allocation3 + $0x360] sm:$0xff] %vm1633, %v1592
        %1662 = vst.msk [vmem:[#allocation3 + $0x380] sm:$0xff] %vm1633, %v1594
        %1663 = vst.msk [vmem:[#allocation3 + $0x3a0] sm:$0xff] %vm1633, %v1596
        %1664 = vst.msk [vmem:[#allocation3 + $0x3c0] sm:$0xff] %vm1633, %v1598
        %1665 = vst.msk [vmem:[#allocation3 + $0x3e0] sm:$0xff] %vm1633, %v1600
        %v1666 = vld [vmem:[%s1472 + $0x1] sm:$0xff]
        %v1667 = vld [vmem:[%s1472 + $0x9] sm:$0xff]
        %v1668 = vld [vmem:[%s1472 + $0x19] sm:$0xff]
        %v1669 = vld [vmem:[%s1472 + $0x21] sm:$0xff]
        %v1670 = vld [vmem:[%s1472 + $0x31] sm:$0xff]
        %v1671 = vld [vmem:[%s1472 + $0x39] sm:$0xff]
        %v1672 = vld [vmem:[%s1472 + $0x49] sm:$0xff]
        %v1673 = vld [vmem:[%s1472 + $0x51] sm:$0xff]
        %v1674 = vld [vmem:[%s1472 + $0x61] sm:$0xff]
        %v1675 = vld [vmem:[%s1472 + $0x69] sm:$0xff]
        %v1676 = vld [vmem:[%s1472 + $0x79] sm:$0xff]
        %v1677 = vld [vmem:[%s1472 + $0x81] sm:$0xff]
        %v1678 = vld [vmem:[%s1472 + $0x91] sm:$0xff]
        %v1679 = vld [vmem:[%s1472 + $0x99] sm:$0xff]
        %v1680 = vld [vmem:[%s1472 + $0xa9] sm:$0xff]
        %v1681 = vld [vmem:[%s1472 + $0xb1] sm:$0xff]
        %v1682 = vld [vmem:[%s1472 + $0xc1] sm:$0xff]
        %v1683 = vld [vmem:[%s1472 + $0xc9] sm:$0xff]
        %v1684 = vld [vmem:[%s1472 + $0xd9] sm:$0xff]
        %v1685 = vld [vmem:[%s1472 + $0xe1] sm:$0xff]
        %v1686 = vld [vmem:[%s1472 + $0xf1] sm:$0xff]
        %v1687 = vld [vmem:[%s1472 + $0xf9] sm:$0xff]
        %v1688 = vld [vmem:[%s1472 + $0x109] sm:$0xff]
        %v1689 = vld [vmem:[%s1472 + $0x111] sm:$0xff]
        %v1690 = vld [vmem:[%s1472 + $0x121] sm:$0xff]
        %v1691 = vld [vmem:[%s1472 + $0x129] sm:$0xff]
        %v1692 = vld [vmem:[%s1472 + $0x139] sm:$0xff]
        %v1693 = vld [vmem:[%s1472 + $0x141] sm:$0xff]
        %v1694 = vld [vmem:[%s1472 + $0x151] sm:$0xff]
        %v1695 = vld [vmem:[%s1472 + $0x159] sm:$0xff]
        %v1696 = vld [vmem:[%s1472 + $0x169] sm:$0xff]
        %v1697 = vld [vmem:[%s1472 + $0x171] sm:$0xff]
        %1730 = vrot.lane.b32.xlu0 %v1666, 96
        %v1731 = vpop.permute.xlu0 %1730
        %1732 = vrot.lane.b32.xlu0 %v1667, 96
        %v1733 = vpop.permute.xlu0 %1732
        %1734 = vrot.lane.b32.xlu0 %v1668, 96
        %v1735 = vpop.permute.xlu0 %1734
        %1736 = vrot.lane.b32.xlu0 %v1669, 96
        %v1737 = vpop.permute.xlu0 %1736
        %1738 = vrot.lane.b32.xlu0 %v1670, 96
        %v1739 = vpop.permute.xlu0 %1738
        %1740 = vrot.lane.b32.xlu0 %v1671, 96
        %v1741 = vpop.permute.xlu0 %1740
        %1742 = vrot.lane.b32.xlu0 %v1672, 96
        %v1743 = vpop.permute.xlu0 %1742
        %1744 = vrot.lane.b32.xlu0 %v1673, 96
        %v1745 = vpop.permute.xlu0 %1744
        %1746 = vrot.lane.b32.xlu0 %v1674, 96
        %v1747 = vpop.permute.xlu0 %1746
        %1748 = vrot.lane.b32.xlu0 %v1675, 96
        %v1749 = vpop.permute.xlu0 %1748
        %1750 = vrot.lane.b32.xlu0 %v1676, 96
        %v1751 = vpop.permute.xlu0 %1750
        %1752 = vrot.lane.b32.xlu0 %v1677, 96
        %v1753 = vpop.permute.xlu0 %1752
        %1754 = vrot.lane.b32.xlu0 %v1678, 96
        %v1755 = vpop.permute.xlu0 %1754
        %1756 = vrot.lane.b32.xlu0 %v1679, 96
        %v1757 = vpop.permute.xlu0 %1756
        %1758 = vrot.lane.b32.xlu0 %v1680, 96
        %v1759 = vpop.permute.xlu0 %1758
        %1760 = vrot.lane.b32.xlu0 %v1681, 96
        %v1761 = vpop.permute.xlu0 %1760
        %1762 = vrot.lane.b32.xlu0 %v1682, 96
        %v1763 = vpop.permute.xlu0 %1762
        %1764 = vrot.lane.b32.xlu0 %v1683, 96
        %v1765 = vpop.permute.xlu0 %1764
        %1766 = vrot.lane.b32.xlu0 %v1684, 96
        %v1767 = vpop.permute.xlu0 %1766
        %1768 = vrot.lane.b32.xlu0 %v1685, 96
        %v1769 = vpop.permute.xlu0 %1768
        %1770 = vrot.lane.b32.xlu0 %v1686, 96
        %v1771 = vpop.permute.xlu0 %1770
        %1772 = vrot.lane.b32.xlu0 %v1687, 96
        %v1773 = vpop.permute.xlu0 %1772
        %1774 = vrot.lane.b32.xlu0 %v1688, 96
        %v1775 = vpop.permute.xlu0 %1774
        %1776 = vrot.lane.b32.xlu0 %v1689, 96
        %v1777 = vpop.permute.xlu0 %1776
        %1778 = vrot.lane.b32.xlu0 %v1690, 96
        %v1779 = vpop.permute.xlu0 %1778
        %1780 = vrot.lane.b32.xlu0 %v1691, 96
        %v1781 = vpop.permute.xlu0 %1780
        %1782 = vrot.lane.b32.xlu0 %v1692, 96
        %v1783 = vpop.permute.xlu0 %1782
        %1784 = vrot.lane.b32.xlu0 %v1693, 96
        %v1785 = vpop.permute.xlu0 %1784
        %1786 = vrot.lane.b32.xlu0 %v1694, 96
        %v1787 = vpop.permute.xlu0 %1786
        %1788 = vrot.lane.b32.xlu0 %v1695, 96
        %v1789 = vpop.permute.xlu0 %1788
        %1790 = vrot.lane.b32.xlu0 %v1696, 96
        %v1791 = vpop.permute.xlu0 %1790
        %1792 = vrot.lane.b32.xlu0 %v1697, 96
        %v1793 = vpop.permute.xlu0 %1792
        %vm1826 = vcmask 917248
        %1827 = vst.msk [vmem:[#allocation3] sm:$0xff] %vm1826, %v1731
        %1828 = vst.msk [vmem:[#allocation3 + $0x20] sm:$0xff] %vm1826, %v1733
        %1829 = vst.msk [vmem:[#allocation3 + $0x40] sm:$0xff] %vm1826, %v1735
        %1830 = vst.msk [vmem:[#allocation3 + $0x60] sm:$0xff] %vm1826, %v1737
        %1831 = vst.msk [vmem:[#allocation3 + $0x80] sm:$0xff] %vm1826, %v1739
        %1832 = vst.msk [vmem:[#allocation3 + $0xa0] sm:$0xff] %vm1826, %v1741
        %1833 = vst.msk [vmem:[#allocation3 + $0xc0] sm:$0xff] %vm1826, %v1743
        %1834 = vst.msk [vmem:[#allocation3 + $0xe0] sm:$0xff] %vm1826, %v1745
        %1835 = vst.msk [vmem:[#allocation3 + $0x100] sm:$0xff] %vm1826, %v1747
        %1836 = vst.msk [vmem:[#allocation3 + $0x120] sm:$0xff] %vm1826, %v1749
        %1837 = vst.msk [vmem:[#allocation3 + $0x140] sm:$0xff] %vm1826, %v1751
        %1838 = vst.msk [vmem:[#allocation3 + $0x160] sm:$0xff] %vm1826, %v1753
        %1839 = vst.msk [vmem:[#allocation3 + $0x180] sm:$0xff] %vm1826, %v1755
        %1840 = vst.msk [vmem:[#allocation3 + $0x1a0] sm:$0xff] %vm1826, %v1757
        %1841 = vst.msk [vmem:[#allocation3 + $0x1c0] sm:$0xff] %vm1826, %v1759
        %1842 = vst.msk [vmem:[#allocation3 + $0x1e0] sm:$0xff] %vm1826, %v1761
        %1843 = vst.msk [vmem:[#allocation3 + $0x200] sm:$0xff] %vm1826, %v1763
        %1844 = vst.msk [vmem:[#allocation3 + $0x220] sm:$0xff] %vm1826, %v1765
        %1845 = vst.msk [vmem:[#allocation3 + $0x240] sm:$0xff] %vm1826, %v1767
        %1846 = vst.msk [vmem:[#allocation3 + $0x260] sm:$0xff] %vm1826, %v1769
        %1847 = vst.msk [vmem:[#allocation3 + $0x280] sm:$0xff] %vm1826, %v1771
        %1848 = vst.msk [vmem:[#allocation3 + $0x2a0] sm:$0xff] %vm1826, %v1773
        %1849 = vst.msk [vmem:[#allocation3 + $0x2c0] sm:$0xff] %vm1826, %v1775
        %1850 = vst.msk [vmem:[#allocation3 + $0x2e0] sm:$0xff] %vm1826, %v1777
        %1851 = vst.msk [vmem:[#allocation3 + $0x300] sm:$0xff] %vm1826, %v1779
        %1852 = vst.msk [vmem:[#allocation3 + $0x320] sm:$0xff] %vm1826, %v1781
        %1853 = vst.msk [vmem:[#allocation3 + $0x340] sm:$0xff] %vm1826, %v1783
        %1854 = vst.msk [vmem:[#allocation3 + $0x360] sm:$0xff] %vm1826, %v1785
        %1855 = vst.msk [vmem:[#allocation3 + $0x380] sm:$0xff] %vm1826, %v1787
        %1856 = vst.msk [vmem:[#allocation3 + $0x3a0] sm:$0xff] %vm1826, %v1789
        %1857 = vst.msk [vmem:[#allocation3 + $0x3c0] sm:$0xff] %vm1826, %v1791
        %1858 = vst.msk [vmem:[#allocation3 + $0x3e0] sm:$0xff] %vm1826, %v1793
        %v1859 = vld [vmem:[%s1472 + $0x2] sm:$0xff]
        %v1860 = vld [vmem:[%s1472 + $0xa] sm:$0xff]
        %v1861 = vld [vmem:[%s1472 + $0x1a] sm:$0xff]
        %v1862 = vld [vmem:[%s1472 + $0x22] sm:$0xff]
        %v1863 = vld [vmem:[%s1472 + $0x32] sm:$0xff]
        %v1864 = vld [vmem:[%s1472 + $0x3a] sm:$0xff]
        %v1865 = vld [vmem:[%s1472 + $0x4a] sm:$0xff]
        %v1866 = vld [vmem:[%s1472 + $0x52] sm:$0xff]
        %v1867 = vld [vmem:[%s1472 + $0x62] sm:$0xff]
        %v1868 = vld [vmem:[%s1472 + $0x6a] sm:$0xff]
        %v1869 = vld [vmem:[%s1472 + $0x7a] sm:$0xff]
        %v1870 = vld [vmem:[%s1472 + $0x82] sm:$0xff]
        %v1871 = vld [vmem:[%s1472 + $0x92] sm:$0xff]
        %v1872 = vld [vmem:[%s1472 + $0x9a] sm:$0xff]
        %v1873 = vld [vmem:[%s1472 + $0xaa] sm:$0xff]
        %v1874 = vld [vmem:[%s1472 + $0xb2] sm:$0xff]
        %v1875 = vld [vmem:[%s1472 + $0xc2] sm:$0xff]
        %v1876 = vld [vmem:[%s1472 + $0xca] sm:$0xff]
        %v1877 = vld [vmem:[%s1472 + $0xda] sm:$0xff]
        %v1878 = vld [vmem:[%s1472 + $0xe2] sm:$0xff]
        %v1879 = vld [vmem:[%s1472 + $0xf2] sm:$0xff]
        %v1880 = vld [vmem:[%s1472 + $0xfa] sm:$0xff]
        %v1881 = vld [vmem:[%s1472 + $0x10a] sm:$0xff]
        %v1882 = vld [vmem:[%s1472 + $0x112] sm:$0xff]
        %v1883 = vld [vmem:[%s1472 + $0x122] sm:$0xff]
        %v1884 = vld [vmem:[%s1472 + $0x12a] sm:$0xff]
        %v1885 = vld [vmem:[%s1472 + $0x13a] sm:$0xff]
        %v1886 = vld [vmem:[%s1472 + $0x142] sm:$0xff]
        %v1887 = vld [vmem:[%s1472 + $0x152] sm:$0xff]
        %v1888 = vld [vmem:[%s1472 + $0x15a] sm:$0xff]
        %v1889 = vld [vmem:[%s1472 + $0x16a] sm:$0xff]
        %v1890 = vld [vmem:[%s1472 + $0x172] sm:$0xff]
        %1923 = vrot.lane.b32.xlu0 %v1859, 112
        %v1924 = vpop.permute.xlu0 %1923
        %1925 = vrot.lane.b32.xlu0 %v1860, 112
        %v1926 = vpop.permute.xlu0 %1925
        %1927 = vrot.lane.b32.xlu0 %v1861, 112
        %v1928 = vpop.permute.xlu0 %1927
        %1929 = vrot.lane.b32.xlu0 %v1862, 112
        %v1930 = vpop.permute.xlu0 %1929
        %1931 = vrot.lane.b32.xlu0 %v1863, 112
        %v1932 = vpop.permute.xlu0 %1931
        %1933 = vrot.lane.b32.xlu0 %v1864, 112
        %v1934 = vpop.permute.xlu0 %1933
        %1935 = vrot.lane.b32.xlu0 %v1865, 112
        %v1936 = vpop.permute.xlu0 %1935
        %1937 = vrot.lane.b32.xlu0 %v1866, 112
        %v1938 = vpop.permute.xlu0 %1937
        %1939 = vrot.lane.b32.xlu0 %v1867, 112
        %v1940 = vpop.permute.xlu0 %1939
        %1941 = vrot.lane.b32.xlu0 %v1868, 112
        %v1942 = vpop.permute.xlu0 %1941
        %1943 = vrot.lane.b32.xlu0 %v1869, 112
        %v1944 = vpop.permute.xlu0 %1943
        %1945 = vrot.lane.b32.xlu0 %v1870, 112
        %v1946 = vpop.permute.xlu0 %1945
        %1947 = vrot.lane.b32.xlu0 %v1871, 112
        %v1948 = vpop.permute.xlu0 %1947
        %1949 = vrot.lane.b32.xlu0 %v1872, 112
        %v1950 = vpop.permute.xlu0 %1949
        %1951 = vrot.lane.b32.xlu0 %v1873, 112
        %v1952 = vpop.permute.xlu0 %1951
        %1953 = vrot.lane.b32.xlu0 %v1874, 112
        %v1954 = vpop.permute.xlu0 %1953
        %1955 = vrot.lane.b32.xlu0 %v1875, 112
        %v1956 = vpop.permute.xlu0 %1955
        %1957 = vrot.lane.b32.xlu0 %v1876, 112
        %v1958 = vpop.permute.xlu0 %1957
        %1959 = vrot.lane.b32.xlu0 %v1877, 112
        %v1960 = vpop.permute.xlu0 %1959
        %1961 = vrot.lane.b32.xlu0 %v1878, 112
        %v1962 = vpop.permute.xlu0 %1961
        %1963 = vrot.lane.b32.xlu0 %v1879, 112
        %v1964 = vpop.permute.xlu0 %1963
        %1965 = vrot.lane.b32.xlu0 %v1880, 112
        %v1966 = vpop.permute.xlu0 %1965
        %1967 = vrot.lane.b32.xlu0 %v1881, 112
        %v1968 = vpop.permute.xlu0 %1967
        %1969 = vrot.lane.b32.xlu0 %v1882, 112
        %v1970 = vpop.permute.xlu0 %1969
        %1971 = vrot.lane.b32.xlu0 %v1883, 112
        %v1972 = vpop.permute.xlu0 %1971
        %1973 = vrot.lane.b32.xlu0 %v1884, 112
        %v1974 = vpop.permute.xlu0 %1973
        %1975 = vrot.lane.b32.xlu0 %v1885, 112
        %v1976 = vpop.permute.xlu0 %1975
        %1977 = vrot.lane.b32.xlu0 %v1886, 112
        %v1978 = vpop.permute.xlu0 %1977
        %1979 = vrot.lane.b32.xlu0 %v1887, 112
        %v1980 = vpop.permute.xlu0 %1979
        %1981 = vrot.lane.b32.xlu0 %v1888, 112
        %v1982 = vpop.permute.xlu0 %1981
        %1983 = vrot.lane.b32.xlu0 %v1889, 112
        %v1984 = vpop.permute.xlu0 %1983
        %1985 = vrot.lane.b32.xlu0 %v1890, 112
        %v1986 = vpop.permute.xlu0 %1985
        %vm2019 = vcmask 1048448
        %2020 = vst.msk [vmem:[#allocation3] sm:$0xff] %vm2019, %v1924
        %2021 = vst.msk [vmem:[#allocation3 + $0x20] sm:$0xff] %vm2019, %v1926
        %2022 = vst.msk [vmem:[#allocation3 + $0x40] sm:$0xff] %vm2019, %v1928
        %2023 = vst.msk [vmem:[#allocation3 + $0x60] sm:$0xff] %vm2019, %v1930
        %2024 = vst.msk [vmem:[#allocation3 + $0x80] sm:$0xff] %vm2019, %v1932
        %2025 = vst.msk [vmem:[#allocation3 + $0xa0] sm:$0xff] %vm2019, %v1934
        %2026 = vst.msk [vmem:[#allocation3 + $0xc0] sm:$0xff] %vm2019, %v1936
        %2027 = vst.msk [vmem:[#allocation3 + $0xe0] sm:$0xff] %vm2019, %v1938
        %2028 = vst.msk [vmem:[#allocation3 + $0x100] sm:$0xff] %vm2019, %v1940
        %2029 = vst.msk [vmem:[#allocation3 + $0x120] sm:$0xff] %vm2019, %v1942
        %2030 = vst.msk [vmem:[#allocation3 + $0x140] sm:$0xff] %vm2019, %v1944
        %2031 = vst.msk [vmem:[#allocation3 + $0x160] sm:$0xff] %vm2019, %v1946
        %2032 = vst.msk [vmem:[#allocation3 + $0x180] sm:$0xff] %vm2019, %v1948
        %2033 = vst.msk [vmem:[#allocation3 + $0x1a0] sm:$0xff] %vm2019, %v1950
        %2034 = vst.msk [vmem:[#allocation3 + $0x1c0] sm:$0xff] %vm2019, %v1952
        %2035 = vst.msk [vmem:[#allocation3 + $0x1e0] sm:$0xff] %vm2019, %v1954
        %2036 = vst.msk [vmem:[#allocation3 + $0x200] sm:$0xff] %vm2019, %v1956
        %2037 = vst.msk [vmem:[#allocation3 + $0x220] sm:$0xff] %vm2019, %v1958
        %2038 = vst.msk [vmem:[#allocation3 + $0x240] sm:$0xff] %vm2019, %v1960
        %2039 = vst.msk [vmem:[#allocation3 + $0x260] sm:$0xff] %vm2019, %v1962
        %2040 = vst.msk [vmem:[#allocation3 + $0x280] sm:$0xff] %vm2019, %v1964
        %2041 = vst.msk [vmem:[#allocation3 + $0x2a0] sm:$0xff] %vm2019, %v1966
        %2042 = vst.msk [vmem:[#allocation3 + $0x2c0] sm:$0xff] %vm2019, %v1968
        %2043 = vst.msk [vmem:[#allocation3 + $0x2e0] sm:$0xff] %vm2019, %v1970
        %2044 = vst.msk [vmem:[#allocation3 + $0x300] sm:$0xff] %vm2019, %v1972
        %2045 = vst.msk [vmem:[#allocation3 + $0x320] sm:$0xff] %vm2019, %v1974
        %2046 = vst.msk [vmem:[#allocation3 + $0x340] sm:$0xff] %vm2019, %v1976
        %2047 = vst.msk [vmem:[#allocation3 + $0x360] sm:$0xff] %vm2019, %v1978
        %2048 = vst.msk [vmem:[#allocation3 + $0x380] sm:$0xff] %vm2019, %v1980
        %2049 = vst.msk [vmem:[#allocation3 + $0x3a0] sm:$0xff] %vm2019, %v1982
        %2050 = vst.msk [vmem:[#allocation3 + $0x3c0] sm:$0xff] %vm2019, %v1984
        %2051 = vst.msk [vmem:[#allocation3 + $0x3e0] sm:$0xff] %vm2019, %v1986
        %v2052 = vld [vmem:[%s1472 + $0x3] sm:$0xff]
        %v2053 = vld [vmem:[%s1472 + $0xb] sm:$0xff]
        %v2054 = vld [vmem:[%s1472 + $0x1b] sm:$0xff]
        %v2055 = vld [vmem:[%s1472 + $0x23] sm:$0xff]
        %v2056 = vld [vmem:[%s1472 + $0x33] sm:$0xff]
        %v2057 = vld [vmem:[%s1472 + $0x3b] sm:$0xff]
        %v2058 = vld [vmem:[%s1472 + $0x4b] sm:$0xff]
        %v2059 = vld [vmem:[%s1472 + $0x53] sm:$0xff]
        %v2060 = vld [vmem:[%s1472 + $0x63] sm:$0xff]
        %v2061 = vld [vmem:[%s1472 + $0x6b] sm:$0xff]
        %v2062 = vld [vmem:[%s1472 + $0x7b] sm:$0xff]
        %v2063 = vld [vmem:[%s1472 + $0x83] sm:$0xff]
        %v2064 = vld [vmem:[%s1472 + $0x93] sm:$0xff]
        %v2065 = vld [vmem:[%s1472 + $0x9b] sm:$0xff]
        %v2066 = vld [vmem:[%s1472 + $0xab] sm:$0xff]
        %v2067 = vld [vmem:[%s1472 + $0xb3] sm:$0xff]
        %v2068 = vld [vmem:[%s1472 + $0xc3] sm:$0xff]
        %v2069 = vld [vmem:[%s1472 + $0xcb] sm:$0xff]
        %v2070 = vld [vmem:[%s1472 + $0xdb] sm:$0xff]
        %v2071 = vld [vmem:[%s1472 + $0xe3] sm:$0xff]
        %v2072 = vld [vmem:[%s1472 + $0xf3] sm:$0xff]
        %v2073 = vld [vmem:[%s1472 + $0xfb] sm:$0xff]
        %v2074 = vld [vmem:[%s1472 + $0x10b] sm:$0xff]
        %v2075 = vld [vmem:[%s1472 + $0x113] sm:$0xff]
        %v2076 = vld [vmem:[%s1472 + $0x123] sm:$0xff]
        %v2077 = vld [vmem:[%s1472 + $0x12b] sm:$0xff]
        %v2078 = vld [vmem:[%s1472 + $0x13b] sm:$0xff]
        %v2079 = vld [vmem:[%s1472 + $0x143] sm:$0xff]
        %v2080 = vld [vmem:[%s1472 + $0x153] sm:$0xff]
        %v2081 = vld [vmem:[%s1472 + $0x15b] sm:$0xff]
        %v2082 = vld [vmem:[%s1472 + $0x16b] sm:$0xff]
        %v2083 = vld [vmem:[%s1472 + $0x173] sm:$0xff]
        %2084 = vst.msk [vmem:[#allocation3 + $0x8] sm:$0xff] %vm509, %v2052
        %2085 = vst.msk [vmem:[#allocation3 + $0x28] sm:$0xff] %vm509, %v2053
        %2086 = vst.msk [vmem:[#allocation3 + $0x48] sm:$0xff] %vm509, %v2054
        %2087 = vst.msk [vmem:[#allocation3 + $0x68] sm:$0xff] %vm509, %v2055
        %2088 = vst.msk [vmem:[#allocation3 + $0x88] sm:$0xff] %vm509, %v2056
        %2089 = vst.msk [vmem:[#allocation3 + $0xa8] sm:$0xff] %vm509, %v2057
        %2090 = vst.msk [vmem:[#allocation3 + $0xc8] sm:$0xff] %vm509, %v2058
        %2091 = vst.msk [vmem:[#allocation3 + $0xe8] sm:$0xff] %vm509, %v2059
        %2092 = vst.msk [vmem:[#allocation3 + $0x108] sm:$0xff] %vm509, %v2060
        %2093 = vst.msk [vmem:[#allocation3 + $0x128] sm:$0xff] %vm509, %v2061
        %2094 = vst.msk [vmem:[#allocation3 + $0x148] sm:$0xff] %vm509, %v2062
        %2095 = vst.msk [vmem:[#allocation3 + $0x168] sm:$0xff] %vm509, %v2063
        %2096 = vst.msk [vmem:[#allocation3 + $0x188] sm:$0xff] %vm509, %v2064
        %2097 = vst.msk [vmem:[#allocation3 + $0x1a8] sm:$0xff] %vm509, %v2065
        %2098 = vst.msk [vmem:[#allocation3 + $0x1c8] sm:$0xff] %vm509, %v2066
        %2099 = vst.msk [vmem:[#allocation3 + $0x1e8] sm:$0xff] %vm509, %v2067
        %2100 = vst.msk [vmem:[#allocation3 + $0x208] sm:$0xff] %vm509, %v2068
        %2101 = vst.msk [vmem:[#allocation3 + $0x228] sm:$0xff] %vm509, %v2069
        %2102 = vst.msk [vmem:[#allocation3 + $0x248] sm:$0xff] %vm509, %v2070
        %2103 = vst.msk [vmem:[#allocation3 + $0x268] sm:$0xff] %vm509, %v2071
        %2104 = vst.msk [vmem:[#allocation3 + $0x288] sm:$0xff] %vm509, %v2072
        %2105 = vst.msk [vmem:[#allocation3 + $0x2a8] sm:$0xff] %vm509, %v2073
        %2106 = vst.msk [vmem:[#allocation3 + $0x2c8] sm:$0xff] %vm509, %v2074
        %2107 = vst.msk [vmem:[#allocation3 + $0x2e8] sm:$0xff] %vm509, %v2075
        %2108 = vst.msk [vmem:[#allocation3 + $0x308] sm:$0xff] %vm509, %v2076
        %2109 = vst.msk [vmem:[#allocation3 + $0x328] sm:$0xff] %vm509, %v2077
        %2110 = vst.msk [vmem:[#allocation3 + $0x348] sm:$0xff] %vm509, %v2078
        %2111 = vst.msk [vmem:[#allocation3 + $0x368] sm:$0xff] %vm509, %v2079
        %2112 = vst.msk [vmem:[#allocation3 + $0x388] sm:$0xff] %vm509, %v2080
        %2113 = vst.msk [vmem:[#allocation3 + $0x3a8] sm:$0xff] %vm509, %v2081
        %2114 = vst.msk [vmem:[#allocation3 + $0x3c8] sm:$0xff] %vm509, %v2082
        %2115 = vst.msk [vmem:[#allocation3 + $0x3e8] sm:$0xff] %vm509, %v2083
        %v2116 = vld [vmem:[%s1472 + $0x4] sm:$0xff]
        %v2117 = vld [vmem:[%s1472 + $0xc] sm:$0xff]
        %v2118 = vld [vmem:[%s1472 + $0x1c] sm:$0xff]
        %v2119 = vld [vmem:[%s1472 + $0x24] sm:$0xff]
        %v2120 = vld [vmem:[%s1472 + $0x34] sm:$0xff]
        %v2121 = vld [vmem:[%s1472 + $0x3c] sm:$0xff]
        %v2122 = vld [vmem:[%s1472 + $0x4c] sm:$0xff]
        %v2123 = vld [vmem:[%s1472 + $0x54] sm:$0xff]
        %v2124 = vld [vmem:[%s1472 + $0x64] sm:$0xff]
        %v2125 = vld [vmem:[%s1472 + $0x6c] sm:$0xff]
        %v2126 = vld [vmem:[%s1472 + $0x7c] sm:$0xff]
        %v2127 = vld [vmem:[%s1472 + $0x84] sm:$0xff]
        %v2128 = vld [vmem:[%s1472 + $0x94] sm:$0xff]
        %v2129 = vld [vmem:[%s1472 + $0x9c] sm:$0xff]
        %v2130 = vld [vmem:[%s1472 + $0xac] sm:$0xff]
        %v2131 = vld [vmem:[%s1472 + $0xb4] sm:$0xff]
        %v2132 = vld [vmem:[%s1472 + $0xc4] sm:$0xff]
        %v2133 = vld [vmem:[%s1472 + $0xcc] sm:$0xff]
        %v2134 = vld [vmem:[%s1472 + $0xdc] sm:$0xff]
        %v2135 = vld [vmem:[%s1472 + $0xe4] sm:$0xff]
        %v2136 = vld [vmem:[%s1472 + $0xf4] sm:$0xff]
        %v2137 = vld [vmem:[%s1472 + $0xfc] sm:$0xff]
        %v2138 = vld [vmem:[%s1472 + $0x10c] sm:$0xff]
        %v2139 = vld [vmem:[%s1472 + $0x114] sm:$0xff]
        %v2140 = vld [vmem:[%s1472 + $0x124] sm:$0xff]
        %v2141 = vld [vmem:[%s1472 + $0x12c] sm:$0xff]
        %v2142 = vld [vmem:[%s1472 + $0x13c] sm:$0xff]
        %v2143 = vld [vmem:[%s1472 + $0x144] sm:$0xff]
        %v2144 = vld [vmem:[%s1472 + $0x154] sm:$0xff]
        %v2145 = vld [vmem:[%s1472 + $0x15c] sm:$0xff]
        %v2146 = vld [vmem:[%s1472 + $0x16c] sm:$0xff]
        %v2147 = vld [vmem:[%s1472 + $0x174] sm:$0xff]
        %2180 = vrot.lane.b32.xlu0 %v2116, 16
        %v2181 = vpop.permute.xlu0 %2180
        %2182 = vrot.lane.b32.xlu0 %v2117, 16
        %v2183 = vpop.permute.xlu0 %2182
        %2184 = vrot.lane.b32.xlu0 %v2118, 16
        %v2185 = vpop.permute.xlu0 %2184
        %2186 = vrot.lane.b32.xlu0 %v2119, 16
        %v2187 = vpop.permute.xlu0 %2186
        %2188 = vrot.lane.b32.xlu0 %v2120, 16
        %v2189 = vpop.permute.xlu0 %2188
        %2190 = vrot.lane.b32.xlu0 %v2121, 16
        %v2191 = vpop.permute.xlu0 %2190
        %2192 = vrot.lane.b32.xlu0 %v2122, 16
        %v2193 = vpop.permute.xlu0 %2192
        %2194 = vrot.lane.b32.xlu0 %v2123, 16
        %v2195 = vpop.permute.xlu0 %2194
        %2196 = vrot.lane.b32.xlu0 %v2124, 16
        %v2197 = vpop.permute.xlu0 %2196
        %2198 = vrot.lane.b32.xlu0 %v2125, 16
        %v2199 = vpop.permute.xlu0 %2198
        %2200 = vrot.lane.b32.xlu0 %v2126, 16
        %v2201 = vpop.permute.xlu0 %2200
        %2202 = vrot.lane.b32.xlu0 %v2127, 16
        %v2203 = vpop.permute.xlu0 %2202
        %2204 = vrot.lane.b32.xlu0 %v2128, 16
        %v2205 = vpop.permute.xlu0 %2204
        %2206 = vrot.lane.b32.xlu0 %v2129, 16
        %v2207 = vpop.permute.xlu0 %2206
        %2208 = vrot.lane.b32.xlu0 %v2130, 16
        %v2209 = vpop.permute.xlu0 %2208
        %2210 = vrot.lane.b32.xlu0 %v2131, 16
        %v2211 = vpop.permute.xlu0 %2210
        %2212 = vrot.lane.b32.xlu0 %v2132, 16
        %v2213 = vpop.permute.xlu0 %2212
        %2214 = vrot.lane.b32.xlu0 %v2133, 16
        %v2215 = vpop.permute.xlu0 %2214
        %2216 = vrot.lane.b32.xlu0 %v2134, 16
        %v2217 = vpop.permute.xlu0 %2216
        %2218 = vrot.lane.b32.xlu0 %v2135, 16
        %v2219 = vpop.permute.xlu0 %2218
        %2220 = vrot.lane.b32.xlu0 %v2136, 16
        %v2221 = vpop.permute.xlu0 %2220
        %2222 = vrot.lane.b32.xlu0 %v2137, 16
        %v2223 = vpop.permute.xlu0 %2222
        %2224 = vrot.lane.b32.xlu0 %v2138, 16
        %v2225 = vpop.permute.xlu0 %2224
        %2226 = vrot.lane.b32.xlu0 %v2139, 16
        %v2227 = vpop.permute.xlu0 %2226
        %2228 = vrot.lane.b32.xlu0 %v2140, 16
        %v2229 = vpop.permute.xlu0 %2228
        %2230 = vrot.lane.b32.xlu0 %v2141, 16
        %v2231 = vpop.permute.xlu0 %2230
        %2232 = vrot.lane.b32.xlu0 %v2142, 16
        %v2233 = vpop.permute.xlu0 %2232
        %2234 = vrot.lane.b32.xlu0 %v2143, 16
        %v2235 = vpop.permute.xlu0 %2234
        %2236 = vrot.lane.b32.xlu0 %v2144, 16
        %v2237 = vpop.permute.xlu0 %2236
        %2238 = vrot.lane.b32.xlu0 %v2145, 16
        %v2239 = vpop.permute.xlu0 %2238
        %2240 = vrot.lane.b32.xlu0 %v2146, 16
        %v2241 = vpop.permute.xlu0 %2240
        %2242 = vrot.lane.b32.xlu0 %v2147, 16
        %v2243 = vpop.permute.xlu0 %2242
        %2276 = vst.msk [vmem:[#allocation3 + $0x8] sm:$0xff] %vm860, %v2181
        %2277 = vst.msk [vmem:[#allocation3 + $0x28] sm:$0xff] %vm860, %v2183
        %2278 = vst.msk [vmem:[#allocation3 + $0x48] sm:$0xff] %vm860, %v2185
        %2279 = vst.msk [vmem:[#allocation3 + $0x68] sm:$0xff] %vm860, %v2187
        %2280 = vst.msk [vmem:[#allocation3 + $0x88] sm:$0xff] %vm860, %v2189
        %2281 = vst.msk [vmem:[#allocation3 + $0xa8] sm:$0xff] %vm860, %v2191
        %2282 = vst.msk [vmem:[#allocation3 + $0xc8] sm:$0xff] %vm860, %v2193
        %2283 = vst.msk [vmem:[#allocation3 + $0xe8] sm:$0xff] %vm860, %v2195
        %2284 = vst.msk [vmem:[#allocation3 + $0x108] sm:$0xff] %vm860, %v2197
        %2285 = vst.msk [vmem:[#allocation3 + $0x128] sm:$0xff] %vm860, %v2199
        %2286 = vst.msk [vmem:[#allocation3 + $0x148] sm:$0xff] %vm860, %v2201
        %2287 = vst.msk [vmem:[#allocation3 + $0x168] sm:$0xff] %vm860, %v2203
        %2288 = vst.msk [vmem:[#allocation3 + $0x188] sm:$0xff] %vm860, %v2205
        %2289 = vst.msk [vmem:[#allocation3 + $0x1a8] sm:$0xff] %vm860, %v2207
        %2290 = vst.msk [vmem:[#allocation3 + $0x1c8] sm:$0xff] %vm860, %v2209
        %2291 = vst.msk [vmem:[#allocation3 + $0x1e8] sm:$0xff] %vm860, %v2211
        %2292 = vst.msk [vmem:[#allocation3 + $0x208] sm:$0xff] %vm860, %v2213
        %2293 = vst.msk [vmem:[#allocation3 + $0x228] sm:$0xff] %vm860, %v2215
        %2294 = vst.msk [vmem:[#allocation3 + $0x248] sm:$0xff] %vm860, %v2217
        %2295 = vst.msk [vmem:[#allocation3 + $0x268] sm:$0xff] %vm860, %v2219
        %2296 = vst.msk [vmem:[#allocation3 + $0x288] sm:$0xff] %vm860, %v2221
        %2297 = vst.msk [vmem:[#allocation3 + $0x2a8] sm:$0xff] %vm860, %v2223
        %2298 = vst.msk [vmem:[#allocation3 + $0x2c8] sm:$0xff] %vm860, %v2225
        %2299 = vst.msk [vmem:[#allocation3 + $0x2e8] sm:$0xff] %vm860, %v2227
        %2300 = vst.msk [vmem:[#allocation3 + $0x308] sm:$0xff] %vm860, %v2229
        %2301 = vst.msk [vmem:[#allocation3 + $0x328] sm:$0xff] %vm860, %v2231
        %2302 = vst.msk [vmem:[#allocation3 + $0x348] sm:$0xff] %vm860, %v2233
        %2303 = vst.msk [vmem:[#allocation3 + $0x368] sm:$0xff] %vm860, %v2235
        %2304 = vst.msk [vmem:[#allocation3 + $0x388] sm:$0xff] %vm860, %v2237
        %2305 = vst.msk [vmem:[#allocation3 + $0x3a8] sm:$0xff] %vm860, %v2239
        %2306 = vst.msk [vmem:[#allocation3 + $0x3c8] sm:$0xff] %vm860, %v2241
        %2307 = vst.msk [vmem:[#allocation3 + $0x3e8] sm:$0xff] %vm860, %v2243
        %v2308 = vld [vmem:[%s603] sm:$0xff]
        %v2309 = vld [vmem:[%s603 + $0x8] sm:$0xff]
        %v2310 = vld [vmem:[%s603 + $0x18] sm:$0xff]
        %v2311 = vld [vmem:[%s603 + $0x20] sm:$0xff]
        %v2312 = vld [vmem:[%s603 + $0x30] sm:$0xff]
        %v2313 = vld [vmem:[%s603 + $0x38] sm:$0xff]
        %v2314 = vld [vmem:[%s603 + $0x48] sm:$0xff]
        %v2315 = vld [vmem:[%s603 + $0x50] sm:$0xff]
        %v2316 = vld [vmem:[%s603 + $0x60] sm:$0xff]
        %v2317 = vld [vmem:[%s603 + $0x68] sm:$0xff]
        %v2318 = vld [vmem:[%s603 + $0x78] sm:$0xff]
        %v2319 = vld [vmem:[%s603 + $0x80] sm:$0xff]
        %v2320 = vld [vmem:[%s603 + $0x90] sm:$0xff]
        %v2321 = vld [vmem:[%s603 + $0x98] sm:$0xff]
        %v2322 = vld [vmem:[%s603 + $0xa8] sm:$0xff]
        %v2323 = vld [vmem:[%s603 + $0xb0] sm:$0xff]
        %v2324 = vld [vmem:[%s603 + $0xc0] sm:$0xff]
        %v2325 = vld [vmem:[%s603 + $0xc8] sm:$0xff]
        %v2326 = vld [vmem:[%s603 + $0xd8] sm:$0xff]
        %v2327 = vld [vmem:[%s603 + $0xe0] sm:$0xff]
        %v2328 = vld [vmem:[%s603 + $0xf0] sm:$0xff]
        %v2329 = vld [vmem:[%s603 + $0xf8] sm:$0xff]
        %v2330 = vld [vmem:[%s603 + $0x108] sm:$0xff]
        %v2331 = vld [vmem:[%s603 + $0x110] sm:$0xff]
        %v2332 = vld [vmem:[%s603 + $0x120] sm:$0xff]
        %v2333 = vld [vmem:[%s603 + $0x128] sm:$0xff]
        %v2334 = vld [vmem:[%s603 + $0x138] sm:$0xff]
        %v2335 = vld [vmem:[%s603 + $0x140] sm:$0xff]
        %v2336 = vld [vmem:[%s603 + $0x150] sm:$0xff]
        %v2337 = vld [vmem:[%s603 + $0x158] sm:$0xff]
        %v2338 = vld [vmem:[%s603 + $0x168] sm:$0xff]
        %v2339 = vld [vmem:[%s603 + $0x170] sm:$0xff]
        %2372 = vrot.lane.b32.xlu0 %v2308, 32
        %v2373 = vpop.permute.xlu0 %2372
        %2374 = vrot.lane.b32.xlu0 %v2309, 32
        %v2375 = vpop.permute.xlu0 %2374
        %2376 = vrot.lane.b32.xlu0 %v2310, 32
        %v2377 = vpop.permute.xlu0 %2376
        %2378 = vrot.lane.b32.xlu0 %v2311, 32
        %v2379 = vpop.permute.xlu0 %2378
        %2380 = vrot.lane.b32.xlu0 %v2312, 32
        %v2381 = vpop.permute.xlu0 %2380
        %2382 = vrot.lane.b32.xlu0 %v2313, 32
        %v2383 = vpop.permute.xlu0 %2382
        %2384 = vrot.lane.b32.xlu0 %v2314, 32
        %v2385 = vpop.permute.xlu0 %2384
        %2386 = vrot.lane.b32.xlu0 %v2315, 32
        %v2387 = vpop.permute.xlu0 %2386
        %2388 = vrot.lane.b32.xlu0 %v2316, 32
        %v2389 = vpop.permute.xlu0 %2388
        %2390 = vrot.lane.b32.xlu0 %v2317, 32
        %v2391 = vpop.permute.xlu0 %2390
        %2392 = vrot.lane.b32.xlu0 %v2318, 32
        %v2393 = vpop.permute.xlu0 %2392
        %2394 = vrot.lane.b32.xlu0 %v2319, 32
        %v2395 = vpop.permute.xlu0 %2394
        %2396 = vrot.lane.b32.xlu0 %v2320, 32
        %v2397 = vpop.permute.xlu0 %2396
        %2398 = vrot.lane.b32.xlu0 %v2321, 32
        %v2399 = vpop.permute.xlu0 %2398
        %2400 = vrot.lane.b32.xlu0 %v2322, 32
        %v2401 = vpop.permute.xlu0 %2400
        %2402 = vrot.lane.b32.xlu0 %v2323, 32
        %v2403 = vpop.permute.xlu0 %2402
        %2404 = vrot.lane.b32.xlu0 %v2324, 32
        %v2405 = vpop.permute.xlu0 %2404
        %2406 = vrot.lane.b32.xlu0 %v2325, 32
        %v2407 = vpop.permute.xlu0 %2406
        %2408 = vrot.lane.b32.xlu0 %v2326, 32
        %v2409 = vpop.permute.xlu0 %2408
        %2410 = vrot.lane.b32.xlu0 %v2327, 32
        %v2411 = vpop.permute.xlu0 %2410
        %2412 = vrot.lane.b32.xlu0 %v2328, 32
        %v2413 = vpop.permute.xlu0 %2412
        %2414 = vrot.lane.b32.xlu0 %v2329, 32
        %v2415 = vpop.permute.xlu0 %2414
        %2416 = vrot.lane.b32.xlu0 %v2330, 32
        %v2417 = vpop.permute.xlu0 %2416
        %2418 = vrot.lane.b32.xlu0 %v2331, 32
        %v2419 = vpop.permute.xlu0 %2418
        %2420 = vrot.lane.b32.xlu0 %v2332, 32
        %v2421 = vpop.permute.xlu0 %2420
        %2422 = vrot.lane.b32.xlu0 %v2333, 32
        %v2423 = vpop.permute.xlu0 %2422
        %2424 = vrot.lane.b32.xlu0 %v2334, 32
        %v2425 = vpop.permute.xlu0 %2424
        %2426 = vrot.lane.b32.xlu0 %v2335, 32
        %v2427 = vpop.permute.xlu0 %2426
        %2428 = vrot.lane.b32.xlu0 %v2336, 32
        %v2429 = vpop.permute.xlu0 %2428
        %2430 = vrot.lane.b32.xlu0 %v2337, 32
        %v2431 = vpop.permute.xlu0 %2430
        %2432 = vrot.lane.b32.xlu0 %v2338, 32
        %v2433 = vpop.permute.xlu0 %2432
        %2434 = vrot.lane.b32.xlu0 %v2339, 32
        %v2435 = vpop.permute.xlu0 %2434
        %2468 = vst.msk [vmem:[#allocation3 + $0x8] sm:$0xff] %vm1053, %v2373
        %2469 = vst.msk [vmem:[#allocation3 + $0x28] sm:$0xff] %vm1053, %v2375
        %2470 = vst.msk [vmem:[#allocation3 + $0x48] sm:$0xff] %vm1053, %v2377
        %2471 = vst.msk [vmem:[#allocation3 + $0x68] sm:$0xff] %vm1053, %v2379
        %2472 = vst.msk [vmem:[#allocation3 + $0x88] sm:$0xff] %vm1053, %v2381
        %2473 = vst.msk [vmem:[#allocation3 + $0xa8] sm:$0xff] %vm1053, %v2383
        %2474 = vst.msk [vmem:[#allocation3 + $0xc8] sm:$0xff] %vm1053, %v2385
        %2475 = vst.msk [vmem:[#allocation3 + $0xe8] sm:$0xff] %vm1053, %v2387
        %2476 = vst.msk [vmem:[#allocation3 + $0x108] sm:$0xff] %vm1053, %v2389
        %2477 = vst.msk [vmem:[#allocation3 + $0x128] sm:$0xff] %vm1053, %v2391
        %2478 = vst.msk [vmem:[#allocation3 + $0x148] sm:$0xff] %vm1053, %v2393
        %2479 = vst.msk [vmem:[#allocation3 + $0x168] sm:$0xff] %vm1053, %v2395
        %2480 = vst.msk [vmem:[#allocation3 + $0x188] sm:$0xff] %vm1053, %v2397
        %2481 = vst.msk [vmem:[#allocation3 + $0x1a8] sm:$0xff] %vm1053, %v2399
        %2482 = vst.msk [vmem:[#allocation3 + $0x1c8] sm:$0xff] %vm1053, %v2401
        %2483 = vst.msk [vmem:[#allocation3 + $0x1e8] sm:$0xff] %vm1053, %v2403
        %2484 = vst.msk [vmem:[#allocation3 + $0x208] sm:$0xff] %vm1053, %v2405
        %2485 = vst.msk [vmem:[#allocation3 + $0x228] sm:$0xff] %vm1053, %v2407
        %2486 = vst.msk [vmem:[#allocation3 + $0x248] sm:$0xff] %vm1053, %v2409
        %2487 = vst.msk [vmem:[#allocation3 + $0x268] sm:$0xff] %vm1053, %v2411
        %2488 = vst.msk [vmem:[#allocation3 + $0x288] sm:$0xff] %vm1053, %v2413
        %2489 = vst.msk [vmem:[#allocation3 + $0x2a8] sm:$0xff] %vm1053, %v2415
        %2490 = vst.msk [vmem:[#allocation3 + $0x2c8] sm:$0xff] %vm1053, %v2417
        %2491 = vst.msk [vmem:[#allocation3 + $0x2e8] sm:$0xff] %vm1053, %v2419
        %2492 = vst.msk [vmem:[#allocation3 + $0x308] sm:$0xff] %vm1053, %v2421
        %2493 = vst.msk [vmem:[#allocation3 + $0x328] sm:$0xff] %vm1053, %v2423
        %2494 = vst.msk [vmem:[#allocation3 + $0x348] sm:$0xff] %vm1053, %v2425
        %2495 = vst.msk [vmem:[#allocation3 + $0x368] sm:$0xff] %vm1053, %v2427
        %2496 = vst.msk [vmem:[#allocation3 + $0x388] sm:$0xff] %vm1053, %v2429
        %2497 = vst.msk [vmem:[#allocation3 + $0x3a8] sm:$0xff] %vm1053, %v2431
        %2498 = vst.msk [vmem:[#allocation3 + $0x3c8] sm:$0xff] %vm1053, %v2433
        %2499 = vst.msk [vmem:[#allocation3 + $0x3e8] sm:$0xff] %vm1053, %v2435
        %v2500 = vld [vmem:[%s603 + $0x1] sm:$0xff]
        %v2501 = vld [vmem:[%s603 + $0x9] sm:$0xff]
        %v2502 = vld [vmem:[%s603 + $0x19] sm:$0xff]
        %v2503 = vld [vmem:[%s603 + $0x21] sm:$0xff]
        %v2504 = vld [vmem:[%s603 + $0x31] sm:$0xff]
        %v2505 = vld [vmem:[%s603 + $0x39] sm:$0xff]
        %v2506 = vld [vmem:[%s603 + $0x49] sm:$0xff]
        %v2507 = vld [vmem:[%s603 + $0x51] sm:$0xff]
        %v2508 = vld [vmem:[%s603 + $0x61] sm:$0xff]
        %v2509 = vld [vmem:[%s603 + $0x69] sm:$0xff]
        %v2510 = vld [vmem:[%s603 + $0x79] sm:$0xff]
        %v2511 = vld [vmem:[%s603 + $0x81] sm:$0xff]
        %v2512 = vld [vmem:[%s603 + $0x91] sm:$0xff]
        %v2513 = vld [vmem:[%s603 + $0x99] sm:$0xff]
        %v2514 = vld [vmem:[%s603 + $0xa9] sm:$0xff]
        %v2515 = vld [vmem:[%s603 + $0xb1] sm:$0xff]
        %v2516 = vld [vmem:[%s603 + $0xc1] sm:$0xff]
        %v2517 = vld [vmem:[%s603 + $0xc9] sm:$0xff]
        %v2518 = vld [vmem:[%s603 + $0xd9] sm:$0xff]
        %v2519 = vld [vmem:[%s603 + $0xe1] sm:$0xff]
        %v2520 = vld [vmem:[%s603 + $0xf1] sm:$0xff]
        %v2521 = vld [vmem:[%s603 + $0xf9] sm:$0xff]
        %v2522 = vld [vmem:[%s603 + $0x109] sm:$0xff]
        %v2523 = vld [vmem:[%s603 + $0x111] sm:$0xff]
        %v2524 = vld [vmem:[%s603 + $0x121] sm:$0xff]
        %v2525 = vld [vmem:[%s603 + $0x129] sm:$0xff]
        %v2526 = vld [vmem:[%s603 + $0x139] sm:$0xff]
        %v2527 = vld [vmem:[%s603 + $0x141] sm:$0xff]
        %v2528 = vld [vmem:[%s603 + $0x151] sm:$0xff]
        %v2529 = vld [vmem:[%s603 + $0x159] sm:$0xff]
        %v2530 = vld [vmem:[%s603 + $0x169] sm:$0xff]
        %v2531 = vld [vmem:[%s603 + $0x171] sm:$0xff]
        %2564 = vrot.lane.b32.xlu0 %v2500, 48
        %v2565 = vpop.permute.xlu0 %2564
        %2566 = vrot.lane.b32.xlu0 %v2501, 48
        %v2567 = vpop.permute.xlu0 %2566
        %2568 = vrot.lane.b32.xlu0 %v2502, 48
        %v2569 = vpop.permute.xlu0 %2568
        %2570 = vrot.lane.b32.xlu0 %v2503, 48
        %v2571 = vpop.permute.xlu0 %2570
        %2572 = vrot.lane.b32.xlu0 %v2504, 48
        %v2573 = vpop.permute.xlu0 %2572
        %2574 = vrot.lane.b32.xlu0 %v2505, 48
        %v2575 = vpop.permute.xlu0 %2574
        %2576 = vrot.lane.b32.xlu0 %v2506, 48
        %v2577 = vpop.permute.xlu0 %2576
        %2578 = vrot.lane.b32.xlu0 %v2507, 48
        %v2579 = vpop.permute.xlu0 %2578
        %2580 = vrot.lane.b32.xlu0 %v2508, 48
        %v2581 = vpop.permute.xlu0 %2580
        %2582 = vrot.lane.b32.xlu0 %v2509, 48
        %v2583 = vpop.permute.xlu0 %2582
        %2584 = vrot.lane.b32.xlu0 %v2510, 48
        %v2585 = vpop.permute.xlu0 %2584
        %2586 = vrot.lane.b32.xlu0 %v2511, 48
        %v2587 = vpop.permute.xlu0 %2586
        %2588 = vrot.lane.b32.xlu0 %v2512, 48
        %v2589 = vpop.permute.xlu0 %2588
        %2590 = vrot.lane.b32.xlu0 %v2513, 48
        %v2591 = vpop.permute.xlu0 %2590
        %2592 = vrot.lane.b32.xlu0 %v2514, 48
        %v2593 = vpop.permute.xlu0 %2592
        %2594 = vrot.lane.b32.xlu0 %v2515, 48
        %v2595 = vpop.permute.xlu0 %2594
        %2596 = vrot.lane.b32.xlu0 %v2516, 48
        %v2597 = vpop.permute.xlu0 %2596
        %2598 = vrot.lane.b32.xlu0 %v2517, 48
        %v2599 = vpop.permute.xlu0 %2598
        %2600 = vrot.lane.b32.xlu0 %v2518, 48
        %v2601 = vpop.permute.xlu0 %2600
        %2602 = vrot.lane.b32.xlu0 %v2519, 48
        %v2603 = vpop.permute.xlu0 %2602
        %2604 = vrot.lane.b32.xlu0 %v2520, 48
        %v2605 = vpop.permute.xlu0 %2604
        %2606 = vrot.lane.b32.xlu0 %v2521, 48
        %v2607 = vpop.permute.xlu0 %2606
        %2608 = vrot.lane.b32.xlu0 %v2522, 48
        %v2609 = vpop.permute.xlu0 %2608
        %2610 = vrot.lane.b32.xlu0 %v2523, 48
        %v2611 = vpop.permute.xlu0 %2610
        %2612 = vrot.lane.b32.xlu0 %v2524, 48
        %v2613 = vpop.permute.xlu0 %2612
        %2614 = vrot.lane.b32.xlu0 %v2525, 48
        %v2615 = vpop.permute.xlu0 %2614
        %2616 = vrot.lane.b32.xlu0 %v2526, 48
        %v2617 = vpop.permute.xlu0 %2616
        %2618 = vrot.lane.b32.xlu0 %v2527, 48
        %v2619 = vpop.permute.xlu0 %2618
        %2620 = vrot.lane.b32.xlu0 %v2528, 48
        %v2621 = vpop.permute.xlu0 %2620
        %2622 = vrot.lane.b32.xlu0 %v2529, 48
        %v2623 = vpop.permute.xlu0 %2622
        %2624 = vrot.lane.b32.xlu0 %v2530, 48
        %v2625 = vpop.permute.xlu0 %2624
        %2626 = vrot.lane.b32.xlu0 %v2531, 48
        %v2627 = vpop.permute.xlu0 %2626
        %2660 = vst.msk [vmem:[#allocation3 + $0x8] sm:$0xff] %vm1246, %v2565
        %2661 = vst.msk [vmem:[#allocation3 + $0x28] sm:$0xff] %vm1246, %v2567
        %2662 = vst.msk [vmem:[#allocation3 + $0x48] sm:$0xff] %vm1246, %v2569
        %2663 = vst.msk [vmem:[#allocation3 + $0x68] sm:$0xff] %vm1246, %v2571
        %2664 = vst.msk [vmem:[#allocation3 + $0x88] sm:$0xff] %vm1246, %v2573
        %2665 = vst.msk [vmem:[#allocation3 + $0xa8] sm:$0xff] %vm1246, %v2575
        %2666 = vst.msk [vmem:[#allocation3 + $0xc8] sm:$0xff] %vm1246, %v2577
        %2667 = vst.msk [vmem:[#allocation3 + $0xe8] sm:$0xff] %vm1246, %v2579
        %2668 = vst.msk [vmem:[#allocation3 + $0x108] sm:$0xff] %vm1246, %v2581
        %2669 = vst.msk [vmem:[#allocation3 + $0x128] sm:$0xff] %vm1246, %v2583
        %2670 = vst.msk [vmem:[#allocation3 + $0x148] sm:$0xff] %vm1246, %v2585
        %2671 = vst.msk [vmem:[#allocation3 + $0x168] sm:$0xff] %vm1246, %v2587
        %2672 = vst.msk [vmem:[#allocation3 + $0x188] sm:$0xff] %vm1246, %v2589
        %2673 = vst.msk [vmem:[#allocation3 + $0x1a8] sm:$0xff] %vm1246, %v2591
        %2674 = vst.msk [vmem:[#allocation3 + $0x1c8] sm:$0xff] %vm1246, %v2593
        %2675 = vst.msk [vmem:[#allocation3 + $0x1e8] sm:$0xff] %vm1246, %v2595
        %2676 = vst.msk [vmem:[#allocation3 + $0x208] sm:$0xff] %vm1246, %v2597
        %2677 = vst.msk [vmem:[#allocation3 + $0x228] sm:$0xff] %vm1246, %v2599
        %2678 = vst.msk [vmem:[#allocation3 + $0x248] sm:$0xff] %vm1246, %v2601
        %2679 = vst.msk [vmem:[#allocation3 + $0x268] sm:$0xff] %vm1246, %v2603
        %2680 = vst.msk [vmem:[#allocation3 + $0x288] sm:$0xff] %vm1246, %v2605
        %2681 = vst.msk [vmem:[#allocation3 + $0x2a8] sm:$0xff] %vm1246, %v2607
        %2682 = vst.msk [vmem:[#allocation3 + $0x2c8] sm:$0xff] %vm1246, %v2609
        %2683 = vst.msk [vmem:[#allocation3 + $0x2e8] sm:$0xff] %vm1246, %v2611
        %2684 = vst.msk [vmem:[#allocation3 + $0x308] sm:$0xff] %vm1246, %v2613
        %2685 = vst.msk [vmem:[#allocation3 + $0x328] sm:$0xff] %vm1246, %v2615
        %2686 = vst.msk [vmem:[#allocation3 + $0x348] sm:$0xff] %vm1246, %v2617
        %2687 = vst.msk [vmem:[#allocation3 + $0x368] sm:$0xff] %vm1246, %v2619
        %2688 = vst.msk [vmem:[#allocation3 + $0x388] sm:$0xff] %vm1246, %v2621
        %2689 = vst.msk [vmem:[#allocation3 + $0x3a8] sm:$0xff] %vm1246, %v2623
        %2690 = vst.msk [vmem:[#allocation3 + $0x3c8] sm:$0xff] %vm1246, %v2625
        %2691 = vst.msk [vmem:[#allocation3 + $0x3e8] sm:$0xff] %vm1246, %v2627
        %v2692 = vld [vmem:[%s603 + $0x2] sm:$0xff]
        %v2693 = vld [vmem:[%s603 + $0xa] sm:$0xff]
        %v2694 = vld [vmem:[%s603 + $0x1a] sm:$0xff]
        %v2695 = vld [vmem:[%s603 + $0x22] sm:$0xff]
        %v2696 = vld [vmem:[%s603 + $0x32] sm:$0xff]
        %v2697 = vld [vmem:[%s603 + $0x3a] sm:$0xff]
        %v2698 = vld [vmem:[%s603 + $0x4a] sm:$0xff]
        %v2699 = vld [vmem:[%s603 + $0x52] sm:$0xff]
        %v2700 = vld [vmem:[%s603 + $0x62] sm:$0xff]
        %v2701 = vld [vmem:[%s603 + $0x6a] sm:$0xff]
        %v2702 = vld [vmem:[%s603 + $0x7a] sm:$0xff]
        %v2703 = vld [vmem:[%s603 + $0x82] sm:$0xff]
        %v2704 = vld [vmem:[%s603 + $0x92] sm:$0xff]
        %v2705 = vld [vmem:[%s603 + $0x9a] sm:$0xff]
        %v2706 = vld [vmem:[%s603 + $0xaa] sm:$0xff]
        %v2707 = vld [vmem:[%s603 + $0xb2] sm:$0xff]
        %v2708 = vld [vmem:[%s603 + $0xc2] sm:$0xff]
        %v2709 = vld [vmem:[%s603 + $0xca] sm:$0xff]
        %v2710 = vld [vmem:[%s603 + $0xda] sm:$0xff]
        %v2711 = vld [vmem:[%s603 + $0xe2] sm:$0xff]
        %v2712 = vld [vmem:[%s603 + $0xf2] sm:$0xff]
        %v2713 = vld [vmem:[%s603 + $0xfa] sm:$0xff]
        %v2714 = vld [vmem:[%s603 + $0x10a] sm:$0xff]
        %v2715 = vld [vmem:[%s603 + $0x112] sm:$0xff]
        %v2716 = vld [vmem:[%s603 + $0x122] sm:$0xff]
        %v2717 = vld [vmem:[%s603 + $0x12a] sm:$0xff]
        %v2718 = vld [vmem:[%s603 + $0x13a] sm:$0xff]
        %v2719 = vld [vmem:[%s603 + $0x142] sm:$0xff]
        %v2720 = vld [vmem:[%s603 + $0x152] sm:$0xff]
        %v2721 = vld [vmem:[%s603 + $0x15a] sm:$0xff]
        %v2722 = vld [vmem:[%s603 + $0x16a] sm:$0xff]
        %v2723 = vld [vmem:[%s603 + $0x172] sm:$0xff]
        %2756 = vrot.lane.b32.xlu0 %v2692, 64
        %v2757 = vpop.permute.xlu0 %2756
        %2758 = vrot.lane.b32.xlu0 %v2693, 64
        %v2759 = vpop.permute.xlu0 %2758
        %2760 = vrot.lane.b32.xlu0 %v2694, 64
        %v2761 = vpop.permute.xlu0 %2760
        %2762 = vrot.lane.b32.xlu0 %v2695, 64
        %v2763 = vpop.permute.xlu0 %2762
        %2764 = vrot.lane.b32.xlu0 %v2696, 64
        %v2765 = vpop.permute.xlu0 %2764
        %2766 = vrot.lane.b32.xlu0 %v2697, 64
        %v2767 = vpop.permute.xlu0 %2766
        %2768 = vrot.lane.b32.xlu0 %v2698, 64
        %v2769 = vpop.permute.xlu0 %2768
        %2770 = vrot.lane.b32.xlu0 %v2699, 64
        %v2771 = vpop.permute.xlu0 %2770
        %2772 = vrot.lane.b32.xlu0 %v2700, 64
        %v2773 = vpop.permute.xlu0 %2772
        %2774 = vrot.lane.b32.xlu0 %v2701, 64
        %v2775 = vpop.permute.xlu0 %2774
        %2776 = vrot.lane.b32.xlu0 %v2702, 64
        %v2777 = vpop.permute.xlu0 %2776
        %2778 = vrot.lane.b32.xlu0 %v2703, 64
        %v2779 = vpop.permute.xlu0 %2778
        %2780 = vrot.lane.b32.xlu0 %v2704, 64
        %v2781 = vpop.permute.xlu0 %2780
        %2782 = vrot.lane.b32.xlu0 %v2705, 64
        %v2783 = vpop.permute.xlu0 %2782
        %2784 = vrot.lane.b32.xlu0 %v2706, 64
        %v2785 = vpop.permute.xlu0 %2784
        %2786 = vrot.lane.b32.xlu0 %v2707, 64
        %v2787 = vpop.permute.xlu0 %2786
        %2788 = vrot.lane.b32.xlu0 %v2708, 64
        %v2789 = vpop.permute.xlu0 %2788
        %2790 = vrot.lane.b32.xlu0 %v2709, 64
        %v2791 = vpop.permute.xlu0 %2790
        %2792 = vrot.lane.b32.xlu0 %v2710, 64
        %v2793 = vpop.permute.xlu0 %2792
        %2794 = vrot.lane.b32.xlu0 %v2711, 64
        %v2795 = vpop.permute.xlu0 %2794
        %2796 = vrot.lane.b32.xlu0 %v2712, 64
        %v2797 = vpop.permute.xlu0 %2796
        %2798 = vrot.lane.b32.xlu0 %v2713, 64
        %v2799 = vpop.permute.xlu0 %2798
        %2800 = vrot.lane.b32.xlu0 %v2714, 64
        %v2801 = vpop.permute.xlu0 %2800
        %2802 = vrot.lane.b32.xlu0 %v2715, 64
        %v2803 = vpop.permute.xlu0 %2802
        %2804 = vrot.lane.b32.xlu0 %v2716, 64
        %v2805 = vpop.permute.xlu0 %2804
        %2806 = vrot.lane.b32.xlu0 %v2717, 64
        %v2807 = vpop.permute.xlu0 %2806
        %2808 = vrot.lane.b32.xlu0 %v2718, 64
        %v2809 = vpop.permute.xlu0 %2808
        %2810 = vrot.lane.b32.xlu0 %v2719, 64
        %v2811 = vpop.permute.xlu0 %2810
        %2812 = vrot.lane.b32.xlu0 %v2720, 64
        %v2813 = vpop.permute.xlu0 %2812
        %2814 = vrot.lane.b32.xlu0 %v2721, 64
        %v2815 = vpop.permute.xlu0 %2814
        %2816 = vrot.lane.b32.xlu0 %v2722, 64
        %v2817 = vpop.permute.xlu0 %2816
        %2818 = vrot.lane.b32.xlu0 %v2723, 64
        %v2819 = vpop.permute.xlu0 %2818
        %2852 = vst.msk [vmem:[#allocation3 + $0x8] sm:$0xff] %vm1439, %v2757
        %2853 = vst.msk [vmem:[#allocation3 + $0x28] sm:$0xff] %vm1439, %v2759
        %2854 = vst.msk [vmem:[#allocation3 + $0x48] sm:$0xff] %vm1439, %v2761
        %2855 = vst.msk [vmem:[#allocation3 + $0x68] sm:$0xff] %vm1439, %v2763
        %2856 = vst.msk [vmem:[#allocation3 + $0x88] sm:$0xff] %vm1439, %v2765
        %2857 = vst.msk [vmem:[#allocation3 + $0xa8] sm:$0xff] %vm1439, %v2767
        %2858 = vst.msk [vmem:[#allocation3 + $0xc8] sm:$0xff] %vm1439, %v2769
        %2859 = vst.msk [vmem:[#allocation3 + $0xe8] sm:$0xff] %vm1439, %v2771
        %2860 = vst.msk [vmem:[#allocation3 + $0x108] sm:$0xff] %vm1439, %v2773
        %2861 = vst.msk [vmem:[#allocation3 + $0x128] sm:$0xff] %vm1439, %v2775
        %2862 = vst.msk [vmem:[#allocation3 + $0x148] sm:$0xff] %vm1439, %v2777
        %2863 = vst.msk [vmem:[#allocation3 + $0x168] sm:$0xff] %vm1439, %v2779
        %2864 = vst.msk [vmem:[#allocation3 + $0x188] sm:$0xff] %vm1439, %v2781
        %2865 = vst.msk [vmem:[#allocation3 + $0x1a8] sm:$0xff] %vm1439, %v2783
        %2866 = vst.msk [vmem:[#allocation3 + $0x1c8] sm:$0xff] %vm1439, %v2785
        %2867 = vst.msk [vmem:[#allocation3 + $0x1e8] sm:$0xff] %vm1439, %v2787
        %2868 = vst.msk [vmem:[#allocation3 + $0x208] sm:$0xff] %vm1439, %v2789
        %2869 = vst.msk [vmem:[#allocation3 + $0x228] sm:$0xff] %vm1439, %v2791
        %2870 = vst.msk [vmem:[#allocation3 + $0x248] sm:$0xff] %vm1439, %v2793
        %2871 = vst.msk [vmem:[#allocation3 + $0x268] sm:$0xff] %vm1439, %v2795
        %2872 = vst.msk [vmem:[#allocation3 + $0x288] sm:$0xff] %vm1439, %v2797
        %2873 = vst.msk [vmem:[#allocation3 + $0x2a8] sm:$0xff] %vm1439, %v2799
        %2874 = vst.msk [vmem:[#allocation3 + $0x2c8] sm:$0xff] %vm1439, %v2801
        %2875 = vst.msk [vmem:[#allocation3 + $0x2e8] sm:$0xff] %vm1439, %v2803
        %2876 = vst.msk [vmem:[#allocation3 + $0x308] sm:$0xff] %vm1439, %v2805
        %2877 = vst.msk [vmem:[#allocation3 + $0x328] sm:$0xff] %vm1439, %v2807
        %2878 = vst.msk [vmem:[#allocation3 + $0x348] sm:$0xff] %vm1439, %v2809
        %2879 = vst.msk [vmem:[#allocation3 + $0x368] sm:$0xff] %vm1439, %v2811
        %2880 = vst.msk [vmem:[#allocation3 + $0x388] sm:$0xff] %vm1439, %v2813
        %2881 = vst.msk [vmem:[#allocation3 + $0x3a8] sm:$0xff] %vm1439, %v2815
        %2882 = vst.msk [vmem:[#allocation3 + $0x3c8] sm:$0xff] %vm1439, %v2817
        %2883 = vst.msk [vmem:[#allocation3 + $0x3e8] sm:$0xff] %vm1439, %v2819
        %v2884 = vld [vmem:[%s603 + $0x3] sm:$0xff]
        %v2885 = vld [vmem:[%s603 + $0xb] sm:$0xff]
        %v2886 = vld [vmem:[%s603 + $0x1b] sm:$0xff]
        %v2887 = vld [vmem:[%s603 + $0x23] sm:$0xff]
        %v2888 = vld [vmem:[%s603 + $0x33] sm:$0xff]
        %v2889 = vld [vmem:[%s603 + $0x3b] sm:$0xff]
        %v2890 = vld [vmem:[%s603 + $0x4b] sm:$0xff]
        %v2891 = vld [vmem:[%s603 + $0x53] sm:$0xff]
        %v2892 = vld [vmem:[%s603 + $0x63] sm:$0xff]
        %v2893 = vld [vmem:[%s603 + $0x6b] sm:$0xff]
        %v2894 = vld [vmem:[%s603 + $0x7b] sm:$0xff]
        %v2895 = vld [vmem:[%s603 + $0x83] sm:$0xff]
        %v2896 = vld [vmem:[%s603 + $0x93] sm:$0xff]
        %v2897 = vld [vmem:[%s603 + $0x9b] sm:$0xff]
        %v2898 = vld [vmem:[%s603 + $0xab] sm:$0xff]
        %v2899 = vld [vmem:[%s603 + $0xb3] sm:$0xff]
        %v2900 = vld [vmem:[%s603 + $0xc3] sm:$0xff]
        %v2901 = vld [vmem:[%s603 + $0xcb] sm:$0xff]
        %v2902 = vld [vmem:[%s603 + $0xdb] sm:$0xff]
        %v2903 = vld [vmem:[%s603 + $0xe3] sm:$0xff]
        %v2904 = vld [vmem:[%s603 + $0xf3] sm:$0xff]
        %v2905 = vld [vmem:[%s603 + $0xfb] sm:$0xff]
        %v2906 = vld [vmem:[%s603 + $0x10b] sm:$0xff]
        %v2907 = vld [vmem:[%s603 + $0x113] sm:$0xff]
        %v2908 = vld [vmem:[%s603 + $0x123] sm:$0xff]
        %v2909 = vld [vmem:[%s603 + $0x12b] sm:$0xff]
        %v2910 = vld [vmem:[%s603 + $0x13b] sm:$0xff]
        %v2911 = vld [vmem:[%s603 + $0x143] sm:$0xff]
        %v2912 = vld [vmem:[%s603 + $0x153] sm:$0xff]
        %v2913 = vld [vmem:[%s603 + $0x15b] sm:$0xff]
        %v2914 = vld [vmem:[%s603 + $0x16b] sm:$0xff]
        %v2915 = vld [vmem:[%s603 + $0x173] sm:$0xff]
        %2948 = vrot.lane.b32.xlu0 %v2884, 80
        %v2949 = vpop.permute.xlu0 %2948
        %2950 = vrot.lane.b32.xlu0 %v2885, 80
        %v2951 = vpop.permute.xlu0 %2950
        %2952 = vrot.lane.b32.xlu0 %v2886, 80
        %v2953 = vpop.permute.xlu0 %2952
        %2954 = vrot.lane.b32.xlu0 %v2887, 80
        %v2955 = vpop.permute.xlu0 %2954
        %2956 = vrot.lane.b32.xlu0 %v2888, 80
        %v2957 = vpop.permute.xlu0 %2956
        %2958 = vrot.lane.b32.xlu0 %v2889, 80
        %v2959 = vpop.permute.xlu0 %2958
        %2960 = vrot.lane.b32.xlu0 %v2890, 80
        %v2961 = vpop.permute.xlu0 %2960
        %2962 = vrot.lane.b32.xlu0 %v2891, 80
        %v2963 = vpop.permute.xlu0 %2962
        %2964 = vrot.lane.b32.xlu0 %v2892, 80
        %v2965 = vpop.permute.xlu0 %2964
        %2966 = vrot.lane.b32.xlu0 %v2893, 80
        %v2967 = vpop.permute.xlu0 %2966
        %2968 = vrot.lane.b32.xlu0 %v2894, 80
        %v2969 = vpop.permute.xlu0 %2968
        %2970 = vrot.lane.b32.xlu0 %v2895, 80
        %v2971 = vpop.permute.xlu0 %2970
        %2972 = vrot.lane.b32.xlu0 %v2896, 80
        %v2973 = vpop.permute.xlu0 %2972
        %2974 = vrot.lane.b32.xlu0 %v2897, 80
        %v2975 = vpop.permute.xlu0 %2974
        %2976 = vrot.lane.b32.xlu0 %v2898, 80
        %v2977 = vpop.permute.xlu0 %2976
        %2978 = vrot.lane.b32.xlu0 %v2899, 80
        %v2979 = vpop.permute.xlu0 %2978
        %2980 = vrot.lane.b32.xlu0 %v2900, 80
        %v2981 = vpop.permute.xlu0 %2980
        %2982 = vrot.lane.b32.xlu0 %v2901, 80
        %v2983 = vpop.permute.xlu0 %2982
        %2984 = vrot.lane.b32.xlu0 %v2902, 80
        %v2985 = vpop.permute.xlu0 %2984
        %2986 = vrot.lane.b32.xlu0 %v2903, 80
        %v2987 = vpop.permute.xlu0 %2986
        %2988 = vrot.lane.b32.xlu0 %v2904, 80
        %v2989 = vpop.permute.xlu0 %2988
        %2990 = vrot.lane.b32.xlu0 %v2905, 80
        %v2991 = vpop.permute.xlu0 %2990
        %2992 = vrot.lane.b32.xlu0 %v2906, 80
        %v2993 = vpop.permute.xlu0 %2992
        %2994 = vrot.lane.b32.xlu0 %v2907, 80
        %v2995 = vpop.permute.xlu0 %2994
        %2996 = vrot.lane.b32.xlu0 %v2908, 80
        %v2997 = vpop.permute.xlu0 %2996
        %2998 = vrot.lane.b32.xlu0 %v2909, 80
        %v2999 = vpop.permute.xlu0 %2998
        %3000 = vrot.lane.b32.xlu0 %v2910, 80
        %v3001 = vpop.permute.xlu0 %3000
        %3002 = vrot.lane.b32.xlu0 %v2911, 80
        %v3003 = vpop.permute.xlu0 %3002
        %3004 = vrot.lane.b32.xlu0 %v2912, 80
        %v3005 = vpop.permute.xlu0 %3004
        %3006 = vrot.lane.b32.xlu0 %v2913, 80
        %v3007 = vpop.permute.xlu0 %3006
        %3008 = vrot.lane.b32.xlu0 %v2914, 80
        %v3009 = vpop.permute.xlu0 %3008
        %3010 = vrot.lane.b32.xlu0 %v2915, 80
        %v3011 = vpop.permute.xlu0 %3010
        %3044 = vst.msk [vmem:[#allocation3 + $0x8] sm:$0xff] %vm1633, %v2949
        %3045 = vst.msk [vmem:[#allocation3 + $0x28] sm:$0xff] %vm1633, %v2951
        %3046 = vst.msk [vmem:[#allocation3 + $0x48] sm:$0xff] %vm1633, %v2953
        %3047 = vst.msk [vmem:[#allocation3 + $0x68] sm:$0xff] %vm1633, %v2955
        %3048 = vst.msk [vmem:[#allocation3 + $0x88] sm:$0xff] %vm1633, %v2957
        %3049 = vst.msk [vmem:[#allocation3 + $0xa8] sm:$0xff] %vm1633, %v2959
        %3050 = vst.msk [vmem:[#allocation3 + $0xc8] sm:$0xff] %vm1633, %v2961
        %3051 = vst.msk [vmem:[#allocation3 + $0xe8] sm:$0xff] %vm1633, %v2963
        %3052 = vst.msk [vmem:[#allocation3 + $0x108] sm:$0xff] %vm1633, %v2965
        %3053 = vst.msk [vmem:[#allocation3 + $0x128] sm:$0xff] %vm1633, %v2967
        %3054 = vst.msk [vmem:[#allocation3 + $0x148] sm:$0xff] %vm1633, %v2969
        %3055 = vst.msk [vmem:[#allocation3 + $0x168] sm:$0xff] %vm1633, %v2971
        %3056 = vst.msk [vmem:[#allocation3 + $0x188] sm:$0xff] %vm1633, %v2973
        %3057 = vst.msk [vmem:[#allocation3 + $0x1a8] sm:$0xff] %vm1633, %v2975
        %3058 = vst.msk [vmem:[#allocation3 + $0x1c8] sm:$0xff] %vm1633, %v2977
        %3059 = vst.msk [vmem:[#allocation3 + $0x1e8] sm:$0xff] %vm1633, %v2979
        %3060 = vst.msk [vmem:[#allocation3 + $0x208] sm:$0xff] %vm1633, %v2981
        %3061 = vst.msk [vmem:[#allocation3 + $0x228] sm:$0xff] %vm1633, %v2983
        %3062 = vst.msk [vmem:[#allocation3 + $0x248] sm:$0xff] %vm1633, %v2985
        %3063 = vst.msk [vmem:[#allocation3 + $0x268] sm:$0xff] %vm1633, %v2987
        %3064 = vst.msk [vmem:[#allocation3 + $0x288] sm:$0xff] %vm1633, %v2989
        %3065 = vst.msk [vmem:[#allocation3 + $0x2a8] sm:$0xff] %vm1633, %v2991
        %3066 = vst.msk [vmem:[#allocation3 + $0x2c8] sm:$0xff] %vm1633, %v2993
        %3067 = vst.msk [vmem:[#allocation3 + $0x2e8] sm:$0xff] %vm1633, %v2995
        %3068 = vst.msk [vmem:[#allocation3 + $0x308] sm:$0xff] %vm1633, %v2997
        %3069 = vst.msk [vmem:[#allocation3 + $0x328] sm:$0xff] %vm1633, %v2999
        %3070 = vst.msk [vmem:[#allocation3 + $0x348] sm:$0xff] %vm1633, %v3001
        %3071 = vst.msk [vmem:[#allocation3 + $0x368] sm:$0xff] %vm1633, %v3003
        %3072 = vst.msk [vmem:[#allocation3 + $0x388] sm:$0xff] %vm1633, %v3005
        %3073 = vst.msk [vmem:[#allocation3 + $0x3a8] sm:$0xff] %vm1633, %v3007
        %3074 = vst.msk [vmem:[#allocation3 + $0x3c8] sm:$0xff] %vm1633, %v3009
        %3075 = vst.msk [vmem:[#allocation3 + $0x3e8] sm:$0xff] %vm1633, %v3011
        %v3076 = vld [vmem:[%s603 + $0x4] sm:$0xff]
        %v3077 = vld [vmem:[%s603 + $0xc] sm:$0xff]
        %v3078 = vld [vmem:[%s603 + $0x1c] sm:$0xff]
        %v3079 = vld [vmem:[%s603 + $0x24] sm:$0xff]
        %v3080 = vld [vmem:[%s603 + $0x34] sm:$0xff]
        %v3081 = vld [vmem:[%s603 + $0x3c] sm:$0xff]
        %v3082 = vld [vmem:[%s603 + $0x4c] sm:$0xff]
        %v3083 = vld [vmem:[%s603 + $0x54] sm:$0xff]
        %v3084 = vld [vmem:[%s603 + $0x64] sm:$0xff]
        %v3085 = vld [vmem:[%s603 + $0x6c] sm:$0xff]
        %v3086 = vld [vmem:[%s603 + $0x7c] sm:$0xff]
        %v3087 = vld [vmem:[%s603 + $0x84] sm:$0xff]
        %v3088 = vld [vmem:[%s603 + $0x94] sm:$0xff]
        %v3089 = vld [vmem:[%s603 + $0x9c] sm:$0xff]
        %v3090 = vld [vmem:[%s603 + $0xac] sm:$0xff]
        %v3091 = vld [vmem:[%s603 + $0xb4] sm:$0xff]
        %v3092 = vld [vmem:[%s603 + $0xc4] sm:$0xff]
        %v3093 = vld [vmem:[%s603 + $0xcc] sm:$0xff]
        %v3094 = vld [vmem:[%s603 + $0xdc] sm:$0xff]
        %v3095 = vld [vmem:[%s603 + $0xe4] sm:$0xff]
        %v3096 = vld [vmem:[%s603 + $0xf4] sm:$0xff]
        %v3097 = vld [vmem:[%s603 + $0xfc] sm:$0xff]
        %v3098 = vld [vmem:[%s603 + $0x10c] sm:$0xff]
        %v3099 = vld [vmem:[%s603 + $0x114] sm:$0xff]
        %v3100 = vld [vmem:[%s603 + $0x124] sm:$0xff]
        %v3101 = vld [vmem:[%s603 + $0x12c] sm:$0xff]
        %v3102 = vld [vmem:[%s603 + $0x13c] sm:$0xff]
        %v3103 = vld [vmem:[%s603 + $0x144] sm:$0xff]
        %v3104 = vld [vmem:[%s603 + $0x154] sm:$0xff]
        %v3105 = vld [vmem:[%s603 + $0x15c] sm:$0xff]
        %v3106 = vld [vmem:[%s603 + $0x16c] sm:$0xff]
        %v3107 = vld [vmem:[%s603 + $0x174] sm:$0xff]
        %3140 = vrot.lane.b32.xlu0 %v3076, 96
        %v3141 = vpop.permute.xlu0 %3140
        %3142 = vrot.lane.b32.xlu0 %v3077, 96
        %v3143 = vpop.permute.xlu0 %3142
        %3144 = vrot.lane.b32.xlu0 %v3078, 96
        %v3145 = vpop.permute.xlu0 %3144
        %3146 = vrot.lane.b32.xlu0 %v3079, 96
        %v3147 = vpop.permute.xlu0 %3146
        %3148 = vrot.lane.b32.xlu0 %v3080, 96
        %v3149 = vpop.permute.xlu0 %3148
        %3150 = vrot.lane.b32.xlu0 %v3081, 96
        %v3151 = vpop.permute.xlu0 %3150
        %3152 = vrot.lane.b32.xlu0 %v3082, 96
        %v3153 = vpop.permute.xlu0 %3152
        %3154 = vrot.lane.b32.xlu0 %v3083, 96
        %v3155 = vpop.permute.xlu0 %3154
        %3156 = vrot.lane.b32.xlu0 %v3084, 96
        %v3157 = vpop.permute.xlu0 %3156
        %3158 = vrot.lane.b32.xlu0 %v3085, 96
        %v3159 = vpop.permute.xlu0 %3158
        %3160 = vrot.lane.b32.xlu0 %v3086, 96
        %v3161 = vpop.permute.xlu0 %3160
        %3162 = vrot.lane.b32.xlu0 %v3087, 96
        %v3163 = vpop.permute.xlu0 %3162
        %3164 = vrot.lane.b32.xlu0 %v3088, 96
        %v3165 = vpop.permute.xlu0 %3164
        %3166 = vrot.lane.b32.xlu0 %v3089, 96
        %v3167 = vpop.permute.xlu0 %3166
        %3168 = vrot.lane.b32.xlu0 %v3090, 96
        %v3169 = vpop.permute.xlu0 %3168
        %3170 = vrot.lane.b32.xlu0 %v3091, 96
        %v3171 = vpop.permute.xlu0 %3170
        %3172 = vrot.lane.b32.xlu0 %v3092, 96
        %v3173 = vpop.permute.xlu0 %3172
        %3174 = vrot.lane.b32.xlu0 %v3093, 96
        %v3175 = vpop.permute.xlu0 %3174
        %3176 = vrot.lane.b32.xlu0 %v3094, 96
        %v3177 = vpop.permute.xlu0 %3176
        %3178 = vrot.lane.b32.xlu0 %v3095, 96
        %v3179 = vpop.permute.xlu0 %3178
        %3180 = vrot.lane.b32.xlu0 %v3096, 96
        %v3181 = vpop.permute.xlu0 %3180
        %3182 = vrot.lane.b32.xlu0 %v3097, 96
        %v3183 = vpop.permute.xlu0 %3182
        %3184 = vrot.lane.b32.xlu0 %v3098, 96
        %v3185 = vpop.permute.xlu0 %3184
        %3186 = vrot.lane.b32.xlu0 %v3099, 96
        %v3187 = vpop.permute.xlu0 %3186
        %3188 = vrot.lane.b32.xlu0 %v3100, 96
        %v3189 = vpop.permute.xlu0 %3188
        %3190 = vrot.lane.b32.xlu0 %v3101, 96
        %v3191 = vpop.permute.xlu0 %3190
        %3192 = vrot.lane.b32.xlu0 %v3102, 96
        %v3193 = vpop.permute.xlu0 %3192
        %3194 = vrot.lane.b32.xlu0 %v3103, 96
        %v3195 = vpop.permute.xlu0 %3194
        %3196 = vrot.lane.b32.xlu0 %v3104, 96
        %v3197 = vpop.permute.xlu0 %3196
        %3198 = vrot.lane.b32.xlu0 %v3105, 96
        %v3199 = vpop.permute.xlu0 %3198
        %3200 = vrot.lane.b32.xlu0 %v3106, 96
        %v3201 = vpop.permute.xlu0 %3200
        %3202 = vrot.lane.b32.xlu0 %v3107, 96
        %v3203 = vpop.permute.xlu0 %3202
        %3236 = vst.msk [vmem:[#allocation3 + $0x8] sm:$0xff] %vm1826, %v3141
        %3237 = vst.msk [vmem:[#allocation3 + $0x28] sm:$0xff] %vm1826, %v3143
        %3238 = vst.msk [vmem:[#allocation3 + $0x48] sm:$0xff] %vm1826, %v3145
        %3239 = vst.msk [vmem:[#allocation3 + $0x68] sm:$0xff] %vm1826, %v3147
        %3240 = vst.msk [vmem:[#allocation3 + $0x88] sm:$0xff] %vm1826, %v3149
        %3241 = vst.msk [vmem:[#allocation3 + $0xa8] sm:$0xff] %vm1826, %v3151
        %3242 = vst.msk [vmem:[#allocation3 + $0xc8] sm:$0xff] %vm1826, %v3153
        %3243 = vst.msk [vmem:[#allocation3 + $0xe8] sm:$0xff] %vm1826, %v3155
        %3244 = vst.msk [vmem:[#allocation3 + $0x108] sm:$0xff] %vm1826, %v3157
        %3245 = vst.msk [vmem:[#allocation3 + $0x128] sm:$0xff] %vm1826, %v3159
        %3246 = vst.msk [vmem:[#allocation3 + $0x148] sm:$0xff] %vm1826, %v3161
        %3247 = vst.msk [vmem:[#allocation3 + $0x168] sm:$0xff] %vm1826, %v3163
        %3248 = vst.msk [vmem:[#allocation3 + $0x188] sm:$0xff] %vm1826, %v3165
        %3249 = vst.msk [vmem:[#allocation3 + $0x1a8] sm:$0xff] %vm1826, %v3167
        %3250 = vst.msk [vmem:[#allocation3 + $0x1c8] sm:$0xff] %vm1826, %v3169
        %3251 = vst.msk [vmem:[#allocation3 + $0x1e8] sm:$0xff] %vm1826, %v3171
        %3252 = vst.msk [vmem:[#allocation3 + $0x208] sm:$0xff] %vm1826, %v3173
        %3253 = vst.msk [vmem:[#allocation3 + $0x228] sm:$0xff] %vm1826, %v3175
        %3254 = vst.msk [vmem:[#allocation3 + $0x248] sm:$0xff] %vm1826, %v3177
        %3255 = vst.msk [vmem:[#allocation3 + $0x268] sm:$0xff] %vm1826, %v3179
        %3256 = vst.msk [vmem:[#allocation3 + $0x288] sm:$0xff] %vm1826, %v3181
        %3257 = vst.msk [vmem:[#allocation3 + $0x2a8] sm:$0xff] %vm1826, %v3183
        %3258 = vst.msk [vmem:[#allocation3 + $0x2c8] sm:$0xff] %vm1826, %v3185
        %3259 = vst.msk [vmem:[#allocation3 + $0x2e8] sm:$0xff] %vm1826, %v3187
        %3260 = vst.msk [vmem:[#allocation3 + $0x308] sm:$0xff] %vm1826, %v3189
        %3261 = vst.msk [vmem:[#allocation3 + $0x328] sm:$0xff] %vm1826, %v3191
        %3262 = vst.msk [vmem:[#allocation3 + $0x348] sm:$0xff] %vm1826, %v3193
        %3263 = vst.msk [vmem:[#allocation3 + $0x368] sm:$0xff] %vm1826, %v3195
        %3264 = vst.msk [vmem:[#allocation3 + $0x388] sm:$0xff] %vm1826, %v3197
        %3265 = vst.msk [vmem:[#allocation3 + $0x3a8] sm:$0xff] %vm1826, %v3199
        %3266 = vst.msk [vmem:[#allocation3 + $0x3c8] sm:$0xff] %vm1826, %v3201
        %3267 = vst.msk [vmem:[#allocation3 + $0x3e8] sm:$0xff] %vm1826, %v3203
        %s3268 = scalar_lea.vmem [#allocation2], 72
        %v3269 = vld [vmem:[%s3268] sm:$0xff]
        %v3270 = vld [vmem:[%s3268 + $0x8] sm:$0xff]
        %v3271 = vld [vmem:[%s3268 + $0x18] sm:$0xff]
        %v3272 = vld [vmem:[%s3268 + $0x20] sm:$0xff]
        %v3273 = vld [vmem:[%s3268 + $0x30] sm:$0xff]
        %v3274 = vld [vmem:[%s3268 + $0x38] sm:$0xff]
        %v3275 = vld [vmem:[%s3268 + $0x48] sm:$0xff]
        %v3276 = vld [vmem:[%s3268 + $0x50] sm:$0xff]
        %v3277 = vld [vmem:[%s3268 + $0x60] sm:$0xff]
        %v3278 = vld [vmem:[%s3268 + $0x68] sm:$0xff]
        %v3279 = vld [vmem:[%s3268 + $0x78] sm:$0xff]
        %v3280 = vld [vmem:[%s3268 + $0x80] sm:$0xff]
        %v3281 = vld [vmem:[%s3268 + $0x90] sm:$0xff]
        %v3282 = vld [vmem:[%s3268 + $0x98] sm:$0xff]
        %v3283 = vld [vmem:[%s3268 + $0xa8] sm:$0xff]
        %v3284 = vld [vmem:[%s3268 + $0xb0] sm:$0xff]
        %v3285 = vld [vmem:[%s3268 + $0xc0] sm:$0xff]
        %v3286 = vld [vmem:[%s3268 + $0xc8] sm:$0xff]
        %v3287 = vld [vmem:[%s3268 + $0xd8] sm:$0xff]
        %v3288 = vld [vmem:[%s3268 + $0xe0] sm:$0xff]
        %v3289 = vld [vmem:[%s3268 + $0xf0] sm:$0xff]
        %v3290 = vld [vmem:[%s3268 + $0xf8] sm:$0xff]
        %v3291 = vld [vmem:[%s3268 + $0x108] sm:$0xff]
        %v3292 = vld [vmem:[%s3268 + $0x110] sm:$0xff]
        %v3293 = vld [vmem:[%s3268 + $0x120] sm:$0xff]
        %v3294 = vld [vmem:[%s3268 + $0x128] sm:$0xff]
        %v3295 = vld [vmem:[%s3268 + $0x138] sm:$0xff]
        %v3296 = vld [vmem:[%s3268 + $0x140] sm:$0xff]
        %v3297 = vld [vmem:[%s3268 + $0x150] sm:$0xff]
        %v3298 = vld [vmem:[%s3268 + $0x158] sm:$0xff]
        %v3299 = vld [vmem:[%s3268 + $0x168] sm:$0xff]
        %v3300 = vld [vmem:[%s3268 + $0x170] sm:$0xff]
        %3333 = vrot.lane.b32.xlu0 %v3269, 112
        %v3334 = vpop.permute.xlu0 %3333
        %3335 = vrot.lane.b32.xlu0 %v3270, 112
        %v3336 = vpop.permute.xlu0 %3335
        %3337 = vrot.lane.b32.xlu0 %v3271, 112
        %v3338 = vpop.permute.xlu0 %3337
        %3339 = vrot.lane.b32.xlu0 %v3272, 112
        %v3340 = vpop.permute.xlu0 %3339
        %3341 = vrot.lane.b32.xlu0 %v3273, 112
        %v3342 = vpop.permute.xlu0 %3341
        %3343 = vrot.lane.b32.xlu0 %v3274, 112
        %v3344 = vpop.permute.xlu0 %3343
        %3345 = vrot.lane.b32.xlu0 %v3275, 112
        %v3346 = vpop.permute.xlu0 %3345
        %3347 = vrot.lane.b32.xlu0 %v3276, 112
        %v3348 = vpop.permute.xlu0 %3347
        %3349 = vrot.lane.b32.xlu0 %v3277, 112
        %v3350 = vpop.permute.xlu0 %3349
        %3351 = vrot.lane.b32.xlu0 %v3278, 112
        %v3352 = vpop.permute.xlu0 %3351
        %3353 = vrot.lane.b32.xlu0 %v3279, 112
        %v3354 = vpop.permute.xlu0 %3353
        %3355 = vrot.lane.b32.xlu0 %v3280, 112
        %v3356 = vpop.permute.xlu0 %3355
        %3357 = vrot.lane.b32.xlu0 %v3281, 112
        %v3358 = vpop.permute.xlu0 %3357
        %3359 = vrot.lane.b32.xlu0 %v3282, 112
        %v3360 = vpop.permute.xlu0 %3359
        %3361 = vrot.lane.b32.xlu0 %v3283, 112
        %v3362 = vpop.permute.xlu0 %3361
        %3363 = vrot.lane.b32.xlu0 %v3284, 112
        %v3364 = vpop.permute.xlu0 %3363
        %3365 = vrot.lane.b32.xlu0 %v3285, 112
        %v3366 = vpop.permute.xlu0 %3365
        %3367 = vrot.lane.b32.xlu0 %v3286, 112
        %v3368 = vpop.permute.xlu0 %3367
        %3369 = vrot.lane.b32.xlu0 %v3287, 112
        %v3370 = vpop.permute.xlu0 %3369
        %3371 = vrot.lane.b32.xlu0 %v3288, 112
        %v3372 = vpop.permute.xlu0 %3371
        %3373 = vrot.lane.b32.xlu0 %v3289, 112
        %v3374 = vpop.permute.xlu0 %3373
        %3375 = vrot.lane.b32.xlu0 %v3290, 112
        %v3376 = vpop.permute.xlu0 %3375
        %3377 = vrot.lane.b32.xlu0 %v3291, 112
        %v3378 = vpop.permute.xlu0 %3377
        %3379 = vrot.lane.b32.xlu0 %v3292, 112
        %v3380 = vpop.permute.xlu0 %3379
        %3381 = vrot.lane.b32.xlu0 %v3293, 112
        %v3382 = vpop.permute.xlu0 %3381
        %3383 = vrot.lane.b32.xlu0 %v3294, 112
        %v3384 = vpop.permute.xlu0 %3383
        %3385 = vrot.lane.b32.xlu0 %v3295, 112
        %v3386 = vpop.permute.xlu0 %3385
        %3387 = vrot.lane.b32.xlu0 %v3296, 112
        %v3388 = vpop.permute.xlu0 %3387
        %3389 = vrot.lane.b32.xlu0 %v3297, 112
        %v3390 = vpop.permute.xlu0 %3389
        %3391 = vrot.lane.b32.xlu0 %v3298, 112
        %v3392 = vpop.permute.xlu0 %3391
        %3393 = vrot.lane.b32.xlu0 %v3299, 112
        %v3394 = vpop.permute.xlu0 %3393
        %3395 = vrot.lane.b32.xlu0 %v3300, 112
        %v3396 = vpop.permute.xlu0 %3395
        %3429 = vst.msk [vmem:[#allocation3 + $0x8] sm:$0xff] %vm2019, %v3334
        %3430 = vst.msk [vmem:[#allocation3 + $0x28] sm:$0xff] %vm2019, %v3336
        %3431 = vst.msk [vmem:[#allocation3 + $0x48] sm:$0xff] %vm2019, %v3338
        %3432 = vst.msk [vmem:[#allocation3 + $0x68] sm:$0xff] %vm2019, %v3340
        %3433 = vst.msk [vmem:[#allocation3 + $0x88] sm:$0xff] %vm2019, %v3342
        %3434 = vst.msk [vmem:[#allocation3 + $0xa8] sm:$0xff] %vm2019, %v3344
        %3435 = vst.msk [vmem:[#allocation3 + $0xc8] sm:$0xff] %vm2019, %v3346
        %3436 = vst.msk [vmem:[#allocation3 + $0xe8] sm:$0xff] %vm2019, %v3348
        %3437 = vst.msk [vmem:[#allocation3 + $0x108] sm:$0xff] %vm2019, %v3350
        %3438 = vst.msk [vmem:[#allocation3 + $0x128] sm:$0xff] %vm2019, %v3352
        %3439 = vst.msk [vmem:[#allocation3 + $0x148] sm:$0xff] %vm2019, %v3354
        %3440 = vst.msk [vmem:[#allocation3 + $0x168] sm:$0xff] %vm2019, %v3356
        %3441 = vst.msk [vmem:[#allocation3 + $0x188] sm:$0xff] %vm2019, %v3358
        %3442 = vst.msk [vmem:[#allocation3 + $0x1a8] sm:$0xff] %vm2019, %v3360
        %3443 = vst.msk [vmem:[#allocation3 + $0x1c8] sm:$0xff] %vm2019, %v3362
        %3444 = vst.msk [vmem:[#allocation3 + $0x1e8] sm:$0xff] %vm2019, %v3364
        %3445 = vst.msk [vmem:[#allocation3 + $0x208] sm:$0xff] %vm2019, %v3366
        %3446 = vst.msk [vmem:[#allocation3 + $0x228] sm:$0xff] %vm2019, %v3368
        %3447 = vst.msk [vmem:[#allocation3 + $0x248] sm:$0xff] %vm2019, %v3370
        %3448 = vst.msk [vmem:[#allocation3 + $0x268] sm:$0xff] %vm2019, %v3372
        %3449 = vst.msk [vmem:[#allocation3 + $0x288] sm:$0xff] %vm2019, %v3374
        %3450 = vst.msk [vmem:[#allocation3 + $0x2a8] sm:$0xff] %vm2019, %v3376
        %3451 = vst.msk [vmem:[#allocation3 + $0x2c8] sm:$0xff] %vm2019, %v3378
        %3452 = vst.msk [vmem:[#allocation3 + $0x2e8] sm:$0xff] %vm2019, %v3380
        %3453 = vst.msk [vmem:[#allocation3 + $0x308] sm:$0xff] %vm2019, %v3382
        %3454 = vst.msk [vmem:[#allocation3 + $0x328] sm:$0xff] %vm2019, %v3384
        %3455 = vst.msk [vmem:[#allocation3 + $0x348] sm:$0xff] %vm2019, %v3386
        %3456 = vst.msk [vmem:[#allocation3 + $0x368] sm:$0xff] %vm2019, %v3388
        %3457 = vst.msk [vmem:[#allocation3 + $0x388] sm:$0xff] %vm2019, %v3390
        %3458 = vst.msk [vmem:[#allocation3 + $0x3a8] sm:$0xff] %vm2019, %v3392
        %3459 = vst.msk [vmem:[#allocation3 + $0x3c8] sm:$0xff] %vm2019, %v3394
        %3460 = vst.msk [vmem:[#allocation3 + $0x3e8] sm:$0xff] %vm2019, %v3396
        %v3461 = vld [vmem:[%s3268 + $0x1] sm:$0xff]
        %v3462 = vld [vmem:[%s3268 + $0x9] sm:$0xff]
        %v3463 = vld [vmem:[%s3268 + $0x19] sm:$0xff]
        %v3464 = vld [vmem:[%s3268 + $0x21] sm:$0xff]
        %v3465 = vld [vmem:[%s3268 + $0x31] sm:$0xff]
        %v3466 = vld [vmem:[%s3268 + $0x39] sm:$0xff]
        %v3467 = vld [vmem:[%s3268 + $0x49] sm:$0xff]
        %v3468 = vld [vmem:[%s3268 + $0x51] sm:$0xff]
        %v3469 = vld [vmem:[%s3268 + $0x61] sm:$0xff]
        %v3470 = vld [vmem:[%s3268 + $0x69] sm:$0xff]
        %v3471 = vld [vmem:[%s3268 + $0x79] sm:$0xff]
        %v3472 = vld [vmem:[%s3268 + $0x81] sm:$0xff]
        %v3473 = vld [vmem:[%s3268 + $0x91] sm:$0xff]
        %v3474 = vld [vmem:[%s3268 + $0x99] sm:$0xff]
        %v3475 = vld [vmem:[%s3268 + $0xa9] sm:$0xff]
        %v3476 = vld [vmem:[%s3268 + $0xb1] sm:$0xff]
        %v3477 = vld [vmem:[%s3268 + $0xc1] sm:$0xff]
        %v3478 = vld [vmem:[%s3268 + $0xc9] sm:$0xff]
        %v3479 = vld [vmem:[%s3268 + $0xd9] sm:$0xff]
        %v3480 = vld [vmem:[%s3268 + $0xe1] sm:$0xff]
        %v3481 = vld [vmem:[%s3268 + $0xf1] sm:$0xff]
        %v3482 = vld [vmem:[%s3268 + $0xf9] sm:$0xff]
        %v3483 = vld [vmem:[%s3268 + $0x109] sm:$0xff]
        %v3484 = vld [vmem:[%s3268 + $0x111] sm:$0xff]
        %v3485 = vld [vmem:[%s3268 + $0x121] sm:$0xff]
        %v3486 = vld [vmem:[%s3268 + $0x129] sm:$0xff]
        %v3487 = vld [vmem:[%s3268 + $0x139] sm:$0xff]
        %v3488 = vld [vmem:[%s3268 + $0x141] sm:$0xff]
        %v3489 = vld [vmem:[%s3268 + $0x151] sm:$0xff]
        %v3490 = vld [vmem:[%s3268 + $0x159] sm:$0xff]
        %v3491 = vld [vmem:[%s3268 + $0x169] sm:$0xff]
        %v3492 = vld [vmem:[%s3268 + $0x171] sm:$0xff]
        %3493 = vst.msk [vmem:[#allocation3 + $0x10] sm:$0xff] %vm509, %v3461
        %3494 = vst.msk [vmem:[#allocation3 + $0x30] sm:$0xff] %vm509, %v3462
        %3495 = vst.msk [vmem:[#allocation3 + $0x50] sm:$0xff] %vm509, %v3463
        %3496 = vst.msk [vmem:[#allocation3 + $0x70] sm:$0xff] %vm509, %v3464
        %3497 = vst.msk [vmem:[#allocation3 + $0x90] sm:$0xff] %vm509, %v3465
        %3498 = vst.msk [vmem:[#allocation3 + $0xb0] sm:$0xff] %vm509, %v3466
        %3499 = vst.msk [vmem:[#allocation3 + $0xd0] sm:$0xff] %vm509, %v3467
        %3500 = vst.msk [vmem:[#allocation3 + $0xf0] sm:$0xff] %vm509, %v3468
        %3501 = vst.msk [vmem:[#allocation3 + $0x110] sm:$0xff] %vm509, %v3469
        %3502 = vst.msk [vmem:[#allocation3 + $0x130] sm:$0xff] %vm509, %v3470
        %3503 = vst.msk [vmem:[#allocation3 + $0x150] sm:$0xff] %vm509, %v3471
        %3504 = vst.msk [vmem:[#allocation3 + $0x170] sm:$0xff] %vm509, %v3472
        %3505 = vst.msk [vmem:[#allocation3 + $0x190] sm:$0xff] %vm509, %v3473
        %3506 = vst.msk [vmem:[#allocation3 + $0x1b0] sm:$0xff] %vm509, %v3474
        %3507 = vst.msk [vmem:[#allocation3 + $0x1d0] sm:$0xff] %vm509, %v3475
        %3508 = vst.msk [vmem:[#allocation3 + $0x1f0] sm:$0xff] %vm509, %v3476
        %3509 = vst.msk [vmem:[#allocation3 + $0x210] sm:$0xff] %vm509, %v3477
        %3510 = vst.msk [vmem:[#allocation3 + $0x230] sm:$0xff] %vm509, %v3478
        %3511 = vst.msk [vmem:[#allocation3 + $0x250] sm:$0xff] %vm509, %v3479
        %3512 = vst.msk [vmem:[#allocation3 + $0x270] sm:$0xff] %vm509, %v3480
        %3513 = vst.msk [vmem:[#allocation3 + $0x290] sm:$0xff] %vm509, %v3481
        %3514 = vst.msk [vmem:[#allocation3 + $0x2b0] sm:$0xff] %vm509, %v3482
        %3515 = vst.msk [vmem:[#allocation3 + $0x2d0] sm:$0xff] %vm509, %v3483
        %3516 = vst.msk [vmem:[#allocation3 + $0x2f0] sm:$0xff] %vm509, %v3484
        %3517 = vst.msk [vmem:[#allocation3 + $0x310] sm:$0xff] %vm509, %v3485
        %3518 = vst.msk [vmem:[#allocation3 + $0x330] sm:$0xff] %vm509, %v3486
        %3519 = vst.msk [vmem:[#allocation3 + $0x350] sm:$0xff] %vm509, %v3487
        %3520 = vst.msk [vmem:[#allocation3 + $0x370] sm:$0xff] %vm509, %v3488
        %3521 = vst.msk [vmem:[#allocation3 + $0x390] sm:$0xff] %vm509, %v3489
        %3522 = vst.msk [vmem:[#allocation3 + $0x3b0] sm:$0xff] %vm509, %v3490
        %3523 = vst.msk [vmem:[#allocation3 + $0x3d0] sm:$0xff] %vm509, %v3491
        %3524 = vst.msk [vmem:[#allocation3 + $0x3f0] sm:$0xff] %vm509, %v3492
        %v3525 = vld [vmem:[%s3268 + $0x2] sm:$0xff]
        %v3526 = vld [vmem:[%s3268 + $0xa] sm:$0xff]
        %v3527 = vld [vmem:[%s3268 + $0x1a] sm:$0xff]
        %v3528 = vld [vmem:[%s3268 + $0x22] sm:$0xff]
        %v3529 = vld [vmem:[%s3268 + $0x32] sm:$0xff]
        %v3530 = vld [vmem:[%s3268 + $0x3a] sm:$0xff]
        %v3531 = vld [vmem:[%s3268 + $0x4a] sm:$0xff]
        %v3532 = vld [vmem:[%s3268 + $0x52] sm:$0xff]
        %v3533 = vld [vmem:[%s3268 + $0x62] sm:$0xff]
        %v3534 = vld [vmem:[%s3268 + $0x6a] sm:$0xff]
        %v3535 = vld [vmem:[%s3268 + $0x7a] sm:$0xff]
        %v3536 = vld [vmem:[%s3268 + $0x82] sm:$0xff]
        %v3537 = vld [vmem:[%s3268 + $0x92] sm:$0xff]
        %v3538 = vld [vmem:[%s3268 + $0x9a] sm:$0xff]
        %v3539 = vld [vmem:[%s3268 + $0xaa] sm:$0xff]
        %v3540 = vld [vmem:[%s3268 + $0xb2] sm:$0xff]
        %v3541 = vld [vmem:[%s3268 + $0xc2] sm:$0xff]
        %v3542 = vld [vmem:[%s3268 + $0xca] sm:$0xff]
        %v3543 = vld [vmem:[%s3268 + $0xda] sm:$0xff]
        %v3544 = vld [vmem:[%s3268 + $0xe2] sm:$0xff]
        %v3545 = vld [vmem:[%s3268 + $0xf2] sm:$0xff]
        %v3546 = vld [vmem:[%s3268 + $0xfa] sm:$0xff]
        %v3547 = vld [vmem:[%s3268 + $0x10a] sm:$0xff]
        %v3548 = vld [vmem:[%s3268 + $0x112] sm:$0xff]
        %v3549 = vld [vmem:[%s3268 + $0x122] sm:$0xff]
        %v3550 = vld [vmem:[%s3268 + $0x12a] sm:$0xff]
        %v3551 = vld [vmem:[%s3268 + $0x13a] sm:$0xff]
        %v3552 = vld [vmem:[%s3268 + $0x142] sm:$0xff]
        %v3553 = vld [vmem:[%s3268 + $0x152] sm:$0xff]
        %v3554 = vld [vmem:[%s3268 + $0x15a] sm:$0xff]
        %v3555 = vld [vmem:[%s3268 + $0x16a] sm:$0xff]
        %v3556 = vld [vmem:[%s3268 + $0x172] sm:$0xff]
        %3589 = vrot.lane.b32.xlu0 %v3525, 16
        %v3590 = vpop.permute.xlu0 %3589
        %3591 = vrot.lane.b32.xlu0 %v3526, 16
        %v3592 = vpop.permute.xlu0 %3591
        %3593 = vrot.lane.b32.xlu0 %v3527, 16
        %v3594 = vpop.permute.xlu0 %3593
        %3595 = vrot.lane.b32.xlu0 %v3528, 16
        %v3596 = vpop.permute.xlu0 %3595
        %3597 = vrot.lane.b32.xlu0 %v3529, 16
        %v3598 = vpop.permute.xlu0 %3597
        %3599 = vrot.lane.b32.xlu0 %v3530, 16
        %v3600 = vpop.permute.xlu0 %3599
        %3601 = vrot.lane.b32.xlu0 %v3531, 16
        %v3602 = vpop.permute.xlu0 %3601
        %3603 = vrot.lane.b32.xlu0 %v3532, 16
        %v3604 = vpop.permute.xlu0 %3603
        %3605 = vrot.lane.b32.xlu0 %v3533, 16
        %v3606 = vpop.permute.xlu0 %3605
        %3607 = vrot.lane.b32.xlu0 %v3534, 16
        %v3608 = vpop.permute.xlu0 %3607
        %3609 = vrot.lane.b32.xlu0 %v3535, 16
        %v3610 = vpop.permute.xlu0 %3609
        %3611 = vrot.lane.b32.xlu0 %v3536, 16
        %v3612 = vpop.permute.xlu0 %3611
        %3613 = vrot.lane.b32.xlu0 %v3537, 16
        %v3614 = vpop.permute.xlu0 %3613
        %3615 = vrot.lane.b32.xlu0 %v3538, 16
        %v3616 = vpop.permute.xlu0 %3615
        %3617 = vrot.lane.b32.xlu0 %v3539, 16
        %v3618 = vpop.permute.xlu0 %3617
        %3619 = vrot.lane.b32.xlu0 %v3540, 16
        %v3620 = vpop.permute.xlu0 %3619
        %3621 = vrot.lane.b32.xlu0 %v3541, 16
        %v3622 = vpop.permute.xlu0 %3621
        %3623 = vrot.lane.b32.xlu0 %v3542, 16
        %v3624 = vpop.permute.xlu0 %3623
        %3625 = vrot.lane.b32.xlu0 %v3543, 16
        %v3626 = vpop.permute.xlu0 %3625
        %3627 = vrot.lane.b32.xlu0 %v3544, 16
        %v3628 = vpop.permute.xlu0 %3627
        %3629 = vrot.lane.b32.xlu0 %v3545, 16
        %v3630 = vpop.permute.xlu0 %3629
        %3631 = vrot.lane.b32.xlu0 %v3546, 16
        %v3632 = vpop.permute.xlu0 %3631
        %3633 = vrot.lane.b32.xlu0 %v3547, 16
        %v3634 = vpop.permute.xlu0 %3633
        %3635 = vrot.lane.b32.xlu0 %v3548, 16
        %v3636 = vpop.permute.xlu0 %3635
        %3637 = vrot.lane.b32.xlu0 %v3549, 16
        %v3638 = vpop.permute.xlu0 %3637
        %3639 = vrot.lane.b32.xlu0 %v3550, 16
        %v3640 = vpop.permute.xlu0 %3639
        %3641 = vrot.lane.b32.xlu0 %v3551, 16
        %v3642 = vpop.permute.xlu0 %3641
        %3643 = vrot.lane.b32.xlu0 %v3552, 16
        %v3644 = vpop.permute.xlu0 %3643
        %3645 = vrot.lane.b32.xlu0 %v3553, 16
        %v3646 = vpop.permute.xlu0 %3645
        %3647 = vrot.lane.b32.xlu0 %v3554, 16
        %v3648 = vpop.permute.xlu0 %3647
        %3649 = vrot.lane.b32.xlu0 %v3555, 16
        %v3650 = vpop.permute.xlu0 %3649
        %3651 = vrot.lane.b32.xlu0 %v3556, 16
        %v3652 = vpop.permute.xlu0 %3651
        %3685 = vst.msk [vmem:[#allocation3 + $0x10] sm:$0xff] %vm860, %v3590
        %3686 = vst.msk [vmem:[#allocation3 + $0x30] sm:$0xff] %vm860, %v3592
        %3687 = vst.msk [vmem:[#allocation3 + $0x50] sm:$0xff] %vm860, %v3594
        %3688 = vst.msk [vmem:[#allocation3 + $0x70] sm:$0xff] %vm860, %v3596
        %3689 = vst.msk [vmem:[#allocation3 + $0x90] sm:$0xff] %vm860, %v3598
        %3690 = vst.msk [vmem:[#allocation3 + $0xb0] sm:$0xff] %vm860, %v3600
        %3691 = vst.msk [vmem:[#allocation3 + $0xd0] sm:$0xff] %vm860, %v3602
        %3692 = vst.msk [vmem:[#allocation3 + $0xf0] sm:$0xff] %vm860, %v3604
        %3693 = vst.msk [vmem:[#allocation3 + $0x110] sm:$0xff] %vm860, %v3606
        %3694 = vst.msk [vmem:[#allocation3 + $0x130] sm:$0xff] %vm860, %v3608
        %3695 = vst.msk [vmem:[#allocation3 + $0x150] sm:$0xff] %vm860, %v3610
        %3696 = vst.msk [vmem:[#allocation3 + $0x170] sm:$0xff] %vm860, %v3612
        %3697 = vst.msk [vmem:[#allocation3 + $0x190] sm:$0xff] %vm860, %v3614
        %3698 = vst.msk [vmem:[#allocation3 + $0x1b0] sm:$0xff] %vm860, %v3616
        %3699 = vst.msk [vmem:[#allocation3 + $0x1d0] sm:$0xff] %vm860, %v3618
        %3700 = vst.msk [vmem:[#allocation3 + $0x1f0] sm:$0xff] %vm860, %v3620
        %3701 = vst.msk [vmem:[#allocation3 + $0x210] sm:$0xff] %vm860, %v3622
        %3702 = vst.msk [vmem:[#allocation3 + $0x230] sm:$0xff] %vm860, %v3624
        %3703 = vst.msk [vmem:[#allocation3 + $0x250] sm:$0xff] %vm860, %v3626
        %3704 = vst.msk [vmem:[#allocation3 + $0x270] sm:$0xff] %vm860, %v3628
        %3705 = vst.msk [vmem:[#allocation3 + $0x290] sm:$0xff] %vm860, %v3630
        %3706 = vst.msk [vmem:[#allocation3 + $0x2b0] sm:$0xff] %vm860, %v3632
        %3707 = vst.msk [vmem:[#allocation3 + $0x2d0] sm:$0xff] %vm860, %v3634
        %3708 = vst.msk [vmem:[#allocation3 + $0x2f0] sm:$0xff] %vm860, %v3636
        %3709 = vst.msk [vmem:[#allocation3 + $0x310] sm:$0xff] %vm860, %v3638
        %3710 = vst.msk [vmem:[#allocation3 + $0x330] sm:$0xff] %vm860, %v3640
        %3711 = vst.msk [vmem:[#allocation3 + $0x350] sm:$0xff] %vm860, %v3642
        %3712 = vst.msk [vmem:[#allocation3 + $0x370] sm:$0xff] %vm860, %v3644
        %3713 = vst.msk [vmem:[#allocation3 + $0x390] sm:$0xff] %vm860, %v3646
        %3714 = vst.msk [vmem:[#allocation3 + $0x3b0] sm:$0xff] %vm860, %v3648
        %3715 = vst.msk [vmem:[#allocation3 + $0x3d0] sm:$0xff] %vm860, %v3650
        %3716 = vst.msk [vmem:[#allocation3 + $0x3f0] sm:$0xff] %vm860, %v3652
        %v3717 = vld [vmem:[%s3268 + $0x3] sm:$0xff]
        %v3718 = vld [vmem:[%s3268 + $0xb] sm:$0xff]
        %v3719 = vld [vmem:[%s3268 + $0x1b] sm:$0xff]
        %v3720 = vld [vmem:[%s3268 + $0x23] sm:$0xff]
        %v3721 = vld [vmem:[%s3268 + $0x33] sm:$0xff]
        %v3722 = vld [vmem:[%s3268 + $0x3b] sm:$0xff]
        %v3723 = vld [vmem:[%s3268 + $0x4b] sm:$0xff]
        %v3724 = vld [vmem:[%s3268 + $0x53] sm:$0xff]
        %v3725 = vld [vmem:[%s3268 + $0x63] sm:$0xff]
        %v3726 = vld [vmem:[%s3268 + $0x6b] sm:$0xff]
        %v3727 = vld [vmem:[%s3268 + $0x7b] sm:$0xff]
        %v3728 = vld [vmem:[%s3268 + $0x83] sm:$0xff]
        %v3729 = vld [vmem:[%s3268 + $0x93] sm:$0xff]
        %v3730 = vld [vmem:[%s3268 + $0x9b] sm:$0xff]
        %v3731 = vld [vmem:[%s3268 + $0xab] sm:$0xff]
        %v3732 = vld [vmem:[%s3268 + $0xb3] sm:$0xff]
        %v3733 = vld [vmem:[%s3268 + $0xc3] sm:$0xff]
        %v3734 = vld [vmem:[%s3268 + $0xcb] sm:$0xff]
        %v3735 = vld [vmem:[%s3268 + $0xdb] sm:$0xff]
        %v3736 = vld [vmem:[%s3268 + $0xe3] sm:$0xff]
        %v3737 = vld [vmem:[%s3268 + $0xf3] sm:$0xff]
        %v3738 = vld [vmem:[%s3268 + $0xfb] sm:$0xff]
        %v3739 = vld [vmem:[%s3268 + $0x10b] sm:$0xff]
        %v3740 = vld [vmem:[%s3268 + $0x113] sm:$0xff]
        %v3741 = vld [vmem:[%s3268 + $0x123] sm:$0xff]
        %v3742 = vld [vmem:[%s3268 + $0x12b] sm:$0xff]
        %v3743 = vld [vmem:[%s3268 + $0x13b] sm:$0xff]
        %v3744 = vld [vmem:[%s3268 + $0x143] sm:$0xff]
        %v3745 = vld [vmem:[%s3268 + $0x153] sm:$0xff]
        %v3746 = vld [vmem:[%s3268 + $0x15b] sm:$0xff]
        %v3747 = vld [vmem:[%s3268 + $0x16b] sm:$0xff]
        %v3748 = vld [vmem:[%s3268 + $0x173] sm:$0xff]
        %3781 = vrot.lane.b32.xlu0 %v3717, 32
        %v3782 = vpop.permute.xlu0 %3781
        %3783 = vrot.lane.b32.xlu0 %v3718, 32
        %v3784 = vpop.permute.xlu0 %3783
        %3785 = vrot.lane.b32.xlu0 %v3719, 32
        %v3786 = vpop.permute.xlu0 %3785
        %3787 = vrot.lane.b32.xlu0 %v3720, 32
        %v3788 = vpop.permute.xlu0 %3787
        %3789 = vrot.lane.b32.xlu0 %v3721, 32
        %v3790 = vpop.permute.xlu0 %3789
        %3791 = vrot.lane.b32.xlu0 %v3722, 32
        %v3792 = vpop.permute.xlu0 %3791
        %3793 = vrot.lane.b32.xlu0 %v3723, 32
        %v3794 = vpop.permute.xlu0 %3793
        %3795 = vrot.lane.b32.xlu0 %v3724, 32
        %v3796 = vpop.permute.xlu0 %3795
        %3797 = vrot.lane.b32.xlu0 %v3725, 32
        %v3798 = vpop.permute.xlu0 %3797
        %3799 = vrot.lane.b32.xlu0 %v3726, 32
        %v3800 = vpop.permute.xlu0 %3799
        %3801 = vrot.lane.b32.xlu0 %v3727, 32
        %v3802 = vpop.permute.xlu0 %3801
        %3803 = vrot.lane.b32.xlu0 %v3728, 32
        %v3804 = vpop.permute.xlu0 %3803
        %3805 = vrot.lane.b32.xlu0 %v3729, 32
        %v3806 = vpop.permute.xlu0 %3805
        %3807 = vrot.lane.b32.xlu0 %v3730, 32
        %v3808 = vpop.permute.xlu0 %3807
        %3809 = vrot.lane.b32.xlu0 %v3731, 32
        %v3810 = vpop.permute.xlu0 %3809
        %3811 = vrot.lane.b32.xlu0 %v3732, 32
        %v3812 = vpop.permute.xlu0 %3811
        %3813 = vrot.lane.b32.xlu0 %v3733, 32
        %v3814 = vpop.permute.xlu0 %3813
        %3815 = vrot.lane.b32.xlu0 %v3734, 32
        %v3816 = vpop.permute.xlu0 %3815
        %3817 = vrot.lane.b32.xlu0 %v3735, 32
        %v3818 = vpop.permute.xlu0 %3817
        %3819 = vrot.lane.b32.xlu0 %v3736, 32
        %v3820 = vpop.permute.xlu0 %3819
        %3821 = vrot.lane.b32.xlu0 %v3737, 32
        %v3822 = vpop.permute.xlu0 %3821
        %3823 = vrot.lane.b32.xlu0 %v3738, 32
        %v3824 = vpop.permute.xlu0 %3823
        %3825 = vrot.lane.b32.xlu0 %v3739, 32
        %v3826 = vpop.permute.xlu0 %3825
        %3827 = vrot.lane.b32.xlu0 %v3740, 32
        %v3828 = vpop.permute.xlu0 %3827
        %3829 = vrot.lane.b32.xlu0 %v3741, 32
        %v3830 = vpop.permute.xlu0 %3829
        %3831 = vrot.lane.b32.xlu0 %v3742, 32
        %v3832 = vpop.permute.xlu0 %3831
        %3833 = vrot.lane.b32.xlu0 %v3743, 32
        %v3834 = vpop.permute.xlu0 %3833
        %3835 = vrot.lane.b32.xlu0 %v3744, 32
        %v3836 = vpop.permute.xlu0 %3835
        %3837 = vrot.lane.b32.xlu0 %v3745, 32
        %v3838 = vpop.permute.xlu0 %3837
        %3839 = vrot.lane.b32.xlu0 %v3746, 32
        %v3840 = vpop.permute.xlu0 %3839
        %3841 = vrot.lane.b32.xlu0 %v3747, 32
        %v3842 = vpop.permute.xlu0 %3841
        %3843 = vrot.lane.b32.xlu0 %v3748, 32
        %v3844 = vpop.permute.xlu0 %3843
        %3877 = vst.msk [vmem:[#allocation3 + $0x10] sm:$0xff] %vm1053, %v3782
        %3878 = vst.msk [vmem:[#allocation3 + $0x30] sm:$0xff] %vm1053, %v3784
        %3879 = vst.msk [vmem:[#allocation3 + $0x50] sm:$0xff] %vm1053, %v3786
        %3880 = vst.msk [vmem:[#allocation3 + $0x70] sm:$0xff] %vm1053, %v3788
        %3881 = vst.msk [vmem:[#allocation3 + $0x90] sm:$0xff] %vm1053, %v3790
        %3882 = vst.msk [vmem:[#allocation3 + $0xb0] sm:$0xff] %vm1053, %v3792
        %3883 = vst.msk [vmem:[#allocation3 + $0xd0] sm:$0xff] %vm1053, %v3794
        %3884 = vst.msk [vmem:[#allocation3 + $0xf0] sm:$0xff] %vm1053, %v3796
        %3885 = vst.msk [vmem:[#allocation3 + $0x110] sm:$0xff] %vm1053, %v3798
        %3886 = vst.msk [vmem:[#allocation3 + $0x130] sm:$0xff] %vm1053, %v3800
        %3887 = vst.msk [vmem:[#allocation3 + $0x150] sm:$0xff] %vm1053, %v3802
        %3888 = vst.msk [vmem:[#allocation3 + $0x170] sm:$0xff] %vm1053, %v3804
        %3889 = vst.msk [vmem:[#allocation3 + $0x190] sm:$0xff] %vm1053, %v3806
        %3890 = vst.msk [vmem:[#allocation3 + $0x1b0] sm:$0xff] %vm1053, %v3808
        %3891 = vst.msk [vmem:[#allocation3 + $0x1d0] sm:$0xff] %vm1053, %v3810
        %3892 = vst.msk [vmem:[#allocation3 + $0x1f0] sm:$0xff] %vm1053, %v3812
        %3893 = vst.msk [vmem:[#allocation3 + $0x210] sm:$0xff] %vm1053, %v3814
        %3894 = vst.msk [vmem:[#allocation3 + $0x230] sm:$0xff] %vm1053, %v3816
        %3895 = vst.msk [vmem:[#allocation3 + $0x250] sm:$0xff] %vm1053, %v3818
        %3896 = vst.msk [vmem:[#allocation3 + $0x270] sm:$0xff] %vm1053, %v3820
        %3897 = vst.msk [vmem:[#allocation3 + $0x290] sm:$0xff] %vm1053, %v3822
        %3898 = vst.msk [vmem:[#allocation3 + $0x2b0] sm:$0xff] %vm1053, %v3824
        %3899 = vst.msk [vmem:[#allocation3 + $0x2d0] sm:$0xff] %vm1053, %v3826
        %3900 = vst.msk [vmem:[#allocation3 + $0x2f0] sm:$0xff] %vm1053, %v3828
        %3901 = vst.msk [vmem:[#allocation3 + $0x310] sm:$0xff] %vm1053, %v3830
        %3902 = vst.msk [vmem:[#allocation3 + $0x330] sm:$0xff] %vm1053, %v3832
        %3903 = vst.msk [vmem:[#allocation3 + $0x350] sm:$0xff] %vm1053, %v3834
        %3904 = vst.msk [vmem:[#allocation3 + $0x370] sm:$0xff] %vm1053, %v3836
        %3905 = vst.msk [vmem:[#allocation3 + $0x390] sm:$0xff] %vm1053, %v3838
        %3906 = vst.msk [vmem:[#allocation3 + $0x3b0] sm:$0xff] %vm1053, %v3840
        %3907 = vst.msk [vmem:[#allocation3 + $0x3d0] sm:$0xff] %vm1053, %v3842
        %3908 = vst.msk [vmem:[#allocation3 + $0x3f0] sm:$0xff] %vm1053, %v3844
        %v3909 = vld [vmem:[%s3268 + $0x4] sm:$0xff]
        %v3910 = vld [vmem:[%s3268 + $0xc] sm:$0xff]
        %v3911 = vld [vmem:[%s3268 + $0x1c] sm:$0xff]
        %v3912 = vld [vmem:[%s3268 + $0x24] sm:$0xff]
        %v3913 = vld [vmem:[%s3268 + $0x34] sm:$0xff]
        %v3914 = vld [vmem:[%s3268 + $0x3c] sm:$0xff]
        %v3915 = vld [vmem:[%s3268 + $0x4c] sm:$0xff]
        %v3916 = vld [vmem:[%s3268 + $0x54] sm:$0xff]
        %v3917 = vld [vmem:[%s3268 + $0x64] sm:$0xff]
        %v3918 = vld [vmem:[%s3268 + $0x6c] sm:$0xff]
        %v3919 = vld [vmem:[%s3268 + $0x7c] sm:$0xff]
        %v3920 = vld [vmem:[%s3268 + $0x84] sm:$0xff]
        %v3921 = vld [vmem:[%s3268 + $0x94] sm:$0xff]
        %v3922 = vld [vmem:[%s3268 + $0x9c] sm:$0xff]
        %v3923 = vld [vmem:[%s3268 + $0xac] sm:$0xff]
        %v3924 = vld [vmem:[%s3268 + $0xb4] sm:$0xff]
        %v3925 = vld [vmem:[%s3268 + $0xc4] sm:$0xff]
        %v3926 = vld [vmem:[%s3268 + $0xcc] sm:$0xff]
        %v3927 = vld [vmem:[%s3268 + $0xdc] sm:$0xff]
        %v3928 = vld [vmem:[%s3268 + $0xe4] sm:$0xff]
        %v3929 = vld [vmem:[%s3268 + $0xf4] sm:$0xff]
        %v3930 = vld [vmem:[%s3268 + $0xfc] sm:$0xff]
        %v3931 = vld [vmem:[%s3268 + $0x10c] sm:$0xff]
        %v3932 = vld [vmem:[%s3268 + $0x114] sm:$0xff]
        %v3933 = vld [vmem:[%s3268 + $0x124] sm:$0xff]
        %v3934 = vld [vmem:[%s3268 + $0x12c] sm:$0xff]
        %v3935 = vld [vmem:[%s3268 + $0x13c] sm:$0xff]
        %v3936 = vld [vmem:[%s3268 + $0x144] sm:$0xff]
        %v3937 = vld [vmem:[%s3268 + $0x154] sm:$0xff]
        %v3938 = vld [vmem:[%s3268 + $0x15c] sm:$0xff]
        %v3939 = vld [vmem:[%s3268 + $0x16c] sm:$0xff]
        %v3940 = vld [vmem:[%s3268 + $0x174] sm:$0xff]
        %3973 = vrot.lane.b32.xlu0 %v3909, 48
        %v3974 = vpop.permute.xlu0 %3973
        %3975 = vrot.lane.b32.xlu0 %v3910, 48
        %v3976 = vpop.permute.xlu0 %3975
        %3977 = vrot.lane.b32.xlu0 %v3911, 48
        %v3978 = vpop.permute.xlu0 %3977
        %3979 = vrot.lane.b32.xlu0 %v3912, 48
        %v3980 = vpop.permute.xlu0 %3979
        %3981 = vrot.lane.b32.xlu0 %v3913, 48
        %v3982 = vpop.permute.xlu0 %3981
        %3983 = vrot.lane.b32.xlu0 %v3914, 48
        %v3984 = vpop.permute.xlu0 %3983
        %3985 = vrot.lane.b32.xlu0 %v3915, 48
        %v3986 = vpop.permute.xlu0 %3985
        %3987 = vrot.lane.b32.xlu0 %v3916, 48
        %v3988 = vpop.permute.xlu0 %3987
        %3989 = vrot.lane.b32.xlu0 %v3917, 48
        %v3990 = vpop.permute.xlu0 %3989
        %3991 = vrot.lane.b32.xlu0 %v3918, 48
        %v3992 = vpop.permute.xlu0 %3991
        %3993 = vrot.lane.b32.xlu0 %v3919, 48
        %v3994 = vpop.permute.xlu0 %3993
        %3995 = vrot.lane.b32.xlu0 %v3920, 48
        %v3996 = vpop.permute.xlu0 %3995
        %3997 = vrot.lane.b32.xlu0 %v3921, 48
        %v3998 = vpop.permute.xlu0 %3997
        %3999 = vrot.lane.b32.xlu0 %v3922, 48
        %v4000 = vpop.permute.xlu0 %3999
        %4001 = vrot.lane.b32.xlu0 %v3923, 48
        %v4002 = vpop.permute.xlu0 %4001
        %4003 = vrot.lane.b32.xlu0 %v3924, 48
        %v4004 = vpop.permute.xlu0 %4003
        %4005 = vrot.lane.b32.xlu0 %v3925, 48
        %v4006 = vpop.permute.xlu0 %4005
        %4007 = vrot.lane.b32.xlu0 %v3926, 48
        %v4008 = vpop.permute.xlu0 %4007
        %4009 = vrot.lane.b32.xlu0 %v3927, 48
        %v4010 = vpop.permute.xlu0 %4009
        %4011 = vrot.lane.b32.xlu0 %v3928, 48
        %v4012 = vpop.permute.xlu0 %4011
        %4013 = vrot.lane.b32.xlu0 %v3929, 48
        %v4014 = vpop.permute.xlu0 %4013
        %4015 = vrot.lane.b32.xlu0 %v3930, 48
        %v4016 = vpop.permute.xlu0 %4015
        %4017 = vrot.lane.b32.xlu0 %v3931, 48
        %v4018 = vpop.permute.xlu0 %4017
        %4019 = vrot.lane.b32.xlu0 %v3932, 48
        %v4020 = vpop.permute.xlu0 %4019
        %4021 = vrot.lane.b32.xlu0 %v3933, 48
        %v4022 = vpop.permute.xlu0 %4021
        %4023 = vrot.lane.b32.xlu0 %v3934, 48
        %v4024 = vpop.permute.xlu0 %4023
        %4025 = vrot.lane.b32.xlu0 %v3935, 48
        %v4026 = vpop.permute.xlu0 %4025
        %4027 = vrot.lane.b32.xlu0 %v3936, 48
        %v4028 = vpop.permute.xlu0 %4027
        %4029 = vrot.lane.b32.xlu0 %v3937, 48
        %v4030 = vpop.permute.xlu0 %4029
        %4031 = vrot.lane.b32.xlu0 %v3938, 48
        %v4032 = vpop.permute.xlu0 %4031
        %4033 = vrot.lane.b32.xlu0 %v3939, 48
        %v4034 = vpop.permute.xlu0 %4033
        %4035 = vrot.lane.b32.xlu0 %v3940, 48
        %v4036 = vpop.permute.xlu0 %4035
        %4069 = vst.msk [vmem:[#allocation3 + $0x10] sm:$0xff] %vm1246, %v3974
        %4070 = vst.msk [vmem:[#allocation3 + $0x30] sm:$0xff] %vm1246, %v3976
        %4071 = vst.msk [vmem:[#allocation3 + $0x50] sm:$0xff] %vm1246, %v3978
        %4072 = vst.msk [vmem:[#allocation3 + $0x70] sm:$0xff] %vm1246, %v3980
        %4073 = vst.msk [vmem:[#allocation3 + $0x90] sm:$0xff] %vm1246, %v3982
        %4074 = vst.msk [vmem:[#allocation3 + $0xb0] sm:$0xff] %vm1246, %v3984
        %4075 = vst.msk [vmem:[#allocation3 + $0xd0] sm:$0xff] %vm1246, %v3986
        %4076 = vst.msk [vmem:[#allocation3 + $0xf0] sm:$0xff] %vm1246, %v3988
        %4077 = vst.msk [vmem:[#allocation3 + $0x110] sm:$0xff] %vm1246, %v3990
        %4078 = vst.msk [vmem:[#allocation3 + $0x130] sm:$0xff] %vm1246, %v3992
        %4079 = vst.msk [vmem:[#allocation3 + $0x150] sm:$0xff] %vm1246, %v3994
        %4080 = vst.msk [vmem:[#allocation3 + $0x170] sm:$0xff] %vm1246, %v3996
        %4081 = vst.msk [vmem:[#allocation3 + $0x190] sm:$0xff] %vm1246, %v3998
        %4082 = vst.msk [vmem:[#allocation3 + $0x1b0] sm:$0xff] %vm1246, %v4000
        %4083 = vst.msk [vmem:[#allocation3 + $0x1d0] sm:$0xff] %vm1246, %v4002
        %4084 = vst.msk [vmem:[#allocation3 + $0x1f0] sm:$0xff] %vm1246, %v4004
        %4085 = vst.msk [vmem:[#allocation3 + $0x210] sm:$0xff] %vm1246, %v4006
        %4086 = vst.msk [vmem:[#allocation3 + $0x230] sm:$0xff] %vm1246, %v4008
        %4087 = vst.msk [vmem:[#allocation3 + $0x250] sm:$0xff] %vm1246, %v4010
        %4088 = vst.msk [vmem:[#allocation3 + $0x270] sm:$0xff] %vm1246, %v4012
        %4089 = vst.msk [vmem:[#allocation3 + $0x290] sm:$0xff] %vm1246, %v4014
        %4090 = vst.msk [vmem:[#allocation3 + $0x2b0] sm:$0xff] %vm1246, %v4016
        %4091 = vst.msk [vmem:[#allocation3 + $0x2d0] sm:$0xff] %vm1246, %v4018
        %4092 = vst.msk [vmem:[#allocation3 + $0x2f0] sm:$0xff] %vm1246, %v4020
        %4093 = vst.msk [vmem:[#allocation3 + $0x310] sm:$0xff] %vm1246, %v4022
        %4094 = vst.msk [vmem:[#allocation3 + $0x330] sm:$0xff] %vm1246, %v4024
        %4095 = vst.msk [vmem:[#allocation3 + $0x350] sm:$0xff] %vm1246, %v4026
        %4096 = vst.msk [vmem:[#allocation3 + $0x370] sm:$0xff] %vm1246, %v4028
        %4097 = vst.msk [vmem:[#allocation3 + $0x390] sm:$0xff] %vm1246, %v4030
        %4098 = vst.msk [vmem:[#allocation3 + $0x3b0] sm:$0xff] %vm1246, %v4032
        %4099 = vst.msk [vmem:[#allocation3 + $0x3d0] sm:$0xff] %vm1246, %v4034
        %4100 = vst.msk [vmem:[#allocation3 + $0x3f0] sm:$0xff] %vm1246, %v4036
        %s4101 = scalar_lea.vmem [#allocation2], 96
        %v4102 = vld [vmem:[%s4101] sm:$0xff]
        %v4103 = vld [vmem:[%s4101 + $0x8] sm:$0xff]
        %v4104 = vld [vmem:[%s4101 + $0x18] sm:$0xff]
        %v4105 = vld [vmem:[%s4101 + $0x20] sm:$0xff]
        %v4106 = vld [vmem:[%s4101 + $0x30] sm:$0xff]
        %v4107 = vld [vmem:[%s4101 + $0x38] sm:$0xff]
        %v4108 = vld [vmem:[%s4101 + $0x48] sm:$0xff]
        %v4109 = vld [vmem:[%s4101 + $0x50] sm:$0xff]
        %v4110 = vld [vmem:[%s4101 + $0x60] sm:$0xff]
        %v4111 = vld [vmem:[%s4101 + $0x68] sm:$0xff]
        %v4112 = vld [vmem:[%s4101 + $0x78] sm:$0xff]
        %v4113 = vld [vmem:[%s4101 + $0x80] sm:$0xff]
        %v4114 = vld [vmem:[%s4101 + $0x90] sm:$0xff]
        %v4115 = vld [vmem:[%s4101 + $0x98] sm:$0xff]
        %v4116 = vld [vmem:[%s4101 + $0xa8] sm:$0xff]
        %v4117 = vld [vmem:[%s4101 + $0xb0] sm:$0xff]
        %v4118 = vld [vmem:[%s4101 + $0xc0] sm:$0xff]
        %v4119 = vld [vmem:[%s4101 + $0xc8] sm:$0xff]
        %v4120 = vld [vmem:[%s4101 + $0xd8] sm:$0xff]
        %v4121 = vld [vmem:[%s4101 + $0xe0] sm:$0xff]
        %v4122 = vld [vmem:[%s4101 + $0xf0] sm:$0xff]
        %v4123 = vld [vmem:[%s4101 + $0xf8] sm:$0xff]
        %v4124 = vld [vmem:[%s4101 + $0x108] sm:$0xff]
        %v4125 = vld [vmem:[%s4101 + $0x110] sm:$0xff]
        %v4126 = vld [vmem:[%s4101 + $0x120] sm:$0xff]
        %v4127 = vld [vmem:[%s4101 + $0x128] sm:$0xff]
        %v4128 = vld [vmem:[%s4101 + $0x138] sm:$0xff]
        %v4129 = vld [vmem:[%s4101 + $0x140] sm:$0xff]
        %v4130 = vld [vmem:[%s4101 + $0x150] sm:$0xff]
        %v4131 = vld [vmem:[%s4101 + $0x158] sm:$0xff]
        %v4132 = vld [vmem:[%s4101 + $0x168] sm:$0xff]
        %v4133 = vld [vmem:[%s4101 + $0x170] sm:$0xff]
        %4166 = vrot.lane.b32.xlu0 %v4102, 64
        %v4167 = vpop.permute.xlu0 %4166
        %4168 = vrot.lane.b32.xlu0 %v4103, 64
        %v4169 = vpop.permute.xlu0 %4168
        %4170 = vrot.lane.b32.xlu0 %v4104, 64
        %v4171 = vpop.permute.xlu0 %4170
        %4172 = vrot.lane.b32.xlu0 %v4105, 64
        %v4173 = vpop.permute.xlu0 %4172
        %4174 = vrot.lane.b32.xlu0 %v4106, 64
        %v4175 = vpop.permute.xlu0 %4174
        %4176 = vrot.lane.b32.xlu0 %v4107, 64
        %v4177 = vpop.permute.xlu0 %4176
        %4178 = vrot.lane.b32.xlu0 %v4108, 64
        %v4179 = vpop.permute.xlu0 %4178
        %4180 = vrot.lane.b32.xlu0 %v4109, 64
        %v4181 = vpop.permute.xlu0 %4180
        %4182 = vrot.lane.b32.xlu0 %v4110, 64
        %v4183 = vpop.permute.xlu0 %4182
        %4184 = vrot.lane.b32.xlu0 %v4111, 64
        %v4185 = vpop.permute.xlu0 %4184
        %4186 = vrot.lane.b32.xlu0 %v4112, 64
        %v4187 = vpop.permute.xlu0 %4186
        %4188 = vrot.lane.b32.xlu0 %v4113, 64
        %v4189 = vpop.permute.xlu0 %4188
        %4190 = vrot.lane.b32.xlu0 %v4114, 64
        %v4191 = vpop.permute.xlu0 %4190
        %4192 = vrot.lane.b32.xlu0 %v4115, 64
        %v4193 = vpop.permute.xlu0 %4192
        %4194 = vrot.lane.b32.xlu0 %v4116, 64
        %v4195 = vpop.permute.xlu0 %4194
        %4196 = vrot.lane.b32.xlu0 %v4117, 64
        %v4197 = vpop.permute.xlu0 %4196
        %4198 = vrot.lane.b32.xlu0 %v4118, 64
        %v4199 = vpop.permute.xlu0 %4198
        %4200 = vrot.lane.b32.xlu0 %v4119, 64
        %v4201 = vpop.permute.xlu0 %4200
        %4202 = vrot.lane.b32.xlu0 %v4120, 64
        %v4203 = vpop.permute.xlu0 %4202
        %4204 = vrot.lane.b32.xlu0 %v4121, 64
        %v4205 = vpop.permute.xlu0 %4204
        %4206 = vrot.lane.b32.xlu0 %v4122, 64
        %v4207 = vpop.permute.xlu0 %4206
        %4208 = vrot.lane.b32.xlu0 %v4123, 64
        %v4209 = vpop.permute.xlu0 %4208
        %4210 = vrot.lane.b32.xlu0 %v4124, 64
        %v4211 = vpop.permute.xlu0 %4210
        %4212 = vrot.lane.b32.xlu0 %v4125, 64
        %v4213 = vpop.permute.xlu0 %4212
        %4214 = vrot.lane.b32.xlu0 %v4126, 64
        %v4215 = vpop.permute.xlu0 %4214
        %4216 = vrot.lane.b32.xlu0 %v4127, 64
        %v4217 = vpop.permute.xlu0 %4216
        %4218 = vrot.lane.b32.xlu0 %v4128, 64
        %v4219 = vpop.permute.xlu0 %4218
        %4220 = vrot.lane.b32.xlu0 %v4129, 64
        %v4221 = vpop.permute.xlu0 %4220
        %4222 = vrot.lane.b32.xlu0 %v4130, 64
        %v4223 = vpop.permute.xlu0 %4222
        %4224 = vrot.lane.b32.xlu0 %v4131, 64
        %v4225 = vpop.permute.xlu0 %4224
        %4226 = vrot.lane.b32.xlu0 %v4132, 64
        %v4227 = vpop.permute.xlu0 %4226
        %4228 = vrot.lane.b32.xlu0 %v4133, 64
        %v4229 = vpop.permute.xlu0 %4228
        %4262 = vst.msk [vmem:[#allocation3 + $0x10] sm:$0xff] %vm1439, %v4167
        %4263 = vst.msk [vmem:[#allocation3 + $0x30] sm:$0xff] %vm1439, %v4169
        %4264 = vst.msk [vmem:[#allocation3 + $0x50] sm:$0xff] %vm1439, %v4171
        %4265 = vst.msk [vmem:[#allocation3 + $0x70] sm:$0xff] %vm1439, %v4173
        %4266 = vst.msk [vmem:[#allocation3 + $0x90] sm:$0xff] %vm1439, %v4175
        %4267 = vst.msk [vmem:[#allocation3 + $0xb0] sm:$0xff] %vm1439, %v4177
        %4268 = vst.msk [vmem:[#allocation3 + $0xd0] sm:$0xff] %vm1439, %v4179
        %4269 = vst.msk [vmem:[#allocation3 + $0xf0] sm:$0xff] %vm1439, %v4181
        %4270 = vst.msk [vmem:[#allocation3 + $0x110] sm:$0xff] %vm1439, %v4183
        %4271 = vst.msk [vmem:[#allocation3 + $0x130] sm:$0xff] %vm1439, %v4185
        %4272 = vst.msk [vmem:[#allocation3 + $0x150] sm:$0xff] %vm1439, %v4187
        %4273 = vst.msk [vmem:[#allocation3 + $0x170] sm:$0xff] %vm1439, %v4189
        %4274 = vst.msk [vmem:[#allocation3 + $0x190] sm:$0xff] %vm1439, %v4191
        %4275 = vst.msk [vmem:[#allocation3 + $0x1b0] sm:$0xff] %vm1439, %v4193
        %4276 = vst.msk [vmem:[#allocation3 + $0x1d0] sm:$0xff] %vm1439, %v4195
        %4277 = vst.msk [vmem:[#allocation3 + $0x1f0] sm:$0xff] %vm1439, %v4197
        %4278 = vst.msk [vmem:[#allocation3 + $0x210] sm:$0xff] %vm1439, %v4199
        %4279 = vst.msk [vmem:[#allocation3 + $0x230] sm:$0xff] %vm1439, %v4201
        %4280 = vst.msk [vmem:[#allocation3 + $0x250] sm:$0xff] %vm1439, %v4203
        %4281 = vst.msk [vmem:[#allocation3 + $0x270] sm:$0xff] %vm1439, %v4205
        %4282 = vst.msk [vmem:[#allocation3 + $0x290] sm:$0xff] %vm1439, %v4207
        %4283 = vst.msk [vmem:[#allocation3 + $0x2b0] sm:$0xff] %vm1439, %v4209
        %4284 = vst.msk [vmem:[#allocation3 + $0x2d0] sm:$0xff] %vm1439, %v4211
        %4285 = vst.msk [vmem:[#allocation3 + $0x2f0] sm:$0xff] %vm1439, %v4213
        %4286 = vst.msk [vmem:[#allocation3 + $0x310] sm:$0xff] %vm1439, %v4215
        %4287 = vst.msk [vmem:[#allocation3 + $0x330] sm:$0xff] %vm1439, %v4217
        %4288 = vst.msk [vmem:[#allocation3 + $0x350] sm:$0xff] %vm1439, %v4219
        %4289 = vst.msk [vmem:[#allocation3 + $0x370] sm:$0xff] %vm1439, %v4221
        %4290 = vst.msk [vmem:[#allocation3 + $0x390] sm:$0xff] %vm1439, %v4223
        %4291 = vst.msk [vmem:[#allocation3 + $0x3b0] sm:$0xff] %vm1439, %v4225
        %4292 = vst.msk [vmem:[#allocation3 + $0x3d0] sm:$0xff] %vm1439, %v4227
        %4293 = vst.msk [vmem:[#allocation3 + $0x3f0] sm:$0xff] %vm1439, %v4229
        %v4294 = vld [vmem:[%s4101 + $0x1] sm:$0xff]
        %v4295 = vld [vmem:[%s4101 + $0x9] sm:$0xff]
        %v4296 = vld [vmem:[%s4101 + $0x19] sm:$0xff]
        %v4297 = vld [vmem:[%s4101 + $0x21] sm:$0xff]
        %v4298 = vld [vmem:[%s4101 + $0x31] sm:$0xff]
        %v4299 = vld [vmem:[%s4101 + $0x39] sm:$0xff]
        %v4300 = vld [vmem:[%s4101 + $0x49] sm:$0xff]
        %v4301 = vld [vmem:[%s4101 + $0x51] sm:$0xff]
        %v4302 = vld [vmem:[%s4101 + $0x61] sm:$0xff]
        %v4303 = vld [vmem:[%s4101 + $0x69] sm:$0xff]
        %v4304 = vld [vmem:[%s4101 + $0x79] sm:$0xff]
        %v4305 = vld [vmem:[%s4101 + $0x81] sm:$0xff]
        %v4306 = vld [vmem:[%s4101 + $0x91] sm:$0xff]
        %v4307 = vld [vmem:[%s4101 + $0x99] sm:$0xff]
        %v4308 = vld [vmem:[%s4101 + $0xa9] sm:$0xff]
        %v4309 = vld [vmem:[%s4101 + $0xb1] sm:$0xff]
        %v4310 = vld [vmem:[%s4101 + $0xc1] sm:$0xff]
        %v4311 = vld [vmem:[%s4101 + $0xc9] sm:$0xff]
        %v4312 = vld [vmem:[%s4101 + $0xd9] sm:$0xff]
        %v4313 = vld [vmem:[%s4101 + $0xe1] sm:$0xff]
        %v4314 = vld [vmem:[%s4101 + $0xf1] sm:$0xff]
        %v4315 = vld [vmem:[%s4101 + $0xf9] sm:$0xff]
        %v4316 = vld [vmem:[%s4101 + $0x109] sm:$0xff]
        %v4317 = vld [vmem:[%s4101 + $0x111] sm:$0xff]
        %v4318 = vld [vmem:[%s4101 + $0x121] sm:$0xff]
        %v4319 = vld [vmem:[%s4101 + $0x129] sm:$0xff]
        %v4320 = vld [vmem:[%s4101 + $0x139] sm:$0xff]
        %v4321 = vld [vmem:[%s4101 + $0x141] sm:$0xff]
        %v4322 = vld [vmem:[%s4101 + $0x151] sm:$0xff]
        %v4323 = vld [vmem:[%s4101 + $0x159] sm:$0xff]
        %v4324 = vld [vmem:[%s4101 + $0x169] sm:$0xff]
        %v4325 = vld [vmem:[%s4101 + $0x171] sm:$0xff]
        %4358 = vrot.lane.b32.xlu0 %v4294, 80
        %v4359 = vpop.permute.xlu0 %4358
        %4360 = vrot.lane.b32.xlu0 %v4295, 80
        %v4361 = vpop.permute.xlu0 %4360
        %4362 = vrot.lane.b32.xlu0 %v4296, 80
        %v4363 = vpop.permute.xlu0 %4362
        %4364 = vrot.lane.b32.xlu0 %v4297, 80
        %v4365 = vpop.permute.xlu0 %4364
        %4366 = vrot.lane.b32.xlu0 %v4298, 80
        %v4367 = vpop.permute.xlu0 %4366
        %4368 = vrot.lane.b32.xlu0 %v4299, 80
        %v4369 = vpop.permute.xlu0 %4368
        %4370 = vrot.lane.b32.xlu0 %v4300, 80
        %v4371 = vpop.permute.xlu0 %4370
        %4372 = vrot.lane.b32.xlu0 %v4301, 80
        %v4373 = vpop.permute.xlu0 %4372
        %4374 = vrot.lane.b32.xlu0 %v4302, 80
        %v4375 = vpop.permute.xlu0 %4374
        %4376 = vrot.lane.b32.xlu0 %v4303, 80
        %v4377 = vpop.permute.xlu0 %4376
        %4378 = vrot.lane.b32.xlu0 %v4304, 80
        %v4379 = vpop.permute.xlu0 %4378
        %4380 = vrot.lane.b32.xlu0 %v4305, 80
        %v4381 = vpop.permute.xlu0 %4380
        %4382 = vrot.lane.b32.xlu0 %v4306, 80
        %v4383 = vpop.permute.xlu0 %4382
        %4384 = vrot.lane.b32.xlu0 %v4307, 80
        %v4385 = vpop.permute.xlu0 %4384
        %4386 = vrot.lane.b32.xlu0 %v4308, 80
        %v4387 = vpop.permute.xlu0 %4386
        %4388 = vrot.lane.b32.xlu0 %v4309, 80
        %v4389 = vpop.permute.xlu0 %4388
        %4390 = vrot.lane.b32.xlu0 %v4310, 80
        %v4391 = vpop.permute.xlu0 %4390
        %4392 = vrot.lane.b32.xlu0 %v4311, 80
        %v4393 = vpop.permute.xlu0 %4392
        %4394 = vrot.lane.b32.xlu0 %v4312, 80
        %v4395 = vpop.permute.xlu0 %4394
        %4396 = vrot.lane.b32.xlu0 %v4313, 80
        %v4397 = vpop.permute.xlu0 %4396
        %4398 = vrot.lane.b32.xlu0 %v4314, 80
        %v4399 = vpop.permute.xlu0 %4398
        %4400 = vrot.lane.b32.xlu0 %v4315, 80
        %v4401 = vpop.permute.xlu0 %4400
        %4402 = vrot.lane.b32.xlu0 %v4316, 80
        %v4403 = vpop.permute.xlu0 %4402
        %4404 = vrot.lane.b32.xlu0 %v4317, 80
        %v4405 = vpop.permute.xlu0 %4404
        %4406 = vrot.lane.b32.xlu0 %v4318, 80
        %v4407 = vpop.permute.xlu0 %4406
        %4408 = vrot.lane.b32.xlu0 %v4319, 80
        %v4409 = vpop.permute.xlu0 %4408
        %4410 = vrot.lane.b32.xlu0 %v4320, 80
        %v4411 = vpop.permute.xlu0 %4410
        %4412 = vrot.lane.b32.xlu0 %v4321, 80
        %v4413 = vpop.permute.xlu0 %4412
        %4414 = vrot.lane.b32.xlu0 %v4322, 80
        %v4415 = vpop.permute.xlu0 %4414
        %4416 = vrot.lane.b32.xlu0 %v4323, 80
        %v4417 = vpop.permute.xlu0 %4416
        %4418 = vrot.lane.b32.xlu0 %v4324, 80
        %v4419 = vpop.permute.xlu0 %4418
        %4420 = vrot.lane.b32.xlu0 %v4325, 80
        %v4421 = vpop.permute.xlu0 %4420
        %4454 = vst.msk [vmem:[#allocation3 + $0x10] sm:$0xff] %vm1633, %v4359
        %4455 = vst.msk [vmem:[#allocation3 + $0x30] sm:$0xff] %vm1633, %v4361
        %4456 = vst.msk [vmem:[#allocation3 + $0x50] sm:$0xff] %vm1633, %v4363
        %4457 = vst.msk [vmem:[#allocation3 + $0x70] sm:$0xff] %vm1633, %v4365
        %4458 = vst.msk [vmem:[#allocation3 + $0x90] sm:$0xff] %vm1633, %v4367
        %4459 = vst.msk [vmem:[#allocation3 + $0xb0] sm:$0xff] %vm1633, %v4369
        %4460 = vst.msk [vmem:[#allocation3 + $0xd0] sm:$0xff] %vm1633, %v4371
        %4461 = vst.msk [vmem:[#allocation3 + $0xf0] sm:$0xff] %vm1633, %v4373
        %4462 = vst.msk [vmem:[#allocation3 + $0x110] sm:$0xff] %vm1633, %v4375
        %4463 = vst.msk [vmem:[#allocation3 + $0x130] sm:$0xff] %vm1633, %v4377
        %4464 = vst.msk [vmem:[#allocation3 + $0x150] sm:$0xff] %vm1633, %v4379
        %4465 = vst.msk [vmem:[#allocation3 + $0x170] sm:$0xff] %vm1633, %v4381
        %4466 = vst.msk [vmem:[#allocation3 + $0x190] sm:$0xff] %vm1633, %v4383
        %4467 = vst.msk [vmem:[#allocation3 + $0x1b0] sm:$0xff] %vm1633, %v4385
        %4468 = vst.msk [vmem:[#allocation3 + $0x1d0] sm:$0xff] %vm1633, %v4387
        %4469 = vst.msk [vmem:[#allocation3 + $0x1f0] sm:$0xff] %vm1633, %v4389
        %4470 = vst.msk [vmem:[#allocation3 + $0x210] sm:$0xff] %vm1633, %v4391
        %4471 = vst.msk [vmem:[#allocation3 + $0x230] sm:$0xff] %vm1633, %v4393
        %4472 = vst.msk [vmem:[#allocation3 + $0x250] sm:$0xff] %vm1633, %v4395
        %4473 = vst.msk [vmem:[#allocation3 + $0x270] sm:$0xff] %vm1633, %v4397
        %4474 = vst.msk [vmem:[#allocation3 + $0x290] sm:$0xff] %vm1633, %v4399
        %4475 = vst.msk [vmem:[#allocation3 + $0x2b0] sm:$0xff] %vm1633, %v4401
        %4476 = vst.msk [vmem:[#allocation3 + $0x2d0] sm:$0xff] %vm1633, %v4403
        %4477 = vst.msk [vmem:[#allocation3 + $0x2f0] sm:$0xff] %vm1633, %v4405
        %4478 = vst.msk [vmem:[#allocation3 + $0x310] sm:$0xff] %vm1633, %v4407
        %4479 = vst.msk [vmem:[#allocation3 + $0x330] sm:$0xff] %vm1633, %v4409
        %4480 = vst.msk [vmem:[#allocation3 + $0x350] sm:$0xff] %vm1633, %v4411
        %4481 = vst.msk [vmem:[#allocation3 + $0x370] sm:$0xff] %vm1633, %v4413
        %4482 = vst.msk [vmem:[#allocation3 + $0x390] sm:$0xff] %vm1633, %v4415
        %4483 = vst.msk [vmem:[#allocation3 + $0x3b0] sm:$0xff] %vm1633, %v4417
        %4484 = vst.msk [vmem:[#allocation3 + $0x3d0] sm:$0xff] %vm1633, %v4419
        %4485 = vst.msk [vmem:[#allocation3 + $0x3f0] sm:$0xff] %vm1633, %v4421
        %v4486 = vld [vmem:[%s4101 + $0x2] sm:$0xff]
        %v4487 = vld [vmem:[%s4101 + $0xa] sm:$0xff]
        %v4488 = vld [vmem:[%s4101 + $0x1a] sm:$0xff]
        %v4489 = vld [vmem:[%s4101 + $0x22] sm:$0xff]
        %v4490 = vld [vmem:[%s4101 + $0x32] sm:$0xff]
        %v4491 = vld [vmem:[%s4101 + $0x3a] sm:$0xff]
        %v4492 = vld [vmem:[%s4101 + $0x4a] sm:$0xff]
        %v4493 = vld [vmem:[%s4101 + $0x52] sm:$0xff]
        %v4494 = vld [vmem:[%s4101 + $0x62] sm:$0xff]
        %v4495 = vld [vmem:[%s4101 + $0x6a] sm:$0xff]
        %v4496 = vld [vmem:[%s4101 + $0x7a] sm:$0xff]
        %v4497 = vld [vmem:[%s4101 + $0x82] sm:$0xff]
        %v4498 = vld [vmem:[%s4101 + $0x92] sm:$0xff]
        %v4499 = vld [vmem:[%s4101 + $0x9a] sm:$0xff]
        %v4500 = vld [vmem:[%s4101 + $0xaa] sm:$0xff]
        %v4501 = vld [vmem:[%s4101 + $0xb2] sm:$0xff]
        %v4502 = vld [vmem:[%s4101 + $0xc2] sm:$0xff]
        %v4503 = vld [vmem:[%s4101 + $0xca] sm:$0xff]
        %v4504 = vld [vmem:[%s4101 + $0xda] sm:$0xff]
        %v4505 = vld [vmem:[%s4101 + $0xe2] sm:$0xff]
        %v4506 = vld [vmem:[%s4101 + $0xf2] sm:$0xff]
        %v4507 = vld [vmem:[%s4101 + $0xfa] sm:$0xff]
        %v4508 = vld [vmem:[%s4101 + $0x10a] sm:$0xff]
        %v4509 = vld [vmem:[%s4101 + $0x112] sm:$0xff]
        %v4510 = vld [vmem:[%s4101 + $0x122] sm:$0xff]
        %v4511 = vld [vmem:[%s4101 + $0x12a] sm:$0xff]
        %v4512 = vld [vmem:[%s4101 + $0x13a] sm:$0xff]
        %v4513 = vld [vmem:[%s4101 + $0x142] sm:$0xff]
        %v4514 = vld [vmem:[%s4101 + $0x152] sm:$0xff]
        %v4515 = vld [vmem:[%s4101 + $0x15a] sm:$0xff]
        %v4516 = vld [vmem:[%s4101 + $0x16a] sm:$0xff]
        %v4517 = vld [vmem:[%s4101 + $0x172] sm:$0xff]
        %4550 = vrot.lane.b32.xlu0 %v4486, 96
        %v4551 = vpop.permute.xlu0 %4550
        %4552 = vrot.lane.b32.xlu0 %v4487, 96
        %v4553 = vpop.permute.xlu0 %4552
        %4554 = vrot.lane.b32.xlu0 %v4488, 96
        %v4555 = vpop.permute.xlu0 %4554
        %4556 = vrot.lane.b32.xlu0 %v4489, 96
        %v4557 = vpop.permute.xlu0 %4556
        %4558 = vrot.lane.b32.xlu0 %v4490, 96
        %v4559 = vpop.permute.xlu0 %4558
        %4560 = vrot.lane.b32.xlu0 %v4491, 96
        %v4561 = vpop.permute.xlu0 %4560
        %4562 = vrot.lane.b32.xlu0 %v4492, 96
        %v4563 = vpop.permute.xlu0 %4562
        %4564 = vrot.lane.b32.xlu0 %v4493, 96
        %v4565 = vpop.permute.xlu0 %4564
        %4566 = vrot.lane.b32.xlu0 %v4494, 96
        %v4567 = vpop.permute.xlu0 %4566
        %4568 = vrot.lane.b32.xlu0 %v4495, 96
        %v4569 = vpop.permute.xlu0 %4568
        %4570 = vrot.lane.b32.xlu0 %v4496, 96
        %v4571 = vpop.permute.xlu0 %4570
        %4572 = vrot.lane.b32.xlu0 %v4497, 96
        %v4573 = vpop.permute.xlu0 %4572
        %4574 = vrot.lane.b32.xlu0 %v4498, 96
        %v4575 = vpop.permute.xlu0 %4574
        %4576 = vrot.lane.b32.xlu0 %v4499, 96
        %v4577 = vpop.permute.xlu0 %4576
        %4578 = vrot.lane.b32.xlu0 %v4500, 96
        %v4579 = vpop.permute.xlu0 %4578
        %4580 = vrot.lane.b32.xlu0 %v4501, 96
        %v4581 = vpop.permute.xlu0 %4580
        %4582 = vrot.lane.b32.xlu0 %v4502, 96
        %v4583 = vpop.permute.xlu0 %4582
        %4584 = vrot.lane.b32.xlu0 %v4503, 96
        %v4585 = vpop.permute.xlu0 %4584
        %4586 = vrot.lane.b32.xlu0 %v4504, 96
        %v4587 = vpop.permute.xlu0 %4586
        %4588 = vrot.lane.b32.xlu0 %v4505, 96
        %v4589 = vpop.permute.xlu0 %4588
        %4590 = vrot.lane.b32.xlu0 %v4506, 96
        %v4591 = vpop.permute.xlu0 %4590
        %4592 = vrot.lane.b32.xlu0 %v4507, 96
        %v4593 = vpop.permute.xlu0 %4592
        %4594 = vrot.lane.b32.xlu0 %v4508, 96
        %v4595 = vpop.permute.xlu0 %4594
        %4596 = vrot.lane.b32.xlu0 %v4509, 96
        %v4597 = vpop.permute.xlu0 %4596
        %4598 = vrot.lane.b32.xlu0 %v4510, 96
        %v4599 = vpop.permute.xlu0 %4598
        %4600 = vrot.lane.b32.xlu0 %v4511, 96
        %v4601 = vpop.permute.xlu0 %4600
        %4602 = vrot.lane.b32.xlu0 %v4512, 96
        %v4603 = vpop.permute.xlu0 %4602
        %4604 = vrot.lane.b32.xlu0 %v4513, 96
        %v4605 = vpop.permute.xlu0 %4604
        %4606 = vrot.lane.b32.xlu0 %v4514, 96
        %v4607 = vpop.permute.xlu0 %4606
        %4608 = vrot.lane.b32.xlu0 %v4515, 96
        %v4609 = vpop.permute.xlu0 %4608
        %4610 = vrot.lane.b32.xlu0 %v4516, 96
        %v4611 = vpop.permute.xlu0 %4610
        %4612 = vrot.lane.b32.xlu0 %v4517, 96
        %v4613 = vpop.permute.xlu0 %4612
        %4646 = vst.msk [vmem:[#allocation3 + $0x10] sm:$0xff] %vm1826, %v4551
        %4647 = vst.msk [vmem:[#allocation3 + $0x30] sm:$0xff] %vm1826, %v4553
        %4648 = vst.msk [vmem:[#allocation3 + $0x50] sm:$0xff] %vm1826, %v4555
        %4649 = vst.msk [vmem:[#allocation3 + $0x70] sm:$0xff] %vm1826, %v4557
        %4650 = vst.msk [vmem:[#allocation3 + $0x90] sm:$0xff] %vm1826, %v4559
        %4651 = vst.msk [vmem:[#allocation3 + $0xb0] sm:$0xff] %vm1826, %v4561
        %4652 = vst.msk [vmem:[#allocation3 + $0xd0] sm:$0xff] %vm1826, %v4563
        %4653 = vst.msk [vmem:[#allocation3 + $0xf0] sm:$0xff] %vm1826, %v4565
        %4654 = vst.msk [vmem:[#allocation3 + $0x110] sm:$0xff] %vm1826, %v4567
        %4655 = vst.msk [vmem:[#allocation3 + $0x130] sm:$0xff] %vm1826, %v4569
        %4656 = vst.msk [vmem:[#allocation3 + $0x150] sm:$0xff] %vm1826, %v4571
        %4657 = vst.msk [vmem:[#allocation3 + $0x170] sm:$0xff] %vm1826, %v4573
        %4658 = vst.msk [vmem:[#allocation3 + $0x190] sm:$0xff] %vm1826, %v4575
        %4659 = vst.msk [vmem:[#allocation3 + $0x1b0] sm:$0xff] %vm1826, %v4577
        %4660 = vst.msk [vmem:[#allocation3 + $0x1d0] sm:$0xff] %vm1826, %v4579
        %4661 = vst.msk [vmem:[#allocation3 + $0x1f0] sm:$0xff] %vm1826, %v4581
        %4662 = vst.msk [vmem:[#allocation3 + $0x210] sm:$0xff] %vm1826, %v4583
        %4663 = vst.msk [vmem:[#allocation3 + $0x230] sm:$0xff] %vm1826, %v4585
        %4664 = vst.msk [vmem:[#allocation3 + $0x250] sm:$0xff] %vm1826, %v4587
        %4665 = vst.msk [vmem:[#allocation3 + $0x270] sm:$0xff] %vm1826, %v4589
        %4666 = vst.msk [vmem:[#allocation3 + $0x290] sm:$0xff] %vm1826, %v4591
        %4667 = vst.msk [vmem:[#allocation3 + $0x2b0] sm:$0xff] %vm1826, %v4593
        %4668 = vst.msk [vmem:[#allocation3 + $0x2d0] sm:$0xff] %vm1826, %v4595
        %4669 = vst.msk [vmem:[#allocation3 + $0x2f0] sm:$0xff] %vm1826, %v4597
        %4670 = vst.msk [vmem:[#allocation3 + $0x310] sm:$0xff] %vm1826, %v4599
        %4671 = vst.msk [vmem:[#allocation3 + $0x330] sm:$0xff] %vm1826, %v4601
        %4672 = vst.msk [vmem:[#allocation3 + $0x350] sm:$0xff] %vm1826, %v4603
        %4673 = vst.msk [vmem:[#allocation3 + $0x370] sm:$0xff] %vm1826, %v4605
        %4674 = vst.msk [vmem:[#allocation3 + $0x390] sm:$0xff] %vm1826, %v4607
        %4675 = vst.msk [vmem:[#allocation3 + $0x3b0] sm:$0xff] %vm1826, %v4609
        %4676 = vst.msk [vmem:[#allocation3 + $0x3d0] sm:$0xff] %vm1826, %v4611
        %4677 = vst.msk [vmem:[#allocation3 + $0x3f0] sm:$0xff] %vm1826, %v4613
        %v4678 = vld [vmem:[%s4101 + $0x3] sm:$0xff]
        %v4679 = vld [vmem:[%s4101 + $0xb] sm:$0xff]
        %v4680 = vld [vmem:[%s4101 + $0x1b] sm:$0xff]
        %v4681 = vld [vmem:[%s4101 + $0x23] sm:$0xff]
        %v4682 = vld [vmem:[%s4101 + $0x33] sm:$0xff]
        %v4683 = vld [vmem:[%s4101 + $0x3b] sm:$0xff]
        %v4684 = vld [vmem:[%s4101 + $0x4b] sm:$0xff]
        %v4685 = vld [vmem:[%s4101 + $0x53] sm:$0xff]
        %v4686 = vld [vmem:[%s4101 + $0x63] sm:$0xff]
        %v4687 = vld [vmem:[%s4101 + $0x6b] sm:$0xff]
        %v4688 = vld [vmem:[%s4101 + $0x7b] sm:$0xff]
        %v4689 = vld [vmem:[%s4101 + $0x83] sm:$0xff]
        %v4690 = vld [vmem:[%s4101 + $0x93] sm:$0xff]
        %v4691 = vld [vmem:[%s4101 + $0x9b] sm:$0xff]
        %v4692 = vld [vmem:[%s4101 + $0xab] sm:$0xff]
        %v4693 = vld [vmem:[%s4101 + $0xb3] sm:$0xff]
        %v4694 = vld [vmem:[%s4101 + $0xc3] sm:$0xff]
        %v4695 = vld [vmem:[%s4101 + $0xcb] sm:$0xff]
        %v4696 = vld [vmem:[%s4101 + $0xdb] sm:$0xff]
        %v4697 = vld [vmem:[%s4101 + $0xe3] sm:$0xff]
        %v4698 = vld [vmem:[%s4101 + $0xf3] sm:$0xff]
        %v4699 = vld [vmem:[%s4101 + $0xfb] sm:$0xff]
        %v4700 = vld [vmem:[%s4101 + $0x10b] sm:$0xff]
        %v4701 = vld [vmem:[%s4101 + $0x113] sm:$0xff]
        %v4702 = vld [vmem:[%s4101 + $0x123] sm:$0xff]
        %v4703 = vld [vmem:[%s4101 + $0x12b] sm:$0xff]
        %v4704 = vld [vmem:[%s4101 + $0x13b] sm:$0xff]
        %v4705 = vld [vmem:[%s4101 + $0x143] sm:$0xff]
        %v4706 = vld [vmem:[%s4101 + $0x153] sm:$0xff]
        %v4707 = vld [vmem:[%s4101 + $0x15b] sm:$0xff]
        %v4708 = vld [vmem:[%s4101 + $0x16b] sm:$0xff]
        %v4709 = vld [vmem:[%s4101 + $0x173] sm:$0xff]
        %4742 = vrot.lane.b32.xlu0 %v4678, 112
        %v4743 = vpop.permute.xlu0 %4742
        %4744 = vrot.lane.b32.xlu0 %v4679, 112
        %v4745 = vpop.permute.xlu0 %4744
        %4746 = vrot.lane.b32.xlu0 %v4680, 112
        %v4747 = vpop.permute.xlu0 %4746
        %4748 = vrot.lane.b32.xlu0 %v4681, 112
        %v4749 = vpop.permute.xlu0 %4748
        %4750 = vrot.lane.b32.xlu0 %v4682, 112
        %v4751 = vpop.permute.xlu0 %4750
        %4752 = vrot.lane.b32.xlu0 %v4683, 112
        %v4753 = vpop.permute.xlu0 %4752
        %4754 = vrot.lane.b32.xlu0 %v4684, 112
        %v4755 = vpop.permute.xlu0 %4754
        %4756 = vrot.lane.b32.xlu0 %v4685, 112
        %v4757 = vpop.permute.xlu0 %4756
        %4758 = vrot.lane.b32.xlu0 %v4686, 112
        %v4759 = vpop.permute.xlu0 %4758
        %4760 = vrot.lane.b32.xlu0 %v4687, 112
        %v4761 = vpop.permute.xlu0 %4760
        %4762 = vrot.lane.b32.xlu0 %v4688, 112
        %v4763 = vpop.permute.xlu0 %4762
        %4764 = vrot.lane.b32.xlu0 %v4689, 112
        %v4765 = vpop.permute.xlu0 %4764
        %4766 = vrot.lane.b32.xlu0 %v4690, 112
        %v4767 = vpop.permute.xlu0 %4766
        %4768 = vrot.lane.b32.xlu0 %v4691, 112
        %v4769 = vpop.permute.xlu0 %4768
        %4770 = vrot.lane.b32.xlu0 %v4692, 112
        %v4771 = vpop.permute.xlu0 %4770
        %4772 = vrot.lane.b32.xlu0 %v4693, 112
        %v4773 = vpop.permute.xlu0 %4772
        %4774 = vrot.lane.b32.xlu0 %v4694, 112
        %v4775 = vpop.permute.xlu0 %4774
        %4776 = vrot.lane.b32.xlu0 %v4695, 112
        %v4777 = vpop.permute.xlu0 %4776
        %4778 = vrot.lane.b32.xlu0 %v4696, 112
        %v4779 = vpop.permute.xlu0 %4778
        %4780 = vrot.lane.b32.xlu0 %v4697, 112
        %v4781 = vpop.permute.xlu0 %4780
        %4782 = vrot.lane.b32.xlu0 %v4698, 112
        %v4783 = vpop.permute.xlu0 %4782
        %4784 = vrot.lane.b32.xlu0 %v4699, 112
        %v4785 = vpop.permute.xlu0 %4784
        %4786 = vrot.lane.b32.xlu0 %v4700, 112
        %v4787 = vpop.permute.xlu0 %4786
        %4788 = vrot.lane.b32.xlu0 %v4701, 112
        %v4789 = vpop.permute.xlu0 %4788
        %4790 = vrot.lane.b32.xlu0 %v4702, 112
        %v4791 = vpop.permute.xlu0 %4790
        %4792 = vrot.lane.b32.xlu0 %v4703, 112
        %v4793 = vpop.permute.xlu0 %4792
        %4794 = vrot.lane.b32.xlu0 %v4704, 112
        %v4795 = vpop.permute.xlu0 %4794
        %4796 = vrot.lane.b32.xlu0 %v4705, 112
        %v4797 = vpop.permute.xlu0 %4796
        %4798 = vrot.lane.b32.xlu0 %v4706, 112
        %v4799 = vpop.permute.xlu0 %4798
        %4800 = vrot.lane.b32.xlu0 %v4707, 112
        %v4801 = vpop.permute.xlu0 %4800
        %4802 = vrot.lane.b32.xlu0 %v4708, 112
        %v4803 = vpop.permute.xlu0 %4802
        %4804 = vrot.lane.b32.xlu0 %v4709, 112
        %v4805 = vpop.permute.xlu0 %4804
        %4838 = vst.msk [vmem:[#allocation3 + $0x10] sm:$0xff] %vm2019, %v4743
        %4839 = vst.msk [vmem:[#allocation3 + $0x30] sm:$0xff] %vm2019, %v4745
        %4840 = vst.msk [vmem:[#allocation3 + $0x50] sm:$0xff] %vm2019, %v4747
        %4841 = vst.msk [vmem:[#allocation3 + $0x70] sm:$0xff] %vm2019, %v4749
        %4842 = vst.msk [vmem:[#allocation3 + $0x90] sm:$0xff] %vm2019, %v4751
        %4843 = vst.msk [vmem:[#allocation3 + $0xb0] sm:$0xff] %vm2019, %v4753
        %4844 = vst.msk [vmem:[#allocation3 + $0xd0] sm:$0xff] %vm2019, %v4755
        %4845 = vst.msk [vmem:[#allocation3 + $0xf0] sm:$0xff] %vm2019, %v4757
        %4846 = vst.msk [vmem:[#allocation3 + $0x110] sm:$0xff] %vm2019, %v4759
        %4847 = vst.msk [vmem:[#allocation3 + $0x130] sm:$0xff] %vm2019, %v4761
        %4848 = vst.msk [vmem:[#allocation3 + $0x150] sm:$0xff] %vm2019, %v4763
        %4849 = vst.msk [vmem:[#allocation3 + $0x170] sm:$0xff] %vm2019, %v4765
        %4850 = vst.msk [vmem:[#allocation3 + $0x190] sm:$0xff] %vm2019, %v4767
        %4851 = vst.msk [vmem:[#allocation3 + $0x1b0] sm:$0xff] %vm2019, %v4769
        %4852 = vst.msk [vmem:[#allocation3 + $0x1d0] sm:$0xff] %vm2019, %v4771
        %4853 = vst.msk [vmem:[#allocation3 + $0x1f0] sm:$0xff] %vm2019, %v4773
        %4854 = vst.msk [vmem:[#allocation3 + $0x210] sm:$0xff] %vm2019, %v4775
        %4855 = vst.msk [vmem:[#allocation3 + $0x230] sm:$0xff] %vm2019, %v4777
        %4856 = vst.msk [vmem:[#allocation3 + $0x250] sm:$0xff] %vm2019, %v4779
        %4857 = vst.msk [vmem:[#allocation3 + $0x270] sm:$0xff] %vm2019, %v4781
        %4858 = vst.msk [vmem:[#allocation3 + $0x290] sm:$0xff] %vm2019, %v4783
        %4859 = vst.msk [vmem:[#allocation3 + $0x2b0] sm:$0xff] %vm2019, %v4785
        %4860 = vst.msk [vmem:[#allocation3 + $0x2d0] sm:$0xff] %vm2019, %v4787
        %4861 = vst.msk [vmem:[#allocation3 + $0x2f0] sm:$0xff] %vm2019, %v4789
        %4862 = vst.msk [vmem:[#allocation3 + $0x310] sm:$0xff] %vm2019, %v4791
        %4863 = vst.msk [vmem:[#allocation3 + $0x330] sm:$0xff] %vm2019, %v4793
        %4864 = vst.msk [vmem:[#allocation3 + $0x350] sm:$0xff] %vm2019, %v4795
        %4865 = vst.msk [vmem:[#allocation3 + $0x370] sm:$0xff] %vm2019, %v4797
        %4866 = vst.msk [vmem:[#allocation3 + $0x390] sm:$0xff] %vm2019, %v4799
        %4867 = vst.msk [vmem:[#allocation3 + $0x3b0] sm:$0xff] %vm2019, %v4801
        %4868 = vst.msk [vmem:[#allocation3 + $0x3d0] sm:$0xff] %vm2019, %v4803
        %4869 = vst.msk [vmem:[#allocation3 + $0x3f0] sm:$0xff] %vm2019, %v4805
        %v4870 = vld [vmem:[%s4101 + $0x4] sm:$0xff]
        %v4871 = vld [vmem:[%s4101 + $0xc] sm:$0xff]
        %v4872 = vld [vmem:[%s4101 + $0x1c] sm:$0xff]
        %v4873 = vld [vmem:[%s4101 + $0x24] sm:$0xff]
        %v4874 = vld [vmem:[%s4101 + $0x34] sm:$0xff]
        %v4875 = vld [vmem:[%s4101 + $0x3c] sm:$0xff]
        %v4876 = vld [vmem:[%s4101 + $0x4c] sm:$0xff]
        %v4877 = vld [vmem:[%s4101 + $0x54] sm:$0xff]
        %v4878 = vld [vmem:[%s4101 + $0x64] sm:$0xff]
        %v4879 = vld [vmem:[%s4101 + $0x6c] sm:$0xff]
        %v4880 = vld [vmem:[%s4101 + $0x7c] sm:$0xff]
        %v4881 = vld [vmem:[%s4101 + $0x84] sm:$0xff]
        %v4882 = vld [vmem:[%s4101 + $0x94] sm:$0xff]
        %v4883 = vld [vmem:[%s4101 + $0x9c] sm:$0xff]
        %v4884 = vld [vmem:[%s4101 + $0xac] sm:$0xff]
        %v4885 = vld [vmem:[%s4101 + $0xb4] sm:$0xff]
        %v4886 = vld [vmem:[%s4101 + $0xc4] sm:$0xff]
        %v4887 = vld [vmem:[%s4101 + $0xcc] sm:$0xff]
        %v4888 = vld [vmem:[%s4101 + $0xdc] sm:$0xff]
        %v4889 = vld [vmem:[%s4101 + $0xe4] sm:$0xff]
        %v4890 = vld [vmem:[%s4101 + $0xf4] sm:$0xff]
        %v4891 = vld [vmem:[%s4101 + $0xfc] sm:$0xff]
        %v4892 = vld [vmem:[%s4101 + $0x10c] sm:$0xff]
        %v4893 = vld [vmem:[%s4101 + $0x114] sm:$0xff]
        %v4894 = vld [vmem:[%s4101 + $0x124] sm:$0xff]
        %v4895 = vld [vmem:[%s4101 + $0x12c] sm:$0xff]
        %v4896 = vld [vmem:[%s4101 + $0x13c] sm:$0xff]
        %v4897 = vld [vmem:[%s4101 + $0x144] sm:$0xff]
        %v4898 = vld [vmem:[%s4101 + $0x154] sm:$0xff]
        %v4899 = vld [vmem:[%s4101 + $0x15c] sm:$0xff]
        %v4900 = vld [vmem:[%s4101 + $0x16c] sm:$0xff]
        %v4901 = vld [vmem:[%s4101 + $0x174] sm:$0xff]
        %4902 = vst.msk [vmem:[#allocation3 + $0x18] sm:$0xff] %vm509, %v4870
        %4903 = vst.msk [vmem:[#allocation3 + $0x38] sm:$0xff] %vm509, %v4871
        %4904 = vst.msk [vmem:[#allocation3 + $0x58] sm:$0xff] %vm509, %v4872
        %4905 = vst.msk [vmem:[#allocation3 + $0x78] sm:$0xff] %vm509, %v4873
        %4906 = vst.msk [vmem:[#allocation3 + $0x98] sm:$0xff] %vm509, %v4874
        %4907 = vst.msk [vmem:[#allocation3 + $0xb8] sm:$0xff] %vm509, %v4875
        %4908 = vst.msk [vmem:[#allocation3 + $0xd8] sm:$0xff] %vm509, %v4876
        %4909 = vst.msk [vmem:[#allocation3 + $0xf8] sm:$0xff] %vm509, %v4877
        %4910 = vst.msk [vmem:[#allocation3 + $0x118] sm:$0xff] %vm509, %v4878
        %4911 = vst.msk [vmem:[#allocation3 + $0x138] sm:$0xff] %vm509, %v4879
        %4912 = vst.msk [vmem:[#allocation3 + $0x158] sm:$0xff] %vm509, %v4880
        %4913 = vst.msk [vmem:[#allocation3 + $0x178] sm:$0xff] %vm509, %v4881
        %4914 = vst.msk [vmem:[#allocation3 + $0x198] sm:$0xff] %vm509, %v4882
        %4915 = vst.msk [vmem:[#allocation3 + $0x1b8] sm:$0xff] %vm509, %v4883
        %4916 = vst.msk [vmem:[#allocation3 + $0x1d8] sm:$0xff] %vm509, %v4884
        %4917 = vst.msk [vmem:[#allocation3 + $0x1f8] sm:$0xff] %vm509, %v4885
        %4918 = vst.msk [vmem:[#allocation3 + $0x218] sm:$0xff] %vm509, %v4886
        %4919 = vst.msk [vmem:[#allocation3 + $0x238] sm:$0xff] %vm509, %v4887
        %4920 = vst.msk [vmem:[#allocation3 + $0x258] sm:$0xff] %vm509, %v4888
        %4921 = vst.msk [vmem:[#allocation3 + $0x278] sm:$0xff] %vm509, %v4889
        %4922 = vst.msk [vmem:[#allocation3 + $0x298] sm:$0xff] %vm509, %v4890
        %4923 = vst.msk [vmem:[#allocation3 + $0x2b8] sm:$0xff] %vm509, %v4891
        %4924 = vst.msk [vmem:[#allocation3 + $0x2d8] sm:$0xff] %vm509, %v4892
        %4925 = vst.msk [vmem:[#allocation3 + $0x2f8] sm:$0xff] %vm509, %v4893
        %4926 = vst.msk [vmem:[#allocation3 + $0x318] sm:$0xff] %vm509, %v4894
        %4927 = vst.msk [vmem:[#allocation3 + $0x338] sm:$0xff] %vm509, %v4895
        %4928 = vst.msk [vmem:[#allocation3 + $0x358] sm:$0xff] %vm509, %v4896
        %4929 = vst.msk [vmem:[#allocation3 + $0x378] sm:$0xff] %vm509, %v4897
        %4930 = vst.msk [vmem:[#allocation3 + $0x398] sm:$0xff] %vm509, %v4898
        %4931 = vst.msk [vmem:[#allocation3 + $0x3b8] sm:$0xff] %vm509, %v4899
        %4932 = vst.msk [vmem:[#allocation3 + $0x3d8] sm:$0xff] %vm509, %v4900
        %4933 = vst.msk [vmem:[#allocation3 + $0x3f8] sm:$0xff] %vm509, %v4901
        %v4934 = vld [vmem:[#allocation3] sm:$0xff]
        %v4935 = vld [vmem:[#allocation3 + $0x8] sm:$0xff]
        %v4936 = vld [vmem:[#allocation3 + $0x10] sm:$0xff]
        %v4937 = vld [vmem:[#allocation3 + $0x18] sm:$0xff]
        %v4938 = vld [vmem:[#allocation3 + $0x20] sm:$0xff]
        %v4939 = vld [vmem:[#allocation3 + $0x28] sm:$0xff]
        %v4940 = vld [vmem:[#allocation3 + $0x30] sm:$0xff]
        %v4941 = vld [vmem:[#allocation3 + $0x38] sm:$0xff]
        %v4942 = vld [vmem:[#allocation3 + $0x40] sm:$0xff]
        %v4943 = vld [vmem:[#allocation3 + $0x48] sm:$0xff]
        %v4944 = vld [vmem:[#allocation3 + $0x50] sm:$0xff]
        %v4945 = vld [vmem:[#allocation3 + $0x58] sm:$0xff]
        %v4946 = vld [vmem:[#allocation3 + $0x60] sm:$0xff]
        %v4947 = vld [vmem:[#allocation3 + $0x68] sm:$0xff]
        %v4948 = vld [vmem:[#allocation3 + $0x70] sm:$0xff]
        %v4949 = vld [vmem:[#allocation3 + $0x78] sm:$0xff]
        %v4950 = vld [vmem:[#allocation3 + $0x80] sm:$0xff]
        %v4951 = vld [vmem:[#allocation3 + $0x88] sm:$0xff]
        %v4952 = vld [vmem:[#allocation3 + $0x90] sm:$0xff]
        %v4953 = vld [vmem:[#allocation3 + $0x98] sm:$0xff]
        %v4954 = vld [vmem:[#allocation3 + $0xa0] sm:$0xff]
        %v4955 = vld [vmem:[#allocation3 + $0xa8] sm:$0xff]
        %v4956 = vld [vmem:[#allocation3 + $0xb0] sm:$0xff]
        %v4957 = vld [vmem:[#allocation3 + $0xb8] sm:$0xff]
        %v4958 = vld [vmem:[#allocation3 + $0xc0] sm:$0xff]
        %v4959 = vld [vmem:[#allocation3 + $0xc8] sm:$0xff]
        %v4960 = vld [vmem:[#allocation3 + $0xd0] sm:$0xff]
        %v4961 = vld [vmem:[#allocation3 + $0xd8] sm:$0xff]
        %v4962 = vld [vmem:[#allocation3 + $0xe0] sm:$0xff]
        %v4963 = vld [vmem:[#allocation3 + $0xe8] sm:$0xff]
        %v4964 = vld [vmem:[#allocation3 + $0xf0] sm:$0xff]
        %v4965 = vld [vmem:[#allocation3 + $0xf8] sm:$0xff]
        %v4966 = vld [vmem:[#allocation3 + $0x100] sm:$0xff]
        %v4967 = vld [vmem:[#allocation3 + $0x108] sm:$0xff]
        %v4968 = vld [vmem:[#allocation3 + $0x110] sm:$0xff]
        %v4969 = vld [vmem:[#allocation3 + $0x118] sm:$0xff]
        %v4970 = vld [vmem:[#allocation3 + $0x120] sm:$0xff]
        %v4971 = vld [vmem:[#allocation3 + $0x128] sm:$0xff]
        %v4972 = vld [vmem:[#allocation3 + $0x130] sm:$0xff]
        %v4973 = vld [vmem:[#allocation3 + $0x138] sm:$0xff]
        %v4974 = vld [vmem:[#allocation3 + $0x140] sm:$0xff]
        %v4975 = vld [vmem:[#allocation3 + $0x148] sm:$0xff]
        %v4976 = vld [vmem:[#allocation3 + $0x150] sm:$0xff]
        %v4977 = vld [vmem:[#allocation3 + $0x158] sm:$0xff]
        %v4978 = vld [vmem:[#allocation3 + $0x160] sm:$0xff]
        %v4979 = vld [vmem:[#allocation3 + $0x168] sm:$0xff]
        %v4980 = vld [vmem:[#allocation3 + $0x170] sm:$0xff]
        %v4981 = vld [vmem:[#allocation3 + $0x178] sm:$0xff]
        %v4982 = vld [vmem:[#allocation3 + $0x180] sm:$0xff]
        %v4983 = vld [vmem:[#allocation3 + $0x188] sm:$0xff]
        %v4984 = vld [vmem:[#allocation3 + $0x190] sm:$0xff]
        %v4985 = vld [vmem:[#allocation3 + $0x198] sm:$0xff]
        %v4986 = vld [vmem:[#allocation3 + $0x1a0] sm:$0xff]
        %v4987 = vld [vmem:[#allocation3 + $0x1a8] sm:$0xff]
        %v4988 = vld [vmem:[#allocation3 + $0x1b0] sm:$0xff]
        %v4989 = vld [vmem:[#allocation3 + $0x1b8] sm:$0xff]
        %v4990 = vld [vmem:[#allocation3 + $0x1c0] sm:$0xff]
        %v4991 = vld [vmem:[#allocation3 + $0x1c8] sm:$0xff]
        %v4992 = vld [vmem:[#allocation3 + $0x1d0] sm:$0xff]
        %v4993 = vld [vmem:[#allocation3 + $0x1d8] sm:$0xff]
        %v4994 = vld [vmem:[#allocation3 + $0x1e0] sm:$0xff]
        %v4995 = vld [vmem:[#allocation3 + $0x1e8] sm:$0xff]
        %v4996 = vld [vmem:[#allocation3 + $0x1f0] sm:$0xff]
        %v4997 = vld [vmem:[#allocation3 + $0x1f8] sm:$0xff]
        %v4998 = vld [vmem:[#allocation3 + $0x200] sm:$0xff]
        %v4999 = vld [vmem:[#allocation3 + $0x208] sm:$0xff]
        %v5000 = vld [vmem:[#allocation3 + $0x210] sm:$0xff]
        %v5001 = vld [vmem:[#allocation3 + $0x218] sm:$0xff]
        %v5002 = vld [vmem:[#allocation3 + $0x220] sm:$0xff]
        %v5003 = vld [vmem:[#allocation3 + $0x228] sm:$0xff]
        %v5004 = vld [vmem:[#allocation3 + $0x230] sm:$0xff]
        %v5005 = vld [vmem:[#allocation3 + $0x238] sm:$0xff]
        %v5006 = vld [vmem:[#allocation3 + $0x240] sm:$0xff]
        %v5007 = vld [vmem:[#allocation3 + $0x248] sm:$0xff]
        %v5008 = vld [vmem:[#allocation3 + $0x250] sm:$0xff]
        %v5009 = vld [vmem:[#allocation3 + $0x258] sm:$0xff]
        %v5010 = vld [vmem:[#allocation3 + $0x260] sm:$0xff]
        %v5011 = vld [vmem:[#allocation3 + $0x268] sm:$0xff]
        %v5012 = vld [vmem:[#allocation3 + $0x270] sm:$0xff]
        %v5013 = vld [vmem:[#allocation3 + $0x278] sm:$0xff]
        %v5014 = vld [vmem:[#allocation3 + $0x280] sm:$0xff]
        %v5015 = vld [vmem:[#allocation3 + $0x288] sm:$0xff]
        %v5016 = vld [vmem:[#allocation3 + $0x290] sm:$0xff]
        %v5017 = vld [vmem:[#allocation3 + $0x298] sm:$0xff]
        %v5018 = vld [vmem:[#allocation3 + $0x2a0] sm:$0xff]
        %v5019 = vld [vmem:[#allocation3 + $0x2a8] sm:$0xff]
        %v5020 = vld [vmem:[#allocation3 + $0x2b0] sm:$0xff]
        %v5021 = vld [vmem:[#allocation3 + $0x2b8] sm:$0xff]
        %v5022 = vld [vmem:[#allocation3 + $0x2c0] sm:$0xff]
        %v5023 = vld [vmem:[#allocation3 + $0x2c8] sm:$0xff]
        %v5024 = vld [vmem:[#allocation3 + $0x2d0] sm:$0xff]
        %v5025 = vld [vmem:[#allocation3 + $0x2d8] sm:$0xff]
        %v5026 = vld [vmem:[#allocation3 + $0x2e0] sm:$0xff]
        %v5027 = vld [vmem:[#allocation3 + $0x2e8] sm:$0xff]
        %v5028 = vld [vmem:[#allocation3 + $0x2f0] sm:$0xff]
        %v5029 = vld [vmem:[#allocation3 + $0x2f8] sm:$0xff]
        %v5030 = vld [vmem:[#allocation3 + $0x300] sm:$0xff]
        %v5031 = vld [vmem:[#allocation3 + $0x308] sm:$0xff]
        %v5032 = vld [vmem:[#allocation3 + $0x310] sm:$0xff]
        %v5033 = vld [vmem:[#allocation3 + $0x318] sm:$0xff]
        %v5034 = vld [vmem:[#allocation3 + $0x320] sm:$0xff]
        %v5035 = vld [vmem:[#allocation3 + $0x328] sm:$0xff]
        %v5036 = vld [vmem:[#allocation3 + $0x330] sm:$0xff]
        %v5037 = vld [vmem:[#allocation3 + $0x338] sm:$0xff]
        %v5038 = vld [vmem:[#allocation3 + $0x340] sm:$0xff]
        %v5039 = vld [vmem:[#allocation3 + $0x348] sm:$0xff]
        %v5040 = vld [vmem:[#allocation3 + $0x350] sm:$0xff]
        %v5041 = vld [vmem:[#allocation3 + $0x358] sm:$0xff]
        %v5042 = vld [vmem:[#allocation3 + $0x360] sm:$0xff]
        %v5043 = vld [vmem:[#allocation3 + $0x368] sm:$0xff]
        %v5044 = vld [vmem:[#allocation3 + $0x370] sm:$0xff]
        %v5045 = vld [vmem:[#allocation3 + $0x378] sm:$0xff]
        %v5046 = vld [vmem:[#allocation3 + $0x380] sm:$0xff]
        %v5047 = vld [vmem:[#allocation3 + $0x388] sm:$0xff]
        %v5048 = vld [vmem:[#allocation3 + $0x390] sm:$0xff]
        %v5049 = vld [vmem:[#allocation3 + $0x398] sm:$0xff]
        %v5050 = vld [vmem:[#allocation3 + $0x3a0] sm:$0xff]
        %v5051 = vld [vmem:[#allocation3 + $0x3a8] sm:$0xff]
        %v5052 = vld [vmem:[#allocation3 + $0x3b0] sm:$0xff]
        %v5053 = vld [vmem:[#allocation3 + $0x3b8] sm:$0xff]
        %v5054 = vld [vmem:[#allocation3 + $0x3c0] sm:$0xff]
        %v5055 = vld [vmem:[#allocation3 + $0x3c8] sm:$0xff]
        %v5056 = vld [vmem:[#allocation3 + $0x3d0] sm:$0xff]
        %v5057 = vld [vmem:[#allocation3 + $0x3d8] sm:$0xff]
        %v5058 = vld [vmem:[#allocation3 + $0x3e0] sm:$0xff]
        %v5059 = vld [vmem:[#allocation3 + $0x3e8] sm:$0xff]
        %v5060 = vld [vmem:[#allocation3 + $0x3f0] sm:$0xff]
        %v5061 = vld [vmem:[#allocation3 + $0x3f8] sm:$0xff]
        %v5062 = vld [vmem:[%s2] sm:$0xff]
        %v5063 = vld [vmem:[%s2 + $0x8] sm:$0xff]
        %v5064 = vld [vmem:[%s2 + $0x10] sm:$0xff]
        %v5065 = vld [vmem:[%s2 + $0x18] sm:$0xff]
        %v5066 = vld [vmem:[%s2 + $0x20] sm:$0xff]
        %v5067 = vld [vmem:[%s2 + $0x28] sm:$0xff]
        %v5068 = vld [vmem:[%s2 + $0x30] sm:$0xff]
        %v5069 = vld [vmem:[%s2 + $0x38] sm:$0xff]
        %v5070 = vld [vmem:[%s2 + $0x40] sm:$0xff]
        %v5071 = vld [vmem:[%s2 + $0x48] sm:$0xff]
        %v5072 = vld [vmem:[%s2 + $0x50] sm:$0xff]
        %v5073 = vld [vmem:[%s2 + $0x58] sm:$0xff]
        %v5074 = vld [vmem:[%s2 + $0x60] sm:$0xff]
        %v5075 = vld [vmem:[%s2 + $0x68] sm:$0xff]
        %v5076 = vld [vmem:[%s2 + $0x70] sm:$0xff]
        %v5077 = vld [vmem:[%s2 + $0x78] sm:$0xff]
        %v5078 = vld [vmem:[%s2 + $0x80] sm:$0xff]
        %v5079 = vld [vmem:[%s2 + $0x88] sm:$0xff]
        %v5080 = vld [vmem:[%s2 + $0x90] sm:$0xff]
        %v5081 = vld [vmem:[%s2 + $0x98] sm:$0xff]
        %v5082 = vld [vmem:[%s2 + $0xa0] sm:$0xff]
        %v5083 = vld [vmem:[%s2 + $0xa8] sm:$0xff]
        %v5084 = vld [vmem:[%s2 + $0xb0] sm:$0xff]
        %v5085 = vld [vmem:[%s2 + $0xb8] sm:$0xff]
        %v5086 = vld [vmem:[%s2 + $0xc0] sm:$0xff]
        %v5087 = vld [vmem:[%s2 + $0xc8] sm:$0xff]
        %v5088 = vld [vmem:[%s2 + $0xd0] sm:$0xff]
        %v5089 = vld [vmem:[%s2 + $0xd8] sm:$0xff]
        %v5090 = vld [vmem:[%s2 + $0xe0] sm:$0xff]
        %v5091 = vld [vmem:[%s2 + $0xe8] sm:$0xff]
        %v5092 = vld [vmem:[%s2 + $0xf0] sm:$0xff]
        %v5093 = vld [vmem:[%s2 + $0xf8] sm:$0xff]
        %v5094 = vld [vmem:[%s2 + $0x100] sm:$0xff]
        %v5095 = vld [vmem:[%s2 + $0x108] sm:$0xff]
        %v5096 = vld [vmem:[%s2 + $0x110] sm:$0xff]
        %v5097 = vld [vmem:[%s2 + $0x118] sm:$0xff]
        %v5098 = vld [vmem:[%s2 + $0x120] sm:$0xff]
        %v5099 = vld [vmem:[%s2 + $0x128] sm:$0xff]
        %v5100 = vld [vmem:[%s2 + $0x130] sm:$0xff]
        %v5101 = vld [vmem:[%s2 + $0x138] sm:$0xff]
        %v5102 = vld [vmem:[%s2 + $0x140] sm:$0xff]
        %v5103 = vld [vmem:[%s2 + $0x148] sm:$0xff]
        %v5104 = vld [vmem:[%s2 + $0x150] sm:$0xff]
        %v5105 = vld [vmem:[%s2 + $0x158] sm:$0xff]
        %v5106 = vld [vmem:[%s2 + $0x160] sm:$0xff]
        %v5107 = vld [vmem:[%s2 + $0x168] sm:$0xff]
        %v5108 = vld [vmem:[%s2 + $0x170] sm:$0xff]
        %v5109 = vld [vmem:[%s2 + $0x178] sm:$0xff]
        %v5110 = vld [vmem:[%s2 + $0x180] sm:$0xff]
        %v5111 = vld [vmem:[%s2 + $0x188] sm:$0xff]
        %v5112 = vld [vmem:[%s3] sm:$0x1]
        %v5114 = vperm.slane %v5112, 0
        %v5117 = vsel %vm509, %v4937, 0
        %v5120 = vsel %vm509, %v4941, 0
        %v5123 = vsel %vm509, %v4945, 0
        %v5126 = vsel %vm509, %v4949, 0
        %v5129 = vsel %vm509, %v4953, 0
        %v5132 = vsel %vm509, %v4957, 0
        %v5135 = vsel %vm509, %v4961, 0
        %v5138 = vsel %vm509, %v4965, 0
        %v5141 = vsel %vm509, %v4969, 0
        %v5144 = vsel %vm509, %v4973, 0
        %v5147 = vsel %vm509, %v4977, 0
        %v5150 = vsel %vm509, %v4981, 0
        %v5153 = vsel %vm509, %v4985, 0
        %v5156 = vsel %vm509, %v4989, 0
        %v5159 = vsel %vm509, %v4993, 0
        %v5162 = vsel %vm509, %v4997, 0
        %v5165 = vsel %vm509, %v5001, 0
        %v5168 = vsel %vm509, %v5005, 0
        %v5171 = vsel %vm509, %v5009, 0
        %v5174 = vsel %vm509, %v5013, 0
        %v5177 = vsel %vm509, %v5017, 0
        %v5180 = vsel %vm509, %v5021, 0
        %v5183 = vsel %vm509, %v5025, 0
        %v5186 = vsel %vm509, %v5029, 0
        %v5189 = vsel %vm509, %v5033, 0
        %v5192 = vsel %vm509, %v5037, 0
        %v5195 = vsel %vm509, %v5041, 0
        %v5198 = vsel %vm509, %v5045, 0
        %v5201 = vsel %vm509, %v5049, 0
        %v5204 = vsel %vm509, %v5053, 0
        %v5207 = vsel %vm509, %v5057, 0
        %v5210 = vsel %vm509, %v5061, 0
        %5212 = vmatpush.msra.mxu0 %v5077
        %5213 = vmatpush.msra.mxu0 %v5076
        %5214 = vmatpush.msra.mxu0 %v5075
        %5215 = vmatpush.msra.mxu0 %v5074
        %5216 = vmatpush.msra.mxu0 %v5073
        %5217 = vmatpush.msra.mxu0 %v5072
        %5218 = vmatpush.msra.mxu0 %v5071
        %5219 = vmatpush.msra.mxu0 %v5070
        %5220 = vmatpush.msra.mxu0 %v5069
        %5221 = vmatpush.msra.mxu0 %v5068
        %5222 = vmatpush.msra.mxu0 %v5067
        %5223 = vmatpush.msra.mxu0 %v5066
        %5224 = vmatpush.msra.mxu0 %v5065
        %5225 = vmatpush.msra.mxu0 %v5064
        %5226 = vmatpush.msra.mxu0 %v5063
        %5227 = vmatpush.msra.mxu0 %v5062
        %5228 = vmatmul.f32.gmra.mxu0 %v4934
        %v5229 = vpop.f32.mrf.mxu0
        %v5230 = vadd.f32 %v5114, %v5229
        %5231 = vmatmul.f32.gmra.mxu0 %v4938
        %v5232 = vpop.f32.mrf.mxu0
        %v5233 = vadd.f32 %v5114, %v5232
        %5234 = vmatmul.f32.gmra.mxu0 %v4942
        %v5235 = vpop.f32.mrf.mxu0
        %v5236 = vadd.f32 %v5114, %v5235
        %5237 = vmatmul.f32.gmra.mxu0 %v4946
        %v5238 = vpop.f32.mrf.mxu0
        %v5239 = vadd.f32 %v5114, %v5238
        %5240 = vmatmul.f32.gmra.mxu0 %v4950
        %v5241 = vpop.f32.mrf.mxu0
        %v5242 = vadd.f32 %v5114, %v5241
        %5243 = vmatmul.f32.gmra.mxu0 %v4954
        %v5244 = vpop.f32.mrf.mxu0
        %v5245 = vadd.f32 %v5114, %v5244
        %5246 = vmatmul.f32.gmra.mxu0 %v4958
        %v5247 = vpop.f32.mrf.mxu0
        %v5248 = vadd.f32 %v5114, %v5247
        %5249 = vmatmul.f32.gmra.mxu0 %v4962
        %v5250 = vpop.f32.mrf.mxu0
        %v5251 = vadd.f32 %v5114, %v5250
        %5252 = vmatmul.f32.gmra.mxu0 %v4966
        %v5253 = vpop.f32.mrf.mxu0
        %v5254 = vadd.f32 %v5114, %v5253
        %5255 = vmatmul.f32.gmra.mxu0 %v4970
        %v5256 = vpop.f32.mrf.mxu0
        %v5257 = vadd.f32 %v5114, %v5256
        %5258 = vmatmul.f32.gmra.mxu0 %v4974
        %v5259 = vpop.f32.mrf.mxu0
        %v5260 = vadd.f32 %v5114, %v5259
        %5261 = vmatmul.f32.gmra.mxu0 %v4978
        %v5262 = vpop.f32.mrf.mxu0
        %v5263 = vadd.f32 %v5114, %v5262
        %5264 = vmatmul.f32.gmra.mxu0 %v4982
        %v5265 = vpop.f32.mrf.mxu0
        %v5266 = vadd.f32 %v5114, %v5265
        %5267 = vmatmul.f32.gmra.mxu0 %v4986
        %v5268 = vpop.f32.mrf.mxu0
        %v5269 = vadd.f32 %v5114, %v5268
        %5270 = vmatmul.f32.gmra.mxu0 %v4990
        %v5271 = vpop.f32.mrf.mxu0
        %v5272 = vadd.f32 %v5114, %v5271
        %5273 = vmatmul.f32.gmra.mxu0 %v4994
        %v5274 = vpop.f32.mrf.mxu0
        %v5275 = vadd.f32 %v5114, %v5274
        %5276 = vmatmul.f32.gmra.mxu0 %v4998
        %v5277 = vpop.f32.mrf.mxu0
        %v5278 = vadd.f32 %v5114, %v5277
        %5279 = vmatmul.f32.gmra.mxu0 %v5002
        %v5280 = vpop.f32.mrf.mxu0
        %v5281 = vadd.f32 %v5114, %v5280
        %5282 = vmatmul.f32.gmra.mxu0 %v5006
        %v5283 = vpop.f32.mrf.mxu0
        %v5284 = vadd.f32 %v5114, %v5283
        %5285 = vmatmul.f32.gmra.mxu0 %v5010
        %v5286 = vpop.f32.mrf.mxu0
        %v5287 = vadd.f32 %v5114, %v5286
        %5288 = vmatmul.f32.gmra.mxu0 %v5014
        %v5289 = vpop.f32.mrf.mxu0
        %v5290 = vadd.f32 %v5114, %v5289
        %5291 = vmatmul.f32.gmra.mxu0 %v5018
        %v5292 = vpop.f32.mrf.mxu0
        %v5293 = vadd.f32 %v5114, %v5292
        %5294 = vmatmul.f32.gmra.mxu0 %v5022
        %v5295 = vpop.f32.mrf.mxu0
        %v5296 = vadd.f32 %v5114, %v5295
        %5297 = vmatmul.f32.gmra.mxu0 %v5026
        %v5298 = vpop.f32.mrf.mxu0
        %v5299 = vadd.f32 %v5114, %v5298
        %5300 = vmatmul.f32.gmra.mxu0 %v5030
        %v5301 = vpop.f32.mrf.mxu0
        %v5302 = vadd.f32 %v5114, %v5301
        %5303 = vmatmul.f32.gmra.mxu0 %v5034
        %v5304 = vpop.f32.mrf.mxu0
        %v5305 = vadd.f32 %v5114, %v5304
        %5306 = vmatmul.f32.gmra.mxu0 %v5038
        %v5307 = vpop.f32.mrf.mxu0
        %v5308 = vadd.f32 %v5114, %v5307
        %5309 = vmatmul.f32.gmra.mxu0 %v5042
        %v5310 = vpop.f32.mrf.mxu0
        %v5311 = vadd.f32 %v5114, %v5310
        %5312 = vmatmul.f32.gmra.mxu0 %v5046
        %v5313 = vpop.f32.mrf.mxu0
        %v5314 = vadd.f32 %v5114, %v5313
        %5315 = vmatmul.f32.gmra.mxu0 %v5050
        %v5316 = vpop.f32.mrf.mxu0
        %v5317 = vadd.f32 %v5114, %v5316
        %5318 = vmatmul.f32.gmra.mxu0 %v5054
        %v5319 = vpop.f32.mrf.mxu0
        %v5320 = vadd.f32 %v5114, %v5319
        %5321 = vmatmul.f32.gmra.mxu0 %v5058
        %v5322 = vpop.f32.mrf.mxu0
        %v5323 = vadd.f32 %v5114, %v5322
        %5324 = vdwg.mxu0
        %5325 = vmatpush.msra.mxu0 %v5093
        %5326 = vmatpush.msra.mxu0 %v5092
        %5327 = vmatpush.msra.mxu0 %v5091
        %5328 = vmatpush.msra.mxu0 %v5090
        %5329 = vmatpush.msra.mxu0 %v5089
        %5330 = vmatpush.msra.mxu0 %v5088
        %5331 = vmatpush.msra.mxu0 %v5087
        %5332 = vmatpush.msra.mxu0 %v5086
        %5333 = vmatpush.msra.mxu0 %v5085
        %5334 = vmatpush.msra.mxu0 %v5084
        %5335 = vmatpush.msra.mxu0 %v5083
        %5336 = vmatpush.msra.mxu0 %v5082
        %5337 = vmatpush.msra.mxu0 %v5081
        %5338 = vmatpush.msra.mxu0 %v5080
        %5339 = vmatpush.msra.mxu0 %v5079
        %5340 = vmatpush.msra.mxu0 %v5078
        %5341 = vmatmul.f32.gmra.mxu0 %v4935
        %v5342 = vpop.f32.mrf.mxu0
        %v5343 = vadd.f32 %v5230, %v5342
        %5344 = vmatmul.f32.gmra.mxu0 %v4939
        %v5345 = vpop.f32.mrf.mxu0
        %v5346 = vadd.f32 %v5233, %v5345
        %5347 = vmatmul.f32.gmra.mxu0 %v4943
        %v5348 = vpop.f32.mrf.mxu0
        %v5349 = vadd.f32 %v5236, %v5348
        %5350 = vmatmul.f32.gmra.mxu0 %v4947
        %v5351 = vpop.f32.mrf.mxu0
        %v5352 = vadd.f32 %v5239, %v5351
        %5353 = vmatmul.f32.gmra.mxu0 %v4951
        %v5354 = vpop.f32.mrf.mxu0
        %v5355 = vadd.f32 %v5242, %v5354
        %5356 = vmatmul.f32.gmra.mxu0 %v4955
        %v5357 = vpop.f32.mrf.mxu0
        %v5358 = vadd.f32 %v5245, %v5357
        %5359 = vmatmul.f32.gmra.mxu0 %v4959
        %v5360 = vpop.f32.mrf.mxu0
        %v5361 = vadd.f32 %v5248, %v5360
        %5362 = vmatmul.f32.gmra.mxu0 %v4963
        %v5363 = vpop.f32.mrf.mxu0
        %v5364 = vadd.f32 %v5251, %v5363
        %5365 = vmatmul.f32.gmra.mxu0 %v4967
        %v5366 = vpop.f32.mrf.mxu0
        %v5367 = vadd.f32 %v5254, %v5366
        %5368 = vmatmul.f32.gmra.mxu0 %v4971
        %v5369 = vpop.f32.mrf.mxu0
        %v5370 = vadd.f32 %v5257, %v5369
        %5371 = vmatmul.f32.gmra.mxu0 %v4975
        %v5372 = vpop.f32.mrf.mxu0
        %v5373 = vadd.f32 %v5260, %v5372
        %5374 = vmatmul.f32.gmra.mxu0 %v4979
        %v5375 = vpop.f32.mrf.mxu0
        %v5376 = vadd.f32 %v5263, %v5375
        %5377 = vmatmul.f32.gmra.mxu0 %v4983
        %v5378 = vpop.f32.mrf.mxu0
        %v5379 = vadd.f32 %v5266, %v5378
        %5380 = vmatmul.f32.gmra.mxu0 %v4987
        %v5381 = vpop.f32.mrf.mxu0
        %v5382 = vadd.f32 %v5269, %v5381
        %5383 = vmatmul.f32.gmra.mxu0 %v4991
        %v5384 = vpop.f32.mrf.mxu0
        %v5385 = vadd.f32 %v5272, %v5384
        %5386 = vmatmul.f32.gmra.mxu0 %v4995
        %v5387 = vpop.f32.mrf.mxu0
        %v5388 = vadd.f32 %v5275, %v5387
        %5389 = vmatmul.f32.gmra.mxu0 %v4999
        %v5390 = vpop.f32.mrf.mxu0
        %v5391 = vadd.f32 %v5278, %v5390
        %5392 = vmatmul.f32.gmra.mxu0 %v5003
        %v5393 = vpop.f32.mrf.mxu0
        %v5394 = vadd.f32 %v5281, %v5393
        %5395 = vmatmul.f32.gmra.mxu0 %v5007
        %v5396 = vpop.f32.mrf.mxu0
        %v5397 = vadd.f32 %v5284, %v5396
        %5398 = vmatmul.f32.gmra.mxu0 %v5011
        %v5399 = vpop.f32.mrf.mxu0
        %v5400 = vadd.f32 %v5287, %v5399
        %5401 = vmatmul.f32.gmra.mxu0 %v5015
        %v5402 = vpop.f32.mrf.mxu0
        %v5403 = vadd.f32 %v5290, %v5402
        %5404 = vmatmul.f32.gmra.mxu0 %v5019
        %v5405 = vpop.f32.mrf.mxu0
        %v5406 = vadd.f32 %v5293, %v5405
        %5407 = vmatmul.f32.gmra.mxu0 %v5023
        %v5408 = vpop.f32.mrf.mxu0
        %v5409 = vadd.f32 %v5296, %v5408
        %5410 = vmatmul.f32.gmra.mxu0 %v5027
        %v5411 = vpop.f32.mrf.mxu0
        %v5412 = vadd.f32 %v5299, %v5411
        %5413 = vmatmul.f32.gmra.mxu0 %v5031
        %v5414 = vpop.f32.mrf.mxu0
        %v5415 = vadd.f32 %v5302, %v5414
        %5416 = vmatmul.f32.gmra.mxu0 %v5035
        %v5417 = vpop.f32.mrf.mxu0
        %v5418 = vadd.f32 %v5305, %v5417
        %5419 = vmatmul.f32.gmra.mxu0 %v5039
        %v5420 = vpop.f32.mrf.mxu0
        %v5421 = vadd.f32 %v5308, %v5420
        %5422 = vmatmul.f32.gmra.mxu0 %v5043
        %v5423 = vpop.f32.mrf.mxu0
        %v5424 = vadd.f32 %v5311, %v5423
        %5425 = vmatmul.f32.gmra.mxu0 %v5047
        %v5426 = vpop.f32.mrf.mxu0
        %v5427 = vadd.f32 %v5314, %v5426
        %5428 = vmatmul.f32.gmra.mxu0 %v5051
        %v5429 = vpop.f32.mrf.mxu0
        %v5430 = vadd.f32 %v5317, %v5429
        %5431 = vmatmul.f32.gmra.mxu0 %v5055
        %v5432 = vpop.f32.mrf.mxu0
        %v5433 = vadd.f32 %v5320, %v5432
        %5434 = vmatmul.f32.gmra.mxu0 %v5059
        %v5435 = vpop.f32.mrf.mxu0
        %v5436 = vadd.f32 %v5323, %v5435
        %5437 = vdwg.mxu0
        %5438 = vmatpush.msra.mxu0 %v5109
        %5439 = vmatpush.msra.mxu0 %v5108
        %5440 = vmatpush.msra.mxu0 %v5107
        %5441 = vmatpush.msra.mxu0 %v5106
        %5442 = vmatpush.msra.mxu0 %v5105
        %5443 = vmatpush.msra.mxu0 %v5104
        %5444 = vmatpush.msra.mxu0 %v5103
        %5445 = vmatpush.msra.mxu0 %v5102
        %5446 = vmatpush.msra.mxu0 %v5101
        %5447 = vmatpush.msra.mxu0 %v5100
        %5448 = vmatpush.msra.mxu0 %v5099
        %5449 = vmatpush.msra.mxu0 %v5098
        %5450 = vmatpush.msra.mxu0 %v5097
        %5451 = vmatpush.msra.mxu0 %v5096
        %5452 = vmatpush.msra.mxu0 %v5095
        %5453 = vmatpush.msra.mxu0 %v5094
        %5454 = vmatmul.f32.gmra.mxu0 %v4936
        %v5455 = vpop.f32.mrf.mxu0
        %v5456 = vadd.f32 %v5343, %v5455
        %5457 = vmatmul.f32.gmra.mxu0 %v4940
        %v5458 = vpop.f32.mrf.mxu0
        %v5459 = vadd.f32 %v5346, %v5458
        %5460 = vmatmul.f32.gmra.mxu0 %v4944
        %v5461 = vpop.f32.mrf.mxu0
        %v5462 = vadd.f32 %v5349, %v5461
        %5463 = vmatmul.f32.gmra.mxu0 %v4948
        %v5464 = vpop.f32.mrf.mxu0
        %v5465 = vadd.f32 %v5352, %v5464
        %5466 = vmatmul.f32.gmra.mxu0 %v4952
        %v5467 = vpop.f32.mrf.mxu0
        %v5468 = vadd.f32 %v5355, %v5467
        %5469 = vmatmul.f32.gmra.mxu0 %v4956
        %v5470 = vpop.f32.mrf.mxu0
        %v5471 = vadd.f32 %v5358, %v5470
        %5472 = vmatmul.f32.gmra.mxu0 %v4960
        %v5473 = vpop.f32.mrf.mxu0
        %v5474 = vadd.f32 %v5361, %v5473
        %5475 = vmatmul.f32.gmra.mxu0 %v4964
        %v5476 = vpop.f32.mrf.mxu0
        %v5477 = vadd.f32 %v5364, %v5476
        %5478 = vmatmul.f32.gmra.mxu0 %v4968
        %v5479 = vpop.f32.mrf.mxu0
        %v5480 = vadd.f32 %v5367, %v5479
        %5481 = vmatmul.f32.gmra.mxu0 %v4972
        %v5482 = vpop.f32.mrf.mxu0
        %v5483 = vadd.f32 %v5370, %v5482
        %5484 = vmatmul.f32.gmra.mxu0 %v4976
        %v5485 = vpop.f32.mrf.mxu0
        %v5486 = vadd.f32 %v5373, %v5485
        %5487 = vmatmul.f32.gmra.mxu0 %v4980
        %v5488 = vpop.f32.mrf.mxu0
        %v5489 = vadd.f32 %v5376, %v5488
        %5490 = vmatmul.f32.gmra.mxu0 %v4984
        %v5491 = vpop.f32.mrf.mxu0
        %v5492 = vadd.f32 %v5379, %v5491
        %5493 = vmatmul.f32.gmra.mxu0 %v4988
        %v5494 = vpop.f32.mrf.mxu0
        %v5495 = vadd.f32 %v5382, %v5494
        %5496 = vmatmul.f32.gmra.mxu0 %v4992
        %v5497 = vpop.f32.mrf.mxu0
        %v5498 = vadd.f32 %v5385, %v5497
        %5499 = vmatmul.f32.gmra.mxu0 %v4996
        %v5500 = vpop.f32.mrf.mxu0
        %v5501 = vadd.f32 %v5388, %v5500
        %5502 = vmatmul.f32.gmra.mxu0 %v5000
        %v5503 = vpop.f32.mrf.mxu0
        %v5504 = vadd.f32 %v5391, %v5503
        %5505 = vmatmul.f32.gmra.mxu0 %v5004
        %v5506 = vpop.f32.mrf.mxu0
        %v5507 = vadd.f32 %v5394, %v5506
        %5508 = vmatmul.f32.gmra.mxu0 %v5008
        %v5509 = vpop.f32.mrf.mxu0
        %v5510 = vadd.f32 %v5397, %v5509
        %5511 = vmatmul.f32.gmra.mxu0 %v5012
        %v5512 = vpop.f32.mrf.mxu0
        %v5513 = vadd.f32 %v5400, %v5512
        %5514 = vmatmul.f32.gmra.mxu0 %v5016
        %v5515 = vpop.f32.mrf.mxu0
        %v5516 = vadd.f32 %v5403, %v5515
        %5517 = vmatmul.f32.gmra.mxu0 %v5020
        %v5518 = vpop.f32.mrf.mxu0
        %v5519 = vadd.f32 %v5406, %v5518
        %5520 = vmatmul.f32.gmra.mxu0 %v5024
        %v5521 = vpop.f32.mrf.mxu0
        %v5522 = vadd.f32 %v5409, %v5521
        %5523 = vmatmul.f32.gmra.mxu0 %v5028
        %v5524 = vpop.f32.mrf.mxu0
        %v5525 = vadd.f32 %v5412, %v5524
        %5526 = vmatmul.f32.gmra.mxu0 %v5032
        %v5527 = vpop.f32.mrf.mxu0
        %v5528 = vadd.f32 %v5415, %v5527
        %5529 = vmatmul.f32.gmra.mxu0 %v5036
        %v5530 = vpop.f32.mrf.mxu0
        %v5531 = vadd.f32 %v5418, %v5530
        %5532 = vmatmul.f32.gmra.mxu0 %v5040
        %v5533 = vpop.f32.mrf.mxu0
        %v5534 = vadd.f32 %v5421, %v5533
        %5535 = vmatmul.f32.gmra.mxu0 %v5044
        %v5536 = vpop.f32.mrf.mxu0
        %v5537 = vadd.f32 %v5424, %v5536
        %5538 = vmatmul.f32.gmra.mxu0 %v5048
        %v5539 = vpop.f32.mrf.mxu0
        %v5540 = vadd.f32 %v5427, %v5539
        %5541 = vmatmul.f32.gmra.mxu0 %v5052
        %v5542 = vpop.f32.mrf.mxu0
        %v5543 = vadd.f32 %v5430, %v5542
        %5544 = vmatmul.f32.gmra.mxu0 %v5056
        %v5545 = vpop.f32.mrf.mxu0
        %v5546 = vadd.f32 %v5433, %v5545
        %5547 = vmatmul.f32.gmra.mxu0 %v5060
        %v5548 = vpop.f32.mrf.mxu0
        %v5549 = vadd.f32 %v5436, %v5548
        %5550 = vdwg.mxu0
        %5551 = vmatpush.msra.mxu0 0.0
        %5552 = vmatpush.msra.mxu0 0.0
        %5553 = vmatpush.msra.mxu0 0.0
        %5554 = vmatpush.msra.mxu0 0.0
        %5555 = vmatpush.msra.mxu0 0.0
        %5556 = vmatpush.msra.mxu0 0.0
        %5557 = vmatpush.msra.mxu0 0.0
        %5558 = vmatpush.msra.mxu0 0.0
        %5559 = vmatpush.msra.mxu0 0.0
        %5560 = vmatpush.msra.mxu0 0.0
        %5561 = vmatpush.msra.mxu0 0.0
        %5562 = vmatpush.msra.mxu0 0.0
        %5563 = vmatpush.msra.mxu0 0.0
        %5564 = vmatpush.msra.mxu0 0.0
        %5565 = vmatpush.msra.mxu0 %v5111
        %5566 = vmatpush.msra.mxu0 %v5110
        %5567 = vmatmul.f32.gmra.mxu0 %v5117
        %v5568 = vpop.f32.mrf.mxu0
        %v5569 = vadd.f32 %v5456, %v5568
        %5570 = vmatmul.f32.gmra.mxu0 %v5120
        %v5571 = vpop.f32.mrf.mxu0
        %v5572 = vadd.f32 %v5459, %v5571
        %5573 = vmatmul.f32.gmra.mxu0 %v5123
        %v5574 = vpop.f32.mrf.mxu0
        %v5575 = vadd.f32 %v5462, %v5574
        %5576 = vmatmul.f32.gmra.mxu0 %v5126
        %v5577 = vpop.f32.mrf.mxu0
        %v5578 = vadd.f32 %v5465, %v5577
        %5579 = vmatmul.f32.gmra.mxu0 %v5129
        %v5580 = vpop.f32.mrf.mxu0
        %v5581 = vadd.f32 %v5468, %v5580
        %5582 = vmatmul.f32.gmra.mxu0 %v5132
        %v5583 = vpop.f32.mrf.mxu0
        %v5584 = vadd.f32 %v5471, %v5583
        %5585 = vmatmul.f32.gmra.mxu0 %v5135
        %v5586 = vpop.f32.mrf.mxu0
        %v5587 = vadd.f32 %v5474, %v5586
        %5588 = vmatmul.f32.gmra.mxu0 %v5138
        %v5589 = vpop.f32.mrf.mxu0
        %v5590 = vadd.f32 %v5477, %v5589
        %5591 = vmatmul.f32.gmra.mxu0 %v5141
        %v5592 = vpop.f32.mrf.mxu0
        %v5593 = vadd.f32 %v5480, %v5592
        %5594 = vmatmul.f32.gmra.mxu0 %v5144
        %v5595 = vpop.f32.mrf.mxu0
        %v5596 = vadd.f32 %v5483, %v5595
        %5597 = vmatmul.f32.gmra.mxu0 %v5147
        %v5598 = vpop.f32.mrf.mxu0
        %v5599 = vadd.f32 %v5486, %v5598
        %5600 = vmatmul.f32.gmra.mxu0 %v5150
        %v5601 = vpop.f32.mrf.mxu0
        %v5602 = vadd.f32 %v5489, %v5601
        %5603 = vmatmul.f32.gmra.mxu0 %v5153
        %v5604 = vpop.f32.mrf.mxu0
        %v5605 = vadd.f32 %v5492, %v5604
        %5606 = vmatmul.f32.gmra.mxu0 %v5156
        %v5607 = vpop.f32.mrf.mxu0
        %v5608 = vadd.f32 %v5495, %v5607
        %5609 = vmatmul.f32.gmra.mxu0 %v5159
        %v5610 = vpop.f32.mrf.mxu0
        %v5611 = vadd.f32 %v5498, %v5610
        %5612 = vmatmul.f32.gmra.mxu0 %v5162
        %v5613 = vpop.f32.mrf.mxu0
        %v5614 = vadd.f32 %v5501, %v5613
        %5615 = vmatmul.f32.gmra.mxu0 %v5165
        %v5616 = vpop.f32.mrf.mxu0
        %v5617 = vadd.f32 %v5504, %v5616
        %5618 = vmatmul.f32.gmra.mxu0 %v5168
        %v5619 = vpop.f32.mrf.mxu0
        %v5620 = vadd.f32 %v5507, %v5619
        %5621 = vmatmul.f32.gmra.mxu0 %v5171
        %v5622 = vpop.f32.mrf.mxu0
        %v5623 = vadd.f32 %v5510, %v5622
        %5624 = vmatmul.f32.gmra.mxu0 %v5174
        %v5625 = vpop.f32.mrf.mxu0
        %v5626 = vadd.f32 %v5513, %v5625
        %5627 = vmatmul.f32.gmra.mxu0 %v5177
        %v5628 = vpop.f32.mrf.mxu0
        %v5629 = vadd.f32 %v5516, %v5628
        %5630 = vmatmul.f32.gmra.mxu0 %v5180
        %v5631 = vpop.f32.mrf.mxu0
        %v5632 = vadd.f32 %v5519, %v5631
        %5633 = vmatmul.f32.gmra.mxu0 %v5183
        %v5634 = vpop.f32.mrf.mxu0
        %v5635 = vadd.f32 %v5522, %v5634
        %5636 = vmatmul.f32.gmra.mxu0 %v5186
        %v5637 = vpop.f32.mrf.mxu0
        %v5638 = vadd.f32 %v5525, %v5637
        %5639 = vmatmul.f32.gmra.mxu0 %v5189
        %v5640 = vpop.f32.mrf.mxu0
        %v5641 = vadd.f32 %v5528, %v5640
        %5642 = vmatmul.f32.gmra.mxu0 %v5192
        %v5643 = vpop.f32.mrf.mxu0
        %v5644 = vadd.f32 %v5531, %v5643
        %5645 = vmatmul.f32.gmra.mxu0 %v5195
        %v5646 = vpop.f32.mrf.mxu0
        %v5647 = vadd.f32 %v5534, %v5646
        %5648 = vmatmul.f32.gmra.mxu0 %v5198
        %v5649 = vpop.f32.mrf.mxu0
        %v5650 = vadd.f32 %v5537, %v5649
        %5651 = vmatmul.f32.gmra.mxu0 %v5201
        %v5652 = vpop.f32.mrf.mxu0
        %v5653 = vadd.f32 %v5540, %v5652
        %5654 = vmatmul.f32.gmra.mxu0 %v5204
        %v5655 = vpop.f32.mrf.mxu0
        %v5656 = vadd.f32 %v5543, %v5655
        %5657 = vmatmul.f32.gmra.mxu0 %v5207
        %v5658 = vpop.f32.mrf.mxu0
        %v5659 = vadd.f32 %v5546, %v5658
        %5660 = vmatmul.f32.gmra.mxu0 %v5210
        %v5661 = vpop.f32.mrf.mxu0
        %v5662 = vadd.f32 %v5549, %v5661
        %5663 = vdwg.mxu0
        %v5664 = vmax.f32 %v5569, 0.0
        %v5665 = vmax.f32 %v5572, 0.0
        %v5666 = vmax.f32 %v5575, 0.0
        %v5667 = vmax.f32 %v5578, 0.0
        %v5668 = vmax.f32 %v5581, 0.0
        %v5669 = vmax.f32 %v5584, 0.0
        %v5670 = vmax.f32 %v5587, 0.0
        %v5671 = vmax.f32 %v5590, 0.0
        %v5672 = vmax.f32 %v5593, 0.0
        %v5673 = vmax.f32 %v5596, 0.0
        %v5674 = vmax.f32 %v5599, 0.0
        %v5675 = vmax.f32 %v5602, 0.0
        %v5676 = vmax.f32 %v5605, 0.0
        %v5677 = vmax.f32 %v5608, 0.0
        %v5678 = vmax.f32 %v5611, 0.0
        %v5679 = vmax.f32 %v5614, 0.0
        %v5680 = vmax.f32 %v5617, 0.0
        %v5681 = vmax.f32 %v5620, 0.0
        %v5682 = vmax.f32 %v5623, 0.0
        %v5683 = vmax.f32 %v5626, 0.0
        %v5684 = vmax.f32 %v5629, 0.0
        %v5685 = vmax.f32 %v5632, 0.0
        %v5686 = vmax.f32 %v5635, 0.0
        %v5687 = vmax.f32 %v5638, 0.0
        %v5688 = vmax.f32 %v5641, 0.0
        %v5689 = vmax.f32 %v5644, 0.0
        %v5690 = vmax.f32 %v5647, 0.0
        %v5691 = vmax.f32 %v5650, 0.0
        %v5692 = vmax.f32 %v5653, 0.0
        %v5693 = vmax.f32 %v5656, 0.0
        %v5694 = vmax.f32 %v5659, 0.0
        %v5695 = vmax.f32 %v5662, 0.0
        %v5696 = vsel %vm509, %v5664, -inf
        %v5697 = vsel %vm509, %v5665, -inf
        %v5698 = vmax.f32 %v5696, %v5697
        %v5699 = vrot.slane %v5698, 4
        %v5700 = vmax.f32 %v5698, %v5699
        %v5701 = vrot.slane %v5700, 2
        %v5702 = vmax.f32 %v5700, %v5701
        %v5703 = vrot.slane %v5702, 1
        %v5704 = vmax.f32 %v5702, %v5703
        %v5705 = vsel %vm509, %v5666, -inf
        %v5706 = vsel %vm509, %v5667, -inf
        %v5707 = vmax.f32 %v5705, %v5706
        %v5708 = vrot.slane %v5707, 4
        %v5709 = vmax.f32 %v5707, %v5708
        %v5710 = vrot.slane %v5709, 2
        %v5711 = vmax.f32 %v5709, %v5710
        %v5712 = vrot.slane %v5711, 1
        %v5713 = vmax.f32 %v5711, %v5712
        %v5714 = vsel %vm509, %v5668, -inf
        %v5715 = vsel %vm509, %v5669, -inf
        %v5716 = vmax.f32 %v5714, %v5715
        %v5717 = vrot.slane %v5716, 4
        %v5718 = vmax.f32 %v5716, %v5717
        %v5719 = vrot.slane %v5718, 2
        %v5720 = vmax.f32 %v5718, %v5719
        %v5721 = vrot.slane %v5720, 1
        %v5722 = vmax.f32 %v5720, %v5721
        %v5723 = vsel %vm509, %v5670, -inf
        %v5724 = vsel %vm509, %v5671, -inf
        %v5725 = vmax.f32 %v5723, %v5724
        %v5726 = vrot.slane %v5725, 4
        %v5727 = vmax.f32 %v5725, %v5726
        %v5728 = vrot.slane %v5727, 2
        %v5729 = vmax.f32 %v5727, %v5728
        %v5730 = vrot.slane %v5729, 1
        %v5731 = vmax.f32 %v5729, %v5730
        %v5732 = vsel %vm509, %v5672, -inf
        %v5733 = vsel %vm509, %v5673, -inf
        %v5734 = vmax.f32 %v5732, %v5733
        %v5735 = vrot.slane %v5734, 4
        %v5736 = vmax.f32 %v5734, %v5735
        %v5737 = vrot.slane %v5736, 2
        %v5738 = vmax.f32 %v5736, %v5737
        %v5739 = vrot.slane %v5738, 1
        %v5740 = vmax.f32 %v5738, %v5739
        %v5741 = vsel %vm509, %v5674, -inf
        %v5742 = vsel %vm509, %v5675, -inf
        %v5743 = vmax.f32 %v5741, %v5742
        %v5744 = vrot.slane %v5743, 4
        %v5745 = vmax.f32 %v5743, %v5744
        %v5746 = vrot.slane %v5745, 2
        %v5747 = vmax.f32 %v5745, %v5746
        %v5748 = vrot.slane %v5747, 1
        %v5749 = vmax.f32 %v5747, %v5748
        %v5750 = vsel %vm509, %v5676, -inf
        %v5751 = vsel %vm509, %v5677, -inf
        %v5752 = vmax.f32 %v5750, %v5751
        %v5753 = vrot.slane %v5752, 4
        %v5754 = vmax.f32 %v5752, %v5753
        %v5755 = vrot.slane %v5754, 2
        %v5756 = vmax.f32 %v5754, %v5755
        %v5757 = vrot.slane %v5756, 1
        %v5758 = vmax.f32 %v5756, %v5757
        %v5759 = vsel %vm509, %v5678, -inf
        %v5760 = vsel %vm509, %v5679, -inf
        %v5761 = vmax.f32 %v5759, %v5760
        %v5762 = vrot.slane %v5761, 4
        %v5763 = vmax.f32 %v5761, %v5762
        %v5764 = vrot.slane %v5763, 2
        %v5765 = vmax.f32 %v5763, %v5764
        %v5766 = vrot.slane %v5765, 1
        %v5767 = vmax.f32 %v5765, %v5766
        %v5768 = vsel %vm509, %v5680, -inf
        %v5769 = vsel %vm509, %v5681, -inf
        %v5770 = vmax.f32 %v5768, %v5769
        %v5771 = vrot.slane %v5770, 4
        %v5772 = vmax.f32 %v5770, %v5771
        %v5773 = vrot.slane %v5772, 2
        %v5774 = vmax.f32 %v5772, %v5773
        %v5775 = vrot.slane %v5774, 1
        %v5776 = vmax.f32 %v5774, %v5775
        %v5777 = vsel %vm509, %v5682, -inf
        %v5778 = vsel %vm509, %v5683, -inf
        %v5779 = vmax.f32 %v5777, %v5778
        %v5780 = vrot.slane %v5779, 4
        %v5781 = vmax.f32 %v5779, %v5780
        %v5782 = vrot.slane %v5781, 2
        %v5783 = vmax.f32 %v5781, %v5782
        %v5784 = vrot.slane %v5783, 1
        %v5785 = vmax.f32 %v5783, %v5784
        %v5786 = vsel %vm509, %v5684, -inf
        %v5787 = vsel %vm509, %v5685, -inf
        %v5788 = vmax.f32 %v5786, %v5787
        %v5789 = vrot.slane %v5788, 4
        %v5790 = vmax.f32 %v5788, %v5789
        %v5791 = vrot.slane %v5790, 2
        %v5792 = vmax.f32 %v5790, %v5791
        %v5793 = vrot.slane %v5792, 1
        %v5794 = vmax.f32 %v5792, %v5793
        %v5795 = vsel %vm509, %v5686, -inf
        %v5796 = vsel %vm509, %v5687, -inf
        %v5797 = vmax.f32 %v5795, %v5796
        %v5798 = vrot.slane %v5797, 4
        %v5799 = vmax.f32 %v5797, %v5798
        %v5800 = vrot.slane %v5799, 2
        %v5801 = vmax.f32 %v5799, %v5800
        %v5802 = vrot.slane %v5801, 1
        %v5803 = vmax.f32 %v5801, %v5802
        %v5804 = vsel %vm509, %v5688, -inf
        %v5805 = vsel %vm509, %v5689, -inf
        %v5806 = vmax.f32 %v5804, %v5805
        %v5807 = vrot.slane %v5806, 4
        %v5808 = vmax.f32 %v5806, %v5807
        %v5809 = vrot.slane %v5808, 2
        %v5810 = vmax.f32 %v5808, %v5809
        %v5811 = vrot.slane %v5810, 1
        %v5812 = vmax.f32 %v5810, %v5811
        %v5813 = vsel %vm509, %v5690, -inf
        %v5814 = vsel %vm509, %v5691, -inf
        %v5815 = vmax.f32 %v5813, %v5814
        %v5816 = vrot.slane %v5815, 4
        %v5817 = vmax.f32 %v5815, %v5816
        %v5818 = vrot.slane %v5817, 2
        %v5819 = vmax.f32 %v5817, %v5818
        %v5820 = vrot.slane %v5819, 1
        %v5821 = vmax.f32 %v5819, %v5820
        %v5822 = vsel %vm509, %v5692, -inf
        %v5823 = vsel %vm509, %v5693, -inf
        %v5824 = vmax.f32 %v5822, %v5823
        %v5825 = vrot.slane %v5824, 4
        %v5826 = vmax.f32 %v5824, %v5825
        %v5827 = vrot.slane %v5826, 2
        %v5828 = vmax.f32 %v5826, %v5827
        %v5829 = vrot.slane %v5828, 1
        %v5830 = vmax.f32 %v5828, %v5829
        %v5831 = vsel %vm509, %v5694, -inf
        %v5832 = vsel %vm509, %v5695, -inf
        %v5833 = vmax.f32 %v5831, %v5832
        %v5834 = vrot.slane %v5833, 4
        %v5835 = vmax.f32 %v5833, %v5834
        %v5836 = vrot.slane %v5835, 2
        %v5837 = vmax.f32 %v5835, %v5836
        %v5838 = vrot.slane %v5837, 1
        %v5839 = vmax.f32 %v5837, %v5838
        %v5840 = vld [vmem:[%s507] sm:$0xff]
        %v5841 = vld [vmem:[%s507 + $0x8] sm:$0xff]
        %v5842 = vld [vmem:[%s4] sm:$0xff]
        %v5843 = vld [vmem:[%s4 + $0x8] sm:$0xff]
        %v5844 = vld [vmem:[%s4 + $0x10] sm:$0xff]
        %v5845 = vld [vmem:[%s4 + $0x18] sm:$0xff]
        %v5846 = vld [vmem:[%s5] sm:$0xff]
        %v5847 = vld [vmem:[%s5 + $0x8] sm:$0xff]
        %vm5864 = vcmask 1041409
        %v5865 = vsel %vm5864, %v5713, %v5704
        %vm5866 = vcmask 1042434
        %v5867 = vsel %vm5866, %v5722, %v5865
        %vm5868 = vcmask 1043459
        %v5869 = vsel %vm5868, %v5731, %v5867
        %vm5870 = vcmask 1044484
        %v5871 = vsel %vm5870, %v5740, %v5869
        %vm5872 = vcmask 1045509
        %v5873 = vsel %vm5872, %v5749, %v5871
        %vm5874 = vcmask 1046534
        %v5875 = vsel %vm5874, %v5758, %v5873
        %vm5876 = vcmask 1047559
        %v5877 = vsel %vm5876, %v5767, %v5875
        %v5878 = vsel %vm5864, %v5785, %v5776
        %v5879 = vsel %vm5866, %v5794, %v5878
        %v5880 = vsel %vm5868, %v5803, %v5879
        %v5881 = vsel %vm5870, %v5812, %v5880
        %v5882 = vsel %vm5872, %v5821, %v5881
        %v5883 = vsel %vm5874, %v5830, %v5882
        %v5884 = vsel %vm5876, %v5839, %v5883
        %v5885 = vsel %vm509, %v5877, 0
        %v5887 = vsel %vm509, %v5884, 0
        %5889 = vmatpush.msra.mxu0 0.0
        %5890 = vmatpush.msra.mxu0 0.0
        %5891 = vmatpush.msra.mxu0 0.0
        %5892 = vmatpush.msra.mxu0 0.0
        %5893 = vmatpush.msra.mxu0 0.0
        %5894 = vmatpush.msra.mxu0 0.0
        %5895 = vmatpush.msra.mxu0 0.0
        %5896 = vmatpush.msra.mxu0 0.0
        %5897 = vmatpush.msra.mxu0 0.0
        %5898 = vmatpush.msra.mxu0 0.0
        %5899 = vmatpush.msra.mxu0 0.0
        %5900 = vmatpush.msra.mxu0 0.0
        %5901 = vmatpush.msra.mxu0 0.0
        %5902 = vmatpush.msra.mxu0 0.0
        %5903 = vmatpush.msra.mxu0 %v5847
        %5904 = vmatpush.msra.mxu0 %v5846
        %5905 = vmatmul.f32.gmra.mxu0 %v5885
        %v5906 = vpop.f32.mrf.mxu0
        %v5907 = vadd.f32 0.0, %v5906
        %5908 = vmatmul.f32.gmra.mxu0 %v5887
        %v5909 = vpop.f32.mrf.mxu0
        %v5910 = vadd.f32 0.0, %v5909
        %5911 = vdwg.mxu0
        %vm5912 = vcmask 261120
        %v5914 = vsel %vm5912, %v5840, 0
        %v5917 = vsel %vm5912, %v5841, 0
        %5919 = vmatpush.msra.mxu0 0.0
        %5920 = vmatpush.msra.mxu0 0.0
        %5921 = vmatpush.msra.mxu0 0.0
        %5922 = vmatpush.msra.mxu0 0.0
        %5923 = vmatpush.msra.mxu0 0.0
        %5924 = vmatpush.msra.mxu0 0.0
        %5925 = vmatpush.msra.mxu0 0.0
        %5926 = vmatpush.msra.mxu0 0.0
        %5927 = vmatpush.msra.mxu0 0.0
        %5928 = vmatpush.msra.mxu0 0.0
        %5929 = vmatpush.msra.mxu0 0.0
        %5930 = vmatpush.msra.mxu0 0.0
        %5931 = vmatpush.msra.mxu0 %v5845
        %5932 = vmatpush.msra.mxu0 %v5844
        %5933 = vmatpush.msra.mxu0 %v5843
        %5934 = vmatpush.msra.mxu0 %v5842
        %5935 = vmatmul.f32.gmra.mxu0 %v5914
        %v5936 = vpop.f32.mrf.mxu0
        %v5937 = vadd.f32 %v5907, %v5936
        %5938 = vmatmul.f32.gmra.mxu0 %v5917
        %v5939 = vpop.f32.mrf.mxu0
        %v5940 = vadd.f32 %v5910, %v5939
        %5941 = vdwg.mxu0
        %v5942 = vld [vmem:[%s8] sm:$0xff]
        %v5943 = vld [vmem:[%s8 + $0x8] sm:$0xff]
        %v5944 = vld [vmem:[%s8 + $0x10] sm:$0xff]
        %v5945 = vld [vmem:[%s8 + $0x18] sm:$0xff]
        %v5946 = vld [vmem:[%s9] sm:$0x1]
        %v5948 = vperm.slane %v5946, 0
        %v5951 = vsel %vm5912, %v5937, 0
        %v5954 = vsel %vm5912, %v5940, 0
        %5956 = vmatpush.msra.mxu0 0.0
        %5957 = vmatpush.msra.mxu0 0.0
        %5958 = vmatpush.msra.mxu0 0.0
        %5959 = vmatpush.msra.mxu0 0.0
        %5960 = vmatpush.msra.mxu0 0.0
        %5961 = vmatpush.msra.mxu0 0.0
        %5962 = vmatpush.msra.mxu0 0.0
        %5963 = vmatpush.msra.mxu0 0.0
        %5964 = vmatpush.msra.mxu0 0.0
        %5965 = vmatpush.msra.mxu0 0.0
        %5966 = vmatpush.msra.mxu0 0.0
        %5967 = vmatpush.msra.mxu0 0.0
        %5968 = vmatpush.msra.mxu0 %v5945
        %5969 = vmatpush.msra.mxu0 %v5944
        %5970 = vmatpush.msra.mxu0 %v5943
        %5971 = vmatpush.msra.mxu0 %v5942
        %5972 = vmatmul.f32.gmra.mxu0 %v5951
        %v5973 = vpop.f32.mrf.mxu0
        %v5974 = vadd.f32 %v5948, %v5973
        %5975 = vmatmul.f32.gmra.mxu0 %v5954
        %v5976 = vpop.f32.mrf.mxu0
        %v5977 = vadd.f32 %v5948, %v5976
        %5978 = vdwg.mxu0
        %v5979 = vxor.u32 %v5974, 2147483648
        %v5980 = vxor.u32 %v5977, 2147483648
        %v5981 = vmul.f32 %v5979, 1.442695
        %v5982 = vpow.pop %v5981
        %v5983 = vmul.f32 %v5980, 1.442695
        %v5984 = vpow.pop %v5983
        %v5985 = vadd.f32 %v5982, 1.0
        %v5986 = vadd.f32 %v5984, 1.0
        %v5987 = vrcp.pop %v5985
        %v5988 = vmul.f32 %v5985, %v5987
        %v5989 = vsub.f32 1.0, %v5988
        %v5990 = vmul.f32 %v5987, %v5989
        %v5991 = vadd.f32 %v5987, %v5990
        %vm5992 = vweird.f32 %v5985
        %vm5993 = vweird.f32 %v5987
        %vm5994 = vmor %vm5992, %vm5993
        %v5995 = vsel %vm5994, %v5987, %v5991
        %v5996 = vand.u32 2147483647, %v5985
        %vm5997 = vcmp.eq.f32.partialorder %v5996, 8.507059e+37
        %v5998 = vand.u32 %v5985, 2147483648
        %v5999 = vor.u32 1.1754944e-38, %v5998
        %v6000 = vsel %vm5997, %v5999, %v5995
        %v6001 = vmul.f32 1.0, %v6000
        %v6002 = vrcp.pop %v5986
        %v6003 = vmul.f32 %v5986, %v6002
        %v6004 = vsub.f32 1.0, %v6003
        %v6005 = vmul.f32 %v6002, %v6004
        %v6006 = vadd.f32 %v6002, %v6005
        %vm6007 = vweird.f32 %v5986
        %vm6008 = vweird.f32 %v6002
        %vm6009 = vmor %vm6007, %vm6008
        %v6010 = vsel %vm6009, %v6002, %v6006
        %v6011 = vand.u32 2147483647, %v5986
        %vm6012 = vcmp.eq.f32.partialorder %v6011, 8.507059e+37
        %v6013 = vand.u32 %v5986, 2147483648
        %v6014 = vor.u32 1.1754944e-38, %v6013
        %v6015 = vsel %vm6012, %v6014, %v6010
        %v6016 = vmul.f32 1.0, %v6015
        %v6017 = vld [vmem:[%s6] sm:$0xff]
        %v6018 = vld [vmem:[%s6 + $0x8] sm:$0xff]
        %v6019 = vld [vmem:[%s6 + $0x10] sm:$0xff]
        %v6020 = vld [vmem:[%s6 + $0x18] sm:$0xff]
        %v6021 = vld [vmem:[%s7] sm:$0x1]
        %v6023 = vperm.slane %v6021, 0
        %6025 = vmatpush.msra.mxu0 0.0
        %6026 = vmatpush.msra.mxu0 0.0
        %6027 = vmatpush.msra.mxu0 0.0
        %6028 = vmatpush.msra.mxu0 0.0
        %6029 = vmatpush.msra.mxu0 0.0
        %6030 = vmatpush.msra.mxu0 0.0
        %6031 = vmatpush.msra.mxu0 0.0
        %6032 = vmatpush.msra.mxu0 0.0
        %6033 = vmatpush.msra.mxu0 0.0
        %6034 = vmatpush.msra.mxu0 0.0
        %6035 = vmatpush.msra.mxu0 0.0
        %6036 = vmatpush.msra.mxu0 0.0
        %6037 = vmatpush.msra.mxu0 %v6020
        %6038 = vmatpush.msra.mxu0 %v6019
        %6039 = vmatpush.msra.mxu0 %v6018
        %6040 = vmatpush.msra.mxu0 %v6017
        %6041 = vmatmul.f32.gmra.mxu0 %v5951
        %v6042 = vpop.f32.mrf.mxu0
        %v6043 = vadd.f32 %v6023, %v6042
        %6044 = vmatmul.f32.gmra.mxu0 %v5954
        %v6045 = vpop.f32.mrf.mxu0
        %v6046 = vadd.f32 %v6023, %v6045
        %6047 = vdwg.mxu0
        %v6048 = vmax.f32 %v6043, 0.0
        %v6049 = vmax.f32 %v6046, 0.0
        %v6050 = vmul.f32 %v6001, %v6048
        %v6051 = vmul.f32 %v6016, %v6049
        %v6052 = vsub.f32 1.0, %v6001
        %v6053 = vsub.f32 1.0, %v6016
        %v6054 = vmul.f32 %v6052, %v5937
        %v6055 = vmul.f32 %v6053, %v5940
        %v6056 = vadd.f32 %v6050, %v6054
        %v6057 = vadd.f32 %v6051, %v6055
        %v6058 = vld [vmem:[%s12] sm:$0xff]
        %v6059 = vld [vmem:[%s12 + $0x8] sm:$0xff]
        %v6060 = vld [vmem:[%s12 + $0x10] sm:$0xff]
        %v6061 = vld [vmem:[%s12 + $0x18] sm:$0xff]
        %v6062 = vld [vmem:[%s13] sm:$0x1]
        %v6064 = vperm.slane %v6062, 0
        %v6067 = vsel %vm5912, %v6056, 0
        %v6070 = vsel %vm5912, %v6057, 0
        %6072 = vmatpush.msra.mxu0 0.0
        %6073 = vmatpush.msra.mxu0 0.0
        %6074 = vmatpush.msra.mxu0 0.0
        %6075 = vmatpush.msra.mxu0 0.0
        %6076 = vmatpush.msra.mxu0 0.0
        %6077 = vmatpush.msra.mxu0 0.0
        %6078 = vmatpush.msra.mxu0 0.0
        %6079 = vmatpush.msra.mxu0 0.0
        %6080 = vmatpush.msra.mxu0 0.0
        %6081 = vmatpush.msra.mxu0 0.0
        %6082 = vmatpush.msra.mxu0 0.0
        %6083 = vmatpush.msra.mxu0 0.0
        %6084 = vmatpush.msra.mxu0 %v6061
        %6085 = vmatpush.msra.mxu0 %v6060
        %6086 = vmatpush.msra.mxu0 %v6059
        %6087 = vmatpush.msra.mxu0 %v6058
        %6088 = vmatmul.f32.gmra.mxu0 %v6067
        %v6089 = vpop.f32.mrf.mxu0
        %v6090 = vadd.f32 %v6064, %v6089
        %6091 = vmatmul.f32.gmra.mxu0 %v6070
        %v6092 = vpop.f32.mrf.mxu0
        %v6093 = vadd.f32 %v6064, %v6092
        %6094 = vdwg.mxu0
        %v6095 = vxor.u32 %v6090, 2147483648
        %v6096 = vxor.u32 %v6093, 2147483648
        %v6097 = vmul.f32 %v6095, 1.442695
        %v6098 = vpow.pop %v6097
        %v6099 = vmul.f32 %v6096, 1.442695
        %v6100 = vpow.pop %v6099
        %v6101 = vadd.f32 %v6098, 1.0
        %v6102 = vadd.f32 %v6100, 1.0
        %v6103 = vrcp.pop %v6101
        %v6104 = vmul.f32 %v6101, %v6103
        %v6105 = vsub.f32 1.0, %v6104
        %v6106 = vmul.f32 %v6103, %v6105
        %v6107 = vadd.f32 %v6103, %v6106
        %vm6108 = vweird.f32 %v6101
        %vm6109 = vweird.f32 %v6103
        %vm6110 = vmor %vm6108, %vm6109
        %v6111 = vsel %vm6110, %v6103, %v6107
        %v6112 = vand.u32 2147483647, %v6101
        %vm6113 = vcmp.eq.f32.partialorder %v6112, 8.507059e+37
        %v6114 = vand.u32 %v6101, 2147483648
        %v6115 = vor.u32 1.1754944e-38, %v6114
        %v6116 = vsel %vm6113, %v6115, %v6111
        %v6117 = vmul.f32 1.0, %v6116
        %v6118 = vrcp.pop %v6102
        %v6119 = vmul.f32 %v6102, %v6118
        %v6120 = vsub.f32 1.0, %v6119
        %v6121 = vmul.f32 %v6118, %v6120
        %v6122 = vadd.f32 %v6118, %v6121
        %vm6123 = vweird.f32 %v6102
        %vm6124 = vweird.f32 %v6118
        %vm6125 = vmor %vm6123, %vm6124
        %v6126 = vsel %vm6125, %v6118, %v6122
        %v6127 = vand.u32 2147483647, %v6102
        %vm6128 = vcmp.eq.f32.partialorder %v6127, 8.507059e+37
        %v6129 = vand.u32 %v6102, 2147483648
        %v6130 = vor.u32 1.1754944e-38, %v6129
        %v6131 = vsel %vm6128, %v6130, %v6126
        %v6132 = vmul.f32 1.0, %v6131
        %v6133 = vld [vmem:[%s10] sm:$0xff]
        %v6134 = vld [vmem:[%s10 + $0x8] sm:$0xff]
        %v6135 = vld [vmem:[%s10 + $0x10] sm:$0xff]
        %v6136 = vld [vmem:[%s10 + $0x18] sm:$0xff]
        %v6137 = vld [vmem:[%s11] sm:$0x1]
        %v6139 = vperm.slane %v6137, 0
        %6141 = vmatpush.msra.mxu0 0.0
        %6142 = vmatpush.msra.mxu0 0.0
        %6143 = vmatpush.msra.mxu0 0.0
        %6144 = vmatpush.msra.mxu0 0.0
        %6145 = vmatpush.msra.mxu0 0.0
        %6146 = vmatpush.msra.mxu0 0.0
        %6147 = vmatpush.msra.mxu0 0.0
        %6148 = vmatpush.msra.mxu0 0.0
        %6149 = vmatpush.msra.mxu0 0.0
        %6150 = vmatpush.msra.mxu0 0.0
        %6151 = vmatpush.msra.mxu0 0.0
        %6152 = vmatpush.msra.mxu0 0.0
        %6153 = vmatpush.msra.mxu0 %v6136
        %6154 = vmatpush.msra.mxu0 %v6135
        %6155 = vmatpush.msra.mxu0 %v6134
        %6156 = vmatpush.msra.mxu0 %v6133
        %6157 = vmatmul.f32.gmra.mxu0 %v6067
        %v6158 = vpop.f32.mrf.mxu0
        %v6159 = vadd.f32 %v6139, %v6158
        %6160 = vmatmul.f32.gmra.mxu0 %v6070
        %v6161 = vpop.f32.mrf.mxu0
        %v6162 = vadd.f32 %v6139, %v6161
        %6163 = vdwg.mxu0
        %v6164 = vmax.f32 %v6159, 0.0
        %v6165 = vmax.f32 %v6162, 0.0
        %v6166 = vmul.f32 %v6117, %v6164
        %v6167 = vmul.f32 %v6132, %v6165
        %v6168 = vsub.f32 1.0, %v6117
        %v6169 = vsub.f32 1.0, %v6132
        %v6170 = vmul.f32 %v6168, %v6056
        %v6171 = vmul.f32 %v6169, %v6057
        %v6172 = vadd.f32 %v6166, %v6170
        %v6173 = vadd.f32 %v6167, %v6171
        %6174 = vst.msk [vmem:[%s502] sm:$0xff] %vm5912, %v6172
        %6175 = vst.msk [vmem:[%s502 + $0x8] sm:$0xff] %vm5912, %v6173
        %s6176 = sand.u32 %s343, 1
        %s6177 = scalar_lea.sflag [#allocation6], %s6176
        %s6178 = sand.u32 %s343, 1
        %s6179 = smul.addr %s6178, 16
        %s6180 = scalar_lea.vmem [#allocation7], %s6179
        // Predicated region
        $region81: #{tpu_custom_call.1} parent=75 // pred_check
          %p6181 = pneg %p353
        $region82: #{tpu_custom_call.1} parent=75 // pred_check_branch
          %6183 = sbr.rel (%p6181) target = $region84
        $region83: #{tpu_custom_call.1} parent=75 // pred_region
          %s6184 = smul.u32 2, %s31
          %6186 = vsyncadd %s6177, 0
          %s6187 = smul.addr %s6184, 8
          %s6188 = scalar_lea.hbm %s14, %s6187
          %s6189 = sshll.u32 %s6180, 4
          %s6190 = int_to_ptr.vmem [resolvable:$true] %s6189
          %s6191 = sshll.u32 %s6188, 4
          %s6192 = int_to_ptr.hbm [resolvable:$true] %s6191
          %6197 = dma.vmem_to_hbm [thread:$0]  %s6190, 256, %s6192, %s6177, 128, 128, 8
        $region84: #{tpu_custom_call.1} parent=75 // pred_fallthru
          _
      $region76: #{tpu_custom_call.1} parent=5 // pred_fallthru
        _
      %p6198 = scmp.le.s32.totalorder 2, %s26
      // Predicated region
      $region85: #{tpu_custom_call.1} parent=5 // pred_check
        %p6199 = pneg %p6198
      $region86: #{tpu_custom_call.1} parent=5 // pred_check_branch
        %6201 = sbr.rel (%p6199) target = $region88
      $region87: #{tpu_custom_call.1} parent=5 // pred_region
        %s6202 = ssub.s32 %s26, 2
        // Predicated region
        $region89: #{tpu_custom_call.1} parent=87 // pred_check
          %p6203 = pneg %p359
        $region90: #{tpu_custom_call.1} parent=87 // pred_check_branch
          %6205 = sbr.rel (%p6203) target = $region92
        $region91: #{tpu_custom_call.1} parent=87 // pred_region
          %s6206 = sand.u32 %s344, 1
          %s6207 = scalar_lea.sflag [#allocation6], %s6206
          %s6208 = sand.u32 %s344, 1
          %s6209 = smul.addr %s6208, 16
          %s6210 = scalar_lea.vmem [#allocation7], %s6209
          %6212 = dma.done %s6207, 256
        $region92: #{tpu_custom_call.1} parent=87 // pred_fallthru
          _
      $region88: #{tpu_custom_call.1} parent=5 // pred_fallthru
        _
    $region6: #{tpu_custom_call.1} parent=1 // loop_footer
      %s30 = sadd.s32 1, %s26
    $region7: #{tpu_custom_call.1} parent=1 // loop_footer_branch
      %25 = sbr.rel target = $region3
    $region8: #{tpu_custom_call.1} parent=1 // loop_exit
      _
    %6213 = vsyncpa [#allocation5], 1
    %s6214 = scalar_lea.sflag [#allocation5], 1
    %6215 = vsyncpa %s6214, 1
    %6216 = vsyncpa [#allocation6], 1
    %s6217 = scalar_lea.sflag [#allocation6], 1
    %6218 = vsyncpa %s6217, 1

</llo_original>
